<compile_context>
chip_gen: v5e
topology: v5e:2x2
jax: 0.10.0
libtpu: 0.0.40
codegen_flags: <defaults>
</compile_context>

<pallas_src>
import functools

import jax
import jax.numpy as jnp
from jax import lax
from jax.experimental import pallas as pl
from jax.experimental.pallas import tpu as pltpu


# Contract last dims of both operands: (batch, in) x (out, in) -> (batch, out).
# This is PyTorch's `x @ W.T` and lowers to the well-supported
# rhs-transposed MXU matmul -- no transposes of the activations needed.
_DN = (((1,), (1,)), ((), ()))


def _autoencoder_kernel(x_ref,
                        w1, b1, w2, b2, w3, b3, w4, b4,      # encoder
                        w5, b5, w6, b6, w7, b7, w8, b8,      # decoder
                        out_ref, *, precision):
    """Fused 8-layer MLP autoencoder forward for one (batch_tile, F) tile."""

    def linear(h, w_ref, b_ref):
        w = w_ref[...]
        z = lax.dot_general(h.astype(w.dtype), w, dimension_numbers=_DN,
                            precision=precision,
                            preferred_element_type=jnp.float32)
        return z + b_ref[...]          # bias (1, out) broadcasts over batch rows

    h = x_ref[...]                     # (batch_tile, F), natural layout

    # ----- encoder -----
    h = jnp.maximum(linear(h, w1, b1), 0.0)
    h = jnp.maximum(linear(h, w2, b2), 0.0)
    h = jnp.maximum(linear(h, w3, b3), 0.0)
    h = linear(h, w4, b4)              # latent, no activation

    # ----- decoder -----
    h = jnp.maximum(linear(h, w5, b5), 0.0)
    h = jnp.maximum(linear(h, w6, b6), 0.0)
    h = jnp.maximum(linear(h, w7, b7), 0.0)
    z = linear(h, w8, b8)

    # Exact sigmoid: exp lands on the EUP; the divide is cheap and keeps full
    # accuracy (approx reciprocal previously cost > 1e-3 of output error).
    out_ref[...] = (1.0 / (1.0 + jnp.exp(-z))).astype(out_ref.dtype)


def _round_up(n, m):
    return ((n + m - 1) // m) * m


def _auto_batch_tile(batch):
    """Rows per grid step.

    Big enough to amortize the ~0.35 us per-grid-step overhead, small enough
    to keep the per-step working set to a few MB (fits every chip's scoped
    VMEM default), and for large batches guarantees >= 2 grid steps so v7x's
    two TensorCores both get work."""
    b = _round_up(batch, 128)
    if b <= 1024:
        return b
    return min(2048, _round_up(b // 2, 128))


def autoencoder_forward(x, params, *, batch_tile=None,
                        compute_dtype=jnp.float32, precision=None):
    """Fused forward pass of the 8-layer MLP autoencoder.

    x:      (B, F) float32, natural batch-first layout (same as the PyTorch module).
    params: list of 8 (W, b) pairs in PyTorch nn.Linear layout:
            W: (out, in), b: (out,).
    compute_dtype: jnp.float32 (default, exact) or jnp.bfloat16 (fast MXU path
            on v6e/v7x; weights are cast once here, f32 accumulation kept).
    Returns (B, F) float32 reconstructions.
    """
    B, F = x.shape
    if batch_tile is None:
        batch_tile = _auto_batch_tile(B)
    assert batch_tile % 8 == 0, "batch_tile must be a multiple of 8"

    if precision is None:
        precision = (lax.Precision.HIGHEST
                     if jnp.dtype(compute_dtype) == jnp.dtype(jnp.float32)
                     else lax.Precision.DEFAULT)

    # Pad the batch up to a multiple of batch_tile; padded rows are computed
    # and discarded.  No transpose of x or of the output anywhere.
    B_pad = _round_up(B, batch_tile)
    if B_pad != B:
        x = jnp.pad(x, ((0, B_pad - B), (0, 0)))

    in_specs = [pl.BlockSpec((batch_tile, F), lambda i: (i, 0))]
    flat_params = []
    for (w, b) in params:
        # Whole-array VMEM blocks with constant index maps: tiny (<100 KB
        # total), resident across the whole grid.  bf16 cast (if any) happens
        # once here rather than per grid step inside the kernel.
        w = jnp.asarray(w).astype(compute_dtype)
        b = jnp.asarray(b, jnp.float32).reshape(1, -1)   # (1, out) row bias
        in_specs.append(pl.BlockSpec(w.shape, lambda i: (0, 0)))
        in_specs.append(pl.BlockSpec(b.shape, lambda i: (0, 0)))
        flat_params.extend([w, b])

    out_spec = pl.BlockSpec((batch_tile, F), lambda i: (i, 0))

    kernel = functools.partial(_autoencoder_kernel, precision=precision)

    out = pl.pallas_call(
        kernel,
        out_shape=jax.ShapeDtypeStruct((B_pad, F), jnp.float32),
        grid_spec=pl.GridSpec(
            grid=(B_pad // batch_tile,),
            in_specs=in_specs,
            out_specs=out_spec,
        ),
        compiler_params=pltpu.CompilerParams(
            dimension_semantics=("parallel",),
        ),
    )(x, *flat_params)

    return out[:B] if B_pad != B else out


def init_params(key, num_features_in, h_size=16, num_latent=10):
    """Deterministic PyTorch-style init: U(-1/sqrt(fan_in), 1/sqrt(fan_in)).
    Weights stored as (out, in), biases as (out,) -- nn.Linear layout."""
    dims = [
        (num_features_in, h_size * 8),
        (h_size * 8, h_size * 4),
        (h_size * 4, h_size * 2),
        (h_size * 2, num_latent),
        (num_latent, h_size * 2),
        (h_size * 2, h_size * 4),
        (h_size * 4, h_size * 8),
        (h_size * 8, num_features_in),
    ]
    params = []
    for (fan_in, fan_out) in dims:
        key, kw, kb = jax.random.split(key, 3)
        bound = 1.0 / jnp.sqrt(jnp.float32(fan_in))
        w = jax.random.uniform(kw, (fan_out, fan_in), jnp.float32, -bound, bound)
        b = jax.random.uniform(kb, (fan_out,), jnp.float32, -bound, bound)
        params.append((w, b))
    return params


def reference_forward(x, params, *, precision=lax.Precision.HIGHEST):
    """Plain-JAX reference matching the PyTorch forward semantics."""

    def linear(h, w, b):
        return jnp.dot(h, w.T, precision=precision) + b

    h = x
    for i in range(3):                                   # encoder hidden layers
        h = jnp.maximum(linear(h, *params[i]), 0.0)
    h = linear(h, *params[3])                            # latent
    for i in range(4, 7):                                # decoder hidden layers
        h = jnp.maximum(linear(h, *params[i]), 0.0)
    z = linear(h, *params[7])
    return 1.0 / (1.0 + jnp.exp(-z))                     # sigmoid


if __name__ == "__main__":
    key = jax.random.PRNGKey(0)
    num_features_in = 24   # feature width of the tabular input rows
    batch = 16

    key, kx, kp = jax.random.split(key, 3)
    x = jax.random.uniform(kx, (batch, num_features_in), jnp.float32)
    params = init_params(kp, num_features_in)

    out = autoencoder_forward(x, params)
    out = jax.block_until_ready(out)

    ref = reference_forward(x, params)
    assert out.shape == (batch, num_features_in)
    err = float(jnp.max(jnp.abs(out - ref)))
    assert err < 2e-3, f"mismatch vs reference: max abs err = {err}"

    print("KERNEL_OK")
</pallas_src>

<mosaic_0001>
module attributes {stable_mosaic.version = 11 : i64} {
  func.func @_autoencoder_kernel(%arg0: i32, %arg1: memref<128x24xf32, #tpu.memory_space<vmem>>, %arg2: memref<128x24xf32, #tpu.memory_space<vmem>>, %arg3: memref<1x128xf32, #tpu.memory_space<vmem>>, %arg4: memref<64x128xf32, #tpu.memory_space<vmem>>, %arg5: memref<1x64xf32, #tpu.memory_space<vmem>>, %arg6: memref<32x64xf32, #tpu.memory_space<vmem>>, %arg7: memref<1x32xf32, #tpu.memory_space<vmem>>, %arg8: memref<10x32xf32, #tpu.memory_space<vmem>>, %arg9: memref<1x10xf32, #tpu.memory_space<vmem>>, %arg10: memref<32x10xf32, #tpu.memory_space<vmem>>, %arg11: memref<1x32xf32, #tpu.memory_space<vmem>>, %arg12: memref<64x32xf32, #tpu.memory_space<vmem>>, %arg13: memref<1x64xf32, #tpu.memory_space<vmem>>, %arg14: memref<128x64xf32, #tpu.memory_space<vmem>>, %arg15: memref<1x128xf32, #tpu.memory_space<vmem>>, %arg16: memref<24x128xf32, #tpu.memory_space<vmem>>, %arg17: memref<1x24xf32, #tpu.memory_space<vmem>>, %arg18: memref<128x24xf32, #tpu.memory_space<vmem>>) attributes {dimension_semantics = [#tpu.dimension_semantics<parallel>], iteration_bounds = array<i64: 1>, scalar_prefetch = 0 : i64, scratch_operands = 0 : i64, tpu.core_type = #tpu.core_type<tc>, window_params = [{transform_indices = @transform_0, window_bounds = array<i64: 128, 24>}, {pipeline_mode = #tpu.pipeline_mode<synchronous>, transform_indices = @transform_1, window_bounds = array<i64: 128, 24>}, {pipeline_mode = #tpu.pipeline_mode<synchronous>, transform_indices = @transform_2, window_bounds = array<i64: 1, 128>}, {pipeline_mode = #tpu.pipeline_mode<synchronous>, transform_indices = @transform_3, window_bounds = array<i64: 64, 128>}, {pipeline_mode = #tpu.pipeline_mode<synchronous>, transform_indices = @transform_4, window_bounds = array<i64: 1, 64>}, {pipeline_mode = #tpu.pipeline_mode<synchronous>, transform_indices = @transform_5, window_bounds = array<i64: 32, 64>}, {pipeline_mode = #tpu.pipeline_mode<synchronous>, transform_indices = @transform_6, window_bounds = array<i64: 1, 32>}, {pipeline_mode = #tpu.pipeline_mode<synchronous>, transform_indices = @transform_7, window_bounds = array<i64: 10, 32>}, {pipeline_mode = #tpu.pipeline_mode<synchronous>, transform_indices = @transform_8, window_bounds = array<i64: 1, 10>}, {pipeline_mode = #tpu.pipeline_mode<synchronous>, transform_indices = @transform_9, window_bounds = array<i64: 32, 10>}, {pipeline_mode = #tpu.pipeline_mode<synchronous>, transform_indices = @transform_10, window_bounds = array<i64: 1, 32>}, {pipeline_mode = #tpu.pipeline_mode<synchronous>, transform_indices = @transform_11, window_bounds = array<i64: 64, 32>}, {pipeline_mode = #tpu.pipeline_mode<synchronous>, transform_indices = @transform_12, window_bounds = array<i64: 1, 64>}, {pipeline_mode = #tpu.pipeline_mode<synchronous>, transform_indices = @transform_13, window_bounds = array<i64: 128, 64>}, {pipeline_mode = #tpu.pipeline_mode<synchronous>, transform_indices = @transform_14, window_bounds = array<i64: 1, 128>}, {pipeline_mode = #tpu.pipeline_mode<synchronous>, transform_indices = @transform_15, window_bounds = array<i64: 24, 128>}, {pipeline_mode = #tpu.pipeline_mode<synchronous>, transform_indices = @transform_16, window_bounds = array<i64: 1, 24>}, {transform_indices = @transform_17, window_bounds = array<i64: 128, 24>}]} {
    %c0 = arith.constant 0 : index
    %c0_0 = arith.constant 0 : index
    %0 = vector.load %arg1[%c0, %c0_0] : memref<128x24xf32, #tpu.memory_space<vmem>>, vector<128x24xf32>
    %c0_1 = arith.constant 0 : index
    %c0_2 = arith.constant 0 : index
    %1 = vector.load %arg2[%c0_1, %c0_2] : memref<128x24xf32, #tpu.memory_space<vmem>>, vector<128x24xf32>
    %cst = arith.constant dense<0.000000e+00> : vector<128x128xf32>
    %2 = tpu.matmul %0, %1, %cst {dimension_numbers = #tpu.dot_dimension_numbers<[1], [1], [0], [0], [0, 0, 1, 0], [], []>, precision = #tpu.contract_precision<fp32>} : vector<128x24xf32>, vector<128x24xf32>, vector<128x128xf32> -> vector<128x128xf32>
    %c0_3 = arith.constant 0 : index
    %c0_4 = arith.constant 0 : index
    %3 = vector.load %arg3[%c0_3, %c0_4] : memref<1x128xf32, #tpu.memory_space<vmem>>, vector<1x128xf32>
    %4 = vector.broadcast %3 : vector<1x128xf32> to vector<128x128xf32>
    %5 = arith.addf %2, %4 : vector<128x128xf32>
    %cst_5 = arith.constant 0.000000e+00 : f32
    %6 = vector.broadcast %cst_5 : f32 to vector<128x128xf32>
    %7 = arith.maximumf %5, %6 : vector<128x128xf32>
    %c0_6 = arith.constant 0 : index
    %c0_7 = arith.constant 0 : index
    %8 = vector.load %arg4[%c0_6, %c0_7] : memref<64x128xf32, #tpu.memory_space<vmem>>, vector<64x128xf32>
    %cst_8 = arith.constant dense<0.000000e+00> : vector<128x64xf32>
    %9 = tpu.matmul %7, %8, %cst_8 {dimension_numbers = #tpu.dot_dimension_numbers<[1], [1], [0], [0], [0, 0, 1, 0], [], []>, precision = #tpu.contract_precision<fp32>} : vector<128x128xf32>, vector<64x128xf32>, vector<128x64xf32> -> vector<128x64xf32>
    %c0_9 = arith.constant 0 : index
    %c0_10 = arith.constant 0 : index
    %10 = vector.load %arg5[%c0_9, %c0_10] : memref<1x64xf32, #tpu.memory_space<vmem>>, vector<1x64xf32>
    %11 = vector.broadcast %10 : vector<1x64xf32> to vector<128x64xf32>
    %12 = arith.addf %9, %11 : vector<128x64xf32>
    %cst_11 = arith.constant 0.000000e+00 : f32
    %13 = vector.broadcast %cst_11 : f32 to vector<128x64xf32>
    %14 = arith.maximumf %12, %13 : vector<128x64xf32>
    %c0_12 = arith.constant 0 : index
    %c0_13 = arith.constant 0 : index
    %15 = vector.load %arg6[%c0_12, %c0_13] : memref<32x64xf32, #tpu.memory_space<vmem>>, vector<32x64xf32>
    %cst_14 = arith.constant dense<0.000000e+00> : vector<128x32xf32>
    %16 = tpu.matmul %14, %15, %cst_14 {dimension_numbers = #tpu.dot_dimension_numbers<[1], [1], [0], [0], [0, 0, 1, 0], [], []>, precision = #tpu.contract_precision<fp32>} : vector<128x64xf32>, vector<32x64xf32>, vector<128x32xf32> -> vector<128x32xf32>
    %c0_15 = arith.constant 0 : index
    %c0_16 = arith.constant 0 : index
    %17 = vector.load %arg7[%c0_15, %c0_16] : memref<1x32xf32, #tpu.memory_space<vmem>>, vector<1x32xf32>
    %18 = vector.broadcast %17 : vector<1x32xf32> to vector<128x32xf32>
    %19 = arith.addf %16, %18 : vector<128x32xf32>
    %cst_17 = arith.constant 0.000000e+00 : f32
    %20 = vector.broadcast %cst_17 : f32 to vector<128x32xf32>
    %21 = arith.maximumf %19, %20 : vector<128x32xf32>
    %c0_18 = arith.constant 0 : index
    %c0_19 = arith.constant 0 : index
    %22 = vector.load %arg8[%c0_18, %c0_19] : memref<10x32xf32, #tpu.memory_space<vmem>>, vector<10x32xf32>
    %cst_20 = arith.constant dense<0.000000e+00> : vector<128x10xf32>
    %23 = tpu.matmul %21, %22, %cst_20 {dimension_numbers = #tpu.dot_dimension_numbers<[1], [1], [0], [0], [0, 0, 1, 0], [], []>, precision = #tpu.contract_precision<fp32>} : vector<128x32xf32>, vector<10x32xf32>, vector<128x10xf32> -> vector<128x10xf32>
    %c0_21 = arith.constant 0 : index
    %c0_22 = arith.constant 0 : index
    %24 = vector.load %arg9[%c0_21, %c0_22] : memref<1x10xf32, #tpu.memory_space<vmem>>, vector<1x10xf32>
    %25 = vector.broadcast %24 : vector<1x10xf32> to vector<128x10xf32>
    %26 = arith.addf %23, %25 : vector<128x10xf32>
    %c0_23 = arith.constant 0 : index
    %c0_24 = arith.constant 0 : index
    %27 = vector.load %arg10[%c0_23, %c0_24] : memref<32x10xf32, #tpu.memory_space<vmem>>, vector<32x10xf32>
    %cst_25 = arith.constant dense<0.000000e+00> : vector<128x32xf32>
    %28 = tpu.matmul %26, %27, %cst_25 {dimension_numbers = #tpu.dot_dimension_numbers<[1], [1], [0], [0], [0, 0, 1, 0], [], []>, precision = #tpu.contract_precision<fp32>} : vector<128x10xf32>, vector<32x10xf32>, vector<128x32xf32> -> vector<128x32xf32>
    %c0_26 = arith.constant 0 : index
    %c0_27 = arith.constant 0 : index
    %29 = vector.load %arg11[%c0_26, %c0_27] : memref<1x32xf32, #tpu.memory_space<vmem>>, vector<1x32xf32>
    %30 = vector.broadcast %29 : vector<1x32xf32> to vector<128x32xf32>
    %31 = arith.addf %28, %30 : vector<128x32xf32>
    %cst_28 = arith.constant 0.000000e+00 : f32
    %32 = vector.broadcast %cst_28 : f32 to vector<128x32xf32>
    %33 = arith.maximumf %31, %32 : vector<128x32xf32>
    %c0_29 = arith.constant 0 : index
    %c0_30 = arith.constant 0 : index
    %34 = vector.load %arg12[%c0_29, %c0_30] : memref<64x32xf32, #tpu.memory_space<vmem>>, vector<64x32xf32>
    %cst_31 = arith.constant dense<0.000000e+00> : vector<128x64xf32>
    %35 = tpu.matmul %33, %34, %cst_31 {dimension_numbers = #tpu.dot_dimension_numbers<[1], [1], [0], [0], [0, 0, 1, 0], [], []>, precision = #tpu.contract_precision<fp32>} : vector<128x32xf32>, vector<64x32xf32>, vector<128x64xf32> -> vector<128x64xf32>
    %c0_32 = arith.constant 0 : index
    %c0_33 = arith.constant 0 : index
    %36 = vector.load %arg13[%c0_32, %c0_33] : memref<1x64xf32, #tpu.memory_space<vmem>>, vector<1x64xf32>
    %37 = vector.broadcast %36 : vector<1x64xf32> to vector<128x64xf32>
    %38 = arith.addf %35, %37 : vector<128x64xf32>
    %cst_34 = arith.constant 0.000000e+00 : f32
    %39 = vector.broadcast %cst_34 : f32 to vector<128x64xf32>
    %40 = arith.maximumf %38, %39 : vector<128x64xf32>
    %c0_35 = arith.constant 0 : index
    %c0_36 = arith.constant 0 : index
    %41 = vector.load %arg14[%c0_35, %c0_36] : memref<128x64xf32, #tpu.memory_space<vmem>>, vector<128x64xf32>
    %cst_37 = arith.constant dense<0.000000e+00> : vector<128x128xf32>
    %42 = tpu.matmul %40, %41, %cst_37 {dimension_numbers = #tpu.dot_dimension_numbers<[1], [1], [0], [0], [0, 0, 1, 0], [], []>, precision = #tpu.contract_precision<fp32>} : vector<128x64xf32>, vector<128x64xf32>, vector<128x128xf32> -> vector<128x128xf32>
    %c0_38 = arith.constant 0 : index
    %c0_39 = arith.constant 0 : index
    %43 = vector.load %arg15[%c0_38, %c0_39] : memref<1x128xf32, #tpu.memory_space<vmem>>, vector<1x128xf32>
    %44 = vector.broadcast %43 : vector<1x128xf32> to vector<128x128xf32>
    %45 = arith.addf %42, %44 : vector<128x128xf32>
    %cst_40 = arith.constant 0.000000e+00 : f32
    %46 = vector.broadcast %cst_40 : f32 to vector<128x128xf32>
    %47 = arith.maximumf %45, %46 : vector<128x128xf32>
    %c0_41 = arith.constant 0 : index
    %c0_42 = arith.constant 0 : index
    %48 = vector.load %arg16[%c0_41, %c0_42] : memref<24x128xf32, #tpu.memory_space<vmem>>, vector<24x128xf32>
    %cst_43 = arith.constant dense<0.000000e+00> : vector<128x24xf32>
    %49 = tpu.matmul %47, %48, %cst_43 {dimension_numbers = #tpu.dot_dimension_numbers<[1], [1], [0], [0], [0, 0, 1, 0], [], []>, precision = #tpu.contract_precision<fp32>} : vector<128x128xf32>, vector<24x128xf32>, vector<128x24xf32> -> vector<128x24xf32>
    %c0_44 = arith.constant 0 : index
    %c0_45 = arith.constant 0 : index
    %50 = vector.load %arg17[%c0_44, %c0_45] : memref<1x24xf32, #tpu.memory_space<vmem>>, vector<1x24xf32>
    %51 = vector.broadcast %50 : vector<1x24xf32> to vector<128x24xf32>
    %52 = arith.addf %49, %51 : vector<128x24xf32>
    %cst_46 = arith.constant 0.000000e+00 : f32
    %53 = vector.broadcast %cst_46 : f32 to vector<128x24xf32>
    %54 = arith.subf %53, %52 : vector<128x24xf32>
    %55 = math.exp %54 : vector<128x24xf32>
    %cst_47 = arith.constant 1.000000e+00 : f32
    %56 = vector.broadcast %cst_47 : f32 to vector<128x24xf32>
    %57 = arith.addf %56, %55 : vector<128x24xf32>
    %cst_48 = arith.constant 1.000000e+00 : f32
    %58 = vector.broadcast %cst_48 : f32 to vector<128x24xf32>
    %59 = arith.divf %58, %57 : vector<128x24xf32>
    %c0_49 = arith.constant 0 : index
    %c0_50 = arith.constant 0 : index
    %60 = vector.load %arg18[%c0_49, %c0_50] : memref<128x24xf32, #tpu.memory_space<vmem>>, vector<128x24xf32>
    tpu.vector_store %arg18[%c0_49, %c0_50], %59 {strides = array<i32>} : memref<128x24xf32, #tpu.memory_space<vmem>>, vector<128x24xf32>,
    return
  }
  func.func @transform_0(%arg0: i32) -> (i32, i32) {
    %c0_i32 = arith.constant 0 : i32
    %c0_i32_0 = arith.constant 0 : i32
    return %arg0, %c0_i32 : i32, i32
  }
  func.func @transform_1(%arg0: i32) -> (i32, i32) {
    %c0_i32 = arith.constant 0 : i32
    %c0_i32_0 = arith.constant 0 : i32
    %c0_i32_1 = arith.constant 0 : i32
    return %c0_i32, %c0_i32_0 : i32, i32
  }
  func.func @transform_2(%arg0: i32) -> (i32, i32) {
    %c0_i32 = arith.constant 0 : i32
    %c0_i32_0 = arith.constant 0 : i32
    %c0_i32_1 = arith.constant 0 : i32
    return %c0_i32, %c0_i32_0 : i32, i32
  }
  func.func @transform_3(%arg0: i32) -> (i32, i32) {
    %c0_i32 = arith.constant 0 : i32
    %c0_i32_0 = arith.constant 0 : i32
    %c0_i32_1 = arith.constant 0 : i32
    return %c0_i32, %c0_i32_0 : i32, i32
  }
  func.func @transform_4(%arg0: i32) -> (i32, i32) {
    %c0_i32 = arith.constant 0 : i32
    %c0_i32_0 = arith.constant 0 : i32
    %c0_i32_1 = arith.constant 0 : i32
    return %c0_i32, %c0_i32_0 : i32, i32
  }
  func.func @transform_5(%arg0: i32) -> (i32, i32) {
    %c0_i32 = arith.constant 0 : i32
    %c0_i32_0 = arith.constant 0 : i32
    %c0_i32_1 = arith.constant 0 : i32
    return %c0_i32, %c0_i32_0 : i32, i32
  }
  func.func @transform_6(%arg0: i32) -> (i32, i32) {
    %c0_i32 = arith.constant 0 : i32
    %c0_i32_0 = arith.constant 0 : i32
    %c0_i32_1 = arith.constant 0 : i32
    return %c0_i32, %c0_i32_0 : i32, i32
  }
  func.func @transform_7(%arg0: i32) -> (i32, i32) {
    %c0_i32 = arith.constant 0 : i32
    %c0_i32_0 = arith.constant 0 : i32
    %c0_i32_1 = arith.constant 0 : i32
    return %c0_i32, %c0_i32_0 : i32, i32
  }
  func.func @transform_8(%arg0: i32) -> (i32, i32) {
    %c0_i32 = arith.constant 0 : i32
    %c0_i32_0 = arith.constant 0 : i32
    %c0_i32_1 = arith.constant 0 : i32
    return %c0_i32, %c0_i32_0 : i32, i32
  }
  func.func @transform_9(%arg0: i32) -> (i32, i32) {
    %c0_i32 = arith.constant 0 : i32
    %c0_i32_0 = arith.constant 0 : i32
    %c0_i32_1 = arith.constant 0 : i32
    return %c0_i32, %c0_i32_0 : i32, i32
  }
  func.func @transform_10(%arg0: i32) -> (i32, i32) {
    %c0_i32 = arith.constant 0 : i32
    %c0_i32_0 = arith.constant 0 : i32
    %c0_i32_1 = arith.constant 0 : i32
    return %c0_i32, %c0_i32_0 : i32, i32
  }
  func.func @transform_11(%arg0: i32) -> (i32, i32) {
    %c0_i32 = arith.constant 0 : i32
    %c0_i32_0 = arith.constant 0 : i32
    %c0_i32_1 = arith.constant 0 : i32
    return %c0_i32, %c0_i32_0 : i32, i32
  }
  func.func @transform_12(%arg0: i32) -> (i32, i32) {
    %c0_i32 = arith.constant 0 : i32
    %c0_i32_0 = arith.constant 0 : i32
    %c0_i32_1 = arith.constant 0 : i32
    return %c0_i32, %c0_i32_0 : i32, i32
  }
  func.func @transform_13(%arg0: i32) -> (i32, i32) {
    %c0_i32 = arith.constant 0 : i32
    %c0_i32_0 = arith.constant 0 : i32
    %c0_i32_1 = arith.constant 0 : i32
    return %c0_i32, %c0_i32_0 : i32, i32
  }
  func.func @transform_14(%arg0: i32) -> (i32, i32) {
    %c0_i32 = arith.constant 0 : i32
    %c0_i32_0 = arith.constant 0 : i32
    %c0_i32_1 = arith.constant 0 : i32
    return %c0_i32, %c0_i32_0 : i32, i32
  }
  func.func @transform_15(%arg0: i32) -> (i32, i32) {
    %c0_i32 = arith.constant 0 : i32
    %c0_i32_0 = arith.constant 0 : i32
    %c0_i32_1 = arith.constant 0 : i32
    return %c0_i32, %c0_i32_0 : i32, i32
  }
  func.func @transform_16(%arg0: i32) -> (i32, i32) {
    %c0_i32 = arith.constant 0 : i32
    %c0_i32_0 = arith.constant 0 : i32
    %c0_i32_1 = arith.constant 0 : i32
    return %c0_i32, %c0_i32_0 : i32, i32
  }
  func.func @transform_17(%arg0: i32) -> (i32, i32) {
    %c0_i32 = arith.constant 0 : i32
    %c0_i32_0 = arith.constant 0 : i32
    return %arg0, %c0_i32 : i32, i32
  }
}

</mosaic_0001>

<llo_original>
// kernel: tpu_custom_call.1
$region0: #{tpu_custom_call.1}
  #allocation0 [shape = 'u32[]', space=smem, size = 0x4, offset = 0x4, fixed_abs, tag = 'smem constant byte address 0x4 - core index']
  #allocation1 [shape = 'u32[72,128]{1,0:T(1,128)}', space=vmem, size = 0x9000, scoped, tag = 'internal scratch']
  %s0 = inlined_call_operand.vmem [shape: f32[128,24], index: 0, kind: input, shape index: {}]
  %s1 = inlined_call_operand.vmem [shape: f32[128,24], index: 1, kind: input, shape index: {}]
  %s2 = inlined_call_operand.vmem [shape: f32[1,128], index: 2, kind: input, shape index: {}]
  %s3 = inlined_call_operand.vmem [shape: f32[64,128], index: 3, kind: input, shape index: {}]
  %s4 = inlined_call_operand.vmem [shape: f32[1,64], index: 4, kind: input, shape index: {}]
  %s5 = inlined_call_operand.vmem [shape: f32[32,64], index: 5, kind: input, shape index: {}]
  %s6 = inlined_call_operand.vmem [shape: f32[1,32], index: 6, kind: input, shape index: {}]
  %s7 = inlined_call_operand.vmem [shape: f32[10,32], index: 7, kind: input, shape index: {}]
  %s8 = inlined_call_operand.vmem [shape: f32[1,10], index: 8, kind: input, shape index: {}]
  %s9 = inlined_call_operand.vmem [shape: f32[32,10], index: 9, kind: input, shape index: {}]
  %s10 = inlined_call_operand.vmem [shape: f32[1,32], index: 10, kind: input, shape index: {}]
  %s11 = inlined_call_operand.vmem [shape: f32[64,32], index: 11, kind: input, shape index: {}]
  %s12 = inlined_call_operand.vmem [shape: f32[1,64], index: 12, kind: input, shape index: {}]
  %s13 = inlined_call_operand.vmem [shape: f32[128,64], index: 13, kind: input, shape index: {}]
  %s14 = inlined_call_operand.vmem [shape: f32[1,128], index: 14, kind: input, shape index: {}]
  %s15 = inlined_call_operand.vmem [shape: f32[24,128], index: 15, kind: input, shape index: {}]
  %s16 = inlined_call_operand.vmem [shape: f32[1,24], index: 16, kind: input, shape index: {}]
  %s17 = inlined_call_operand.vmem [shape: f32[128,24], index: 17, kind: output, shape index: {}]
  %s18 = sld [smem:[#allocation0]]
  $region78: #{tpu_custom_call.1} parent=0
    _
  %s20 = ssub.s32 1, %s18
  %s21 = scalar_select 0, %s20, %s18
  // Predicated region
  $region2: #{tpu_custom_call.1} parent=0 // pred_check
    _
  $region3: #{tpu_custom_call.1} parent=0 // pred_check_branch
    %23 = sbr.rel (0) target = $region5
  $region4: #{tpu_custom_call.1} parent=0 // pred_region
    _
  $region5: #{tpu_custom_call.1} parent=0 // pred_fallthru
    _
  // Predicated region
  $region6: #{tpu_custom_call.1} parent=0 // pred_check
    _
  $region7: #{tpu_custom_call.1} parent=0 // pred_check_branch
    %25 = sbr.rel (0) target = $region9
  $region8: #{tpu_custom_call.1} parent=0 // pred_region
    _
  $region9: #{tpu_custom_call.1} parent=0 // pred_fallthru
    _
  // Predicated region
  $region10: #{tpu_custom_call.1} parent=0 // pred_check
    _
  $region11: #{tpu_custom_call.1} parent=0 // pred_check_branch
    %27 = sbr.rel (0) target = $region13
  $region12: #{tpu_custom_call.1} parent=0 // pred_region
    _
  $region13: #{tpu_custom_call.1} parent=0 // pred_fallthru
    _
  // Predicated region
  $region14: #{tpu_custom_call.1} parent=0 // pred_check
    _
  $region15: #{tpu_custom_call.1} parent=0 // pred_check_branch
    %29 = sbr.rel (0) target = $region17
  $region16: #{tpu_custom_call.1} parent=0 // pred_region
    _
  $region17: #{tpu_custom_call.1} parent=0 // pred_fallthru
    _
  // Predicated region
  $region18: #{tpu_custom_call.1} parent=0 // pred_check
    _
  $region19: #{tpu_custom_call.1} parent=0 // pred_check_branch
    %31 = sbr.rel (0) target = $region21
  $region20: #{tpu_custom_call.1} parent=0 // pred_region
    _
  $region21: #{tpu_custom_call.1} parent=0 // pred_fallthru
    _
  // Predicated region
  $region22: #{tpu_custom_call.1} parent=0 // pred_check
    _
  $region23: #{tpu_custom_call.1} parent=0 // pred_check_branch
    %33 = sbr.rel (0) target = $region25
  $region24: #{tpu_custom_call.1} parent=0 // pred_region
    _
  $region25: #{tpu_custom_call.1} parent=0 // pred_fallthru
    _
  // Predicated region
  $region26: #{tpu_custom_call.1} parent=0 // pred_check
    _
  $region27: #{tpu_custom_call.1} parent=0 // pred_check_branch
    %35 = sbr.rel (0) target = $region29
  $region28: #{tpu_custom_call.1} parent=0 // pred_region
    _
  $region29: #{tpu_custom_call.1} parent=0 // pred_fallthru
    _
  // Predicated region
  $region30: #{tpu_custom_call.1} parent=0 // pred_check
    _
  $region31: #{tpu_custom_call.1} parent=0 // pred_check_branch
    %37 = sbr.rel (0) target = $region33
  $region32: #{tpu_custom_call.1} parent=0 // pred_region
    _
  $region33: #{tpu_custom_call.1} parent=0 // pred_fallthru
    _
  // Predicated region
  $region34: #{tpu_custom_call.1} parent=0 // pred_check
    _
  $region35: #{tpu_custom_call.1} parent=0 // pred_check_branch
    %39 = sbr.rel (0) target = $region37
  $region36: #{tpu_custom_call.1} parent=0 // pred_region
    _
  $region37: #{tpu_custom_call.1} parent=0 // pred_fallthru
    _
  // Predicated region
  $region38: #{tpu_custom_call.1} parent=0 // pred_check
    _
  $region39: #{tpu_custom_call.1} parent=0 // pred_check_branch
    %41 = sbr.rel (0) target = $region41
  $region40: #{tpu_custom_call.1} parent=0 // pred_region
    _
  $region41: #{tpu_custom_call.1} parent=0 // pred_fallthru
    _
  // Predicated region
  $region42: #{tpu_custom_call.1} parent=0 // pred_check
    _
  $region43: #{tpu_custom_call.1} parent=0 // pred_check_branch
    %43 = sbr.rel (0) target = $region45
  $region44: #{tpu_custom_call.1} parent=0 // pred_region
    _
  $region45: #{tpu_custom_call.1} parent=0 // pred_fallthru
    _
  // Predicated region
  $region46: #{tpu_custom_call.1} parent=0 // pred_check
    _
  $region47: #{tpu_custom_call.1} parent=0 // pred_check_branch
    %45 = sbr.rel (0) target = $region49
  $region48: #{tpu_custom_call.1} parent=0 // pred_region
    _
  $region49: #{tpu_custom_call.1} parent=0 // pred_fallthru
    _
  // Predicated region
  $region50: #{tpu_custom_call.1} parent=0 // pred_check
    _
  $region51: #{tpu_custom_call.1} parent=0 // pred_check_branch
    %47 = sbr.rel (0) target = $region53
  $region52: #{tpu_custom_call.1} parent=0 // pred_region
    _
  $region53: #{tpu_custom_call.1} parent=0 // pred_fallthru
    _
  // Predicated region
  $region54: #{tpu_custom_call.1} parent=0 // pred_check
    _
  $region55: #{tpu_custom_call.1} parent=0 // pred_check_branch
    %49 = sbr.rel (0) target = $region57
  $region56: #{tpu_custom_call.1} parent=0 // pred_region
    _
  $region57: #{tpu_custom_call.1} parent=0 // pred_fallthru
    _
  // Predicated region
  $region58: #{tpu_custom_call.1} parent=0 // pred_check
    _
  $region59: #{tpu_custom_call.1} parent=0 // pred_check_branch
    %51 = sbr.rel (0) target = $region61
  $region60: #{tpu_custom_call.1} parent=0 // pred_region
    _
  $region61: #{tpu_custom_call.1} parent=0 // pred_fallthru
    _
  // Predicated region
  $region62: #{tpu_custom_call.1} parent=0 // pred_check
    _
  $region63: #{tpu_custom_call.1} parent=0 // pred_check_branch
    %53 = sbr.rel (0) target = $region65
  $region64: #{tpu_custom_call.1} parent=0 // pred_region
    _
  $region65: #{tpu_custom_call.1} parent=0 // pred_fallthru
    _
  // Predicated region
  $region66: #{tpu_custom_call.1} parent=0 // pred_check
    _
  $region67: #{tpu_custom_call.1} parent=0 // pred_check_branch
    %55 = sbr.rel (0) target = $region69
  $region68: #{tpu_custom_call.1} parent=0 // pred_region
    _
  $region69: #{tpu_custom_call.1} parent=0 // pred_fallthru
    _
  %v56 = vld [vmem:[%s0] sm:$0xff]
  %v57 = vld [vmem:[%s0 + $0x8] sm:$0xff]
  %v58 = vld [vmem:[%s0 + $0x10] sm:$0xff]
  %v59 = vld [vmem:[%s0 + $0x18] sm:$0xff]
  %v60 = vld [vmem:[%s0 + $0x20] sm:$0xff]
  %v61 = vld [vmem:[%s0 + $0x28] sm:$0xff]
  %v62 = vld [vmem:[%s0 + $0x30] sm:$0xff]
  %v63 = vld [vmem:[%s0 + $0x38] sm:$0xff]
  %v64 = vld [vmem:[%s0 + $0x40] sm:$0xff]
  %v65 = vld [vmem:[%s0 + $0x48] sm:$0xff]
  %v66 = vld [vmem:[%s0 + $0x50] sm:$0xff]
  %v67 = vld [vmem:[%s0 + $0x58] sm:$0xff]
  %v68 = vld [vmem:[%s0 + $0x60] sm:$0xff]
  %v69 = vld [vmem:[%s0 + $0x68] sm:$0xff]
  %v70 = vld [vmem:[%s0 + $0x70] sm:$0xff]
  %v71 = vld [vmem:[%s0 + $0x78] sm:$0xff]
  %v72 = vld [vmem:[%s1] sm:$0xff]
  %v73 = vld [vmem:[%s1 + $0x8] sm:$0xff]
  %v74 = vld [vmem:[%s1 + $0x10] sm:$0xff]
  %v75 = vld [vmem:[%s1 + $0x18] sm:$0xff]
  %v76 = vld [vmem:[%s1 + $0x20] sm:$0xff]
  %v77 = vld [vmem:[%s1 + $0x28] sm:$0xff]
  %v78 = vld [vmem:[%s1 + $0x30] sm:$0xff]
  %v79 = vld [vmem:[%s1 + $0x38] sm:$0xff]
  %v80 = vld [vmem:[%s1 + $0x40] sm:$0xff]
  %v81 = vld [vmem:[%s1 + $0x48] sm:$0xff]
  %v82 = vld [vmem:[%s1 + $0x50] sm:$0xff]
  %v83 = vld [vmem:[%s1 + $0x58] sm:$0xff]
  %v84 = vld [vmem:[%s1 + $0x60] sm:$0xff]
  %v85 = vld [vmem:[%s1 + $0x68] sm:$0xff]
  %v86 = vld [vmem:[%s1 + $0x70] sm:$0xff]
  %v87 = vld [vmem:[%s1 + $0x78] sm:$0xff]
  %v88 = vld [vmem:[%s2] sm:$0x1]
  %v90 = vperm.slane %v88, 0
  %vm92 = vcmask 195584
  %v94 = vsel %vm92, %v56, 0
  %v97 = vsel %vm92, %v57, 0
  %v100 = vsel %vm92, %v58, 0
  %v103 = vsel %vm92, %v59, 0
  %v106 = vsel %vm92, %v60, 0
  %v109 = vsel %vm92, %v61, 0
  %v112 = vsel %vm92, %v62, 0
  %v115 = vsel %vm92, %v63, 0
  %v118 = vsel %vm92, %v64, 0
  %v121 = vsel %vm92, %v65, 0
  %v124 = vsel %vm92, %v66, 0
  %v127 = vsel %vm92, %v67, 0
  %v130 = vsel %vm92, %v68, 0
  %v133 = vsel %vm92, %v69, 0
  %v136 = vsel %vm92, %v70, 0
  %v139 = vsel %vm92, %v71, 0
  %v142 = vsel %vm92, %v72, 0
  %v145 = vsel %vm92, %v73, 0
  %v148 = vsel %vm92, %v74, 0
  %v151 = vsel %vm92, %v75, 0
  %v154 = vsel %vm92, %v76, 0
  %v157 = vsel %vm92, %v77, 0
  %v160 = vsel %vm92, %v78, 0
  %v163 = vsel %vm92, %v79, 0
  %v166 = vsel %vm92, %v80, 0
  %v169 = vsel %vm92, %v81, 0
  %v172 = vsel %vm92, %v82, 0
  %v175 = vsel %vm92, %v83, 0
  %v178 = vsel %vm92, %v84, 0
  %v181 = vsel %vm92, %v85, 0
  %v184 = vsel %vm92, %v86, 0
  %v187 = vsel %vm92, %v87, 0
  %v189 = vand.u32 %v187, 4294901760
  %190 = vmatpush.xpose.msra.mxu0 %v189
  %v191 = vand.u32 %v184, 4294901760
  %192 = vmatpush.xpose.msra.mxu0 %v191
  %v193 = vand.u32 %v181, 4294901760
  %194 = vmatpush.xpose.msra.mxu0 %v193
  %v195 = vand.u32 %v178, 4294901760
  %196 = vmatpush.xpose.msra.mxu0 %v195
  %v197 = vand.u32 %v175, 4294901760
  %198 = vmatpush.xpose.msra.mxu0 %v197
  %v199 = vand.u32 %v172, 4294901760
  %200 = vmatpush.xpose.msra.mxu0 %v199
  %v201 = vand.u32 %v169, 4294901760
  %202 = vmatpush.xpose.msra.mxu0 %v201
  %v203 = vand.u32 %v166, 4294901760
  %204 = vmatpush.xpose.msra.mxu0 %v203
  %v205 = vand.u32 %v163, 4294901760
  %206 = vmatpush.xpose.msra.mxu0 %v205
  %v207 = vand.u32 %v160, 4294901760
  %208 = vmatpush.xpose.msra.mxu0 %v207
  %v209 = vand.u32 %v157, 4294901760
  %210 = vmatpush.xpose.msra.mxu0 %v209
  %v211 = vand.u32 %v154, 4294901760
  %212 = vmatpush.xpose.msra.mxu0 %v211
  %v213 = vand.u32 %v151, 4294901760
  %214 = vmatpush.xpose.msra.mxu0 %v213
  %v215 = vand.u32 %v148, 4294901760
  %216 = vmatpush.xpose.msra.mxu0 %v215
  %v217 = vand.u32 %v145, 4294901760
  %218 = vmatpush.xpose.msra.mxu0 %v217
  %v219 = vand.u32 %v142, 4294901760
  %220 = vmatpush.xpose.msra.mxu0 %v219
  %v221 = vand.u32 %v94, 4294901760
  %v222 = vsub.f32 %v94, %v221
  %v223 = vand.u32 %v222, 4294901760
  %v224 = vsub.f32 %v222, %v223
  %v225 = vand.u32 %v224, 4294901760
  %226 = vmatmul.f32.gmra.mxu0 %v225
  %v227 = vpop.f32.mrf.mxu0
  %v228 = vadd.f32 %v90, %v227
  %v229 = vand.u32 %v97, 4294901760
  %v230 = vsub.f32 %v97, %v229
  %v231 = vand.u32 %v230, 4294901760
  %v232 = vsub.f32 %v230, %v231
  %v233 = vand.u32 %v232, 4294901760
  %234 = vmatmul.f32.gmra.mxu0 %v233
  %v235 = vpop.f32.mrf.mxu0
  %v236 = vadd.f32 %v90, %v235
  %v237 = vand.u32 %v100, 4294901760
  %v238 = vsub.f32 %v100, %v237
  %v239 = vand.u32 %v238, 4294901760
  %v240 = vsub.f32 %v238, %v239
  %v241 = vand.u32 %v240, 4294901760
  %242 = vmatmul.f32.gmra.mxu0 %v241
  %v243 = vpop.f32.mrf.mxu0
  %v244 = vadd.f32 %v90, %v243
  %v245 = vand.u32 %v103, 4294901760
  %v246 = vsub.f32 %v103, %v245
  %v247 = vand.u32 %v246, 4294901760
  %v248 = vsub.f32 %v246, %v247
  %v249 = vand.u32 %v248, 4294901760
  %250 = vmatmul.f32.gmra.mxu0 %v249
  %v251 = vpop.f32.mrf.mxu0
  %v252 = vadd.f32 %v90, %v251
  %v253 = vand.u32 %v106, 4294901760
  %v254 = vsub.f32 %v106, %v253
  %v255 = vand.u32 %v254, 4294901760
  %v256 = vsub.f32 %v254, %v255
  %v257 = vand.u32 %v256, 4294901760
  %258 = vmatmul.f32.gmra.mxu0 %v257
  %v259 = vpop.f32.mrf.mxu0
  %v260 = vadd.f32 %v90, %v259
  %v261 = vand.u32 %v109, 4294901760
  %v262 = vsub.f32 %v109, %v261
  %v263 = vand.u32 %v262, 4294901760
  %v264 = vsub.f32 %v262, %v263
  %v265 = vand.u32 %v264, 4294901760
  %266 = vmatmul.f32.gmra.mxu0 %v265
  %v267 = vpop.f32.mrf.mxu0
  %v268 = vadd.f32 %v90, %v267
  %v269 = vand.u32 %v112, 4294901760
  %v270 = vsub.f32 %v112, %v269
  %v271 = vand.u32 %v270, 4294901760
  %v272 = vsub.f32 %v270, %v271
  %v273 = vand.u32 %v272, 4294901760
  %274 = vmatmul.f32.gmra.mxu0 %v273
  %v275 = vpop.f32.mrf.mxu0
  %v276 = vadd.f32 %v90, %v275
  %v277 = vand.u32 %v115, 4294901760
  %v278 = vsub.f32 %v115, %v277
  %v279 = vand.u32 %v278, 4294901760
  %v280 = vsub.f32 %v278, %v279
  %v281 = vand.u32 %v280, 4294901760
  %282 = vmatmul.f32.gmra.mxu0 %v281
  %v283 = vpop.f32.mrf.mxu0
  %v284 = vadd.f32 %v90, %v283
  %v285 = vand.u32 %v118, 4294901760
  %v286 = vsub.f32 %v118, %v285
  %v287 = vand.u32 %v286, 4294901760
  %v288 = vsub.f32 %v286, %v287
  %v289 = vand.u32 %v288, 4294901760
  %290 = vmatmul.f32.gmra.mxu0 %v289
  %v291 = vpop.f32.mrf.mxu0
  %v292 = vadd.f32 %v90, %v291
  %v293 = vand.u32 %v121, 4294901760
  %v294 = vsub.f32 %v121, %v293
  %v295 = vand.u32 %v294, 4294901760
  %v296 = vsub.f32 %v294, %v295
  %v297 = vand.u32 %v296, 4294901760
  %298 = vmatmul.f32.gmra.mxu0 %v297
  %v299 = vpop.f32.mrf.mxu0
  %v300 = vadd.f32 %v90, %v299
  %v301 = vand.u32 %v124, 4294901760
  %v302 = vsub.f32 %v124, %v301
  %v303 = vand.u32 %v302, 4294901760
  %v304 = vsub.f32 %v302, %v303
  %v305 = vand.u32 %v304, 4294901760
  %306 = vmatmul.f32.gmra.mxu0 %v305
  %v307 = vpop.f32.mrf.mxu0
  %v308 = vadd.f32 %v90, %v307
  %v309 = vand.u32 %v127, 4294901760
  %v310 = vsub.f32 %v127, %v309
  %v311 = vand.u32 %v310, 4294901760
  %v312 = vsub.f32 %v310, %v311
  %v313 = vand.u32 %v312, 4294901760
  %314 = vmatmul.f32.gmra.mxu0 %v313
  %v315 = vpop.f32.mrf.mxu0
  %v316 = vadd.f32 %v90, %v315
  %v317 = vand.u32 %v130, 4294901760
  %v318 = vsub.f32 %v130, %v317
  %v319 = vand.u32 %v318, 4294901760
  %v320 = vsub.f32 %v318, %v319
  %v321 = vand.u32 %v320, 4294901760
  %322 = vmatmul.f32.gmra.mxu0 %v321
  %v323 = vpop.f32.mrf.mxu0
  %v324 = vadd.f32 %v90, %v323
  %v325 = vand.u32 %v133, 4294901760
  %v326 = vsub.f32 %v133, %v325
  %v327 = vand.u32 %v326, 4294901760
  %v328 = vsub.f32 %v326, %v327
  %v329 = vand.u32 %v328, 4294901760
  %330 = vmatmul.f32.gmra.mxu0 %v329
  %v331 = vpop.f32.mrf.mxu0
  %v332 = vadd.f32 %v90, %v331
  %v333 = vand.u32 %v136, 4294901760
  %v334 = vsub.f32 %v136, %v333
  %v335 = vand.u32 %v334, 4294901760
  %v336 = vsub.f32 %v334, %v335
  %v337 = vand.u32 %v336, 4294901760
  %338 = vmatmul.f32.gmra.mxu0 %v337
  %v339 = vpop.f32.mrf.mxu0
  %v340 = vadd.f32 %v90, %v339
  %v341 = vand.u32 %v139, 4294901760
  %v342 = vsub.f32 %v139, %v341
  %v343 = vand.u32 %v342, 4294901760
  %v344 = vsub.f32 %v342, %v343
  %v345 = vand.u32 %v344, 4294901760
  %346 = vmatmul.f32.gmra.mxu0 %v345
  %v347 = vpop.f32.mrf.mxu0
  %v348 = vadd.f32 %v90, %v347
  %349 = vdwg.mxu0
  %v350 = vand.u32 %v187, 4294901760
  %v351 = vsub.f32 %v187, %v350
  %v352 = vand.u32 %v351, 4294901760
  %v353 = vsub.f32 %v351, %v352
  %v354 = vand.u32 %v353, 4294901760
  %355 = vmatpush.xpose.msra.mxu0 %v354
  %v356 = vand.u32 %v184, 4294901760
  %v357 = vsub.f32 %v184, %v356
  %v358 = vand.u32 %v357, 4294901760
  %v359 = vsub.f32 %v357, %v358
  %v360 = vand.u32 %v359, 4294901760
  %361 = vmatpush.xpose.msra.mxu0 %v360
  %v362 = vand.u32 %v181, 4294901760
  %v363 = vsub.f32 %v181, %v362
  %v364 = vand.u32 %v363, 4294901760
  %v365 = vsub.f32 %v363, %v364
  %v366 = vand.u32 %v365, 4294901760
  %367 = vmatpush.xpose.msra.mxu0 %v366
  %v368 = vand.u32 %v178, 4294901760
  %v369 = vsub.f32 %v178, %v368
  %v370 = vand.u32 %v369, 4294901760
  %v371 = vsub.f32 %v369, %v370
  %v372 = vand.u32 %v371, 4294901760
  %373 = vmatpush.xpose.msra.mxu0 %v372
  %v374 = vand.u32 %v175, 4294901760
  %v375 = vsub.f32 %v175, %v374
  %v376 = vand.u32 %v375, 4294901760
  %v377 = vsub.f32 %v375, %v376
  %v378 = vand.u32 %v377, 4294901760
  %379 = vmatpush.xpose.msra.mxu0 %v378
  %v380 = vand.u32 %v172, 4294901760
  %v381 = vsub.f32 %v172, %v380
  %v382 = vand.u32 %v381, 4294901760
  %v383 = vsub.f32 %v381, %v382
  %v384 = vand.u32 %v383, 4294901760
  %385 = vmatpush.xpose.msra.mxu0 %v384
  %v386 = vand.u32 %v169, 4294901760
  %v387 = vsub.f32 %v169, %v386
  %v388 = vand.u32 %v387, 4294901760
  %v389 = vsub.f32 %v387, %v388
  %v390 = vand.u32 %v389, 4294901760
  %391 = vmatpush.xpose.msra.mxu0 %v390
  %v392 = vand.u32 %v166, 4294901760
  %v393 = vsub.f32 %v166, %v392
  %v394 = vand.u32 %v393, 4294901760
  %v395 = vsub.f32 %v393, %v394
  %v396 = vand.u32 %v395, 4294901760
  %397 = vmatpush.xpose.msra.mxu0 %v396
  %v398 = vand.u32 %v163, 4294901760
  %v399 = vsub.f32 %v163, %v398
  %v400 = vand.u32 %v399, 4294901760
  %v401 = vsub.f32 %v399, %v400
  %v402 = vand.u32 %v401, 4294901760
  %403 = vmatpush.xpose.msra.mxu0 %v402
  %v404 = vand.u32 %v160, 4294901760
  %v405 = vsub.f32 %v160, %v404
  %v406 = vand.u32 %v405, 4294901760
  %v407 = vsub.f32 %v405, %v406
  %v408 = vand.u32 %v407, 4294901760
  %409 = vmatpush.xpose.msra.mxu0 %v408
  %v410 = vand.u32 %v157, 4294901760
  %v411 = vsub.f32 %v157, %v410
  %v412 = vand.u32 %v411, 4294901760
  %v413 = vsub.f32 %v411, %v412
  %v414 = vand.u32 %v413, 4294901760
  %415 = vmatpush.xpose.msra.mxu0 %v414
  %v416 = vand.u32 %v154, 4294901760
  %v417 = vsub.f32 %v154, %v416
  %v418 = vand.u32 %v417, 4294901760
  %v419 = vsub.f32 %v417, %v418
  %v420 = vand.u32 %v419, 4294901760
  %421 = vmatpush.xpose.msra.mxu0 %v420
  %v422 = vand.u32 %v151, 4294901760
  %v423 = vsub.f32 %v151, %v422
  %v424 = vand.u32 %v423, 4294901760
  %v425 = vsub.f32 %v423, %v424
  %v426 = vand.u32 %v425, 4294901760
  %427 = vmatpush.xpose.msra.mxu0 %v426
  %v428 = vand.u32 %v148, 4294901760
  %v429 = vsub.f32 %v148, %v428
  %v430 = vand.u32 %v429, 4294901760
  %v431 = vsub.f32 %v429, %v430
  %v432 = vand.u32 %v431, 4294901760
  %433 = vmatpush.xpose.msra.mxu0 %v432
  %v434 = vand.u32 %v145, 4294901760
  %v435 = vsub.f32 %v145, %v434
  %v436 = vand.u32 %v435, 4294901760
  %v437 = vsub.f32 %v435, %v436
  %v438 = vand.u32 %v437, 4294901760
  %439 = vmatpush.xpose.msra.mxu0 %v438
  %v440 = vand.u32 %v142, 4294901760
  %v441 = vsub.f32 %v142, %v440
  %v442 = vand.u32 %v441, 4294901760
  %v443 = vsub.f32 %v441, %v442
  %v444 = vand.u32 %v443, 4294901760
  %445 = vmatpush.xpose.msra.mxu0 %v444
  %v446 = vand.u32 %v94, 4294901760
  %447 = vmatmul.f32.gmra.mxu0 %v446
  %v448 = vpop.f32.mrf.mxu0
  %v449 = vadd.f32 %v228, %v448
  %v450 = vand.u32 %v97, 4294901760
  %451 = vmatmul.f32.gmra.mxu0 %v450
  %v452 = vpop.f32.mrf.mxu0
  %v453 = vadd.f32 %v236, %v452
  %v454 = vand.u32 %v100, 4294901760
  %455 = vmatmul.f32.gmra.mxu0 %v454
  %v456 = vpop.f32.mrf.mxu0
  %v457 = vadd.f32 %v244, %v456
  %v458 = vand.u32 %v103, 4294901760
  %459 = vmatmul.f32.gmra.mxu0 %v458
  %v460 = vpop.f32.mrf.mxu0
  %v461 = vadd.f32 %v252, %v460
  %v462 = vand.u32 %v106, 4294901760
  %463 = vmatmul.f32.gmra.mxu0 %v462
  %v464 = vpop.f32.mrf.mxu0
  %v465 = vadd.f32 %v260, %v464
  %v466 = vand.u32 %v109, 4294901760
  %467 = vmatmul.f32.gmra.mxu0 %v466
  %v468 = vpop.f32.mrf.mxu0
  %v469 = vadd.f32 %v268, %v468
  %v470 = vand.u32 %v112, 4294901760
  %471 = vmatmul.f32.gmra.mxu0 %v470
  %v472 = vpop.f32.mrf.mxu0
  %v473 = vadd.f32 %v276, %v472
  %v474 = vand.u32 %v115, 4294901760
  %475 = vmatmul.f32.gmra.mxu0 %v474
  %v476 = vpop.f32.mrf.mxu0
  %v477 = vadd.f32 %v284, %v476
  %v478 = vand.u32 %v118, 4294901760
  %479 = vmatmul.f32.gmra.mxu0 %v478
  %v480 = vpop.f32.mrf.mxu0
  %v481 = vadd.f32 %v292, %v480
  %v482 = vand.u32 %v121, 4294901760
  %483 = vmatmul.f32.gmra.mxu0 %v482
  %v484 = vpop.f32.mrf.mxu0
  %v485 = vadd.f32 %v300, %v484
  %v486 = vand.u32 %v124, 4294901760
  %487 = vmatmul.f32.gmra.mxu0 %v486
  %v488 = vpop.f32.mrf.mxu0
  %v489 = vadd.f32 %v308, %v488
  %v490 = vand.u32 %v127, 4294901760
  %491 = vmatmul.f32.gmra.mxu0 %v490
  %v492 = vpop.f32.mrf.mxu0
  %v493 = vadd.f32 %v316, %v492
  %v494 = vand.u32 %v130, 4294901760
  %495 = vmatmul.f32.gmra.mxu0 %v494
  %v496 = vpop.f32.mrf.mxu0
  %v497 = vadd.f32 %v324, %v496
  %v498 = vand.u32 %v133, 4294901760
  %499 = vmatmul.f32.gmra.mxu0 %v498
  %v500 = vpop.f32.mrf.mxu0
  %v501 = vadd.f32 %v332, %v500
  %v502 = vand.u32 %v136, 4294901760
  %503 = vmatmul.f32.gmra.mxu0 %v502
  %v504 = vpop.f32.mrf.mxu0
  %v505 = vadd.f32 %v340, %v504
  %v506 = vand.u32 %v139, 4294901760
  %507 = vmatmul.f32.gmra.mxu0 %v506
  %v508 = vpop.f32.mrf.mxu0
  %v509 = vadd.f32 %v348, %v508
  %510 = vdwg.mxu0
  %v511 = vand.u32 %v187, 4294901760
  %v512 = vsub.f32 %v187, %v511
  %513 = vmatpush.xpose.msra.mxu0 %v512
  %v514 = vand.u32 %v184, 4294901760
  %v515 = vsub.f32 %v184, %v514
  %516 = vmatpush.xpose.msra.mxu0 %v515
  %v517 = vand.u32 %v181, 4294901760
  %v518 = vsub.f32 %v181, %v517
  %519 = vmatpush.xpose.msra.mxu0 %v518
  %v520 = vand.u32 %v178, 4294901760
  %v521 = vsub.f32 %v178, %v520
  %522 = vmatpush.xpose.msra.mxu0 %v521
  %v523 = vand.u32 %v175, 4294901760
  %v524 = vsub.f32 %v175, %v523
  %525 = vmatpush.xpose.msra.mxu0 %v524
  %v526 = vand.u32 %v172, 4294901760
  %v527 = vsub.f32 %v172, %v526
  %528 = vmatpush.xpose.msra.mxu0 %v527
  %v529 = vand.u32 %v169, 4294901760
  %v530 = vsub.f32 %v169, %v529
  %531 = vmatpush.xpose.msra.mxu0 %v530
  %v532 = vand.u32 %v166, 4294901760
  %v533 = vsub.f32 %v166, %v532
  %534 = vmatpush.xpose.msra.mxu0 %v533
  %v535 = vand.u32 %v163, 4294901760
  %v536 = vsub.f32 %v163, %v535
  %537 = vmatpush.xpose.msra.mxu0 %v536
  %v538 = vand.u32 %v160, 4294901760
  %v539 = vsub.f32 %v160, %v538
  %540 = vmatpush.xpose.msra.mxu0 %v539
  %v541 = vand.u32 %v157, 4294901760
  %v542 = vsub.f32 %v157, %v541
  %543 = vmatpush.xpose.msra.mxu0 %v542
  %v544 = vand.u32 %v154, 4294901760
  %v545 = vsub.f32 %v154, %v544
  %546 = vmatpush.xpose.msra.mxu0 %v545
  %v547 = vand.u32 %v151, 4294901760
  %v548 = vsub.f32 %v151, %v547
  %549 = vmatpush.xpose.msra.mxu0 %v548
  %v550 = vand.u32 %v148, 4294901760
  %v551 = vsub.f32 %v148, %v550
  %552 = vmatpush.xpose.msra.mxu0 %v551
  %v553 = vand.u32 %v145, 4294901760
  %v554 = vsub.f32 %v145, %v553
  %555 = vmatpush.xpose.msra.mxu0 %v554
  %v556 = vand.u32 %v142, 4294901760
  %v557 = vsub.f32 %v142, %v556
  %558 = vmatpush.xpose.msra.mxu0 %v557
  %v559 = vand.u32 %v94, 4294901760
  %v560 = vsub.f32 %v94, %v559
  %561 = vmatmul.f32.gmra.mxu0 %v560
  %v562 = vpop.f32.mrf.mxu0
  %v563 = vadd.f32 %v449, %v562
  %v564 = vand.u32 %v97, 4294901760
  %v565 = vsub.f32 %v97, %v564
  %566 = vmatmul.f32.gmra.mxu0 %v565
  %v567 = vpop.f32.mrf.mxu0
  %v568 = vadd.f32 %v453, %v567
  %v569 = vand.u32 %v100, 4294901760
  %v570 = vsub.f32 %v100, %v569
  %571 = vmatmul.f32.gmra.mxu0 %v570
  %v572 = vpop.f32.mrf.mxu0
  %v573 = vadd.f32 %v457, %v572
  %v574 = vand.u32 %v103, 4294901760
  %v575 = vsub.f32 %v103, %v574
  %576 = vmatmul.f32.gmra.mxu0 %v575
  %v577 = vpop.f32.mrf.mxu0
  %v578 = vadd.f32 %v461, %v577
  %v579 = vand.u32 %v106, 4294901760
  %v580 = vsub.f32 %v106, %v579
  %581 = vmatmul.f32.gmra.mxu0 %v580
  %v582 = vpop.f32.mrf.mxu0
  %v583 = vadd.f32 %v465, %v582
  %v584 = vand.u32 %v109, 4294901760
  %v585 = vsub.f32 %v109, %v584
  %586 = vmatmul.f32.gmra.mxu0 %v585
  %v587 = vpop.f32.mrf.mxu0
  %v588 = vadd.f32 %v469, %v587
  %v589 = vand.u32 %v112, 4294901760
  %v590 = vsub.f32 %v112, %v589
  %591 = vmatmul.f32.gmra.mxu0 %v590
  %v592 = vpop.f32.mrf.mxu0
  %v593 = vadd.f32 %v473, %v592
  %v594 = vand.u32 %v115, 4294901760
  %v595 = vsub.f32 %v115, %v594
  %596 = vmatmul.f32.gmra.mxu0 %v595
  %v597 = vpop.f32.mrf.mxu0
  %v598 = vadd.f32 %v477, %v597
  %v599 = vand.u32 %v118, 4294901760
  %v600 = vsub.f32 %v118, %v599
  %601 = vmatmul.f32.gmra.mxu0 %v600
  %v602 = vpop.f32.mrf.mxu0
  %v603 = vadd.f32 %v481, %v602
  %v604 = vand.u32 %v121, 4294901760
  %v605 = vsub.f32 %v121, %v604
  %606 = vmatmul.f32.gmra.mxu0 %v605
  %v607 = vpop.f32.mrf.mxu0
  %v608 = vadd.f32 %v485, %v607
  %v609 = vand.u32 %v124, 4294901760
  %v610 = vsub.f32 %v124, %v609
  %611 = vmatmul.f32.gmra.mxu0 %v610
  %v612 = vpop.f32.mrf.mxu0
  %v613 = vadd.f32 %v489, %v612
  %v614 = vand.u32 %v127, 4294901760
  %v615 = vsub.f32 %v127, %v614
  %616 = vmatmul.f32.gmra.mxu0 %v615
  %v617 = vpop.f32.mrf.mxu0
  %v618 = vadd.f32 %v493, %v617
  %v619 = vand.u32 %v130, 4294901760
  %v620 = vsub.f32 %v130, %v619
  %621 = vmatmul.f32.gmra.mxu0 %v620
  %v622 = vpop.f32.mrf.mxu0
  %v623 = vadd.f32 %v497, %v622
  %v624 = vand.u32 %v133, 4294901760
  %v625 = vsub.f32 %v133, %v624
  %626 = vmatmul.f32.gmra.mxu0 %v625
  %v627 = vpop.f32.mrf.mxu0
  %v628 = vadd.f32 %v501, %v627
  %v629 = vand.u32 %v136, 4294901760
  %v630 = vsub.f32 %v136, %v629
  %631 = vmatmul.f32.gmra.mxu0 %v630
  %v632 = vpop.f32.mrf.mxu0
  %v633 = vadd.f32 %v505, %v632
  %v634 = vand.u32 %v139, 4294901760
  %v635 = vsub.f32 %v139, %v634
  %636 = vmatmul.f32.gmra.mxu0 %v635
  %v637 = vpop.f32.mrf.mxu0
  %v638 = vadd.f32 %v509, %v637
  %639 = vdwg.mxu0
  %v640 = vand.u32 %v187, 4294901760
  %641 = vmatpush.xpose.msra.mxu0 %v640
  %v642 = vand.u32 %v184, 4294901760
  %643 = vmatpush.xpose.msra.mxu0 %v642
  %v644 = vand.u32 %v181, 4294901760
  %645 = vmatpush.xpose.msra.mxu0 %v644
  %v646 = vand.u32 %v178, 4294901760
  %647 = vmatpush.xpose.msra.mxu0 %v646
  %v648 = vand.u32 %v175, 4294901760
  %649 = vmatpush.xpose.msra.mxu0 %v648
  %v650 = vand.u32 %v172, 4294901760
  %651 = vmatpush.xpose.msra.mxu0 %v650
  %v652 = vand.u32 %v169, 4294901760
  %653 = vmatpush.xpose.msra.mxu0 %v652
  %v654 = vand.u32 %v166, 4294901760
  %655 = vmatpush.xpose.msra.mxu0 %v654
  %v656 = vand.u32 %v163, 4294901760
  %657 = vmatpush.xpose.msra.mxu0 %v656
  %v658 = vand.u32 %v160, 4294901760
  %659 = vmatpush.xpose.msra.mxu0 %v658
  %v660 = vand.u32 %v157, 4294901760
  %661 = vmatpush.xpose.msra.mxu0 %v660
  %v662 = vand.u32 %v154, 4294901760
  %663 = vmatpush.xpose.msra.mxu0 %v662
  %v664 = vand.u32 %v151, 4294901760
  %665 = vmatpush.xpose.msra.mxu0 %v664
  %v666 = vand.u32 %v148, 4294901760
  %667 = vmatpush.xpose.msra.mxu0 %v666
  %v668 = vand.u32 %v145, 4294901760
  %669 = vmatpush.xpose.msra.mxu0 %v668
  %v670 = vand.u32 %v142, 4294901760
  %671 = vmatpush.xpose.msra.mxu0 %v670
  %v672 = vand.u32 %v94, 4294901760
  %v673 = vsub.f32 %v94, %v672
  %v674 = vand.u32 %v673, 4294901760
  %675 = vmatmul.f32.gmra.mxu0 %v674
  %v676 = vpop.f32.mrf.mxu0
  %v677 = vadd.f32 %v563, %v676
  %v678 = vand.u32 %v97, 4294901760
  %v679 = vsub.f32 %v97, %v678
  %v680 = vand.u32 %v679, 4294901760
  %681 = vmatmul.f32.gmra.mxu0 %v680
  %v682 = vpop.f32.mrf.mxu0
  %v683 = vadd.f32 %v568, %v682
  %v684 = vand.u32 %v100, 4294901760
  %v685 = vsub.f32 %v100, %v684
  %v686 = vand.u32 %v685, 4294901760
  %687 = vmatmul.f32.gmra.mxu0 %v686
  %v688 = vpop.f32.mrf.mxu0
  %v689 = vadd.f32 %v573, %v688
  %v690 = vand.u32 %v103, 4294901760
  %v691 = vsub.f32 %v103, %v690
  %v692 = vand.u32 %v691, 4294901760
  %693 = vmatmul.f32.gmra.mxu0 %v692
  %v694 = vpop.f32.mrf.mxu0
  %v695 = vadd.f32 %v578, %v694
  %v696 = vand.u32 %v106, 4294901760
  %v697 = vsub.f32 %v106, %v696
  %v698 = vand.u32 %v697, 4294901760
  %699 = vmatmul.f32.gmra.mxu0 %v698
  %v700 = vpop.f32.mrf.mxu0
  %v701 = vadd.f32 %v583, %v700
  %v702 = vand.u32 %v109, 4294901760
  %v703 = vsub.f32 %v109, %v702
  %v704 = vand.u32 %v703, 4294901760
  %705 = vmatmul.f32.gmra.mxu0 %v704
  %v706 = vpop.f32.mrf.mxu0
  %v707 = vadd.f32 %v588, %v706
  %v708 = vand.u32 %v112, 4294901760
  %v709 = vsub.f32 %v112, %v708
  %v710 = vand.u32 %v709, 4294901760
  %711 = vmatmul.f32.gmra.mxu0 %v710
  %v712 = vpop.f32.mrf.mxu0
  %v713 = vadd.f32 %v593, %v712
  %v714 = vand.u32 %v115, 4294901760
  %v715 = vsub.f32 %v115, %v714
  %v716 = vand.u32 %v715, 4294901760
  %717 = vmatmul.f32.gmra.mxu0 %v716
  %v718 = vpop.f32.mrf.mxu0
  %v719 = vadd.f32 %v598, %v718
  %v720 = vand.u32 %v118, 4294901760
  %v721 = vsub.f32 %v118, %v720
  %v722 = vand.u32 %v721, 4294901760
  %723 = vmatmul.f32.gmra.mxu0 %v722
  %v724 = vpop.f32.mrf.mxu0
  %v725 = vadd.f32 %v603, %v724
  %v726 = vand.u32 %v121, 4294901760
  %v727 = vsub.f32 %v121, %v726
  %v728 = vand.u32 %v727, 4294901760
  %729 = vmatmul.f32.gmra.mxu0 %v728
  %v730 = vpop.f32.mrf.mxu0
  %v731 = vadd.f32 %v608, %v730
  %v732 = vand.u32 %v124, 4294901760
  %v733 = vsub.f32 %v124, %v732
  %v734 = vand.u32 %v733, 4294901760
  %735 = vmatmul.f32.gmra.mxu0 %v734
  %v736 = vpop.f32.mrf.mxu0
  %v737 = vadd.f32 %v613, %v736
  %v738 = vand.u32 %v127, 4294901760
  %v739 = vsub.f32 %v127, %v738
  %v740 = vand.u32 %v739, 4294901760
  %741 = vmatmul.f32.gmra.mxu0 %v740
  %v742 = vpop.f32.mrf.mxu0
  %v743 = vadd.f32 %v618, %v742
  %v744 = vand.u32 %v130, 4294901760
  %v745 = vsub.f32 %v130, %v744
  %v746 = vand.u32 %v745, 4294901760
  %747 = vmatmul.f32.gmra.mxu0 %v746
  %v748 = vpop.f32.mrf.mxu0
  %v749 = vadd.f32 %v623, %v748
  %v750 = vand.u32 %v133, 4294901760
  %v751 = vsub.f32 %v133, %v750
  %v752 = vand.u32 %v751, 4294901760
  %753 = vmatmul.f32.gmra.mxu0 %v752
  %v754 = vpop.f32.mrf.mxu0
  %v755 = vadd.f32 %v628, %v754
  %v756 = vand.u32 %v136, 4294901760
  %v757 = vsub.f32 %v136, %v756
  %v758 = vand.u32 %v757, 4294901760
  %759 = vmatmul.f32.gmra.mxu0 %v758
  %v760 = vpop.f32.mrf.mxu0
  %v761 = vadd.f32 %v633, %v760
  %v762 = vand.u32 %v139, 4294901760
  %v763 = vsub.f32 %v139, %v762
  %v764 = vand.u32 %v763, 4294901760
  %765 = vmatmul.f32.gmra.mxu0 %v764
  %v766 = vpop.f32.mrf.mxu0
  %v767 = vadd.f32 %v638, %v766
  %768 = vdwg.mxu0
  %v769 = vand.u32 %v187, 4294901760
  %v770 = vsub.f32 %v187, %v769
  %v771 = vand.u32 %v770, 4294901760
  %772 = vmatpush.xpose.msra.mxu0 %v771
  %v773 = vand.u32 %v184, 4294901760
  %v774 = vsub.f32 %v184, %v773
  %v775 = vand.u32 %v774, 4294901760
  %776 = vmatpush.xpose.msra.mxu0 %v775
  %v777 = vand.u32 %v181, 4294901760
  %v778 = vsub.f32 %v181, %v777
  %v779 = vand.u32 %v778, 4294901760
  %780 = vmatpush.xpose.msra.mxu0 %v779
  %v781 = vand.u32 %v178, 4294901760
  %v782 = vsub.f32 %v178, %v781
  %v783 = vand.u32 %v782, 4294901760
  %784 = vmatpush.xpose.msra.mxu0 %v783
  %v785 = vand.u32 %v175, 4294901760
  %v786 = vsub.f32 %v175, %v785
  %v787 = vand.u32 %v786, 4294901760
  %788 = vmatpush.xpose.msra.mxu0 %v787
  %v789 = vand.u32 %v172, 4294901760
  %v790 = vsub.f32 %v172, %v789
  %v791 = vand.u32 %v790, 4294901760
  %792 = vmatpush.xpose.msra.mxu0 %v791
  %v793 = vand.u32 %v169, 4294901760
  %v794 = vsub.f32 %v169, %v793
  %v795 = vand.u32 %v794, 4294901760
  %796 = vmatpush.xpose.msra.mxu0 %v795
  %v797 = vand.u32 %v166, 4294901760
  %v798 = vsub.f32 %v166, %v797
  %v799 = vand.u32 %v798, 4294901760
  %800 = vmatpush.xpose.msra.mxu0 %v799
  %v801 = vand.u32 %v163, 4294901760
  %v802 = vsub.f32 %v163, %v801
  %v803 = vand.u32 %v802, 4294901760
  %804 = vmatpush.xpose.msra.mxu0 %v803
  %v805 = vand.u32 %v160, 4294901760
  %v806 = vsub.f32 %v160, %v805
  %v807 = vand.u32 %v806, 4294901760
  %808 = vmatpush.xpose.msra.mxu0 %v807
  %v809 = vand.u32 %v157, 4294901760
  %v810 = vsub.f32 %v157, %v809
  %v811 = vand.u32 %v810, 4294901760
  %812 = vmatpush.xpose.msra.mxu0 %v811
  %v813 = vand.u32 %v154, 4294901760
  %v814 = vsub.f32 %v154, %v813
  %v815 = vand.u32 %v814, 4294901760
  %816 = vmatpush.xpose.msra.mxu0 %v815
  %v817 = vand.u32 %v151, 4294901760
  %v818 = vsub.f32 %v151, %v817
  %v819 = vand.u32 %v818, 4294901760
  %820 = vmatpush.xpose.msra.mxu0 %v819
  %v821 = vand.u32 %v148, 4294901760
  %v822 = vsub.f32 %v148, %v821
  %v823 = vand.u32 %v822, 4294901760
  %824 = vmatpush.xpose.msra.mxu0 %v823
  %v825 = vand.u32 %v145, 4294901760
  %v826 = vsub.f32 %v145, %v825
  %v827 = vand.u32 %v826, 4294901760
  %828 = vmatpush.xpose.msra.mxu0 %v827
  %v829 = vand.u32 %v142, 4294901760
  %v830 = vsub.f32 %v142, %v829
  %v831 = vand.u32 %v830, 4294901760
  %832 = vmatpush.xpose.msra.mxu0 %v831
  %v833 = vand.u32 %v94, 4294901760
  %834 = vmatmul.f32.gmra.mxu0 %v833
  %v835 = vpop.f32.mrf.mxu0
  %v836 = vadd.f32 %v677, %v835
  %v837 = vand.u32 %v97, 4294901760
  %838 = vmatmul.f32.gmra.mxu0 %v837
  %v839 = vpop.f32.mrf.mxu0
  %v840 = vadd.f32 %v683, %v839
  %v841 = vand.u32 %v100, 4294901760
  %842 = vmatmul.f32.gmra.mxu0 %v841
  %v843 = vpop.f32.mrf.mxu0
  %v844 = vadd.f32 %v689, %v843
  %v845 = vand.u32 %v103, 4294901760
  %846 = vmatmul.f32.gmra.mxu0 %v845
  %v847 = vpop.f32.mrf.mxu0
  %v848 = vadd.f32 %v695, %v847
  %v849 = vand.u32 %v106, 4294901760
  %850 = vmatmul.f32.gmra.mxu0 %v849
  %v851 = vpop.f32.mrf.mxu0
  %v852 = vadd.f32 %v701, %v851
  %v853 = vand.u32 %v109, 4294901760
  %854 = vmatmul.f32.gmra.mxu0 %v853
  %v855 = vpop.f32.mrf.mxu0
  %v856 = vadd.f32 %v707, %v855
  %v857 = vand.u32 %v112, 4294901760
  %858 = vmatmul.f32.gmra.mxu0 %v857
  %v859 = vpop.f32.mrf.mxu0
  %v860 = vadd.f32 %v713, %v859
  %v861 = vand.u32 %v115, 4294901760
  %862 = vmatmul.f32.gmra.mxu0 %v861
  %v863 = vpop.f32.mrf.mxu0
  %v864 = vadd.f32 %v719, %v863
  %v865 = vand.u32 %v118, 4294901760
  %866 = vmatmul.f32.gmra.mxu0 %v865
  %v867 = vpop.f32.mrf.mxu0
  %v868 = vadd.f32 %v725, %v867
  %v869 = vand.u32 %v121, 4294901760
  %870 = vmatmul.f32.gmra.mxu0 %v869
  %v871 = vpop.f32.mrf.mxu0
  %v872 = vadd.f32 %v731, %v871
  %v873 = vand.u32 %v124, 4294901760
  %874 = vmatmul.f32.gmra.mxu0 %v873
  %v875 = vpop.f32.mrf.mxu0
  %v876 = vadd.f32 %v737, %v875
  %v877 = vand.u32 %v127, 4294901760
  %878 = vmatmul.f32.gmra.mxu0 %v877
  %v879 = vpop.f32.mrf.mxu0
  %v880 = vadd.f32 %v743, %v879
  %v881 = vand.u32 %v130, 4294901760
  %882 = vmatmul.f32.gmra.mxu0 %v881
  %v883 = vpop.f32.mrf.mxu0
  %v884 = vadd.f32 %v749, %v883
  %v885 = vand.u32 %v133, 4294901760
  %886 = vmatmul.f32.gmra.mxu0 %v885
  %v887 = vpop.f32.mrf.mxu0
  %v888 = vadd.f32 %v755, %v887
  %v889 = vand.u32 %v136, 4294901760
  %890 = vmatmul.f32.gmra.mxu0 %v889
  %v891 = vpop.f32.mrf.mxu0
  %v892 = vadd.f32 %v761, %v891
  %v893 = vand.u32 %v139, 4294901760
  %894 = vmatmul.f32.gmra.mxu0 %v893
  %v895 = vpop.f32.mrf.mxu0
  %v896 = vadd.f32 %v767, %v895
  %897 = vdwg.mxu0
  %v898 = vand.u32 %v187, 4294901760
  %899 = vmatpush.xpose.msra.mxu0 %v898
  %v900 = vand.u32 %v184, 4294901760
  %901 = vmatpush.xpose.msra.mxu0 %v900
  %v902 = vand.u32 %v181, 4294901760
  %903 = vmatpush.xpose.msra.mxu0 %v902
  %v904 = vand.u32 %v178, 4294901760
  %905 = vmatpush.xpose.msra.mxu0 %v904
  %v906 = vand.u32 %v175, 4294901760
  %907 = vmatpush.xpose.msra.mxu0 %v906
  %v908 = vand.u32 %v172, 4294901760
  %909 = vmatpush.xpose.msra.mxu0 %v908
  %v910 = vand.u32 %v169, 4294901760
  %911 = vmatpush.xpose.msra.mxu0 %v910
  %v912 = vand.u32 %v166, 4294901760
  %913 = vmatpush.xpose.msra.mxu0 %v912
  %v914 = vand.u32 %v163, 4294901760
  %915 = vmatpush.xpose.msra.mxu0 %v914
  %v916 = vand.u32 %v160, 4294901760
  %917 = vmatpush.xpose.msra.mxu0 %v916
  %v918 = vand.u32 %v157, 4294901760
  %919 = vmatpush.xpose.msra.mxu0 %v918
  %v920 = vand.u32 %v154, 4294901760
  %921 = vmatpush.xpose.msra.mxu0 %v920
  %v922 = vand.u32 %v151, 4294901760
  %923 = vmatpush.xpose.msra.mxu0 %v922
  %v924 = vand.u32 %v148, 4294901760
  %925 = vmatpush.xpose.msra.mxu0 %v924
  %v926 = vand.u32 %v145, 4294901760
  %927 = vmatpush.xpose.msra.mxu0 %v926
  %v928 = vand.u32 %v142, 4294901760
  %929 = vmatpush.xpose.msra.mxu0 %v928
  %v930 = vand.u32 %v94, 4294901760
  %931 = vmatmul.f32.gmra.mxu0 %v930
  %v932 = vpop.f32.mrf.mxu0
  %v933 = vadd.f32 %v836, %v932
  %v934 = vand.u32 %v97, 4294901760
  %935 = vmatmul.f32.gmra.mxu0 %v934
  %v936 = vpop.f32.mrf.mxu0
  %v937 = vadd.f32 %v840, %v936
  %v938 = vand.u32 %v100, 4294901760
  %939 = vmatmul.f32.gmra.mxu0 %v938
  %v940 = vpop.f32.mrf.mxu0
  %v941 = vadd.f32 %v844, %v940
  %v942 = vand.u32 %v103, 4294901760
  %943 = vmatmul.f32.gmra.mxu0 %v942
  %v944 = vpop.f32.mrf.mxu0
  %v945 = vadd.f32 %v848, %v944
  %v946 = vand.u32 %v106, 4294901760
  %947 = vmatmul.f32.gmra.mxu0 %v946
  %v948 = vpop.f32.mrf.mxu0
  %v949 = vadd.f32 %v852, %v948
  %v950 = vand.u32 %v109, 4294901760
  %951 = vmatmul.f32.gmra.mxu0 %v950
  %v952 = vpop.f32.mrf.mxu0
  %v953 = vadd.f32 %v856, %v952
  %v954 = vand.u32 %v112, 4294901760
  %955 = vmatmul.f32.gmra.mxu0 %v954
  %v956 = vpop.f32.mrf.mxu0
  %v957 = vadd.f32 %v860, %v956
  %v958 = vand.u32 %v115, 4294901760
  %959 = vmatmul.f32.gmra.mxu0 %v958
  %v960 = vpop.f32.mrf.mxu0
  %v961 = vadd.f32 %v864, %v960
  %v962 = vand.u32 %v118, 4294901760
  %963 = vmatmul.f32.gmra.mxu0 %v962
  %v964 = vpop.f32.mrf.mxu0
  %v965 = vadd.f32 %v868, %v964
  %v966 = vand.u32 %v121, 4294901760
  %967 = vmatmul.f32.gmra.mxu0 %v966
  %v968 = vpop.f32.mrf.mxu0
  %v969 = vadd.f32 %v872, %v968
  %v970 = vand.u32 %v124, 4294901760
  %971 = vmatmul.f32.gmra.mxu0 %v970
  %v972 = vpop.f32.mrf.mxu0
  %v973 = vadd.f32 %v876, %v972
  %v974 = vand.u32 %v127, 4294901760
  %975 = vmatmul.f32.gmra.mxu0 %v974
  %v976 = vpop.f32.mrf.mxu0
  %v977 = vadd.f32 %v880, %v976
  %v978 = vand.u32 %v130, 4294901760
  %979 = vmatmul.f32.gmra.mxu0 %v978
  %v980 = vpop.f32.mrf.mxu0
  %v981 = vadd.f32 %v884, %v980
  %v982 = vand.u32 %v133, 4294901760
  %983 = vmatmul.f32.gmra.mxu0 %v982
  %v984 = vpop.f32.mrf.mxu0
  %v985 = vadd.f32 %v888, %v984
  %v986 = vand.u32 %v136, 4294901760
  %987 = vmatmul.f32.gmra.mxu0 %v986
  %v988 = vpop.f32.mrf.mxu0
  %v989 = vadd.f32 %v892, %v988
  %v990 = vand.u32 %v139, 4294901760
  %991 = vmatmul.f32.gmra.mxu0 %v990
  %v992 = vpop.f32.mrf.mxu0
  %v993 = vadd.f32 %v896, %v992
  %994 = vdwg.mxu0
  %v995 = vmax.f32 %v933, 0.0
  %v996 = vmax.f32 %v937, 0.0
  %v997 = vmax.f32 %v941, 0.0
  %v998 = vmax.f32 %v945, 0.0
  %v999 = vmax.f32 %v949, 0.0
  %v1000 = vmax.f32 %v953, 0.0
  %v1001 = vmax.f32 %v957, 0.0
  %v1002 = vmax.f32 %v961, 0.0
  %v1003 = vmax.f32 %v965, 0.0
  %v1004 = vmax.f32 %v969, 0.0
  %v1005 = vmax.f32 %v973, 0.0
  %v1006 = vmax.f32 %v977, 0.0
  %v1007 = vmax.f32 %v981, 0.0
  %v1008 = vmax.f32 %v985, 0.0
  %v1009 = vmax.f32 %v989, 0.0
  %v1010 = vmax.f32 %v993, 0.0
  %v1011 = vld [vmem:[%s3] sm:$0xff]
  %v1012 = vld [vmem:[%s3 + $0x8] sm:$0xff]
  %v1013 = vld [vmem:[%s3 + $0x10] sm:$0xff]
  %v1014 = vld [vmem:[%s3 + $0x18] sm:$0xff]
  %v1015 = vld [vmem:[%s3 + $0x20] sm:$0xff]
  %v1016 = vld [vmem:[%s3 + $0x28] sm:$0xff]
  %v1017 = vld [vmem:[%s3 + $0x30] sm:$0xff]
  %v1018 = vld [vmem:[%s3 + $0x38] sm:$0xff]
  %v1019 = vld [vmem:[%s4] sm:$0x1]
  %v1021 = vperm.slane %v1019, 0
  %1023 = vmatpush.xpose.msra.mxu0 0.0
  %1024 = vmatpush.xpose.msra.mxu0 0.0
  %1025 = vmatpush.xpose.msra.mxu0 0.0
  %1026 = vmatpush.xpose.msra.mxu0 0.0
  %1027 = vmatpush.xpose.msra.mxu0 0.0
  %1028 = vmatpush.xpose.msra.mxu0 0.0
  %1029 = vmatpush.xpose.msra.mxu0 0.0
  %1030 = vmatpush.xpose.msra.mxu0 0.0
  %v1031 = vand.u32 %v1018, 4294901760
  %1032 = vmatpush.xpose.msra.mxu0 %v1031
  %v1033 = vand.u32 %v1017, 4294901760
  %1034 = vmatpush.xpose.msra.mxu0 %v1033
  %v1035 = vand.u32 %v1016, 4294901760
  %1036 = vmatpush.xpose.msra.mxu0 %v1035
  %v1037 = vand.u32 %v1015, 4294901760
  %1038 = vmatpush.xpose.msra.mxu0 %v1037
  %v1039 = vand.u32 %v1014, 4294901760
  %1040 = vmatpush.xpose.msra.mxu0 %v1039
  %v1041 = vand.u32 %v1013, 4294901760
  %1042 = vmatpush.xpose.msra.mxu0 %v1041
  %v1043 = vand.u32 %v1012, 4294901760
  %1044 = vmatpush.xpose.msra.mxu0 %v1043
  %v1045 = vand.u32 %v1011, 4294901760
  %1046 = vmatpush.xpose.msra.mxu0 %v1045
  %v1047 = vand.u32 %v995, 4294901760
  %v1048 = vsub.f32 %v995, %v1047
  %v1049 = vand.u32 %v1048, 4294901760
  %v1050 = vsub.f32 %v1048, %v1049
  %v1051 = vand.u32 %v1050, 4294901760
  %1052 = vmatmul.f32.gmra.mxu0 %v1051
  %v1053 = vpop.f32.mrf.mxu0
  %v1054 = vadd.f32 %v1021, %v1053
  %v1055 = vand.u32 %v996, 4294901760
  %v1056 = vsub.f32 %v996, %v1055
  %v1057 = vand.u32 %v1056, 4294901760
  %v1058 = vsub.f32 %v1056, %v1057
  %v1059 = vand.u32 %v1058, 4294901760
  %1060 = vmatmul.f32.gmra.mxu0 %v1059
  %v1061 = vpop.f32.mrf.mxu0
  %v1062 = vadd.f32 %v1021, %v1061
  %v1063 = vand.u32 %v997, 4294901760
  %v1064 = vsub.f32 %v997, %v1063
  %v1065 = vand.u32 %v1064, 4294901760
  %v1066 = vsub.f32 %v1064, %v1065
  %v1067 = vand.u32 %v1066, 4294901760
  %1068 = vmatmul.f32.gmra.mxu0 %v1067
  %v1069 = vpop.f32.mrf.mxu0
  %v1070 = vadd.f32 %v1021, %v1069
  %v1071 = vand.u32 %v998, 4294901760
  %v1072 = vsub.f32 %v998, %v1071
  %v1073 = vand.u32 %v1072, 4294901760
  %v1074 = vsub.f32 %v1072, %v1073
  %v1075 = vand.u32 %v1074, 4294901760
  %1076 = vmatmul.f32.gmra.mxu0 %v1075
  %v1077 = vpop.f32.mrf.mxu0
  %v1078 = vadd.f32 %v1021, %v1077
  %v1079 = vand.u32 %v999, 4294901760
  %v1080 = vsub.f32 %v999, %v1079
  %v1081 = vand.u32 %v1080, 4294901760
  %v1082 = vsub.f32 %v1080, %v1081
  %v1083 = vand.u32 %v1082, 4294901760
  %1084 = vmatmul.f32.gmra.mxu0 %v1083
  %v1085 = vpop.f32.mrf.mxu0
  %v1086 = vadd.f32 %v1021, %v1085
  %v1087 = vand.u32 %v1000, 4294901760
  %v1088 = vsub.f32 %v1000, %v1087
  %v1089 = vand.u32 %v1088, 4294901760
  %v1090 = vsub.f32 %v1088, %v1089
  %v1091 = vand.u32 %v1090, 4294901760
  %1092 = vmatmul.f32.gmra.mxu0 %v1091
  %v1093 = vpop.f32.mrf.mxu0
  %v1094 = vadd.f32 %v1021, %v1093
  %v1095 = vand.u32 %v1001, 4294901760
  %v1096 = vsub.f32 %v1001, %v1095
  %v1097 = vand.u32 %v1096, 4294901760
  %v1098 = vsub.f32 %v1096, %v1097
  %v1099 = vand.u32 %v1098, 4294901760
  %1100 = vmatmul.f32.gmra.mxu0 %v1099
  %v1101 = vpop.f32.mrf.mxu0
  %v1102 = vadd.f32 %v1021, %v1101
  %v1103 = vand.u32 %v1002, 4294901760
  %v1104 = vsub.f32 %v1002, %v1103
  %v1105 = vand.u32 %v1104, 4294901760
  %v1106 = vsub.f32 %v1104, %v1105
  %v1107 = vand.u32 %v1106, 4294901760
  %1108 = vmatmul.f32.gmra.mxu0 %v1107
  %v1109 = vpop.f32.mrf.mxu0
  %v1110 = vadd.f32 %v1021, %v1109
  %v1111 = vand.u32 %v1003, 4294901760
  %v1112 = vsub.f32 %v1003, %v1111
  %v1113 = vand.u32 %v1112, 4294901760
  %v1114 = vsub.f32 %v1112, %v1113
  %v1115 = vand.u32 %v1114, 4294901760
  %1116 = vmatmul.f32.gmra.mxu0 %v1115
  %v1117 = vpop.f32.mrf.mxu0
  %v1118 = vadd.f32 %v1021, %v1117
  %v1119 = vand.u32 %v1004, 4294901760
  %v1120 = vsub.f32 %v1004, %v1119
  %v1121 = vand.u32 %v1120, 4294901760
  %v1122 = vsub.f32 %v1120, %v1121
  %v1123 = vand.u32 %v1122, 4294901760
  %1124 = vmatmul.f32.gmra.mxu0 %v1123
  %v1125 = vpop.f32.mrf.mxu0
  %v1126 = vadd.f32 %v1021, %v1125
  %v1127 = vand.u32 %v1005, 4294901760
  %v1128 = vsub.f32 %v1005, %v1127
  %v1129 = vand.u32 %v1128, 4294901760
  %v1130 = vsub.f32 %v1128, %v1129
  %v1131 = vand.u32 %v1130, 4294901760
  %1132 = vmatmul.f32.gmra.mxu0 %v1131
  %v1133 = vpop.f32.mrf.mxu0
  %v1134 = vadd.f32 %v1021, %v1133
  %v1135 = vand.u32 %v1006, 4294901760
  %v1136 = vsub.f32 %v1006, %v1135
  %v1137 = vand.u32 %v1136, 4294901760
  %v1138 = vsub.f32 %v1136, %v1137
  %v1139 = vand.u32 %v1138, 4294901760
  %1140 = vmatmul.f32.gmra.mxu0 %v1139
  %v1141 = vpop.f32.mrf.mxu0
  %v1142 = vadd.f32 %v1021, %v1141
  %v1143 = vand.u32 %v1007, 4294901760
  %v1144 = vsub.f32 %v1007, %v1143
  %v1145 = vand.u32 %v1144, 4294901760
  %v1146 = vsub.f32 %v1144, %v1145
  %v1147 = vand.u32 %v1146, 4294901760
  %1148 = vmatmul.f32.gmra.mxu0 %v1147
  %v1149 = vpop.f32.mrf.mxu0
  %v1150 = vadd.f32 %v1021, %v1149
  %v1151 = vand.u32 %v1008, 4294901760
  %v1152 = vsub.f32 %v1008, %v1151
  %v1153 = vand.u32 %v1152, 4294901760
  %v1154 = vsub.f32 %v1152, %v1153
  %v1155 = vand.u32 %v1154, 4294901760
  %1156 = vmatmul.f32.gmra.mxu0 %v1155
  %v1157 = vpop.f32.mrf.mxu0
  %v1158 = vadd.f32 %v1021, %v1157
  %v1159 = vand.u32 %v1009, 4294901760
  %v1160 = vsub.f32 %v1009, %v1159
  %v1161 = vand.u32 %v1160, 4294901760
  %v1162 = vsub.f32 %v1160, %v1161
  %v1163 = vand.u32 %v1162, 4294901760
  %1164 = vmatmul.f32.gmra.mxu0 %v1163
  %v1165 = vpop.f32.mrf.mxu0
  %v1166 = vadd.f32 %v1021, %v1165
  %v1167 = vand.u32 %v1010, 4294901760
  %v1168 = vsub.f32 %v1010, %v1167
  %v1169 = vand.u32 %v1168, 4294901760
  %v1170 = vsub.f32 %v1168, %v1169
  %v1171 = vand.u32 %v1170, 4294901760
  %1172 = vmatmul.f32.gmra.mxu0 %v1171
  %v1173 = vpop.f32.mrf.mxu0
  %v1174 = vadd.f32 %v1021, %v1173
  %1175 = vdwg.mxu0
  %1176 = vmatpush.xpose.msra.mxu0 0.0
  %1177 = vmatpush.xpose.msra.mxu0 0.0
  %1178 = vmatpush.xpose.msra.mxu0 0.0
  %1179 = vmatpush.xpose.msra.mxu0 0.0
  %1180 = vmatpush.xpose.msra.mxu0 0.0
  %1181 = vmatpush.xpose.msra.mxu0 0.0
  %1182 = vmatpush.xpose.msra.mxu0 0.0
  %1183 = vmatpush.xpose.msra.mxu0 0.0
  %v1184 = vand.u32 %v1018, 4294901760
  %v1185 = vsub.f32 %v1018, %v1184
  %v1186 = vand.u32 %v1185, 4294901760
  %v1187 = vsub.f32 %v1185, %v1186
  %v1188 = vand.u32 %v1187, 4294901760
  %1189 = vmatpush.xpose.msra.mxu0 %v1188
  %v1190 = vand.u32 %v1017, 4294901760
  %v1191 = vsub.f32 %v1017, %v1190
  %v1192 = vand.u32 %v1191, 4294901760
  %v1193 = vsub.f32 %v1191, %v1192
  %v1194 = vand.u32 %v1193, 4294901760
  %1195 = vmatpush.xpose.msra.mxu0 %v1194
  %v1196 = vand.u32 %v1016, 4294901760
  %v1197 = vsub.f32 %v1016, %v1196
  %v1198 = vand.u32 %v1197, 4294901760
  %v1199 = vsub.f32 %v1197, %v1198
  %v1200 = vand.u32 %v1199, 4294901760
  %1201 = vmatpush.xpose.msra.mxu0 %v1200
  %v1202 = vand.u32 %v1015, 4294901760
  %v1203 = vsub.f32 %v1015, %v1202
  %v1204 = vand.u32 %v1203, 4294901760
  %v1205 = vsub.f32 %v1203, %v1204
  %v1206 = vand.u32 %v1205, 4294901760
  %1207 = vmatpush.xpose.msra.mxu0 %v1206
  %v1208 = vand.u32 %v1014, 4294901760
  %v1209 = vsub.f32 %v1014, %v1208
  %v1210 = vand.u32 %v1209, 4294901760
  %v1211 = vsub.f32 %v1209, %v1210
  %v1212 = vand.u32 %v1211, 4294901760
  %1213 = vmatpush.xpose.msra.mxu0 %v1212
  %v1214 = vand.u32 %v1013, 4294901760
  %v1215 = vsub.f32 %v1013, %v1214
  %v1216 = vand.u32 %v1215, 4294901760
  %v1217 = vsub.f32 %v1215, %v1216
  %v1218 = vand.u32 %v1217, 4294901760
  %1219 = vmatpush.xpose.msra.mxu0 %v1218
  %v1220 = vand.u32 %v1012, 4294901760
  %v1221 = vsub.f32 %v1012, %v1220
  %v1222 = vand.u32 %v1221, 4294901760
  %v1223 = vsub.f32 %v1221, %v1222
  %v1224 = vand.u32 %v1223, 4294901760
  %1225 = vmatpush.xpose.msra.mxu0 %v1224
  %v1226 = vand.u32 %v1011, 4294901760
  %v1227 = vsub.f32 %v1011, %v1226
  %v1228 = vand.u32 %v1227, 4294901760
  %v1229 = vsub.f32 %v1227, %v1228
  %v1230 = vand.u32 %v1229, 4294901760
  %1231 = vmatpush.xpose.msra.mxu0 %v1230
  %v1232 = vand.u32 %v995, 4294901760
  %1233 = vmatmul.f32.gmra.mxu0 %v1232
  %v1234 = vpop.f32.mrf.mxu0
  %v1235 = vadd.f32 %v1054, %v1234
  %v1236 = vand.u32 %v996, 4294901760
  %1237 = vmatmul.f32.gmra.mxu0 %v1236
  %v1238 = vpop.f32.mrf.mxu0
  %v1239 = vadd.f32 %v1062, %v1238
  %v1240 = vand.u32 %v997, 4294901760
  %1241 = vmatmul.f32.gmra.mxu0 %v1240
  %v1242 = vpop.f32.mrf.mxu0
  %v1243 = vadd.f32 %v1070, %v1242
  %v1244 = vand.u32 %v998, 4294901760
  %1245 = vmatmul.f32.gmra.mxu0 %v1244
  %v1246 = vpop.f32.mrf.mxu0
  %v1247 = vadd.f32 %v1078, %v1246
  %v1248 = vand.u32 %v999, 4294901760
  %1249 = vmatmul.f32.gmra.mxu0 %v1248
  %v1250 = vpop.f32.mrf.mxu0
  %v1251 = vadd.f32 %v1086, %v1250
  %v1252 = vand.u32 %v1000, 4294901760
  %1253 = vmatmul.f32.gmra.mxu0 %v1252
  %v1254 = vpop.f32.mrf.mxu0
  %v1255 = vadd.f32 %v1094, %v1254
  %v1256 = vand.u32 %v1001, 4294901760
  %1257 = vmatmul.f32.gmra.mxu0 %v1256
  %v1258 = vpop.f32.mrf.mxu0
  %v1259 = vadd.f32 %v1102, %v1258
  %v1260 = vand.u32 %v1002, 4294901760
  %1261 = vmatmul.f32.gmra.mxu0 %v1260
  %v1262 = vpop.f32.mrf.mxu0
  %v1263 = vadd.f32 %v1110, %v1262
  %v1264 = vand.u32 %v1003, 4294901760
  %1265 = vmatmul.f32.gmra.mxu0 %v1264
  %v1266 = vpop.f32.mrf.mxu0
  %v1267 = vadd.f32 %v1118, %v1266
  %v1268 = vand.u32 %v1004, 4294901760
  %1269 = vmatmul.f32.gmra.mxu0 %v1268
  %v1270 = vpop.f32.mrf.mxu0
  %v1271 = vadd.f32 %v1126, %v1270
  %v1272 = vand.u32 %v1005, 4294901760
  %1273 = vmatmul.f32.gmra.mxu0 %v1272
  %v1274 = vpop.f32.mrf.mxu0
  %v1275 = vadd.f32 %v1134, %v1274
  %v1276 = vand.u32 %v1006, 4294901760
  %1277 = vmatmul.f32.gmra.mxu0 %v1276
  %v1278 = vpop.f32.mrf.mxu0
  %v1279 = vadd.f32 %v1142, %v1278
  %v1280 = vand.u32 %v1007, 4294901760
  %1281 = vmatmul.f32.gmra.mxu0 %v1280
  %v1282 = vpop.f32.mrf.mxu0
  %v1283 = vadd.f32 %v1150, %v1282
  %v1284 = vand.u32 %v1008, 4294901760
  %1285 = vmatmul.f32.gmra.mxu0 %v1284
  %v1286 = vpop.f32.mrf.mxu0
  %v1287 = vadd.f32 %v1158, %v1286
  %v1288 = vand.u32 %v1009, 4294901760
  %1289 = vmatmul.f32.gmra.mxu0 %v1288
  %v1290 = vpop.f32.mrf.mxu0
  %v1291 = vadd.f32 %v1166, %v1290
  %v1292 = vand.u32 %v1010, 4294901760
  %1293 = vmatmul.f32.gmra.mxu0 %v1292
  %v1294 = vpop.f32.mrf.mxu0
  %v1295 = vadd.f32 %v1174, %v1294
  %1296 = vdwg.mxu0
  %1297 = vmatpush.xpose.msra.mxu0 0.0
  %1298 = vmatpush.xpose.msra.mxu0 0.0
  %1299 = vmatpush.xpose.msra.mxu0 0.0
  %1300 = vmatpush.xpose.msra.mxu0 0.0
  %1301 = vmatpush.xpose.msra.mxu0 0.0
  %1302 = vmatpush.xpose.msra.mxu0 0.0
  %1303 = vmatpush.xpose.msra.mxu0 0.0
  %1304 = vmatpush.xpose.msra.mxu0 0.0
  %v1305 = vand.u32 %v1018, 4294901760
  %v1306 = vsub.f32 %v1018, %v1305
  %1307 = vmatpush.xpose.msra.mxu0 %v1306
  %v1308 = vand.u32 %v1017, 4294901760
  %v1309 = vsub.f32 %v1017, %v1308
  %1310 = vmatpush.xpose.msra.mxu0 %v1309
  %v1311 = vand.u32 %v1016, 4294901760
  %v1312 = vsub.f32 %v1016, %v1311
  %1313 = vmatpush.xpose.msra.mxu0 %v1312
  %v1314 = vand.u32 %v1015, 4294901760
  %v1315 = vsub.f32 %v1015, %v1314
  %1316 = vmatpush.xpose.msra.mxu0 %v1315
  %v1317 = vand.u32 %v1014, 4294901760
  %v1318 = vsub.f32 %v1014, %v1317
  %1319 = vmatpush.xpose.msra.mxu0 %v1318
  %v1320 = vand.u32 %v1013, 4294901760
  %v1321 = vsub.f32 %v1013, %v1320
  %1322 = vmatpush.xpose.msra.mxu0 %v1321
  %v1323 = vand.u32 %v1012, 4294901760
  %v1324 = vsub.f32 %v1012, %v1323
  %1325 = vmatpush.xpose.msra.mxu0 %v1324
  %v1326 = vand.u32 %v1011, 4294901760
  %v1327 = vsub.f32 %v1011, %v1326
  %1328 = vmatpush.xpose.msra.mxu0 %v1327
  %v1329 = vand.u32 %v995, 4294901760
  %v1330 = vsub.f32 %v995, %v1329
  %1331 = vmatmul.f32.gmra.mxu0 %v1330
  %v1332 = vpop.f32.mrf.mxu0
  %v1333 = vadd.f32 %v1235, %v1332
  %v1334 = vand.u32 %v996, 4294901760
  %v1335 = vsub.f32 %v996, %v1334
  %1336 = vmatmul.f32.gmra.mxu0 %v1335
  %v1337 = vpop.f32.mrf.mxu0
  %v1338 = vadd.f32 %v1239, %v1337
  %v1339 = vand.u32 %v997, 4294901760
  %v1340 = vsub.f32 %v997, %v1339
  %1341 = vmatmul.f32.gmra.mxu0 %v1340
  %v1342 = vpop.f32.mrf.mxu0
  %v1343 = vadd.f32 %v1243, %v1342
  %v1344 = vand.u32 %v998, 4294901760
  %v1345 = vsub.f32 %v998, %v1344
  %1346 = vmatmul.f32.gmra.mxu0 %v1345
  %v1347 = vpop.f32.mrf.mxu0
  %v1348 = vadd.f32 %v1247, %v1347
  %v1349 = vand.u32 %v999, 4294901760
  %v1350 = vsub.f32 %v999, %v1349
  %1351 = vmatmul.f32.gmra.mxu0 %v1350
  %v1352 = vpop.f32.mrf.mxu0
  %v1353 = vadd.f32 %v1251, %v1352
  %v1354 = vand.u32 %v1000, 4294901760
  %v1355 = vsub.f32 %v1000, %v1354
  %1356 = vmatmul.f32.gmra.mxu0 %v1355
  %v1357 = vpop.f32.mrf.mxu0
  %v1358 = vadd.f32 %v1255, %v1357
  %v1359 = vand.u32 %v1001, 4294901760
  %v1360 = vsub.f32 %v1001, %v1359
  %1361 = vmatmul.f32.gmra.mxu0 %v1360
  %v1362 = vpop.f32.mrf.mxu0
  %v1363 = vadd.f32 %v1259, %v1362
  %v1364 = vand.u32 %v1002, 4294901760
  %v1365 = vsub.f32 %v1002, %v1364
  %1366 = vmatmul.f32.gmra.mxu0 %v1365
  %v1367 = vpop.f32.mrf.mxu0
  %v1368 = vadd.f32 %v1263, %v1367
  %v1369 = vand.u32 %v1003, 4294901760
  %v1370 = vsub.f32 %v1003, %v1369
  %1371 = vmatmul.f32.gmra.mxu0 %v1370
  %v1372 = vpop.f32.mrf.mxu0
  %v1373 = vadd.f32 %v1267, %v1372
  %v1374 = vand.u32 %v1004, 4294901760
  %v1375 = vsub.f32 %v1004, %v1374
  %1376 = vmatmul.f32.gmra.mxu0 %v1375
  %v1377 = vpop.f32.mrf.mxu0
  %v1378 = vadd.f32 %v1271, %v1377
  %v1379 = vand.u32 %v1005, 4294901760
  %v1380 = vsub.f32 %v1005, %v1379
  %1381 = vmatmul.f32.gmra.mxu0 %v1380
  %v1382 = vpop.f32.mrf.mxu0
  %v1383 = vadd.f32 %v1275, %v1382
  %v1384 = vand.u32 %v1006, 4294901760
  %v1385 = vsub.f32 %v1006, %v1384
  %1386 = vmatmul.f32.gmra.mxu0 %v1385
  %v1387 = vpop.f32.mrf.mxu0
  %v1388 = vadd.f32 %v1279, %v1387
  %v1389 = vand.u32 %v1007, 4294901760
  %v1390 = vsub.f32 %v1007, %v1389
  %1391 = vmatmul.f32.gmra.mxu0 %v1390
  %v1392 = vpop.f32.mrf.mxu0
  %v1393 = vadd.f32 %v1283, %v1392
  %v1394 = vand.u32 %v1008, 4294901760
  %v1395 = vsub.f32 %v1008, %v1394
  %1396 = vmatmul.f32.gmra.mxu0 %v1395
  %v1397 = vpop.f32.mrf.mxu0
  %v1398 = vadd.f32 %v1287, %v1397
  %v1399 = vand.u32 %v1009, 4294901760
  %v1400 = vsub.f32 %v1009, %v1399
  %1401 = vmatmul.f32.gmra.mxu0 %v1400
  %v1402 = vpop.f32.mrf.mxu0
  %v1403 = vadd.f32 %v1291, %v1402
  %v1404 = vand.u32 %v1010, 4294901760
  %v1405 = vsub.f32 %v1010, %v1404
  %1406 = vmatmul.f32.gmra.mxu0 %v1405
  %v1407 = vpop.f32.mrf.mxu0
  %v1408 = vadd.f32 %v1295, %v1407
  %1409 = vdwg.mxu0
  %1410 = vmatpush.xpose.msra.mxu0 0.0
  %1411 = vmatpush.xpose.msra.mxu0 0.0
  %1412 = vmatpush.xpose.msra.mxu0 0.0
  %1413 = vmatpush.xpose.msra.mxu0 0.0
  %1414 = vmatpush.xpose.msra.mxu0 0.0
  %1415 = vmatpush.xpose.msra.mxu0 0.0
  %1416 = vmatpush.xpose.msra.mxu0 0.0
  %1417 = vmatpush.xpose.msra.mxu0 0.0
  %v1418 = vand.u32 %v1018, 4294901760
  %1419 = vmatpush.xpose.msra.mxu0 %v1418
  %v1420 = vand.u32 %v1017, 4294901760
  %1421 = vmatpush.xpose.msra.mxu0 %v1420
  %v1422 = vand.u32 %v1016, 4294901760
  %1423 = vmatpush.xpose.msra.mxu0 %v1422
  %v1424 = vand.u32 %v1015, 4294901760
  %1425 = vmatpush.xpose.msra.mxu0 %v1424
  %v1426 = vand.u32 %v1014, 4294901760
  %1427 = vmatpush.xpose.msra.mxu0 %v1426
  %v1428 = vand.u32 %v1013, 4294901760
  %1429 = vmatpush.xpose.msra.mxu0 %v1428
  %v1430 = vand.u32 %v1012, 4294901760
  %1431 = vmatpush.xpose.msra.mxu0 %v1430
  %v1432 = vand.u32 %v1011, 4294901760
  %1433 = vmatpush.xpose.msra.mxu0 %v1432
  %v1434 = vand.u32 %v995, 4294901760
  %v1435 = vsub.f32 %v995, %v1434
  %v1436 = vand.u32 %v1435, 4294901760
  %1437 = vmatmul.f32.gmra.mxu0 %v1436
  %v1438 = vpop.f32.mrf.mxu0
  %v1439 = vadd.f32 %v1333, %v1438
  %v1440 = vand.u32 %v996, 4294901760
  %v1441 = vsub.f32 %v996, %v1440
  %v1442 = vand.u32 %v1441, 4294901760
  %1443 = vmatmul.f32.gmra.mxu0 %v1442
  %v1444 = vpop.f32.mrf.mxu0
  %v1445 = vadd.f32 %v1338, %v1444
  %v1446 = vand.u32 %v997, 4294901760
  %v1447 = vsub.f32 %v997, %v1446
  %v1448 = vand.u32 %v1447, 4294901760
  %1449 = vmatmul.f32.gmra.mxu0 %v1448
  %v1450 = vpop.f32.mrf.mxu0
  %v1451 = vadd.f32 %v1343, %v1450
  %v1452 = vand.u32 %v998, 4294901760
  %v1453 = vsub.f32 %v998, %v1452
  %v1454 = vand.u32 %v1453, 4294901760
  %1455 = vmatmul.f32.gmra.mxu0 %v1454
  %v1456 = vpop.f32.mrf.mxu0
  %v1457 = vadd.f32 %v1348, %v1456
  %v1458 = vand.u32 %v999, 4294901760
  %v1459 = vsub.f32 %v999, %v1458
  %v1460 = vand.u32 %v1459, 4294901760
  %1461 = vmatmul.f32.gmra.mxu0 %v1460
  %v1462 = vpop.f32.mrf.mxu0
  %v1463 = vadd.f32 %v1353, %v1462
  %v1464 = vand.u32 %v1000, 4294901760
  %v1465 = vsub.f32 %v1000, %v1464
  %v1466 = vand.u32 %v1465, 4294901760
  %1467 = vmatmul.f32.gmra.mxu0 %v1466
  %v1468 = vpop.f32.mrf.mxu0
  %v1469 = vadd.f32 %v1358, %v1468
  %v1470 = vand.u32 %v1001, 4294901760
  %v1471 = vsub.f32 %v1001, %v1470
  %v1472 = vand.u32 %v1471, 4294901760
  %1473 = vmatmul.f32.gmra.mxu0 %v1472
  %v1474 = vpop.f32.mrf.mxu0
  %v1475 = vadd.f32 %v1363, %v1474
  %v1476 = vand.u32 %v1002, 4294901760
  %v1477 = vsub.f32 %v1002, %v1476
  %v1478 = vand.u32 %v1477, 4294901760
  %1479 = vmatmul.f32.gmra.mxu0 %v1478
  %v1480 = vpop.f32.mrf.mxu0
  %v1481 = vadd.f32 %v1368, %v1480
  %v1482 = vand.u32 %v1003, 4294901760
  %v1483 = vsub.f32 %v1003, %v1482
  %v1484 = vand.u32 %v1483, 4294901760
  %1485 = vmatmul.f32.gmra.mxu0 %v1484
  %v1486 = vpop.f32.mrf.mxu0
  %v1487 = vadd.f32 %v1373, %v1486
  %v1488 = vand.u32 %v1004, 4294901760
  %v1489 = vsub.f32 %v1004, %v1488
  %v1490 = vand.u32 %v1489, 4294901760
  %1491 = vmatmul.f32.gmra.mxu0 %v1490
  %v1492 = vpop.f32.mrf.mxu0
  %v1493 = vadd.f32 %v1378, %v1492
  %v1494 = vand.u32 %v1005, 4294901760
  %v1495 = vsub.f32 %v1005, %v1494
  %v1496 = vand.u32 %v1495, 4294901760
  %1497 = vmatmul.f32.gmra.mxu0 %v1496
  %v1498 = vpop.f32.mrf.mxu0
  %v1499 = vadd.f32 %v1383, %v1498
  %v1500 = vand.u32 %v1006, 4294901760
  %v1501 = vsub.f32 %v1006, %v1500
  %v1502 = vand.u32 %v1501, 4294901760
  %1503 = vmatmul.f32.gmra.mxu0 %v1502
  %v1504 = vpop.f32.mrf.mxu0
  %v1505 = vadd.f32 %v1388, %v1504
  %v1506 = vand.u32 %v1007, 4294901760
  %v1507 = vsub.f32 %v1007, %v1506
  %v1508 = vand.u32 %v1507, 4294901760
  %1509 = vmatmul.f32.gmra.mxu0 %v1508
  %v1510 = vpop.f32.mrf.mxu0
  %v1511 = vadd.f32 %v1393, %v1510
  %v1512 = vand.u32 %v1008, 4294901760
  %v1513 = vsub.f32 %v1008, %v1512
  %v1514 = vand.u32 %v1513, 4294901760
  %1515 = vmatmul.f32.gmra.mxu0 %v1514
  %v1516 = vpop.f32.mrf.mxu0
  %v1517 = vadd.f32 %v1398, %v1516
  %v1518 = vand.u32 %v1009, 4294901760
  %v1519 = vsub.f32 %v1009, %v1518
  %v1520 = vand.u32 %v1519, 4294901760
  %1521 = vmatmul.f32.gmra.mxu0 %v1520
  %v1522 = vpop.f32.mrf.mxu0
  %v1523 = vadd.f32 %v1403, %v1522
  %v1524 = vand.u32 %v1010, 4294901760
  %v1525 = vsub.f32 %v1010, %v1524
  %v1526 = vand.u32 %v1525, 4294901760
  %1527 = vmatmul.f32.gmra.mxu0 %v1526
  %v1528 = vpop.f32.mrf.mxu0
  %v1529 = vadd.f32 %v1408, %v1528
  %1530 = vdwg.mxu0
  %1531 = vmatpush.xpose.msra.mxu0 0.0
  %1532 = vmatpush.xpose.msra.mxu0 0.0
  %1533 = vmatpush.xpose.msra.mxu0 0.0
  %1534 = vmatpush.xpose.msra.mxu0 0.0
  %1535 = vmatpush.xpose.msra.mxu0 0.0
  %1536 = vmatpush.xpose.msra.mxu0 0.0
  %1537 = vmatpush.xpose.msra.mxu0 0.0
  %1538 = vmatpush.xpose.msra.mxu0 0.0
  %v1539 = vand.u32 %v1018, 4294901760
  %v1540 = vsub.f32 %v1018, %v1539
  %v1541 = vand.u32 %v1540, 4294901760
  %1542 = vmatpush.xpose.msra.mxu0 %v1541
  %v1543 = vand.u32 %v1017, 4294901760
  %v1544 = vsub.f32 %v1017, %v1543
  %v1545 = vand.u32 %v1544, 4294901760
  %1546 = vmatpush.xpose.msra.mxu0 %v1545
  %v1547 = vand.u32 %v1016, 4294901760
  %v1548 = vsub.f32 %v1016, %v1547
  %v1549 = vand.u32 %v1548, 4294901760
  %1550 = vmatpush.xpose.msra.mxu0 %v1549
  %v1551 = vand.u32 %v1015, 4294901760
  %v1552 = vsub.f32 %v1015, %v1551
  %v1553 = vand.u32 %v1552, 4294901760
  %1554 = vmatpush.xpose.msra.mxu0 %v1553
  %v1555 = vand.u32 %v1014, 4294901760
  %v1556 = vsub.f32 %v1014, %v1555
  %v1557 = vand.u32 %v1556, 4294901760
  %1558 = vmatpush.xpose.msra.mxu0 %v1557
  %v1559 = vand.u32 %v1013, 4294901760
  %v1560 = vsub.f32 %v1013, %v1559
  %v1561 = vand.u32 %v1560, 4294901760
  %1562 = vmatpush.xpose.msra.mxu0 %v1561
  %v1563 = vand.u32 %v1012, 4294901760
  %v1564 = vsub.f32 %v1012, %v1563
  %v1565 = vand.u32 %v1564, 4294901760
  %1566 = vmatpush.xpose.msra.mxu0 %v1565
  %v1567 = vand.u32 %v1011, 4294901760
  %v1568 = vsub.f32 %v1011, %v1567
  %v1569 = vand.u32 %v1568, 4294901760
  %1570 = vmatpush.xpose.msra.mxu0 %v1569
  %v1571 = vand.u32 %v995, 4294901760
  %1572 = vmatmul.f32.gmra.mxu0 %v1571
  %v1573 = vpop.f32.mrf.mxu0
  %v1574 = vadd.f32 %v1439, %v1573
  %v1575 = vand.u32 %v996, 4294901760
  %1576 = vmatmul.f32.gmra.mxu0 %v1575
  %v1577 = vpop.f32.mrf.mxu0
  %v1578 = vadd.f32 %v1445, %v1577
  %v1579 = vand.u32 %v997, 4294901760
  %1580 = vmatmul.f32.gmra.mxu0 %v1579
  %v1581 = vpop.f32.mrf.mxu0
  %v1582 = vadd.f32 %v1451, %v1581
  %v1583 = vand.u32 %v998, 4294901760
  %1584 = vmatmul.f32.gmra.mxu0 %v1583
  %v1585 = vpop.f32.mrf.mxu0
  %v1586 = vadd.f32 %v1457, %v1585
  %v1587 = vand.u32 %v999, 4294901760
  %1588 = vmatmul.f32.gmra.mxu0 %v1587
  %v1589 = vpop.f32.mrf.mxu0
  %v1590 = vadd.f32 %v1463, %v1589
  %v1591 = vand.u32 %v1000, 4294901760
  %1592 = vmatmul.f32.gmra.mxu0 %v1591
  %v1593 = vpop.f32.mrf.mxu0
  %v1594 = vadd.f32 %v1469, %v1593
  %v1595 = vand.u32 %v1001, 4294901760
  %1596 = vmatmul.f32.gmra.mxu0 %v1595
  %v1597 = vpop.f32.mrf.mxu0
  %v1598 = vadd.f32 %v1475, %v1597
  %v1599 = vand.u32 %v1002, 4294901760
  %1600 = vmatmul.f32.gmra.mxu0 %v1599
  %v1601 = vpop.f32.mrf.mxu0
  %v1602 = vadd.f32 %v1481, %v1601
  %v1603 = vand.u32 %v1003, 4294901760
  %1604 = vmatmul.f32.gmra.mxu0 %v1603
  %v1605 = vpop.f32.mrf.mxu0
  %v1606 = vadd.f32 %v1487, %v1605
  %v1607 = vand.u32 %v1004, 4294901760
  %1608 = vmatmul.f32.gmra.mxu0 %v1607
  %v1609 = vpop.f32.mrf.mxu0
  %v1610 = vadd.f32 %v1493, %v1609
  %v1611 = vand.u32 %v1005, 4294901760
  %1612 = vmatmul.f32.gmra.mxu0 %v1611
  %v1613 = vpop.f32.mrf.mxu0
  %v1614 = vadd.f32 %v1499, %v1613
  %v1615 = vand.u32 %v1006, 4294901760
  %1616 = vmatmul.f32.gmra.mxu0 %v1615
  %v1617 = vpop.f32.mrf.mxu0
  %v1618 = vadd.f32 %v1505, %v1617
  %v1619 = vand.u32 %v1007, 4294901760
  %1620 = vmatmul.f32.gmra.mxu0 %v1619
  %v1621 = vpop.f32.mrf.mxu0
  %v1622 = vadd.f32 %v1511, %v1621
  %v1623 = vand.u32 %v1008, 4294901760
  %1624 = vmatmul.f32.gmra.mxu0 %v1623
  %v1625 = vpop.f32.mrf.mxu0
  %v1626 = vadd.f32 %v1517, %v1625
  %v1627 = vand.u32 %v1009, 4294901760
  %1628 = vmatmul.f32.gmra.mxu0 %v1627
  %v1629 = vpop.f32.mrf.mxu0
  %v1630 = vadd.f32 %v1523, %v1629
  %v1631 = vand.u32 %v1010, 4294901760
  %1632 = vmatmul.f32.gmra.mxu0 %v1631
  %v1633 = vpop.f32.mrf.mxu0
  %v1634 = vadd.f32 %v1529, %v1633
  %1635 = vdwg.mxu0
  %1636 = vmatpush.xpose.msra.mxu0 0.0
  %1637 = vmatpush.xpose.msra.mxu0 0.0
  %1638 = vmatpush.xpose.msra.mxu0 0.0
  %1639 = vmatpush.xpose.msra.mxu0 0.0
  %1640 = vmatpush.xpose.msra.mxu0 0.0
  %1641 = vmatpush.xpose.msra.mxu0 0.0
  %1642 = vmatpush.xpose.msra.mxu0 0.0
  %1643 = vmatpush.xpose.msra.mxu0 0.0
  %v1644 = vand.u32 %v1018, 4294901760
  %1645 = vmatpush.xpose.msra.mxu0 %v1644
  %v1646 = vand.u32 %v1017, 4294901760
  %1647 = vmatpush.xpose.msra.mxu0 %v1646
  %v1648 = vand.u32 %v1016, 4294901760
  %1649 = vmatpush.xpose.msra.mxu0 %v1648
  %v1650 = vand.u32 %v1015, 4294901760
  %1651 = vmatpush.xpose.msra.mxu0 %v1650
  %v1652 = vand.u32 %v1014, 4294901760
  %1653 = vmatpush.xpose.msra.mxu0 %v1652
  %v1654 = vand.u32 %v1013, 4294901760
  %1655 = vmatpush.xpose.msra.mxu0 %v1654
  %v1656 = vand.u32 %v1012, 4294901760
  %1657 = vmatpush.xpose.msra.mxu0 %v1656
  %v1658 = vand.u32 %v1011, 4294901760
  %1659 = vmatpush.xpose.msra.mxu0 %v1658
  %v1660 = vand.u32 %v995, 4294901760
  %1661 = vmatmul.f32.gmra.mxu0 %v1660
  %v1662 = vpop.f32.mrf.mxu0
  %v1663 = vadd.f32 %v1574, %v1662
  %v1664 = vand.u32 %v996, 4294901760
  %1665 = vmatmul.f32.gmra.mxu0 %v1664
  %v1666 = vpop.f32.mrf.mxu0
  %v1667 = vadd.f32 %v1578, %v1666
  %v1668 = vand.u32 %v997, 4294901760
  %1669 = vmatmul.f32.gmra.mxu0 %v1668
  %v1670 = vpop.f32.mrf.mxu0
  %v1671 = vadd.f32 %v1582, %v1670
  %v1672 = vand.u32 %v998, 4294901760
  %1673 = vmatmul.f32.gmra.mxu0 %v1672
  %v1674 = vpop.f32.mrf.mxu0
  %v1675 = vadd.f32 %v1586, %v1674
  %v1676 = vand.u32 %v999, 4294901760
  %1677 = vmatmul.f32.gmra.mxu0 %v1676
  %v1678 = vpop.f32.mrf.mxu0
  %v1679 = vadd.f32 %v1590, %v1678
  %v1680 = vand.u32 %v1000, 4294901760
  %1681 = vmatmul.f32.gmra.mxu0 %v1680
  %v1682 = vpop.f32.mrf.mxu0
  %v1683 = vadd.f32 %v1594, %v1682
  %v1684 = vand.u32 %v1001, 4294901760
  %1685 = vmatmul.f32.gmra.mxu0 %v1684
  %v1686 = vpop.f32.mrf.mxu0
  %v1687 = vadd.f32 %v1598, %v1686
  %v1688 = vand.u32 %v1002, 4294901760
  %1689 = vmatmul.f32.gmra.mxu0 %v1688
  %v1690 = vpop.f32.mrf.mxu0
  %v1691 = vadd.f32 %v1602, %v1690
  %v1692 = vand.u32 %v1003, 4294901760
  %1693 = vmatmul.f32.gmra.mxu0 %v1692
  %v1694 = vpop.f32.mrf.mxu0
  %v1695 = vadd.f32 %v1606, %v1694
  %v1696 = vand.u32 %v1004, 4294901760
  %1697 = vmatmul.f32.gmra.mxu0 %v1696
  %v1698 = vpop.f32.mrf.mxu0
  %v1699 = vadd.f32 %v1610, %v1698
  %v1700 = vand.u32 %v1005, 4294901760
  %1701 = vmatmul.f32.gmra.mxu0 %v1700
  %v1702 = vpop.f32.mrf.mxu0
  %v1703 = vadd.f32 %v1614, %v1702
  %v1704 = vand.u32 %v1006, 4294901760
  %1705 = vmatmul.f32.gmra.mxu0 %v1704
  %v1706 = vpop.f32.mrf.mxu0
  %v1707 = vadd.f32 %v1618, %v1706
  %v1708 = vand.u32 %v1007, 4294901760
  %1709 = vmatmul.f32.gmra.mxu0 %v1708
  %v1710 = vpop.f32.mrf.mxu0
  %v1711 = vadd.f32 %v1622, %v1710
  %v1712 = vand.u32 %v1008, 4294901760
  %1713 = vmatmul.f32.gmra.mxu0 %v1712
  %v1714 = vpop.f32.mrf.mxu0
  %v1715 = vadd.f32 %v1626, %v1714
  %v1716 = vand.u32 %v1009, 4294901760
  %1717 = vmatmul.f32.gmra.mxu0 %v1716
  %v1718 = vpop.f32.mrf.mxu0
  %v1719 = vadd.f32 %v1630, %v1718
  %v1720 = vand.u32 %v1010, 4294901760
  %1721 = vmatmul.f32.gmra.mxu0 %v1720
  %v1722 = vpop.f32.mrf.mxu0
  %v1723 = vadd.f32 %v1634, %v1722
  %1724 = vdwg.mxu0
  %v1725 = vmax.f32 %v1663, 0.0
  %v1726 = vmax.f32 %v1667, 0.0
  %v1727 = vmax.f32 %v1671, 0.0
  %v1728 = vmax.f32 %v1675, 0.0
  %v1729 = vmax.f32 %v1679, 0.0
  %v1730 = vmax.f32 %v1683, 0.0
  %v1731 = vmax.f32 %v1687, 0.0
  %v1732 = vmax.f32 %v1691, 0.0
  %v1733 = vmax.f32 %v1695, 0.0
  %v1734 = vmax.f32 %v1699, 0.0
  %v1735 = vmax.f32 %v1703, 0.0
  %v1736 = vmax.f32 %v1707, 0.0
  %v1737 = vmax.f32 %v1711, 0.0
  %v1738 = vmax.f32 %v1715, 0.0
  %v1739 = vmax.f32 %v1719, 0.0
  %v1740 = vmax.f32 %v1723, 0.0
  %v1741 = vld [vmem:[%s5] sm:$0xff]
  %v1742 = vld [vmem:[%s5 + $0x8] sm:$0xff]
  %v1743 = vld [vmem:[%s5 + $0x10] sm:$0xff]
  %v1744 = vld [vmem:[%s5 + $0x18] sm:$0xff]
  %v1745 = vld [vmem:[%s6] sm:$0x1]
  %v1747 = vperm.slane %v1745, 0
  %vm1749 = vcmask 523264
  %v1751 = vsel %vm1749, %v1725, 0
  %v1754 = vsel %vm1749, %v1726, 0
  %v1757 = vsel %vm1749, %v1727, 0
  %v1760 = vsel %vm1749, %v1728, 0
  %v1763 = vsel %vm1749, %v1729, 0
  %v1766 = vsel %vm1749, %v1730, 0
  %v1769 = vsel %vm1749, %v1731, 0
  %v1772 = vsel %vm1749, %v1732, 0
  %v1775 = vsel %vm1749, %v1733, 0
  %v1778 = vsel %vm1749, %v1734, 0
  %v1781 = vsel %vm1749, %v1735, 0
  %v1784 = vsel %vm1749, %v1736, 0
  %v1787 = vsel %vm1749, %v1737, 0
  %v1790 = vsel %vm1749, %v1738, 0
  %v1793 = vsel %vm1749, %v1739, 0
  %v1796 = vsel %vm1749, %v1740, 0
  %v1799 = vsel %vm1749, %v1741, 0
  %v1802 = vsel %vm1749, %v1742, 0
  %v1805 = vsel %vm1749, %v1743, 0
  %v1808 = vsel %vm1749, %v1744, 0
  %1810 = vmatpush.xpose.msra.mxu0 0.0
  %1811 = vmatpush.xpose.msra.mxu0 0.0
  %1812 = vmatpush.xpose.msra.mxu0 0.0
  %1813 = vmatpush.xpose.msra.mxu0 0.0
  %1814 = vmatpush.xpose.msra.mxu0 0.0
  %1815 = vmatpush.xpose.msra.mxu0 0.0
  %1816 = vmatpush.xpose.msra.mxu0 0.0
  %1817 = vmatpush.xpose.msra.mxu0 0.0
  %1818 = vmatpush.xpose.msra.mxu0 0.0
  %1819 = vmatpush.xpose.msra.mxu0 0.0
  %1820 = vmatpush.xpose.msra.mxu0 0.0
  %1821 = vmatpush.xpose.msra.mxu0 0.0
  %v1822 = vand.u32 %v1808, 4294901760
  %1823 = vmatpush.xpose.msra.mxu0 %v1822
  %v1824 = vand.u32 %v1805, 4294901760
  %1825 = vmatpush.xpose.msra.mxu0 %v1824
  %v1826 = vand.u32 %v1802, 4294901760
  %1827 = vmatpush.xpose.msra.mxu0 %v1826
  %v1828 = vand.u32 %v1799, 4294901760
  %1829 = vmatpush.xpose.msra.mxu0 %v1828
  %v1830 = vand.u32 %v1751, 4294901760
  %v1831 = vsub.f32 %v1751, %v1830
  %v1832 = vand.u32 %v1831, 4294901760
  %v1833 = vsub.f32 %v1831, %v1832
  %v1834 = vand.u32 %v1833, 4294901760
  %1835 = vmatmul.f32.gmra.mxu0 %v1834
  %v1836 = vpop.f32.mrf.mxu0
  %v1837 = vadd.f32 %v1747, %v1836
  %v1838 = vand.u32 %v1754, 4294901760
  %v1839 = vsub.f32 %v1754, %v1838
  %v1840 = vand.u32 %v1839, 4294901760
  %v1841 = vsub.f32 %v1839, %v1840
  %v1842 = vand.u32 %v1841, 4294901760
  %1843 = vmatmul.f32.gmra.mxu0 %v1842
  %v1844 = vpop.f32.mrf.mxu0
  %v1845 = vadd.f32 %v1747, %v1844
  %v1846 = vand.u32 %v1757, 4294901760
  %v1847 = vsub.f32 %v1757, %v1846
  %v1848 = vand.u32 %v1847, 4294901760
  %v1849 = vsub.f32 %v1847, %v1848
  %v1850 = vand.u32 %v1849, 4294901760
  %1851 = vmatmul.f32.gmra.mxu0 %v1850
  %v1852 = vpop.f32.mrf.mxu0
  %v1853 = vadd.f32 %v1747, %v1852
  %v1854 = vand.u32 %v1760, 4294901760
  %v1855 = vsub.f32 %v1760, %v1854
  %v1856 = vand.u32 %v1855, 4294901760
  %v1857 = vsub.f32 %v1855, %v1856
  %v1858 = vand.u32 %v1857, 4294901760
  %1859 = vmatmul.f32.gmra.mxu0 %v1858
  %v1860 = vpop.f32.mrf.mxu0
  %v1861 = vadd.f32 %v1747, %v1860
  %v1862 = vand.u32 %v1763, 4294901760
  %v1863 = vsub.f32 %v1763, %v1862
  %v1864 = vand.u32 %v1863, 4294901760
  %v1865 = vsub.f32 %v1863, %v1864
  %v1866 = vand.u32 %v1865, 4294901760
  %1867 = vmatmul.f32.gmra.mxu0 %v1866
  %v1868 = vpop.f32.mrf.mxu0
  %v1869 = vadd.f32 %v1747, %v1868
  %v1870 = vand.u32 %v1766, 4294901760
  %v1871 = vsub.f32 %v1766, %v1870
  %v1872 = vand.u32 %v1871, 4294901760
  %v1873 = vsub.f32 %v1871, %v1872
  %v1874 = vand.u32 %v1873, 4294901760
  %1875 = vmatmul.f32.gmra.mxu0 %v1874
  %v1876 = vpop.f32.mrf.mxu0
  %v1877 = vadd.f32 %v1747, %v1876
  %v1878 = vand.u32 %v1769, 4294901760
  %v1879 = vsub.f32 %v1769, %v1878
  %v1880 = vand.u32 %v1879, 4294901760
  %v1881 = vsub.f32 %v1879, %v1880
  %v1882 = vand.u32 %v1881, 4294901760
  %1883 = vmatmul.f32.gmra.mxu0 %v1882
  %v1884 = vpop.f32.mrf.mxu0
  %v1885 = vadd.f32 %v1747, %v1884
  %v1886 = vand.u32 %v1772, 4294901760
  %v1887 = vsub.f32 %v1772, %v1886
  %v1888 = vand.u32 %v1887, 4294901760
  %v1889 = vsub.f32 %v1887, %v1888
  %v1890 = vand.u32 %v1889, 4294901760
  %1891 = vmatmul.f32.gmra.mxu0 %v1890
  %v1892 = vpop.f32.mrf.mxu0
  %v1893 = vadd.f32 %v1747, %v1892
  %v1894 = vand.u32 %v1775, 4294901760
  %v1895 = vsub.f32 %v1775, %v1894
  %v1896 = vand.u32 %v1895, 4294901760
  %v1897 = vsub.f32 %v1895, %v1896
  %v1898 = vand.u32 %v1897, 4294901760
  %1899 = vmatmul.f32.gmra.mxu0 %v1898
  %v1900 = vpop.f32.mrf.mxu0
  %v1901 = vadd.f32 %v1747, %v1900
  %v1902 = vand.u32 %v1778, 4294901760
  %v1903 = vsub.f32 %v1778, %v1902
  %v1904 = vand.u32 %v1903, 4294901760
  %v1905 = vsub.f32 %v1903, %v1904
  %v1906 = vand.u32 %v1905, 4294901760
  %1907 = vmatmul.f32.gmra.mxu0 %v1906
  %v1908 = vpop.f32.mrf.mxu0
  %v1909 = vadd.f32 %v1747, %v1908
  %v1910 = vand.u32 %v1781, 4294901760
  %v1911 = vsub.f32 %v1781, %v1910
  %v1912 = vand.u32 %v1911, 4294901760
  %v1913 = vsub.f32 %v1911, %v1912
  %v1914 = vand.u32 %v1913, 4294901760
  %1915 = vmatmul.f32.gmra.mxu0 %v1914
  %v1916 = vpop.f32.mrf.mxu0
  %v1917 = vadd.f32 %v1747, %v1916
  %v1918 = vand.u32 %v1784, 4294901760
  %v1919 = vsub.f32 %v1784, %v1918
  %v1920 = vand.u32 %v1919, 4294901760
  %v1921 = vsub.f32 %v1919, %v1920
  %v1922 = vand.u32 %v1921, 4294901760
  %1923 = vmatmul.f32.gmra.mxu0 %v1922
  %v1924 = vpop.f32.mrf.mxu0
  %v1925 = vadd.f32 %v1747, %v1924
  %v1926 = vand.u32 %v1787, 4294901760
  %v1927 = vsub.f32 %v1787, %v1926
  %v1928 = vand.u32 %v1927, 4294901760
  %v1929 = vsub.f32 %v1927, %v1928
  %v1930 = vand.u32 %v1929, 4294901760
  %1931 = vmatmul.f32.gmra.mxu0 %v1930
  %v1932 = vpop.f32.mrf.mxu0
  %v1933 = vadd.f32 %v1747, %v1932
  %v1934 = vand.u32 %v1790, 4294901760
  %v1935 = vsub.f32 %v1790, %v1934
  %v1936 = vand.u32 %v1935, 4294901760
  %v1937 = vsub.f32 %v1935, %v1936
  %v1938 = vand.u32 %v1937, 4294901760
  %1939 = vmatmul.f32.gmra.mxu0 %v1938
  %v1940 = vpop.f32.mrf.mxu0
  %v1941 = vadd.f32 %v1747, %v1940
  %v1942 = vand.u32 %v1793, 4294901760
  %v1943 = vsub.f32 %v1793, %v1942
  %v1944 = vand.u32 %v1943, 4294901760
  %v1945 = vsub.f32 %v1943, %v1944
  %v1946 = vand.u32 %v1945, 4294901760
  %1947 = vmatmul.f32.gmra.mxu0 %v1946
  %v1948 = vpop.f32.mrf.mxu0
  %v1949 = vadd.f32 %v1747, %v1948
  %v1950 = vand.u32 %v1796, 4294901760
  %v1951 = vsub.f32 %v1796, %v1950
  %v1952 = vand.u32 %v1951, 4294901760
  %v1953 = vsub.f32 %v1951, %v1952
  %v1954 = vand.u32 %v1953, 4294901760
  %1955 = vmatmul.f32.gmra.mxu0 %v1954
  %v1956 = vpop.f32.mrf.mxu0
  %v1957 = vadd.f32 %v1747, %v1956
  %1958 = vdwg.mxu0
  %1959 = vmatpush.xpose.msra.mxu0 0.0
  %1960 = vmatpush.xpose.msra.mxu0 0.0
  %1961 = vmatpush.xpose.msra.mxu0 0.0
  %1962 = vmatpush.xpose.msra.mxu0 0.0
  %1963 = vmatpush.xpose.msra.mxu0 0.0
  %1964 = vmatpush.xpose.msra.mxu0 0.0
  %1965 = vmatpush.xpose.msra.mxu0 0.0
  %1966 = vmatpush.xpose.msra.mxu0 0.0
  %1967 = vmatpush.xpose.msra.mxu0 0.0
  %1968 = vmatpush.xpose.msra.mxu0 0.0
  %1969 = vmatpush.xpose.msra.mxu0 0.0
  %1970 = vmatpush.xpose.msra.mxu0 0.0
  %v1971 = vand.u32 %v1808, 4294901760
  %v1972 = vsub.f32 %v1808, %v1971
  %v1973 = vand.u32 %v1972, 4294901760
  %v1974 = vsub.f32 %v1972, %v1973
  %v1975 = vand.u32 %v1974, 4294901760
  %1976 = vmatpush.xpose.msra.mxu0 %v1975
  %v1977 = vand.u32 %v1805, 4294901760
  %v1978 = vsub.f32 %v1805, %v1977
  %v1979 = vand.u32 %v1978, 4294901760
  %v1980 = vsub.f32 %v1978, %v1979
  %v1981 = vand.u32 %v1980, 4294901760
  %1982 = vmatpush.xpose.msra.mxu0 %v1981
  %v1983 = vand.u32 %v1802, 4294901760
  %v1984 = vsub.f32 %v1802, %v1983
  %v1985 = vand.u32 %v1984, 4294901760
  %v1986 = vsub.f32 %v1984, %v1985
  %v1987 = vand.u32 %v1986, 4294901760
  %1988 = vmatpush.xpose.msra.mxu0 %v1987
  %v1989 = vand.u32 %v1799, 4294901760
  %v1990 = vsub.f32 %v1799, %v1989
  %v1991 = vand.u32 %v1990, 4294901760
  %v1992 = vsub.f32 %v1990, %v1991
  %v1993 = vand.u32 %v1992, 4294901760
  %1994 = vmatpush.xpose.msra.mxu0 %v1993
  %v1995 = vand.u32 %v1751, 4294901760
  %1996 = vmatmul.f32.gmra.mxu0 %v1995
  %v1997 = vpop.f32.mrf.mxu0
  %v1998 = vadd.f32 %v1837, %v1997
  %v1999 = vand.u32 %v1754, 4294901760
  %2000 = vmatmul.f32.gmra.mxu0 %v1999
  %v2001 = vpop.f32.mrf.mxu0
  %v2002 = vadd.f32 %v1845, %v2001
  %v2003 = vand.u32 %v1757, 4294901760
  %2004 = vmatmul.f32.gmra.mxu0 %v2003
  %v2005 = vpop.f32.mrf.mxu0
  %v2006 = vadd.f32 %v1853, %v2005
  %v2007 = vand.u32 %v1760, 4294901760
  %2008 = vmatmul.f32.gmra.mxu0 %v2007
  %v2009 = vpop.f32.mrf.mxu0
  %v2010 = vadd.f32 %v1861, %v2009
  %v2011 = vand.u32 %v1763, 4294901760
  %2012 = vmatmul.f32.gmra.mxu0 %v2011
  %v2013 = vpop.f32.mrf.mxu0
  %v2014 = vadd.f32 %v1869, %v2013
  %v2015 = vand.u32 %v1766, 4294901760
  %2016 = vmatmul.f32.gmra.mxu0 %v2015
  %v2017 = vpop.f32.mrf.mxu0
  %v2018 = vadd.f32 %v1877, %v2017
  %v2019 = vand.u32 %v1769, 4294901760
  %2020 = vmatmul.f32.gmra.mxu0 %v2019
  %v2021 = vpop.f32.mrf.mxu0
  %v2022 = vadd.f32 %v1885, %v2021
  %v2023 = vand.u32 %v1772, 4294901760
  %2024 = vmatmul.f32.gmra.mxu0 %v2023
  %v2025 = vpop.f32.mrf.mxu0
  %v2026 = vadd.f32 %v1893, %v2025
  %v2027 = vand.u32 %v1775, 4294901760
  %2028 = vmatmul.f32.gmra.mxu0 %v2027
  %v2029 = vpop.f32.mrf.mxu0
  %v2030 = vadd.f32 %v1901, %v2029
  %v2031 = vand.u32 %v1778, 4294901760
  %2032 = vmatmul.f32.gmra.mxu0 %v2031
  %v2033 = vpop.f32.mrf.mxu0
  %v2034 = vadd.f32 %v1909, %v2033
  %v2035 = vand.u32 %v1781, 4294901760
  %2036 = vmatmul.f32.gmra.mxu0 %v2035
  %v2037 = vpop.f32.mrf.mxu0
  %v2038 = vadd.f32 %v1917, %v2037
  %v2039 = vand.u32 %v1784, 4294901760
  %2040 = vmatmul.f32.gmra.mxu0 %v2039
  %v2041 = vpop.f32.mrf.mxu0
  %v2042 = vadd.f32 %v1925, %v2041
  %v2043 = vand.u32 %v1787, 4294901760
  %2044 = vmatmul.f32.gmra.mxu0 %v2043
  %v2045 = vpop.f32.mrf.mxu0
  %v2046 = vadd.f32 %v1933, %v2045
  %v2047 = vand.u32 %v1790, 4294901760
  %2048 = vmatmul.f32.gmra.mxu0 %v2047
  %v2049 = vpop.f32.mrf.mxu0
  %v2050 = vadd.f32 %v1941, %v2049
  %v2051 = vand.u32 %v1793, 4294901760
  %2052 = vmatmul.f32.gmra.mxu0 %v2051
  %v2053 = vpop.f32.mrf.mxu0
  %v2054 = vadd.f32 %v1949, %v2053
  %v2055 = vand.u32 %v1796, 4294901760
  %2056 = vmatmul.f32.gmra.mxu0 %v2055
  %v2057 = vpop.f32.mrf.mxu0
  %v2058 = vadd.f32 %v1957, %v2057
  %2059 = vdwg.mxu0
  %2060 = vmatpush.xpose.msra.mxu0 0.0
  %2061 = vmatpush.xpose.msra.mxu0 0.0
  %2062 = vmatpush.xpose.msra.mxu0 0.0
  %2063 = vmatpush.xpose.msra.mxu0 0.0
  %2064 = vmatpush.xpose.msra.mxu0 0.0
  %2065 = vmatpush.xpose.msra.mxu0 0.0
  %2066 = vmatpush.xpose.msra.mxu0 0.0
  %2067 = vmatpush.xpose.msra.mxu0 0.0
  %2068 = vmatpush.xpose.msra.mxu0 0.0
  %2069 = vmatpush.xpose.msra.mxu0 0.0
  %2070 = vmatpush.xpose.msra.mxu0 0.0
  %2071 = vmatpush.xpose.msra.mxu0 0.0
  %v2072 = vand.u32 %v1808, 4294901760
  %v2073 = vsub.f32 %v1808, %v2072
  %2074 = vmatpush.xpose.msra.mxu0 %v2073
  %v2075 = vand.u32 %v1805, 4294901760
  %v2076 = vsub.f32 %v1805, %v2075
  %2077 = vmatpush.xpose.msra.mxu0 %v2076
  %v2078 = vand.u32 %v1802, 4294901760
  %v2079 = vsub.f32 %v1802, %v2078
  %2080 = vmatpush.xpose.msra.mxu0 %v2079
  %v2081 = vand.u32 %v1799, 4294901760
  %v2082 = vsub.f32 %v1799, %v2081
  %2083 = vmatpush.xpose.msra.mxu0 %v2082
  %v2084 = vand.u32 %v1751, 4294901760
  %v2085 = vsub.f32 %v1751, %v2084
  %2086 = vmatmul.f32.gmra.mxu0 %v2085
  %v2087 = vpop.f32.mrf.mxu0
  %v2088 = vadd.f32 %v1998, %v2087
  %v2089 = vand.u32 %v1754, 4294901760
  %v2090 = vsub.f32 %v1754, %v2089
  %2091 = vmatmul.f32.gmra.mxu0 %v2090
  %v2092 = vpop.f32.mrf.mxu0
  %v2093 = vadd.f32 %v2002, %v2092
  %v2094 = vand.u32 %v1757, 4294901760
  %v2095 = vsub.f32 %v1757, %v2094
  %2096 = vmatmul.f32.gmra.mxu0 %v2095
  %v2097 = vpop.f32.mrf.mxu0
  %v2098 = vadd.f32 %v2006, %v2097
  %v2099 = vand.u32 %v1760, 4294901760
  %v2100 = vsub.f32 %v1760, %v2099
  %2101 = vmatmul.f32.gmra.mxu0 %v2100
  %v2102 = vpop.f32.mrf.mxu0
  %v2103 = vadd.f32 %v2010, %v2102
  %v2104 = vand.u32 %v1763, 4294901760
  %v2105 = vsub.f32 %v1763, %v2104
  %2106 = vmatmul.f32.gmra.mxu0 %v2105
  %v2107 = vpop.f32.mrf.mxu0
  %v2108 = vadd.f32 %v2014, %v2107
  %v2109 = vand.u32 %v1766, 4294901760
  %v2110 = vsub.f32 %v1766, %v2109
  %2111 = vmatmul.f32.gmra.mxu0 %v2110
  %v2112 = vpop.f32.mrf.mxu0
  %v2113 = vadd.f32 %v2018, %v2112
  %v2114 = vand.u32 %v1769, 4294901760
  %v2115 = vsub.f32 %v1769, %v2114
  %2116 = vmatmul.f32.gmra.mxu0 %v2115
  %v2117 = vpop.f32.mrf.mxu0
  %v2118 = vadd.f32 %v2022, %v2117
  %v2119 = vand.u32 %v1772, 4294901760
  %v2120 = vsub.f32 %v1772, %v2119
  %2121 = vmatmul.f32.gmra.mxu0 %v2120
  %v2122 = vpop.f32.mrf.mxu0
  %v2123 = vadd.f32 %v2026, %v2122
  %v2124 = vand.u32 %v1775, 4294901760
  %v2125 = vsub.f32 %v1775, %v2124
  %2126 = vmatmul.f32.gmra.mxu0 %v2125
  %v2127 = vpop.f32.mrf.mxu0
  %v2128 = vadd.f32 %v2030, %v2127
  %v2129 = vand.u32 %v1778, 4294901760
  %v2130 = vsub.f32 %v1778, %v2129
  %2131 = vmatmul.f32.gmra.mxu0 %v2130
  %v2132 = vpop.f32.mrf.mxu0
  %v2133 = vadd.f32 %v2034, %v2132
  %v2134 = vand.u32 %v1781, 4294901760
  %v2135 = vsub.f32 %v1781, %v2134
  %2136 = vmatmul.f32.gmra.mxu0 %v2135
  %v2137 = vpop.f32.mrf.mxu0
  %v2138 = vadd.f32 %v2038, %v2137
  %v2139 = vand.u32 %v1784, 4294901760
  %v2140 = vsub.f32 %v1784, %v2139
  %2141 = vmatmul.f32.gmra.mxu0 %v2140
  %v2142 = vpop.f32.mrf.mxu0
  %v2143 = vadd.f32 %v2042, %v2142
  %v2144 = vand.u32 %v1787, 4294901760
  %v2145 = vsub.f32 %v1787, %v2144
  %2146 = vmatmul.f32.gmra.mxu0 %v2145
  %v2147 = vpop.f32.mrf.mxu0
  %v2148 = vadd.f32 %v2046, %v2147
  %v2149 = vand.u32 %v1790, 4294901760
  %v2150 = vsub.f32 %v1790, %v2149
  %2151 = vmatmul.f32.gmra.mxu0 %v2150
  %v2152 = vpop.f32.mrf.mxu0
  %v2153 = vadd.f32 %v2050, %v2152
  %v2154 = vand.u32 %v1793, 4294901760
  %v2155 = vsub.f32 %v1793, %v2154
  %2156 = vmatmul.f32.gmra.mxu0 %v2155
  %v2157 = vpop.f32.mrf.mxu0
  %v2158 = vadd.f32 %v2054, %v2157
  %v2159 = vand.u32 %v1796, 4294901760
  %v2160 = vsub.f32 %v1796, %v2159
  %2161 = vmatmul.f32.gmra.mxu0 %v2160
  %v2162 = vpop.f32.mrf.mxu0
  %v2163 = vadd.f32 %v2058, %v2162
  %2164 = vdwg.mxu0
  %2165 = vmatpush.xpose.msra.mxu0 0.0
  %2166 = vmatpush.xpose.msra.mxu0 0.0
  %2167 = vmatpush.xpose.msra.mxu0 0.0
  %2168 = vmatpush.xpose.msra.mxu0 0.0
  %2169 = vmatpush.xpose.msra.mxu0 0.0
  %2170 = vmatpush.xpose.msra.mxu0 0.0
  %2171 = vmatpush.xpose.msra.mxu0 0.0
  %2172 = vmatpush.xpose.msra.mxu0 0.0
  %2173 = vmatpush.xpose.msra.mxu0 0.0
  %2174 = vmatpush.xpose.msra.mxu0 0.0
  %2175 = vmatpush.xpose.msra.mxu0 0.0
  %2176 = vmatpush.xpose.msra.mxu0 0.0
  %v2177 = vand.u32 %v1808, 4294901760
  %2178 = vmatpush.xpose.msra.mxu0 %v2177
  %v2179 = vand.u32 %v1805, 4294901760
  %2180 = vmatpush.xpose.msra.mxu0 %v2179
  %v2181 = vand.u32 %v1802, 4294901760
  %2182 = vmatpush.xpose.msra.mxu0 %v2181
  %v2183 = vand.u32 %v1799, 4294901760
  %2184 = vmatpush.xpose.msra.mxu0 %v2183
  %v2185 = vand.u32 %v1751, 4294901760
  %v2186 = vsub.f32 %v1751, %v2185
  %v2187 = vand.u32 %v2186, 4294901760
  %2188 = vmatmul.f32.gmra.mxu0 %v2187
  %v2189 = vpop.f32.mrf.mxu0
  %v2190 = vadd.f32 %v2088, %v2189
  %v2191 = vand.u32 %v1754, 4294901760
  %v2192 = vsub.f32 %v1754, %v2191
  %v2193 = vand.u32 %v2192, 4294901760
  %2194 = vmatmul.f32.gmra.mxu0 %v2193
  %v2195 = vpop.f32.mrf.mxu0
  %v2196 = vadd.f32 %v2093, %v2195
  %v2197 = vand.u32 %v1757, 4294901760
  %v2198 = vsub.f32 %v1757, %v2197
  %v2199 = vand.u32 %v2198, 4294901760
  %2200 = vmatmul.f32.gmra.mxu0 %v2199
  %v2201 = vpop.f32.mrf.mxu0
  %v2202 = vadd.f32 %v2098, %v2201
  %v2203 = vand.u32 %v1760, 4294901760
  %v2204 = vsub.f32 %v1760, %v2203
  %v2205 = vand.u32 %v2204, 4294901760
  %2206 = vmatmul.f32.gmra.mxu0 %v2205
  %v2207 = vpop.f32.mrf.mxu0
  %v2208 = vadd.f32 %v2103, %v2207
  %v2209 = vand.u32 %v1763, 4294901760
  %v2210 = vsub.f32 %v1763, %v2209
  %v2211 = vand.u32 %v2210, 4294901760
  %2212 = vmatmul.f32.gmra.mxu0 %v2211
  %v2213 = vpop.f32.mrf.mxu0
  %v2214 = vadd.f32 %v2108, %v2213
  %v2215 = vand.u32 %v1766, 4294901760
  %v2216 = vsub.f32 %v1766, %v2215
  %v2217 = vand.u32 %v2216, 4294901760
  %2218 = vmatmul.f32.gmra.mxu0 %v2217
  %v2219 = vpop.f32.mrf.mxu0
  %v2220 = vadd.f32 %v2113, %v2219
  %v2221 = vand.u32 %v1769, 4294901760
  %v2222 = vsub.f32 %v1769, %v2221
  %v2223 = vand.u32 %v2222, 4294901760
  %2224 = vmatmul.f32.gmra.mxu0 %v2223
  %v2225 = vpop.f32.mrf.mxu0
  %v2226 = vadd.f32 %v2118, %v2225
  %v2227 = vand.u32 %v1772, 4294901760
  %v2228 = vsub.f32 %v1772, %v2227
  %v2229 = vand.u32 %v2228, 4294901760
  %2230 = vmatmul.f32.gmra.mxu0 %v2229
  %v2231 = vpop.f32.mrf.mxu0
  %v2232 = vadd.f32 %v2123, %v2231
  %v2233 = vand.u32 %v1775, 4294901760
  %v2234 = vsub.f32 %v1775, %v2233
  %v2235 = vand.u32 %v2234, 4294901760
  %2236 = vmatmul.f32.gmra.mxu0 %v2235
  %v2237 = vpop.f32.mrf.mxu0
  %v2238 = vadd.f32 %v2128, %v2237
  %v2239 = vand.u32 %v1778, 4294901760
  %v2240 = vsub.f32 %v1778, %v2239
  %v2241 = vand.u32 %v2240, 4294901760
  %2242 = vmatmul.f32.gmra.mxu0 %v2241
  %v2243 = vpop.f32.mrf.mxu0
  %v2244 = vadd.f32 %v2133, %v2243
  %v2245 = vand.u32 %v1781, 4294901760
  %v2246 = vsub.f32 %v1781, %v2245
  %v2247 = vand.u32 %v2246, 4294901760
  %2248 = vmatmul.f32.gmra.mxu0 %v2247
  %v2249 = vpop.f32.mrf.mxu0
  %v2250 = vadd.f32 %v2138, %v2249
  %v2251 = vand.u32 %v1784, 4294901760
  %v2252 = vsub.f32 %v1784, %v2251
  %v2253 = vand.u32 %v2252, 4294901760
  %2254 = vmatmul.f32.gmra.mxu0 %v2253
  %v2255 = vpop.f32.mrf.mxu0
  %v2256 = vadd.f32 %v2143, %v2255
  %v2257 = vand.u32 %v1787, 4294901760
  %v2258 = vsub.f32 %v1787, %v2257
  %v2259 = vand.u32 %v2258, 4294901760
  %2260 = vmatmul.f32.gmra.mxu0 %v2259
  %v2261 = vpop.f32.mrf.mxu0
  %v2262 = vadd.f32 %v2148, %v2261
  %v2263 = vand.u32 %v1790, 4294901760
  %v2264 = vsub.f32 %v1790, %v2263
  %v2265 = vand.u32 %v2264, 4294901760
  %2266 = vmatmul.f32.gmra.mxu0 %v2265
  %v2267 = vpop.f32.mrf.mxu0
  %v2268 = vadd.f32 %v2153, %v2267
  %v2269 = vand.u32 %v1793, 4294901760
  %v2270 = vsub.f32 %v1793, %v2269
  %v2271 = vand.u32 %v2270, 4294901760
  %2272 = vmatmul.f32.gmra.mxu0 %v2271
  %v2273 = vpop.f32.mrf.mxu0
  %v2274 = vadd.f32 %v2158, %v2273
  %v2275 = vand.u32 %v1796, 4294901760
  %v2276 = vsub.f32 %v1796, %v2275
  %v2277 = vand.u32 %v2276, 4294901760
  %2278 = vmatmul.f32.gmra.mxu0 %v2277
  %v2279 = vpop.f32.mrf.mxu0
  %v2280 = vadd.f32 %v2163, %v2279
  %2281 = vdwg.mxu0
  %2282 = vmatpush.xpose.msra.mxu0 0.0
  %2283 = vmatpush.xpose.msra.mxu0 0.0
  %2284 = vmatpush.xpose.msra.mxu0 0.0
  %2285 = vmatpush.xpose.msra.mxu0 0.0
  %2286 = vmatpush.xpose.msra.mxu0 0.0
  %2287 = vmatpush.xpose.msra.mxu0 0.0
  %2288 = vmatpush.xpose.msra.mxu0 0.0
  %2289 = vmatpush.xpose.msra.mxu0 0.0
  %2290 = vmatpush.xpose.msra.mxu0 0.0
  %2291 = vmatpush.xpose.msra.mxu0 0.0
  %2292 = vmatpush.xpose.msra.mxu0 0.0
  %2293 = vmatpush.xpose.msra.mxu0 0.0
  %v2294 = vand.u32 %v1808, 4294901760
  %v2295 = vsub.f32 %v1808, %v2294
  %v2296 = vand.u32 %v2295, 4294901760
  %2297 = vmatpush.xpose.msra.mxu0 %v2296
  %v2298 = vand.u32 %v1805, 4294901760
  %v2299 = vsub.f32 %v1805, %v2298
  %v2300 = vand.u32 %v2299, 4294901760
  %2301 = vmatpush.xpose.msra.mxu0 %v2300
  %v2302 = vand.u32 %v1802, 4294901760
  %v2303 = vsub.f32 %v1802, %v2302
  %v2304 = vand.u32 %v2303, 4294901760
  %2305 = vmatpush.xpose.msra.mxu0 %v2304
  %v2306 = vand.u32 %v1799, 4294901760
  %v2307 = vsub.f32 %v1799, %v2306
  %v2308 = vand.u32 %v2307, 4294901760
  %2309 = vmatpush.xpose.msra.mxu0 %v2308
  %v2310 = vand.u32 %v1751, 4294901760
  %2311 = vmatmul.f32.gmra.mxu0 %v2310
  %v2312 = vpop.f32.mrf.mxu0
  %v2313 = vadd.f32 %v2190, %v2312
  %v2314 = vand.u32 %v1754, 4294901760
  %2315 = vmatmul.f32.gmra.mxu0 %v2314
  %v2316 = vpop.f32.mrf.mxu0
  %v2317 = vadd.f32 %v2196, %v2316
  %v2318 = vand.u32 %v1757, 4294901760
  %2319 = vmatmul.f32.gmra.mxu0 %v2318
  %v2320 = vpop.f32.mrf.mxu0
  %v2321 = vadd.f32 %v2202, %v2320
  %v2322 = vand.u32 %v1760, 4294901760
  %2323 = vmatmul.f32.gmra.mxu0 %v2322
  %v2324 = vpop.f32.mrf.mxu0
  %v2325 = vadd.f32 %v2208, %v2324
  %v2326 = vand.u32 %v1763, 4294901760
  %2327 = vmatmul.f32.gmra.mxu0 %v2326
  %v2328 = vpop.f32.mrf.mxu0
  %v2329 = vadd.f32 %v2214, %v2328
  %v2330 = vand.u32 %v1766, 4294901760
  %2331 = vmatmul.f32.gmra.mxu0 %v2330
  %v2332 = vpop.f32.mrf.mxu0
  %v2333 = vadd.f32 %v2220, %v2332
  %v2334 = vand.u32 %v1769, 4294901760
  %2335 = vmatmul.f32.gmra.mxu0 %v2334
  %v2336 = vpop.f32.mrf.mxu0
  %v2337 = vadd.f32 %v2226, %v2336
  %v2338 = vand.u32 %v1772, 4294901760
  %2339 = vmatmul.f32.gmra.mxu0 %v2338
  %v2340 = vpop.f32.mrf.mxu0
  %v2341 = vadd.f32 %v2232, %v2340
  %v2342 = vand.u32 %v1775, 4294901760
  %2343 = vmatmul.f32.gmra.mxu0 %v2342
  %v2344 = vpop.f32.mrf.mxu0
  %v2345 = vadd.f32 %v2238, %v2344
  %v2346 = vand.u32 %v1778, 4294901760
  %2347 = vmatmul.f32.gmra.mxu0 %v2346
  %v2348 = vpop.f32.mrf.mxu0
  %v2349 = vadd.f32 %v2244, %v2348
  %v2350 = vand.u32 %v1781, 4294901760
  %2351 = vmatmul.f32.gmra.mxu0 %v2350
  %v2352 = vpop.f32.mrf.mxu0
  %v2353 = vadd.f32 %v2250, %v2352
  %v2354 = vand.u32 %v1784, 4294901760
  %2355 = vmatmul.f32.gmra.mxu0 %v2354
  %v2356 = vpop.f32.mrf.mxu0
  %v2357 = vadd.f32 %v2256, %v2356
  %v2358 = vand.u32 %v1787, 4294901760
  %2359 = vmatmul.f32.gmra.mxu0 %v2358
  %v2360 = vpop.f32.mrf.mxu0
  %v2361 = vadd.f32 %v2262, %v2360
  %v2362 = vand.u32 %v1790, 4294901760
  %2363 = vmatmul.f32.gmra.mxu0 %v2362
  %v2364 = vpop.f32.mrf.mxu0
  %v2365 = vadd.f32 %v2268, %v2364
  %v2366 = vand.u32 %v1793, 4294901760
  %2367 = vmatmul.f32.gmra.mxu0 %v2366
  %v2368 = vpop.f32.mrf.mxu0
  %v2369 = vadd.f32 %v2274, %v2368
  %v2370 = vand.u32 %v1796, 4294901760
  %2371 = vmatmul.f32.gmra.mxu0 %v2370
  %v2372 = vpop.f32.mrf.mxu0
  %v2373 = vadd.f32 %v2280, %v2372
  %2374 = vdwg.mxu0
  %2375 = vmatpush.xpose.msra.mxu0 0.0
  %2376 = vmatpush.xpose.msra.mxu0 0.0
  %2377 = vmatpush.xpose.msra.mxu0 0.0
  %2378 = vmatpush.xpose.msra.mxu0 0.0
  %2379 = vmatpush.xpose.msra.mxu0 0.0
  %2380 = vmatpush.xpose.msra.mxu0 0.0
  %2381 = vmatpush.xpose.msra.mxu0 0.0
  %2382 = vmatpush.xpose.msra.mxu0 0.0
  %2383 = vmatpush.xpose.msra.mxu0 0.0
  %2384 = vmatpush.xpose.msra.mxu0 0.0
  %2385 = vmatpush.xpose.msra.mxu0 0.0
  %2386 = vmatpush.xpose.msra.mxu0 0.0
  %v2387 = vand.u32 %v1808, 4294901760
  %2388 = vmatpush.xpose.msra.mxu0 %v2387
  %v2389 = vand.u32 %v1805, 4294901760
  %2390 = vmatpush.xpose.msra.mxu0 %v2389
  %v2391 = vand.u32 %v1802, 4294901760
  %2392 = vmatpush.xpose.msra.mxu0 %v2391
  %v2393 = vand.u32 %v1799, 4294901760
  %2394 = vmatpush.xpose.msra.mxu0 %v2393
  %v2395 = vand.u32 %v1751, 4294901760
  %2396 = vmatmul.f32.gmra.mxu0 %v2395
  %v2397 = vpop.f32.mrf.mxu0
  %v2398 = vadd.f32 %v2313, %v2397
  %v2399 = vand.u32 %v1754, 4294901760
  %2400 = vmatmul.f32.gmra.mxu0 %v2399
  %v2401 = vpop.f32.mrf.mxu0
  %v2402 = vadd.f32 %v2317, %v2401
  %v2403 = vand.u32 %v1757, 4294901760
  %2404 = vmatmul.f32.gmra.mxu0 %v2403
  %v2405 = vpop.f32.mrf.mxu0
  %v2406 = vadd.f32 %v2321, %v2405
  %v2407 = vand.u32 %v1760, 4294901760
  %2408 = vmatmul.f32.gmra.mxu0 %v2407
  %v2409 = vpop.f32.mrf.mxu0
  %v2410 = vadd.f32 %v2325, %v2409
  %v2411 = vand.u32 %v1763, 4294901760
  %2412 = vmatmul.f32.gmra.mxu0 %v2411
  %v2413 = vpop.f32.mrf.mxu0
  %v2414 = vadd.f32 %v2329, %v2413
  %v2415 = vand.u32 %v1766, 4294901760
  %2416 = vmatmul.f32.gmra.mxu0 %v2415
  %v2417 = vpop.f32.mrf.mxu0
  %v2418 = vadd.f32 %v2333, %v2417
  %v2419 = vand.u32 %v1769, 4294901760
  %2420 = vmatmul.f32.gmra.mxu0 %v2419
  %v2421 = vpop.f32.mrf.mxu0
  %v2422 = vadd.f32 %v2337, %v2421
  %v2423 = vand.u32 %v1772, 4294901760
  %2424 = vmatmul.f32.gmra.mxu0 %v2423
  %v2425 = vpop.f32.mrf.mxu0
  %v2426 = vadd.f32 %v2341, %v2425
  %v2427 = vand.u32 %v1775, 4294901760
  %2428 = vmatmul.f32.gmra.mxu0 %v2427
  %v2429 = vpop.f32.mrf.mxu0
  %v2430 = vadd.f32 %v2345, %v2429
  %v2431 = vand.u32 %v1778, 4294901760
  %2432 = vmatmul.f32.gmra.mxu0 %v2431
  %v2433 = vpop.f32.mrf.mxu0
  %v2434 = vadd.f32 %v2349, %v2433
  %v2435 = vand.u32 %v1781, 4294901760
  %2436 = vmatmul.f32.gmra.mxu0 %v2435
  %v2437 = vpop.f32.mrf.mxu0
  %v2438 = vadd.f32 %v2353, %v2437
  %v2439 = vand.u32 %v1784, 4294901760
  %2440 = vmatmul.f32.gmra.mxu0 %v2439
  %v2441 = vpop.f32.mrf.mxu0
  %v2442 = vadd.f32 %v2357, %v2441
  %v2443 = vand.u32 %v1787, 4294901760
  %2444 = vmatmul.f32.gmra.mxu0 %v2443
  %v2445 = vpop.f32.mrf.mxu0
  %v2446 = vadd.f32 %v2361, %v2445
  %v2447 = vand.u32 %v1790, 4294901760
  %2448 = vmatmul.f32.gmra.mxu0 %v2447
  %v2449 = vpop.f32.mrf.mxu0
  %v2450 = vadd.f32 %v2365, %v2449
  %v2451 = vand.u32 %v1793, 4294901760
  %2452 = vmatmul.f32.gmra.mxu0 %v2451
  %v2453 = vpop.f32.mrf.mxu0
  %v2454 = vadd.f32 %v2369, %v2453
  %v2455 = vand.u32 %v1796, 4294901760
  %2456 = vmatmul.f32.gmra.mxu0 %v2455
  %v2457 = vpop.f32.mrf.mxu0
  %v2458 = vadd.f32 %v2373, %v2457
  %2459 = vdwg.mxu0
  %v2460 = vmax.f32 %v2398, 0.0
  %v2461 = vmax.f32 %v2402, 0.0
  %v2462 = vmax.f32 %v2406, 0.0
  %v2463 = vmax.f32 %v2410, 0.0
  %v2464 = vmax.f32 %v2414, 0.0
  %v2465 = vmax.f32 %v2418, 0.0
  %v2466 = vmax.f32 %v2422, 0.0
  %v2467 = vmax.f32 %v2426, 0.0
  %v2468 = vmax.f32 %v2430, 0.0
  %v2469 = vmax.f32 %v2434, 0.0
  %v2470 = vmax.f32 %v2438, 0.0
  %v2471 = vmax.f32 %v2442, 0.0
  %v2472 = vmax.f32 %v2446, 0.0
  %v2473 = vmax.f32 %v2450, 0.0
  %v2474 = vmax.f32 %v2454, 0.0
  %v2475 = vmax.f32 %v2458, 0.0
  %v2476 = vld [vmem:[%s7] sm:$0xff]
  %v2477 = vld [vmem:[%s7 + $0x8] sm:$0x3]
  %v2478 = vld [vmem:[%s8] sm:$0x1]
  %v2480 = vperm.slane %v2478, 0
  %vm2482 = vcmask 261120
  %v2484 = vsel %vm2482, %v2460, 0
  %v2487 = vsel %vm2482, %v2461, 0
  %v2490 = vsel %vm2482, %v2462, 0
  %v2493 = vsel %vm2482, %v2463, 0
  %v2496 = vsel %vm2482, %v2464, 0
  %v2499 = vsel %vm2482, %v2465, 0
  %v2502 = vsel %vm2482, %v2466, 0
  %v2505 = vsel %vm2482, %v2467, 0
  %v2508 = vsel %vm2482, %v2468, 0
  %v2511 = vsel %vm2482, %v2469, 0
  %v2514 = vsel %vm2482, %v2470, 0
  %v2517 = vsel %vm2482, %v2471, 0
  %v2520 = vsel %vm2482, %v2472, 0
  %v2523 = vsel %vm2482, %v2473, 0
  %v2526 = vsel %vm2482, %v2474, 0
  %v2529 = vsel %vm2482, %v2475, 0
  %v2532 = vsel %vm2482, %v2476, 0
  %v2535 = vsel %vm2482, %v2477, 0
  %2537 = vmatpush.xpose.msra.mxu0 0.0
  %2538 = vmatpush.xpose.msra.mxu0 0.0
  %2539 = vmatpush.xpose.msra.mxu0 0.0
  %2540 = vmatpush.xpose.msra.mxu0 0.0
  %2541 = vmatpush.xpose.msra.mxu0 0.0
  %2542 = vmatpush.xpose.msra.mxu0 0.0
  %2543 = vmatpush.xpose.msra.mxu0 0.0
  %2544 = vmatpush.xpose.msra.mxu0 0.0
  %2545 = vmatpush.xpose.msra.mxu0 0.0
  %2546 = vmatpush.xpose.msra.mxu0 0.0
  %2547 = vmatpush.xpose.msra.mxu0 0.0
  %2548 = vmatpush.xpose.msra.mxu0 0.0
  %2549 = vmatpush.xpose.msra.mxu0 0.0
  %2550 = vmatpush.xpose.msra.mxu0 0.0
  %v2551 = vand.u32 %v2535, 4294901760
  %2552 = vmatpush.xpose.msra.mxu0 %v2551
  %v2553 = vand.u32 %v2532, 4294901760
  %2554 = vmatpush.xpose.msra.mxu0 %v2553
  %v2555 = vand.u32 %v2484, 4294901760
  %v2556 = vsub.f32 %v2484, %v2555
  %v2557 = vand.u32 %v2556, 4294901760
  %v2558 = vsub.f32 %v2556, %v2557
  %v2559 = vand.u32 %v2558, 4294901760
  %2560 = vmatmul.f32.gmra.mxu0 %v2559
  %v2561 = vpop.f32.mrf.mxu0
  %v2562 = vadd.f32 %v2480, %v2561
  %v2563 = vand.u32 %v2487, 4294901760
  %v2564 = vsub.f32 %v2487, %v2563
  %v2565 = vand.u32 %v2564, 4294901760
  %v2566 = vsub.f32 %v2564, %v2565
  %v2567 = vand.u32 %v2566, 4294901760
  %2568 = vmatmul.f32.gmra.mxu0 %v2567
  %v2569 = vpop.f32.mrf.mxu0
  %v2570 = vadd.f32 %v2480, %v2569
  %v2571 = vand.u32 %v2490, 4294901760
  %v2572 = vsub.f32 %v2490, %v2571
  %v2573 = vand.u32 %v2572, 4294901760
  %v2574 = vsub.f32 %v2572, %v2573
  %v2575 = vand.u32 %v2574, 4294901760
  %2576 = vmatmul.f32.gmra.mxu0 %v2575
  %v2577 = vpop.f32.mrf.mxu0
  %v2578 = vadd.f32 %v2480, %v2577
  %v2579 = vand.u32 %v2493, 4294901760
  %v2580 = vsub.f32 %v2493, %v2579
  %v2581 = vand.u32 %v2580, 4294901760
  %v2582 = vsub.f32 %v2580, %v2581
  %v2583 = vand.u32 %v2582, 4294901760
  %2584 = vmatmul.f32.gmra.mxu0 %v2583
  %v2585 = vpop.f32.mrf.mxu0
  %v2586 = vadd.f32 %v2480, %v2585
  %v2587 = vand.u32 %v2496, 4294901760
  %v2588 = vsub.f32 %v2496, %v2587
  %v2589 = vand.u32 %v2588, 4294901760
  %v2590 = vsub.f32 %v2588, %v2589
  %v2591 = vand.u32 %v2590, 4294901760
  %2592 = vmatmul.f32.gmra.mxu0 %v2591
  %v2593 = vpop.f32.mrf.mxu0
  %v2594 = vadd.f32 %v2480, %v2593
  %v2595 = vand.u32 %v2499, 4294901760
  %v2596 = vsub.f32 %v2499, %v2595
  %v2597 = vand.u32 %v2596, 4294901760
  %v2598 = vsub.f32 %v2596, %v2597
  %v2599 = vand.u32 %v2598, 4294901760
  %2600 = vmatmul.f32.gmra.mxu0 %v2599
  %v2601 = vpop.f32.mrf.mxu0
  %v2602 = vadd.f32 %v2480, %v2601
  %v2603 = vand.u32 %v2502, 4294901760
  %v2604 = vsub.f32 %v2502, %v2603
  %v2605 = vand.u32 %v2604, 4294901760
  %v2606 = vsub.f32 %v2604, %v2605
  %v2607 = vand.u32 %v2606, 4294901760
  %2608 = vmatmul.f32.gmra.mxu0 %v2607
  %v2609 = vpop.f32.mrf.mxu0
  %v2610 = vadd.f32 %v2480, %v2609
  %v2611 = vand.u32 %v2505, 4294901760
  %v2612 = vsub.f32 %v2505, %v2611
  %v2613 = vand.u32 %v2612, 4294901760
  %v2614 = vsub.f32 %v2612, %v2613
  %v2615 = vand.u32 %v2614, 4294901760
  %2616 = vmatmul.f32.gmra.mxu0 %v2615
  %v2617 = vpop.f32.mrf.mxu0
  %v2618 = vadd.f32 %v2480, %v2617
  %v2619 = vand.u32 %v2508, 4294901760
  %v2620 = vsub.f32 %v2508, %v2619
  %v2621 = vand.u32 %v2620, 4294901760
  %v2622 = vsub.f32 %v2620, %v2621
  %v2623 = vand.u32 %v2622, 4294901760
  %2624 = vmatmul.f32.gmra.mxu0 %v2623
  %v2625 = vpop.f32.mrf.mxu0
  %v2626 = vadd.f32 %v2480, %v2625
  %v2627 = vand.u32 %v2511, 4294901760
  %v2628 = vsub.f32 %v2511, %v2627
  %v2629 = vand.u32 %v2628, 4294901760
  %v2630 = vsub.f32 %v2628, %v2629
  %v2631 = vand.u32 %v2630, 4294901760
  %2632 = vmatmul.f32.gmra.mxu0 %v2631
  %v2633 = vpop.f32.mrf.mxu0
  %v2634 = vadd.f32 %v2480, %v2633
  %v2635 = vand.u32 %v2514, 4294901760
  %v2636 = vsub.f32 %v2514, %v2635
  %v2637 = vand.u32 %v2636, 4294901760
  %v2638 = vsub.f32 %v2636, %v2637
  %v2639 = vand.u32 %v2638, 4294901760
  %2640 = vmatmul.f32.gmra.mxu0 %v2639
  %v2641 = vpop.f32.mrf.mxu0
  %v2642 = vadd.f32 %v2480, %v2641
  %v2643 = vand.u32 %v2517, 4294901760
  %v2644 = vsub.f32 %v2517, %v2643
  %v2645 = vand.u32 %v2644, 4294901760
  %v2646 = vsub.f32 %v2644, %v2645
  %v2647 = vand.u32 %v2646, 4294901760
  %2648 = vmatmul.f32.gmra.mxu0 %v2647
  %v2649 = vpop.f32.mrf.mxu0
  %v2650 = vadd.f32 %v2480, %v2649
  %v2651 = vand.u32 %v2520, 4294901760
  %v2652 = vsub.f32 %v2520, %v2651
  %v2653 = vand.u32 %v2652, 4294901760
  %v2654 = vsub.f32 %v2652, %v2653
  %v2655 = vand.u32 %v2654, 4294901760
  %2656 = vmatmul.f32.gmra.mxu0 %v2655
  %v2657 = vpop.f32.mrf.mxu0
  %v2658 = vadd.f32 %v2480, %v2657
  %v2659 = vand.u32 %v2523, 4294901760
  %v2660 = vsub.f32 %v2523, %v2659
  %v2661 = vand.u32 %v2660, 4294901760
  %v2662 = vsub.f32 %v2660, %v2661
  %v2663 = vand.u32 %v2662, 4294901760
  %2664 = vmatmul.f32.gmra.mxu0 %v2663
  %v2665 = vpop.f32.mrf.mxu0
  %v2666 = vadd.f32 %v2480, %v2665
  %v2667 = vand.u32 %v2526, 4294901760
  %v2668 = vsub.f32 %v2526, %v2667
  %v2669 = vand.u32 %v2668, 4294901760
  %v2670 = vsub.f32 %v2668, %v2669
  %v2671 = vand.u32 %v2670, 4294901760
  %2672 = vmatmul.f32.gmra.mxu0 %v2671
  %v2673 = vpop.f32.mrf.mxu0
  %v2674 = vadd.f32 %v2480, %v2673
  %v2675 = vand.u32 %v2529, 4294901760
  %v2676 = vsub.f32 %v2529, %v2675
  %v2677 = vand.u32 %v2676, 4294901760
  %v2678 = vsub.f32 %v2676, %v2677
  %v2679 = vand.u32 %v2678, 4294901760
  %2680 = vmatmul.f32.gmra.mxu0 %v2679
  %v2681 = vpop.f32.mrf.mxu0
  %v2682 = vadd.f32 %v2480, %v2681
  %2683 = vdwg.mxu0
  %2684 = vmatpush.xpose.msra.mxu0 0.0
  %2685 = vmatpush.xpose.msra.mxu0 0.0
  %2686 = vmatpush.xpose.msra.mxu0 0.0
  %2687 = vmatpush.xpose.msra.mxu0 0.0
  %2688 = vmatpush.xpose.msra.mxu0 0.0
  %2689 = vmatpush.xpose.msra.mxu0 0.0
  %2690 = vmatpush.xpose.msra.mxu0 0.0
  %2691 = vmatpush.xpose.msra.mxu0 0.0
  %2692 = vmatpush.xpose.msra.mxu0 0.0
  %2693 = vmatpush.xpose.msra.mxu0 0.0
  %2694 = vmatpush.xpose.msra.mxu0 0.0
  %2695 = vmatpush.xpose.msra.mxu0 0.0
  %2696 = vmatpush.xpose.msra.mxu0 0.0
  %2697 = vmatpush.xpose.msra.mxu0 0.0
  %v2698 = vand.u32 %v2535, 4294901760
  %v2699 = vsub.f32 %v2535, %v2698
  %v2700 = vand.u32 %v2699, 4294901760
  %v2701 = vsub.f32 %v2699, %v2700
  %v2702 = vand.u32 %v2701, 4294901760
  %2703 = vmatpush.xpose.msra.mxu0 %v2702
  %v2704 = vand.u32 %v2532, 4294901760
  %v2705 = vsub.f32 %v2532, %v2704
  %v2706 = vand.u32 %v2705, 4294901760
  %v2707 = vsub.f32 %v2705, %v2706
  %v2708 = vand.u32 %v2707, 4294901760
  %2709 = vmatpush.xpose.msra.mxu0 %v2708
  %v2710 = vand.u32 %v2484, 4294901760
  %2711 = vmatmul.f32.gmra.mxu0 %v2710
  %v2712 = vpop.f32.mrf.mxu0
  %v2713 = vadd.f32 %v2562, %v2712
  %v2714 = vand.u32 %v2487, 4294901760
  %2715 = vmatmul.f32.gmra.mxu0 %v2714
  %v2716 = vpop.f32.mrf.mxu0
  %v2717 = vadd.f32 %v2570, %v2716
  %v2718 = vand.u32 %v2490, 4294901760
  %2719 = vmatmul.f32.gmra.mxu0 %v2718
  %v2720 = vpop.f32.mrf.mxu0
  %v2721 = vadd.f32 %v2578, %v2720
  %v2722 = vand.u32 %v2493, 4294901760
  %2723 = vmatmul.f32.gmra.mxu0 %v2722
  %v2724 = vpop.f32.mrf.mxu0
  %v2725 = vadd.f32 %v2586, %v2724
  %v2726 = vand.u32 %v2496, 4294901760
  %2727 = vmatmul.f32.gmra.mxu0 %v2726
  %v2728 = vpop.f32.mrf.mxu0
  %v2729 = vadd.f32 %v2594, %v2728
  %v2730 = vand.u32 %v2499, 4294901760
  %2731 = vmatmul.f32.gmra.mxu0 %v2730
  %v2732 = vpop.f32.mrf.mxu0
  %v2733 = vadd.f32 %v2602, %v2732
  %v2734 = vand.u32 %v2502, 4294901760
  %2735 = vmatmul.f32.gmra.mxu0 %v2734
  %v2736 = vpop.f32.mrf.mxu0
  %v2737 = vadd.f32 %v2610, %v2736
  %v2738 = vand.u32 %v2505, 4294901760
  %2739 = vmatmul.f32.gmra.mxu0 %v2738
  %v2740 = vpop.f32.mrf.mxu0
  %v2741 = vadd.f32 %v2618, %v2740
  %v2742 = vand.u32 %v2508, 4294901760
  %2743 = vmatmul.f32.gmra.mxu0 %v2742
  %v2744 = vpop.f32.mrf.mxu0
  %v2745 = vadd.f32 %v2626, %v2744
  %v2746 = vand.u32 %v2511, 4294901760
  %2747 = vmatmul.f32.gmra.mxu0 %v2746
  %v2748 = vpop.f32.mrf.mxu0
  %v2749 = vadd.f32 %v2634, %v2748
  %v2750 = vand.u32 %v2514, 4294901760
  %2751 = vmatmul.f32.gmra.mxu0 %v2750
  %v2752 = vpop.f32.mrf.mxu0
  %v2753 = vadd.f32 %v2642, %v2752
  %v2754 = vand.u32 %v2517, 4294901760
  %2755 = vmatmul.f32.gmra.mxu0 %v2754
  %v2756 = vpop.f32.mrf.mxu0
  %v2757 = vadd.f32 %v2650, %v2756
  %v2758 = vand.u32 %v2520, 4294901760
  %2759 = vmatmul.f32.gmra.mxu0 %v2758
  %v2760 = vpop.f32.mrf.mxu0
  %v2761 = vadd.f32 %v2658, %v2760
  %v2762 = vand.u32 %v2523, 4294901760
  %2763 = vmatmul.f32.gmra.mxu0 %v2762
  %v2764 = vpop.f32.mrf.mxu0
  %v2765 = vadd.f32 %v2666, %v2764
  %v2766 = vand.u32 %v2526, 4294901760
  %2767 = vmatmul.f32.gmra.mxu0 %v2766
  %v2768 = vpop.f32.mrf.mxu0
  %v2769 = vadd.f32 %v2674, %v2768
  %v2770 = vand.u32 %v2529, 4294901760
  %2771 = vmatmul.f32.gmra.mxu0 %v2770
  %v2772 = vpop.f32.mrf.mxu0
  %v2773 = vadd.f32 %v2682, %v2772
  %2774 = vdwg.mxu0
  %2775 = vmatpush.xpose.msra.mxu0 0.0
  %2776 = vmatpush.xpose.msra.mxu0 0.0
  %2777 = vmatpush.xpose.msra.mxu0 0.0
  %2778 = vmatpush.xpose.msra.mxu0 0.0
  %2779 = vmatpush.xpose.msra.mxu0 0.0
  %2780 = vmatpush.xpose.msra.mxu0 0.0
  %2781 = vmatpush.xpose.msra.mxu0 0.0
  %2782 = vmatpush.xpose.msra.mxu0 0.0
  %2783 = vmatpush.xpose.msra.mxu0 0.0
  %2784 = vmatpush.xpose.msra.mxu0 0.0
  %2785 = vmatpush.xpose.msra.mxu0 0.0
  %2786 = vmatpush.xpose.msra.mxu0 0.0
  %2787 = vmatpush.xpose.msra.mxu0 0.0
  %2788 = vmatpush.xpose.msra.mxu0 0.0
  %v2789 = vand.u32 %v2535, 4294901760
  %v2790 = vsub.f32 %v2535, %v2789
  %2791 = vmatpush.xpose.msra.mxu0 %v2790
  %v2792 = vand.u32 %v2532, 4294901760
  %v2793 = vsub.f32 %v2532, %v2792
  %2794 = vmatpush.xpose.msra.mxu0 %v2793
  %v2795 = vand.u32 %v2484, 4294901760
  %v2796 = vsub.f32 %v2484, %v2795
  %2797 = vmatmul.f32.gmra.mxu0 %v2796
  %v2798 = vpop.f32.mrf.mxu0
  %v2799 = vadd.f32 %v2713, %v2798
  %v2800 = vand.u32 %v2487, 4294901760
  %v2801 = vsub.f32 %v2487, %v2800
  %2802 = vmatmul.f32.gmra.mxu0 %v2801
  %v2803 = vpop.f32.mrf.mxu0
  %v2804 = vadd.f32 %v2717, %v2803
  %v2805 = vand.u32 %v2490, 4294901760
  %v2806 = vsub.f32 %v2490, %v2805
  %2807 = vmatmul.f32.gmra.mxu0 %v2806
  %v2808 = vpop.f32.mrf.mxu0
  %v2809 = vadd.f32 %v2721, %v2808
  %v2810 = vand.u32 %v2493, 4294901760
  %v2811 = vsub.f32 %v2493, %v2810
  %2812 = vmatmul.f32.gmra.mxu0 %v2811
  %v2813 = vpop.f32.mrf.mxu0
  %v2814 = vadd.f32 %v2725, %v2813
  %v2815 = vand.u32 %v2496, 4294901760
  %v2816 = vsub.f32 %v2496, %v2815
  %2817 = vmatmul.f32.gmra.mxu0 %v2816
  %v2818 = vpop.f32.mrf.mxu0
  %v2819 = vadd.f32 %v2729, %v2818
  %v2820 = vand.u32 %v2499, 4294901760
  %v2821 = vsub.f32 %v2499, %v2820
  %2822 = vmatmul.f32.gmra.mxu0 %v2821
  %v2823 = vpop.f32.mrf.mxu0
  %v2824 = vadd.f32 %v2733, %v2823
  %v2825 = vand.u32 %v2502, 4294901760
  %v2826 = vsub.f32 %v2502, %v2825
  %2827 = vmatmul.f32.gmra.mxu0 %v2826
  %v2828 = vpop.f32.mrf.mxu0
  %v2829 = vadd.f32 %v2737, %v2828
  %v2830 = vand.u32 %v2505, 4294901760
  %v2831 = vsub.f32 %v2505, %v2830
  %2832 = vmatmul.f32.gmra.mxu0 %v2831
  %v2833 = vpop.f32.mrf.mxu0
  %v2834 = vadd.f32 %v2741, %v2833
  %v2835 = vand.u32 %v2508, 4294901760
  %v2836 = vsub.f32 %v2508, %v2835
  %2837 = vmatmul.f32.gmra.mxu0 %v2836
  %v2838 = vpop.f32.mrf.mxu0
  %v2839 = vadd.f32 %v2745, %v2838
  %v2840 = vand.u32 %v2511, 4294901760
  %v2841 = vsub.f32 %v2511, %v2840
  %2842 = vmatmul.f32.gmra.mxu0 %v2841
  %v2843 = vpop.f32.mrf.mxu0
  %v2844 = vadd.f32 %v2749, %v2843
  %v2845 = vand.u32 %v2514, 4294901760
  %v2846 = vsub.f32 %v2514, %v2845
  %2847 = vmatmul.f32.gmra.mxu0 %v2846
  %v2848 = vpop.f32.mrf.mxu0
  %v2849 = vadd.f32 %v2753, %v2848
  %v2850 = vand.u32 %v2517, 4294901760
  %v2851 = vsub.f32 %v2517, %v2850
  %2852 = vmatmul.f32.gmra.mxu0 %v2851
  %v2853 = vpop.f32.mrf.mxu0
  %v2854 = vadd.f32 %v2757, %v2853
  %v2855 = vand.u32 %v2520, 4294901760
  %v2856 = vsub.f32 %v2520, %v2855
  %2857 = vmatmul.f32.gmra.mxu0 %v2856
  %v2858 = vpop.f32.mrf.mxu0
  %v2859 = vadd.f32 %v2761, %v2858
  %v2860 = vand.u32 %v2523, 4294901760
  %v2861 = vsub.f32 %v2523, %v2860
  %2862 = vmatmul.f32.gmra.mxu0 %v2861
  %v2863 = vpop.f32.mrf.mxu0
  %v2864 = vadd.f32 %v2765, %v2863
  %v2865 = vand.u32 %v2526, 4294901760
  %v2866 = vsub.f32 %v2526, %v2865
  %2867 = vmatmul.f32.gmra.mxu0 %v2866
  %v2868 = vpop.f32.mrf.mxu0
  %v2869 = vadd.f32 %v2769, %v2868
  %v2870 = vand.u32 %v2529, 4294901760
  %v2871 = vsub.f32 %v2529, %v2870
  %2872 = vmatmul.f32.gmra.mxu0 %v2871
  %v2873 = vpop.f32.mrf.mxu0
  %v2874 = vadd.f32 %v2773, %v2873
  %2875 = vdwg.mxu0
  %2876 = vmatpush.xpose.msra.mxu0 0.0
  %2877 = vmatpush.xpose.msra.mxu0 0.0
  %2878 = vmatpush.xpose.msra.mxu0 0.0
  %2879 = vmatpush.xpose.msra.mxu0 0.0
  %2880 = vmatpush.xpose.msra.mxu0 0.0
  %2881 = vmatpush.xpose.msra.mxu0 0.0
  %2882 = vmatpush.xpose.msra.mxu0 0.0
  %2883 = vmatpush.xpose.msra.mxu0 0.0
  %2884 = vmatpush.xpose.msra.mxu0 0.0
  %2885 = vmatpush.xpose.msra.mxu0 0.0
  %2886 = vmatpush.xpose.msra.mxu0 0.0
  %2887 = vmatpush.xpose.msra.mxu0 0.0
  %2888 = vmatpush.xpose.msra.mxu0 0.0
  %2889 = vmatpush.xpose.msra.mxu0 0.0
  %v2890 = vand.u32 %v2535, 4294901760
  %2891 = vmatpush.xpose.msra.mxu0 %v2890
  %v2892 = vand.u32 %v2532, 4294901760
  %2893 = vmatpush.xpose.msra.mxu0 %v2892
  %v2894 = vand.u32 %v2484, 4294901760
  %v2895 = vsub.f32 %v2484, %v2894
  %v2896 = vand.u32 %v2895, 4294901760
  %2897 = vmatmul.f32.gmra.mxu0 %v2896
  %v2898 = vpop.f32.mrf.mxu0
  %v2899 = vadd.f32 %v2799, %v2898
  %v2900 = vand.u32 %v2487, 4294901760
  %v2901 = vsub.f32 %v2487, %v2900
  %v2902 = vand.u32 %v2901, 4294901760
  %2903 = vmatmul.f32.gmra.mxu0 %v2902
  %v2904 = vpop.f32.mrf.mxu0
  %v2905 = vadd.f32 %v2804, %v2904
  %v2906 = vand.u32 %v2490, 4294901760
  %v2907 = vsub.f32 %v2490, %v2906
  %v2908 = vand.u32 %v2907, 4294901760
  %2909 = vmatmul.f32.gmra.mxu0 %v2908
  %v2910 = vpop.f32.mrf.mxu0
  %v2911 = vadd.f32 %v2809, %v2910
  %v2912 = vand.u32 %v2493, 4294901760
  %v2913 = vsub.f32 %v2493, %v2912
  %v2914 = vand.u32 %v2913, 4294901760
  %2915 = vmatmul.f32.gmra.mxu0 %v2914
  %v2916 = vpop.f32.mrf.mxu0
  %v2917 = vadd.f32 %v2814, %v2916
  %v2918 = vand.u32 %v2496, 4294901760
  %v2919 = vsub.f32 %v2496, %v2918
  %v2920 = vand.u32 %v2919, 4294901760
  %2921 = vmatmul.f32.gmra.mxu0 %v2920
  %v2922 = vpop.f32.mrf.mxu0
  %v2923 = vadd.f32 %v2819, %v2922
  %v2924 = vand.u32 %v2499, 4294901760
  %v2925 = vsub.f32 %v2499, %v2924
  %v2926 = vand.u32 %v2925, 4294901760
  %2927 = vmatmul.f32.gmra.mxu0 %v2926
  %v2928 = vpop.f32.mrf.mxu0
  %v2929 = vadd.f32 %v2824, %v2928
  %v2930 = vand.u32 %v2502, 4294901760
  %v2931 = vsub.f32 %v2502, %v2930
  %v2932 = vand.u32 %v2931, 4294901760
  %2933 = vmatmul.f32.gmra.mxu0 %v2932
  %v2934 = vpop.f32.mrf.mxu0
  %v2935 = vadd.f32 %v2829, %v2934
  %v2936 = vand.u32 %v2505, 4294901760
  %v2937 = vsub.f32 %v2505, %v2936
  %v2938 = vand.u32 %v2937, 4294901760
  %2939 = vmatmul.f32.gmra.mxu0 %v2938
  %v2940 = vpop.f32.mrf.mxu0
  %v2941 = vadd.f32 %v2834, %v2940
  %v2942 = vand.u32 %v2508, 4294901760
  %v2943 = vsub.f32 %v2508, %v2942
  %v2944 = vand.u32 %v2943, 4294901760
  %2945 = vmatmul.f32.gmra.mxu0 %v2944
  %v2946 = vpop.f32.mrf.mxu0
  %v2947 = vadd.f32 %v2839, %v2946
  %v2948 = vand.u32 %v2511, 4294901760
  %v2949 = vsub.f32 %v2511, %v2948
  %v2950 = vand.u32 %v2949, 4294901760
  %2951 = vmatmul.f32.gmra.mxu0 %v2950
  %v2952 = vpop.f32.mrf.mxu0
  %v2953 = vadd.f32 %v2844, %v2952
  %v2954 = vand.u32 %v2514, 4294901760
  %v2955 = vsub.f32 %v2514, %v2954
  %v2956 = vand.u32 %v2955, 4294901760
  %2957 = vmatmul.f32.gmra.mxu0 %v2956
  %v2958 = vpop.f32.mrf.mxu0
  %v2959 = vadd.f32 %v2849, %v2958
  %v2960 = vand.u32 %v2517, 4294901760
  %v2961 = vsub.f32 %v2517, %v2960
  %v2962 = vand.u32 %v2961, 4294901760
  %2963 = vmatmul.f32.gmra.mxu0 %v2962
  %v2964 = vpop.f32.mrf.mxu0
  %v2965 = vadd.f32 %v2854, %v2964
  %v2966 = vand.u32 %v2520, 4294901760
  %v2967 = vsub.f32 %v2520, %v2966
  %v2968 = vand.u32 %v2967, 4294901760
  %2969 = vmatmul.f32.gmra.mxu0 %v2968
  %v2970 = vpop.f32.mrf.mxu0
  %v2971 = vadd.f32 %v2859, %v2970
  %v2972 = vand.u32 %v2523, 4294901760
  %v2973 = vsub.f32 %v2523, %v2972
  %v2974 = vand.u32 %v2973, 4294901760
  %2975 = vmatmul.f32.gmra.mxu0 %v2974
  %v2976 = vpop.f32.mrf.mxu0
  %v2977 = vadd.f32 %v2864, %v2976
  %v2978 = vand.u32 %v2526, 4294901760
  %v2979 = vsub.f32 %v2526, %v2978
  %v2980 = vand.u32 %v2979, 4294901760
  %2981 = vmatmul.f32.gmra.mxu0 %v2980
  %v2982 = vpop.f32.mrf.mxu0
  %v2983 = vadd.f32 %v2869, %v2982
  %v2984 = vand.u32 %v2529, 4294901760
  %v2985 = vsub.f32 %v2529, %v2984
  %v2986 = vand.u32 %v2985, 4294901760
  %2987 = vmatmul.f32.gmra.mxu0 %v2986
  %v2988 = vpop.f32.mrf.mxu0
  %v2989 = vadd.f32 %v2874, %v2988
  %2990 = vdwg.mxu0
  %2991 = vmatpush.xpose.msra.mxu0 0.0
  %2992 = vmatpush.xpose.msra.mxu0 0.0
  %2993 = vmatpush.xpose.msra.mxu0 0.0
  %2994 = vmatpush.xpose.msra.mxu0 0.0
  %2995 = vmatpush.xpose.msra.mxu0 0.0
  %2996 = vmatpush.xpose.msra.mxu0 0.0
  %2997 = vmatpush.xpose.msra.mxu0 0.0
  %2998 = vmatpush.xpose.msra.mxu0 0.0
  %2999 = vmatpush.xpose.msra.mxu0 0.0
  %3000 = vmatpush.xpose.msra.mxu0 0.0
  %3001 = vmatpush.xpose.msra.mxu0 0.0
  %3002 = vmatpush.xpose.msra.mxu0 0.0
  %3003 = vmatpush.xpose.msra.mxu0 0.0
  %3004 = vmatpush.xpose.msra.mxu0 0.0
  %v3005 = vand.u32 %v2535, 4294901760
  %v3006 = vsub.f32 %v2535, %v3005
  %v3007 = vand.u32 %v3006, 4294901760
  %3008 = vmatpush.xpose.msra.mxu0 %v3007
  %v3009 = vand.u32 %v2532, 4294901760
  %v3010 = vsub.f32 %v2532, %v3009
  %v3011 = vand.u32 %v3010, 4294901760
  %3012 = vmatpush.xpose.msra.mxu0 %v3011
  %v3013 = vand.u32 %v2484, 4294901760
  %3014 = vmatmul.f32.gmra.mxu0 %v3013
  %v3015 = vpop.f32.mrf.mxu0
  %v3016 = vadd.f32 %v2899, %v3015
  %v3017 = vand.u32 %v2487, 4294901760
  %3018 = vmatmul.f32.gmra.mxu0 %v3017
  %v3019 = vpop.f32.mrf.mxu0
  %v3020 = vadd.f32 %v2905, %v3019
  %v3021 = vand.u32 %v2490, 4294901760
  %3022 = vmatmul.f32.gmra.mxu0 %v3021
  %v3023 = vpop.f32.mrf.mxu0
  %v3024 = vadd.f32 %v2911, %v3023
  %v3025 = vand.u32 %v2493, 4294901760
  %3026 = vmatmul.f32.gmra.mxu0 %v3025
  %v3027 = vpop.f32.mrf.mxu0
  %v3028 = vadd.f32 %v2917, %v3027
  %v3029 = vand.u32 %v2496, 4294901760
  %3030 = vmatmul.f32.gmra.mxu0 %v3029
  %v3031 = vpop.f32.mrf.mxu0
  %v3032 = vadd.f32 %v2923, %v3031
  %v3033 = vand.u32 %v2499, 4294901760
  %3034 = vmatmul.f32.gmra.mxu0 %v3033
  %v3035 = vpop.f32.mrf.mxu0
  %v3036 = vadd.f32 %v2929, %v3035
  %v3037 = vand.u32 %v2502, 4294901760
  %3038 = vmatmul.f32.gmra.mxu0 %v3037
  %v3039 = vpop.f32.mrf.mxu0
  %v3040 = vadd.f32 %v2935, %v3039
  %v3041 = vand.u32 %v2505, 4294901760
  %3042 = vmatmul.f32.gmra.mxu0 %v3041
  %v3043 = vpop.f32.mrf.mxu0
  %v3044 = vadd.f32 %v2941, %v3043
  %v3045 = vand.u32 %v2508, 4294901760
  %3046 = vmatmul.f32.gmra.mxu0 %v3045
  %v3047 = vpop.f32.mrf.mxu0
  %v3048 = vadd.f32 %v2947, %v3047
  %v3049 = vand.u32 %v2511, 4294901760
  %3050 = vmatmul.f32.gmra.mxu0 %v3049
  %v3051 = vpop.f32.mrf.mxu0
  %v3052 = vadd.f32 %v2953, %v3051
  %v3053 = vand.u32 %v2514, 4294901760
  %3054 = vmatmul.f32.gmra.mxu0 %v3053
  %v3055 = vpop.f32.mrf.mxu0
  %v3056 = vadd.f32 %v2959, %v3055
  %v3057 = vand.u32 %v2517, 4294901760
  %3058 = vmatmul.f32.gmra.mxu0 %v3057
  %v3059 = vpop.f32.mrf.mxu0
  %v3060 = vadd.f32 %v2965, %v3059
  %v3061 = vand.u32 %v2520, 4294901760
  %3062 = vmatmul.f32.gmra.mxu0 %v3061
  %v3063 = vpop.f32.mrf.mxu0
  %v3064 = vadd.f32 %v2971, %v3063
  %v3065 = vand.u32 %v2523, 4294901760
  %3066 = vmatmul.f32.gmra.mxu0 %v3065
  %v3067 = vpop.f32.mrf.mxu0
  %v3068 = vadd.f32 %v2977, %v3067
  %v3069 = vand.u32 %v2526, 4294901760
  %3070 = vmatmul.f32.gmra.mxu0 %v3069
  %v3071 = vpop.f32.mrf.mxu0
  %v3072 = vadd.f32 %v2983, %v3071
  %v3073 = vand.u32 %v2529, 4294901760
  %3074 = vmatmul.f32.gmra.mxu0 %v3073
  %v3075 = vpop.f32.mrf.mxu0
  %v3076 = vadd.f32 %v2989, %v3075
  %3077 = vdwg.mxu0
  %3078 = vmatpush.xpose.msra.mxu0 0.0
  %3079 = vmatpush.xpose.msra.mxu0 0.0
  %3080 = vmatpush.xpose.msra.mxu0 0.0
  %3081 = vmatpush.xpose.msra.mxu0 0.0
  %3082 = vmatpush.xpose.msra.mxu0 0.0
  %3083 = vmatpush.xpose.msra.mxu0 0.0
  %3084 = vmatpush.xpose.msra.mxu0 0.0
  %3085 = vmatpush.xpose.msra.mxu0 0.0
  %3086 = vmatpush.xpose.msra.mxu0 0.0
  %3087 = vmatpush.xpose.msra.mxu0 0.0
  %3088 = vmatpush.xpose.msra.mxu0 0.0
  %3089 = vmatpush.xpose.msra.mxu0 0.0
  %3090 = vmatpush.xpose.msra.mxu0 0.0
  %3091 = vmatpush.xpose.msra.mxu0 0.0
  %v3092 = vand.u32 %v2535, 4294901760
  %3093 = vmatpush.xpose.msra.mxu0 %v3092
  %v3094 = vand.u32 %v2532, 4294901760
  %3095 = vmatpush.xpose.msra.mxu0 %v3094
  %v3096 = vand.u32 %v2484, 4294901760
  %3097 = vmatmul.f32.gmra.mxu0 %v3096
  %v3098 = vpop.f32.mrf.mxu0
  %v3099 = vadd.f32 %v3016, %v3098
  %v3100 = vand.u32 %v2487, 4294901760
  %3101 = vmatmul.f32.gmra.mxu0 %v3100
  %v3102 = vpop.f32.mrf.mxu0
  %v3103 = vadd.f32 %v3020, %v3102
  %v3104 = vand.u32 %v2490, 4294901760
  %3105 = vmatmul.f32.gmra.mxu0 %v3104
  %v3106 = vpop.f32.mrf.mxu0
  %v3107 = vadd.f32 %v3024, %v3106
  %v3108 = vand.u32 %v2493, 4294901760
  %3109 = vmatmul.f32.gmra.mxu0 %v3108
  %v3110 = vpop.f32.mrf.mxu0
  %v3111 = vadd.f32 %v3028, %v3110
  %v3112 = vand.u32 %v2496, 4294901760
  %3113 = vmatmul.f32.gmra.mxu0 %v3112
  %v3114 = vpop.f32.mrf.mxu0
  %v3115 = vadd.f32 %v3032, %v3114
  %v3116 = vand.u32 %v2499, 4294901760
  %3117 = vmatmul.f32.gmra.mxu0 %v3116
  %v3118 = vpop.f32.mrf.mxu0
  %v3119 = vadd.f32 %v3036, %v3118
  %v3120 = vand.u32 %v2502, 4294901760
  %3121 = vmatmul.f32.gmra.mxu0 %v3120
  %v3122 = vpop.f32.mrf.mxu0
  %v3123 = vadd.f32 %v3040, %v3122
  %v3124 = vand.u32 %v2505, 4294901760
  %3125 = vmatmul.f32.gmra.mxu0 %v3124
  %v3126 = vpop.f32.mrf.mxu0
  %v3127 = vadd.f32 %v3044, %v3126
  %v3128 = vand.u32 %v2508, 4294901760
  %3129 = vmatmul.f32.gmra.mxu0 %v3128
  %v3130 = vpop.f32.mrf.mxu0
  %v3131 = vadd.f32 %v3048, %v3130
  %v3132 = vand.u32 %v2511, 4294901760
  %3133 = vmatmul.f32.gmra.mxu0 %v3132
  %v3134 = vpop.f32.mrf.mxu0
  %v3135 = vadd.f32 %v3052, %v3134
  %v3136 = vand.u32 %v2514, 4294901760
  %3137 = vmatmul.f32.gmra.mxu0 %v3136
  %v3138 = vpop.f32.mrf.mxu0
  %v3139 = vadd.f32 %v3056, %v3138
  %v3140 = vand.u32 %v2517, 4294901760
  %3141 = vmatmul.f32.gmra.mxu0 %v3140
  %v3142 = vpop.f32.mrf.mxu0
  %v3143 = vadd.f32 %v3060, %v3142
  %v3144 = vand.u32 %v2520, 4294901760
  %3145 = vmatmul.f32.gmra.mxu0 %v3144
  %v3146 = vpop.f32.mrf.mxu0
  %v3147 = vadd.f32 %v3064, %v3146
  %v3148 = vand.u32 %v2523, 4294901760
  %3149 = vmatmul.f32.gmra.mxu0 %v3148
  %v3150 = vpop.f32.mrf.mxu0
  %v3151 = vadd.f32 %v3068, %v3150
  %v3152 = vand.u32 %v2526, 4294901760
  %3153 = vmatmul.f32.gmra.mxu0 %v3152
  %v3154 = vpop.f32.mrf.mxu0
  %v3155 = vadd.f32 %v3072, %v3154
  %v3156 = vand.u32 %v2529, 4294901760
  %3157 = vmatmul.f32.gmra.mxu0 %v3156
  %v3158 = vpop.f32.mrf.mxu0
  %v3159 = vadd.f32 %v3076, %v3158
  %3160 = vdwg.mxu0
  %v3161 = vld [vmem:[%s9] sm:$0xff]
  %v3162 = vld [vmem:[%s9 + $0x8] sm:$0xff]
  %v3163 = vld [vmem:[%s9 + $0x10] sm:$0xff]
  %v3164 = vld [vmem:[%s9 + $0x18] sm:$0xff]
  %v3165 = vld [vmem:[%s10] sm:$0x1]
  %v3167 = vperm.slane %v3165, 0
  %vm3169 = vcmask 80896
  %v3171 = vsel %vm3169, %v3099, 0
  %v3174 = vsel %vm3169, %v3103, 0
  %v3177 = vsel %vm3169, %v3107, 0
  %v3180 = vsel %vm3169, %v3111, 0
  %v3183 = vsel %vm3169, %v3115, 0
  %v3186 = vsel %vm3169, %v3119, 0
  %v3189 = vsel %vm3169, %v3123, 0
  %v3192 = vsel %vm3169, %v3127, 0
  %v3195 = vsel %vm3169, %v3131, 0
  %v3198 = vsel %vm3169, %v3135, 0
  %v3201 = vsel %vm3169, %v3139, 0
  %v3204 = vsel %vm3169, %v3143, 0
  %v3207 = vsel %vm3169, %v3147, 0
  %v3210 = vsel %vm3169, %v3151, 0
  %v3213 = vsel %vm3169, %v3155, 0
  %v3216 = vsel %vm3169, %v3159, 0
  %v3219 = vsel %vm3169, %v3161, 0
  %v3222 = vsel %vm3169, %v3162, 0
  %v3225 = vsel %vm3169, %v3163, 0
  %v3228 = vsel %vm3169, %v3164, 0
  %3230 = vmatpush.xpose.msra.mxu0 0.0
  %3231 = vmatpush.xpose.msra.mxu0 0.0
  %3232 = vmatpush.xpose.msra.mxu0 0.0
  %3233 = vmatpush.xpose.msra.mxu0 0.0
  %3234 = vmatpush.xpose.msra.mxu0 0.0
  %3235 = vmatpush.xpose.msra.mxu0 0.0
  %3236 = vmatpush.xpose.msra.mxu0 0.0
  %3237 = vmatpush.xpose.msra.mxu0 0.0
  %3238 = vmatpush.xpose.msra.mxu0 0.0
  %3239 = vmatpush.xpose.msra.mxu0 0.0
  %3240 = vmatpush.xpose.msra.mxu0 0.0
  %3241 = vmatpush.xpose.msra.mxu0 0.0
  %v3242 = vand.u32 %v3228, 4294901760
  %3243 = vmatpush.xpose.msra.mxu0 %v3242
  %v3244 = vand.u32 %v3225, 4294901760
  %3245 = vmatpush.xpose.msra.mxu0 %v3244
  %v3246 = vand.u32 %v3222, 4294901760
  %3247 = vmatpush.xpose.msra.mxu0 %v3246
  %v3248 = vand.u32 %v3219, 4294901760
  %3249 = vmatpush.xpose.msra.mxu0 %v3248
  %v3250 = vand.u32 %v3171, 4294901760
  %v3251 = vsub.f32 %v3171, %v3250
  %v3252 = vand.u32 %v3251, 4294901760
  %v3253 = vsub.f32 %v3251, %v3252
  %v3254 = vand.u32 %v3253, 4294901760
  %3255 = vmatmul.f32.gmra.mxu0 %v3254
  %v3256 = vpop.f32.mrf.mxu0
  %v3257 = vadd.f32 %v3167, %v3256
  %v3258 = vand.u32 %v3174, 4294901760
  %v3259 = vsub.f32 %v3174, %v3258
  %v3260 = vand.u32 %v3259, 4294901760
  %v3261 = vsub.f32 %v3259, %v3260
  %v3262 = vand.u32 %v3261, 4294901760
  %3263 = vmatmul.f32.gmra.mxu0 %v3262
  %v3264 = vpop.f32.mrf.mxu0
  %v3265 = vadd.f32 %v3167, %v3264
  %v3266 = vand.u32 %v3177, 4294901760
  %v3267 = vsub.f32 %v3177, %v3266
  %v3268 = vand.u32 %v3267, 4294901760
  %v3269 = vsub.f32 %v3267, %v3268
  %v3270 = vand.u32 %v3269, 4294901760
  %3271 = vmatmul.f32.gmra.mxu0 %v3270
  %v3272 = vpop.f32.mrf.mxu0
  %v3273 = vadd.f32 %v3167, %v3272
  %v3274 = vand.u32 %v3180, 4294901760
  %v3275 = vsub.f32 %v3180, %v3274
  %v3276 = vand.u32 %v3275, 4294901760
  %v3277 = vsub.f32 %v3275, %v3276
  %v3278 = vand.u32 %v3277, 4294901760
  %3279 = vmatmul.f32.gmra.mxu0 %v3278
  %v3280 = vpop.f32.mrf.mxu0
  %v3281 = vadd.f32 %v3167, %v3280
  %v3282 = vand.u32 %v3183, 4294901760
  %v3283 = vsub.f32 %v3183, %v3282
  %v3284 = vand.u32 %v3283, 4294901760
  %v3285 = vsub.f32 %v3283, %v3284
  %v3286 = vand.u32 %v3285, 4294901760
  %3287 = vmatmul.f32.gmra.mxu0 %v3286
  %v3288 = vpop.f32.mrf.mxu0
  %v3289 = vadd.f32 %v3167, %v3288
  %v3290 = vand.u32 %v3186, 4294901760
  %v3291 = vsub.f32 %v3186, %v3290
  %v3292 = vand.u32 %v3291, 4294901760
  %v3293 = vsub.f32 %v3291, %v3292
  %v3294 = vand.u32 %v3293, 4294901760
  %3295 = vmatmul.f32.gmra.mxu0 %v3294
  %v3296 = vpop.f32.mrf.mxu0
  %v3297 = vadd.f32 %v3167, %v3296
  %v3298 = vand.u32 %v3189, 4294901760
  %v3299 = vsub.f32 %v3189, %v3298
  %v3300 = vand.u32 %v3299, 4294901760
  %v3301 = vsub.f32 %v3299, %v3300
  %v3302 = vand.u32 %v3301, 4294901760
  %3303 = vmatmul.f32.gmra.mxu0 %v3302
  %v3304 = vpop.f32.mrf.mxu0
  %v3305 = vadd.f32 %v3167, %v3304
  %v3306 = vand.u32 %v3192, 4294901760
  %v3307 = vsub.f32 %v3192, %v3306
  %v3308 = vand.u32 %v3307, 4294901760
  %v3309 = vsub.f32 %v3307, %v3308
  %v3310 = vand.u32 %v3309, 4294901760
  %3311 = vmatmul.f32.gmra.mxu0 %v3310
  %v3312 = vpop.f32.mrf.mxu0
  %v3313 = vadd.f32 %v3167, %v3312
  %v3314 = vand.u32 %v3195, 4294901760
  %v3315 = vsub.f32 %v3195, %v3314
  %v3316 = vand.u32 %v3315, 4294901760
  %v3317 = vsub.f32 %v3315, %v3316
  %v3318 = vand.u32 %v3317, 4294901760
  %3319 = vmatmul.f32.gmra.mxu0 %v3318
  %v3320 = vpop.f32.mrf.mxu0
  %v3321 = vadd.f32 %v3167, %v3320
  %v3322 = vand.u32 %v3198, 4294901760
  %v3323 = vsub.f32 %v3198, %v3322
  %v3324 = vand.u32 %v3323, 4294901760
  %v3325 = vsub.f32 %v3323, %v3324
  %v3326 = vand.u32 %v3325, 4294901760
  %3327 = vmatmul.f32.gmra.mxu0 %v3326
  %v3328 = vpop.f32.mrf.mxu0
  %v3329 = vadd.f32 %v3167, %v3328
  %v3330 = vand.u32 %v3201, 4294901760
  %v3331 = vsub.f32 %v3201, %v3330
  %v3332 = vand.u32 %v3331, 4294901760
  %v3333 = vsub.f32 %v3331, %v3332
  %v3334 = vand.u32 %v3333, 4294901760
  %3335 = vmatmul.f32.gmra.mxu0 %v3334
  %v3336 = vpop.f32.mrf.mxu0
  %v3337 = vadd.f32 %v3167, %v3336
  %v3338 = vand.u32 %v3204, 4294901760
  %v3339 = vsub.f32 %v3204, %v3338
  %v3340 = vand.u32 %v3339, 4294901760
  %v3341 = vsub.f32 %v3339, %v3340
  %v3342 = vand.u32 %v3341, 4294901760
  %3343 = vmatmul.f32.gmra.mxu0 %v3342
  %v3344 = vpop.f32.mrf.mxu0
  %v3345 = vadd.f32 %v3167, %v3344
  %v3346 = vand.u32 %v3207, 4294901760
  %v3347 = vsub.f32 %v3207, %v3346
  %v3348 = vand.u32 %v3347, 4294901760
  %v3349 = vsub.f32 %v3347, %v3348
  %v3350 = vand.u32 %v3349, 4294901760
  %3351 = vmatmul.f32.gmra.mxu0 %v3350
  %v3352 = vpop.f32.mrf.mxu0
  %v3353 = vadd.f32 %v3167, %v3352
  %v3354 = vand.u32 %v3210, 4294901760
  %v3355 = vsub.f32 %v3210, %v3354
  %v3356 = vand.u32 %v3355, 4294901760
  %v3357 = vsub.f32 %v3355, %v3356
  %v3358 = vand.u32 %v3357, 4294901760
  %3359 = vmatmul.f32.gmra.mxu0 %v3358
  %v3360 = vpop.f32.mrf.mxu0
  %v3361 = vadd.f32 %v3167, %v3360
  %v3362 = vand.u32 %v3213, 4294901760
  %v3363 = vsub.f32 %v3213, %v3362
  %v3364 = vand.u32 %v3363, 4294901760
  %v3365 = vsub.f32 %v3363, %v3364
  %v3366 = vand.u32 %v3365, 4294901760
  %3367 = vmatmul.f32.gmra.mxu0 %v3366
  %v3368 = vpop.f32.mrf.mxu0
  %v3369 = vadd.f32 %v3167, %v3368
  %v3370 = vand.u32 %v3216, 4294901760
  %v3371 = vsub.f32 %v3216, %v3370
  %v3372 = vand.u32 %v3371, 4294901760
  %v3373 = vsub.f32 %v3371, %v3372
  %v3374 = vand.u32 %v3373, 4294901760
  %3375 = vmatmul.f32.gmra.mxu0 %v3374
  %v3376 = vpop.f32.mrf.mxu0
  %v3377 = vadd.f32 %v3167, %v3376
  %3378 = vdwg.mxu0
  %3379 = vmatpush.xpose.msra.mxu0 0.0
  %3380 = vmatpush.xpose.msra.mxu0 0.0
  %3381 = vmatpush.xpose.msra.mxu0 0.0
  %3382 = vmatpush.xpose.msra.mxu0 0.0
  %3383 = vmatpush.xpose.msra.mxu0 0.0
  %3384 = vmatpush.xpose.msra.mxu0 0.0
  %3385 = vmatpush.xpose.msra.mxu0 0.0
  %3386 = vmatpush.xpose.msra.mxu0 0.0
  %3387 = vmatpush.xpose.msra.mxu0 0.0
  %3388 = vmatpush.xpose.msra.mxu0 0.0
  %3389 = vmatpush.xpose.msra.mxu0 0.0
  %3390 = vmatpush.xpose.msra.mxu0 0.0
  %v3391 = vand.u32 %v3228, 4294901760
  %v3392 = vsub.f32 %v3228, %v3391
  %v3393 = vand.u32 %v3392, 4294901760
  %v3394 = vsub.f32 %v3392, %v3393
  %v3395 = vand.u32 %v3394, 4294901760
  %3396 = vmatpush.xpose.msra.mxu0 %v3395
  %v3397 = vand.u32 %v3225, 4294901760
  %v3398 = vsub.f32 %v3225, %v3397
  %v3399 = vand.u32 %v3398, 4294901760
  %v3400 = vsub.f32 %v3398, %v3399
  %v3401 = vand.u32 %v3400, 4294901760
  %3402 = vmatpush.xpose.msra.mxu0 %v3401
  %v3403 = vand.u32 %v3222, 4294901760
  %v3404 = vsub.f32 %v3222, %v3403
  %v3405 = vand.u32 %v3404, 4294901760
  %v3406 = vsub.f32 %v3404, %v3405
  %v3407 = vand.u32 %v3406, 4294901760
  %3408 = vmatpush.xpose.msra.mxu0 %v3407
  %v3409 = vand.u32 %v3219, 4294901760
  %v3410 = vsub.f32 %v3219, %v3409
  %v3411 = vand.u32 %v3410, 4294901760
  %v3412 = vsub.f32 %v3410, %v3411
  %v3413 = vand.u32 %v3412, 4294901760
  %3414 = vmatpush.xpose.msra.mxu0 %v3413
  %v3415 = vand.u32 %v3171, 4294901760
  %3416 = vmatmul.f32.gmra.mxu0 %v3415
  %v3417 = vpop.f32.mrf.mxu0
  %v3418 = vadd.f32 %v3257, %v3417
  %v3419 = vand.u32 %v3174, 4294901760
  %3420 = vmatmul.f32.gmra.mxu0 %v3419
  %v3421 = vpop.f32.mrf.mxu0
  %v3422 = vadd.f32 %v3265, %v3421
  %v3423 = vand.u32 %v3177, 4294901760
  %3424 = vmatmul.f32.gmra.mxu0 %v3423
  %v3425 = vpop.f32.mrf.mxu0
  %v3426 = vadd.f32 %v3273, %v3425
  %v3427 = vand.u32 %v3180, 4294901760
  %3428 = vmatmul.f32.gmra.mxu0 %v3427
  %v3429 = vpop.f32.mrf.mxu0
  %v3430 = vadd.f32 %v3281, %v3429
  %v3431 = vand.u32 %v3183, 4294901760
  %3432 = vmatmul.f32.gmra.mxu0 %v3431
  %v3433 = vpop.f32.mrf.mxu0
  %v3434 = vadd.f32 %v3289, %v3433
  %v3435 = vand.u32 %v3186, 4294901760
  %3436 = vmatmul.f32.gmra.mxu0 %v3435
  %v3437 = vpop.f32.mrf.mxu0
  %v3438 = vadd.f32 %v3297, %v3437
  %v3439 = vand.u32 %v3189, 4294901760
  %3440 = vmatmul.f32.gmra.mxu0 %v3439
  %v3441 = vpop.f32.mrf.mxu0
  %v3442 = vadd.f32 %v3305, %v3441
  %v3443 = vand.u32 %v3192, 4294901760
  %3444 = vmatmul.f32.gmra.mxu0 %v3443
  %v3445 = vpop.f32.mrf.mxu0
  %v3446 = vadd.f32 %v3313, %v3445
  %v3447 = vand.u32 %v3195, 4294901760
  %3448 = vmatmul.f32.gmra.mxu0 %v3447
  %v3449 = vpop.f32.mrf.mxu0
  %v3450 = vadd.f32 %v3321, %v3449
  %v3451 = vand.u32 %v3198, 4294901760
  %3452 = vmatmul.f32.gmra.mxu0 %v3451
  %v3453 = vpop.f32.mrf.mxu0
  %v3454 = vadd.f32 %v3329, %v3453
  %v3455 = vand.u32 %v3201, 4294901760
  %3456 = vmatmul.f32.gmra.mxu0 %v3455
  %v3457 = vpop.f32.mrf.mxu0
  %v3458 = vadd.f32 %v3337, %v3457
  %v3459 = vand.u32 %v3204, 4294901760
  %3460 = vmatmul.f32.gmra.mxu0 %v3459
  %v3461 = vpop.f32.mrf.mxu0
  %v3462 = vadd.f32 %v3345, %v3461
  %v3463 = vand.u32 %v3207, 4294901760
  %3464 = vmatmul.f32.gmra.mxu0 %v3463
  %v3465 = vpop.f32.mrf.mxu0
  %v3466 = vadd.f32 %v3353, %v3465
  %v3467 = vand.u32 %v3210, 4294901760
  %3468 = vmatmul.f32.gmra.mxu0 %v3467
  %v3469 = vpop.f32.mrf.mxu0
  %v3470 = vadd.f32 %v3361, %v3469
  %v3471 = vand.u32 %v3213, 4294901760
  %3472 = vmatmul.f32.gmra.mxu0 %v3471
  %v3473 = vpop.f32.mrf.mxu0
  %v3474 = vadd.f32 %v3369, %v3473
  %v3475 = vand.u32 %v3216, 4294901760
  %3476 = vmatmul.f32.gmra.mxu0 %v3475
  %v3477 = vpop.f32.mrf.mxu0
  %v3478 = vadd.f32 %v3377, %v3477
  %3479 = vdwg.mxu0
  %3480 = vmatpush.xpose.msra.mxu0 0.0
  %3481 = vmatpush.xpose.msra.mxu0 0.0
  %3482 = vmatpush.xpose.msra.mxu0 0.0
  %3483 = vmatpush.xpose.msra.mxu0 0.0
  %3484 = vmatpush.xpose.msra.mxu0 0.0
  %3485 = vmatpush.xpose.msra.mxu0 0.0
  %3486 = vmatpush.xpose.msra.mxu0 0.0
  %3487 = vmatpush.xpose.msra.mxu0 0.0
  %3488 = vmatpush.xpose.msra.mxu0 0.0
  %3489 = vmatpush.xpose.msra.mxu0 0.0
  %3490 = vmatpush.xpose.msra.mxu0 0.0
  %3491 = vmatpush.xpose.msra.mxu0 0.0
  %v3492 = vand.u32 %v3228, 4294901760
  %v3493 = vsub.f32 %v3228, %v3492
  %3494 = vmatpush.xpose.msra.mxu0 %v3493
  %v3495 = vand.u32 %v3225, 4294901760
  %v3496 = vsub.f32 %v3225, %v3495
  %3497 = vmatpush.xpose.msra.mxu0 %v3496
  %v3498 = vand.u32 %v3222, 4294901760
  %v3499 = vsub.f32 %v3222, %v3498
  %3500 = vmatpush.xpose.msra.mxu0 %v3499
  %v3501 = vand.u32 %v3219, 4294901760
  %v3502 = vsub.f32 %v3219, %v3501
  %3503 = vmatpush.xpose.msra.mxu0 %v3502
  %v3504 = vand.u32 %v3171, 4294901760
  %v3505 = vsub.f32 %v3171, %v3504
  %3506 = vmatmul.f32.gmra.mxu0 %v3505
  %v3507 = vpop.f32.mrf.mxu0
  %v3508 = vadd.f32 %v3418, %v3507
  %v3509 = vand.u32 %v3174, 4294901760
  %v3510 = vsub.f32 %v3174, %v3509
  %3511 = vmatmul.f32.gmra.mxu0 %v3510
  %v3512 = vpop.f32.mrf.mxu0
  %v3513 = vadd.f32 %v3422, %v3512
  %v3514 = vand.u32 %v3177, 4294901760
  %v3515 = vsub.f32 %v3177, %v3514
  %3516 = vmatmul.f32.gmra.mxu0 %v3515
  %v3517 = vpop.f32.mrf.mxu0
  %v3518 = vadd.f32 %v3426, %v3517
  %v3519 = vand.u32 %v3180, 4294901760
  %v3520 = vsub.f32 %v3180, %v3519
  %3521 = vmatmul.f32.gmra.mxu0 %v3520
  %v3522 = vpop.f32.mrf.mxu0
  %v3523 = vadd.f32 %v3430, %v3522
  %v3524 = vand.u32 %v3183, 4294901760
  %v3525 = vsub.f32 %v3183, %v3524
  %3526 = vmatmul.f32.gmra.mxu0 %v3525
  %v3527 = vpop.f32.mrf.mxu0
  %v3528 = vadd.f32 %v3434, %v3527
  %v3529 = vand.u32 %v3186, 4294901760
  %v3530 = vsub.f32 %v3186, %v3529
  %3531 = vmatmul.f32.gmra.mxu0 %v3530
  %v3532 = vpop.f32.mrf.mxu0
  %v3533 = vadd.f32 %v3438, %v3532
  %v3534 = vand.u32 %v3189, 4294901760
  %v3535 = vsub.f32 %v3189, %v3534
  %3536 = vmatmul.f32.gmra.mxu0 %v3535
  %v3537 = vpop.f32.mrf.mxu0
  %v3538 = vadd.f32 %v3442, %v3537
  %v3539 = vand.u32 %v3192, 4294901760
  %v3540 = vsub.f32 %v3192, %v3539
  %3541 = vmatmul.f32.gmra.mxu0 %v3540
  %v3542 = vpop.f32.mrf.mxu0
  %v3543 = vadd.f32 %v3446, %v3542
  %v3544 = vand.u32 %v3195, 4294901760
  %v3545 = vsub.f32 %v3195, %v3544
  %3546 = vmatmul.f32.gmra.mxu0 %v3545
  %v3547 = vpop.f32.mrf.mxu0
  %v3548 = vadd.f32 %v3450, %v3547
  %v3549 = vand.u32 %v3198, 4294901760
  %v3550 = vsub.f32 %v3198, %v3549
  %3551 = vmatmul.f32.gmra.mxu0 %v3550
  %v3552 = vpop.f32.mrf.mxu0
  %v3553 = vadd.f32 %v3454, %v3552
  %v3554 = vand.u32 %v3201, 4294901760
  %v3555 = vsub.f32 %v3201, %v3554
  %3556 = vmatmul.f32.gmra.mxu0 %v3555
  %v3557 = vpop.f32.mrf.mxu0
  %v3558 = vadd.f32 %v3458, %v3557
  %v3559 = vand.u32 %v3204, 4294901760
  %v3560 = vsub.f32 %v3204, %v3559
  %3561 = vmatmul.f32.gmra.mxu0 %v3560
  %v3562 = vpop.f32.mrf.mxu0
  %v3563 = vadd.f32 %v3462, %v3562
  %v3564 = vand.u32 %v3207, 4294901760
  %v3565 = vsub.f32 %v3207, %v3564
  %3566 = vmatmul.f32.gmra.mxu0 %v3565
  %v3567 = vpop.f32.mrf.mxu0
  %v3568 = vadd.f32 %v3466, %v3567
  %v3569 = vand.u32 %v3210, 4294901760
  %v3570 = vsub.f32 %v3210, %v3569
  %3571 = vmatmul.f32.gmra.mxu0 %v3570
  %v3572 = vpop.f32.mrf.mxu0
  %v3573 = vadd.f32 %v3470, %v3572
  %v3574 = vand.u32 %v3213, 4294901760
  %v3575 = vsub.f32 %v3213, %v3574
  %3576 = vmatmul.f32.gmra.mxu0 %v3575
  %v3577 = vpop.f32.mrf.mxu0
  %v3578 = vadd.f32 %v3474, %v3577
  %v3579 = vand.u32 %v3216, 4294901760
  %v3580 = vsub.f32 %v3216, %v3579
  %3581 = vmatmul.f32.gmra.mxu0 %v3580
  %v3582 = vpop.f32.mrf.mxu0
  %v3583 = vadd.f32 %v3478, %v3582
  %3584 = vdwg.mxu0
  %3585 = vmatpush.xpose.msra.mxu0 0.0
  %3586 = vmatpush.xpose.msra.mxu0 0.0
  %3587 = vmatpush.xpose.msra.mxu0 0.0
  %3588 = vmatpush.xpose.msra.mxu0 0.0
  %3589 = vmatpush.xpose.msra.mxu0 0.0
  %3590 = vmatpush.xpose.msra.mxu0 0.0
  %3591 = vmatpush.xpose.msra.mxu0 0.0
  %3592 = vmatpush.xpose.msra.mxu0 0.0
  %3593 = vmatpush.xpose.msra.mxu0 0.0
  %3594 = vmatpush.xpose.msra.mxu0 0.0
  %3595 = vmatpush.xpose.msra.mxu0 0.0
  %3596 = vmatpush.xpose.msra.mxu0 0.0
  %v3597 = vand.u32 %v3228, 4294901760
  %3598 = vmatpush.xpose.msra.mxu0 %v3597
  %v3599 = vand.u32 %v3225, 4294901760
  %3600 = vmatpush.xpose.msra.mxu0 %v3599
  %v3601 = vand.u32 %v3222, 4294901760
  %3602 = vmatpush.xpose.msra.mxu0 %v3601
  %v3603 = vand.u32 %v3219, 4294901760
  %3604 = vmatpush.xpose.msra.mxu0 %v3603
  %v3605 = vand.u32 %v3171, 4294901760
  %v3606 = vsub.f32 %v3171, %v3605
  %v3607 = vand.u32 %v3606, 4294901760
  %3608 = vmatmul.f32.gmra.mxu0 %v3607
  %v3609 = vpop.f32.mrf.mxu0
  %v3610 = vadd.f32 %v3508, %v3609
  %v3611 = vand.u32 %v3174, 4294901760
  %v3612 = vsub.f32 %v3174, %v3611
  %v3613 = vand.u32 %v3612, 4294901760
  %3614 = vmatmul.f32.gmra.mxu0 %v3613
  %v3615 = vpop.f32.mrf.mxu0
  %v3616 = vadd.f32 %v3513, %v3615
  %v3617 = vand.u32 %v3177, 4294901760
  %v3618 = vsub.f32 %v3177, %v3617
  %v3619 = vand.u32 %v3618, 4294901760
  %3620 = vmatmul.f32.gmra.mxu0 %v3619
  %v3621 = vpop.f32.mrf.mxu0
  %v3622 = vadd.f32 %v3518, %v3621
  %v3623 = vand.u32 %v3180, 4294901760
  %v3624 = vsub.f32 %v3180, %v3623
  %v3625 = vand.u32 %v3624, 4294901760
  %3626 = vmatmul.f32.gmra.mxu0 %v3625
  %v3627 = vpop.f32.mrf.mxu0
  %v3628 = vadd.f32 %v3523, %v3627
  %v3629 = vand.u32 %v3183, 4294901760
  %v3630 = vsub.f32 %v3183, %v3629
  %v3631 = vand.u32 %v3630, 4294901760
  %3632 = vmatmul.f32.gmra.mxu0 %v3631
  %v3633 = vpop.f32.mrf.mxu0
  %v3634 = vadd.f32 %v3528, %v3633
  %v3635 = vand.u32 %v3186, 4294901760
  %v3636 = vsub.f32 %v3186, %v3635
  %v3637 = vand.u32 %v3636, 4294901760
  %3638 = vmatmul.f32.gmra.mxu0 %v3637
  %v3639 = vpop.f32.mrf.mxu0
  %v3640 = vadd.f32 %v3533, %v3639
  %v3641 = vand.u32 %v3189, 4294901760
  %v3642 = vsub.f32 %v3189, %v3641
  %v3643 = vand.u32 %v3642, 4294901760
  %3644 = vmatmul.f32.gmra.mxu0 %v3643
  %v3645 = vpop.f32.mrf.mxu0
  %v3646 = vadd.f32 %v3538, %v3645
  %v3647 = vand.u32 %v3192, 4294901760
  %v3648 = vsub.f32 %v3192, %v3647
  %v3649 = vand.u32 %v3648, 4294901760
  %3650 = vmatmul.f32.gmra.mxu0 %v3649
  %v3651 = vpop.f32.mrf.mxu0
  %v3652 = vadd.f32 %v3543, %v3651
  %v3653 = vand.u32 %v3195, 4294901760
  %v3654 = vsub.f32 %v3195, %v3653
  %v3655 = vand.u32 %v3654, 4294901760
  %3656 = vmatmul.f32.gmra.mxu0 %v3655
  %v3657 = vpop.f32.mrf.mxu0
  %v3658 = vadd.f32 %v3548, %v3657
  %v3659 = vand.u32 %v3198, 4294901760
  %v3660 = vsub.f32 %v3198, %v3659
  %v3661 = vand.u32 %v3660, 4294901760
  %3662 = vmatmul.f32.gmra.mxu0 %v3661
  %v3663 = vpop.f32.mrf.mxu0
  %v3664 = vadd.f32 %v3553, %v3663
  %v3665 = vand.u32 %v3201, 4294901760
  %v3666 = vsub.f32 %v3201, %v3665
  %v3667 = vand.u32 %v3666, 4294901760
  %3668 = vmatmul.f32.gmra.mxu0 %v3667
  %v3669 = vpop.f32.mrf.mxu0
  %v3670 = vadd.f32 %v3558, %v3669
  %v3671 = vand.u32 %v3204, 4294901760
  %v3672 = vsub.f32 %v3204, %v3671
  %v3673 = vand.u32 %v3672, 4294901760
  %3674 = vmatmul.f32.gmra.mxu0 %v3673
  %v3675 = vpop.f32.mrf.mxu0
  %v3676 = vadd.f32 %v3563, %v3675
  %v3677 = vand.u32 %v3207, 4294901760
  %v3678 = vsub.f32 %v3207, %v3677
  %v3679 = vand.u32 %v3678, 4294901760
  %3680 = vmatmul.f32.gmra.mxu0 %v3679
  %v3681 = vpop.f32.mrf.mxu0
  %v3682 = vadd.f32 %v3568, %v3681
  %v3683 = vand.u32 %v3210, 4294901760
  %v3684 = vsub.f32 %v3210, %v3683
  %v3685 = vand.u32 %v3684, 4294901760
  %3686 = vmatmul.f32.gmra.mxu0 %v3685
  %v3687 = vpop.f32.mrf.mxu0
  %v3688 = vadd.f32 %v3573, %v3687
  %v3689 = vand.u32 %v3213, 4294901760
  %v3690 = vsub.f32 %v3213, %v3689
  %v3691 = vand.u32 %v3690, 4294901760
  %3692 = vmatmul.f32.gmra.mxu0 %v3691
  %v3693 = vpop.f32.mrf.mxu0
  %v3694 = vadd.f32 %v3578, %v3693
  %v3695 = vand.u32 %v3216, 4294901760
  %v3696 = vsub.f32 %v3216, %v3695
  %v3697 = vand.u32 %v3696, 4294901760
  %3698 = vmatmul.f32.gmra.mxu0 %v3697
  %v3699 = vpop.f32.mrf.mxu0
  %v3700 = vadd.f32 %v3583, %v3699
  %3701 = vdwg.mxu0
  %3702 = vmatpush.xpose.msra.mxu0 0.0
  %3703 = vmatpush.xpose.msra.mxu0 0.0
  %3704 = vmatpush.xpose.msra.mxu0 0.0
  %3705 = vmatpush.xpose.msra.mxu0 0.0
  %3706 = vmatpush.xpose.msra.mxu0 0.0
  %3707 = vmatpush.xpose.msra.mxu0 0.0
  %3708 = vmatpush.xpose.msra.mxu0 0.0
  %3709 = vmatpush.xpose.msra.mxu0 0.0
  %3710 = vmatpush.xpose.msra.mxu0 0.0
  %3711 = vmatpush.xpose.msra.mxu0 0.0
  %3712 = vmatpush.xpose.msra.mxu0 0.0
  %3713 = vmatpush.xpose.msra.mxu0 0.0
  %v3714 = vand.u32 %v3228, 4294901760
  %v3715 = vsub.f32 %v3228, %v3714
  %v3716 = vand.u32 %v3715, 4294901760
  %3717 = vmatpush.xpose.msra.mxu0 %v3716
  %v3718 = vand.u32 %v3225, 4294901760
  %v3719 = vsub.f32 %v3225, %v3718
  %v3720 = vand.u32 %v3719, 4294901760
  %3721 = vmatpush.xpose.msra.mxu0 %v3720
  %v3722 = vand.u32 %v3222, 4294901760
  %v3723 = vsub.f32 %v3222, %v3722
  %v3724 = vand.u32 %v3723, 4294901760
  %3725 = vmatpush.xpose.msra.mxu0 %v3724
  %v3726 = vand.u32 %v3219, 4294901760
  %v3727 = vsub.f32 %v3219, %v3726
  %v3728 = vand.u32 %v3727, 4294901760
  %3729 = vmatpush.xpose.msra.mxu0 %v3728
  %v3730 = vand.u32 %v3171, 4294901760
  %3731 = vmatmul.f32.gmra.mxu0 %v3730
  %v3732 = vpop.f32.mrf.mxu0
  %v3733 = vadd.f32 %v3610, %v3732
  %v3734 = vand.u32 %v3174, 4294901760
  %3735 = vmatmul.f32.gmra.mxu0 %v3734
  %v3736 = vpop.f32.mrf.mxu0
  %v3737 = vadd.f32 %v3616, %v3736
  %v3738 = vand.u32 %v3177, 4294901760
  %3739 = vmatmul.f32.gmra.mxu0 %v3738
  %v3740 = vpop.f32.mrf.mxu0
  %v3741 = vadd.f32 %v3622, %v3740
  %v3742 = vand.u32 %v3180, 4294901760
  %3743 = vmatmul.f32.gmra.mxu0 %v3742
  %v3744 = vpop.f32.mrf.mxu0
  %v3745 = vadd.f32 %v3628, %v3744
  %v3746 = vand.u32 %v3183, 4294901760
  %3747 = vmatmul.f32.gmra.mxu0 %v3746
  %v3748 = vpop.f32.mrf.mxu0
  %v3749 = vadd.f32 %v3634, %v3748
  %v3750 = vand.u32 %v3186, 4294901760
  %3751 = vmatmul.f32.gmra.mxu0 %v3750
  %v3752 = vpop.f32.mrf.mxu0
  %v3753 = vadd.f32 %v3640, %v3752
  %v3754 = vand.u32 %v3189, 4294901760
  %3755 = vmatmul.f32.gmra.mxu0 %v3754
  %v3756 = vpop.f32.mrf.mxu0
  %v3757 = vadd.f32 %v3646, %v3756
  %v3758 = vand.u32 %v3192, 4294901760
  %3759 = vmatmul.f32.gmra.mxu0 %v3758
  %v3760 = vpop.f32.mrf.mxu0
  %v3761 = vadd.f32 %v3652, %v3760
  %v3762 = vand.u32 %v3195, 4294901760
  %3763 = vmatmul.f32.gmra.mxu0 %v3762
  %v3764 = vpop.f32.mrf.mxu0
  %v3765 = vadd.f32 %v3658, %v3764
  %v3766 = vand.u32 %v3198, 4294901760
  %3767 = vmatmul.f32.gmra.mxu0 %v3766
  %v3768 = vpop.f32.mrf.mxu0
  %v3769 = vadd.f32 %v3664, %v3768
  %v3770 = vand.u32 %v3201, 4294901760
  %3771 = vmatmul.f32.gmra.mxu0 %v3770
  %v3772 = vpop.f32.mrf.mxu0
  %v3773 = vadd.f32 %v3670, %v3772
  %v3774 = vand.u32 %v3204, 4294901760
  %3775 = vmatmul.f32.gmra.mxu0 %v3774
  %v3776 = vpop.f32.mrf.mxu0
  %v3777 = vadd.f32 %v3676, %v3776
  %v3778 = vand.u32 %v3207, 4294901760
  %3779 = vmatmul.f32.gmra.mxu0 %v3778
  %v3780 = vpop.f32.mrf.mxu0
  %v3781 = vadd.f32 %v3682, %v3780
  %v3782 = vand.u32 %v3210, 4294901760
  %3783 = vmatmul.f32.gmra.mxu0 %v3782
  %v3784 = vpop.f32.mrf.mxu0
  %v3785 = vadd.f32 %v3688, %v3784
  %v3786 = vand.u32 %v3213, 4294901760
  %3787 = vmatmul.f32.gmra.mxu0 %v3786
  %v3788 = vpop.f32.mrf.mxu0
  %v3789 = vadd.f32 %v3694, %v3788
  %v3790 = vand.u32 %v3216, 4294901760
  %3791 = vmatmul.f32.gmra.mxu0 %v3790
  %v3792 = vpop.f32.mrf.mxu0
  %v3793 = vadd.f32 %v3700, %v3792
  %3794 = vdwg.mxu0
  %3795 = vmatpush.xpose.msra.mxu0 0.0
  %3796 = vmatpush.xpose.msra.mxu0 0.0
  %3797 = vmatpush.xpose.msra.mxu0 0.0
  %3798 = vmatpush.xpose.msra.mxu0 0.0
  %3799 = vmatpush.xpose.msra.mxu0 0.0
  %3800 = vmatpush.xpose.msra.mxu0 0.0
  %3801 = vmatpush.xpose.msra.mxu0 0.0
  %3802 = vmatpush.xpose.msra.mxu0 0.0
  %3803 = vmatpush.xpose.msra.mxu0 0.0
  %3804 = vmatpush.xpose.msra.mxu0 0.0
  %3805 = vmatpush.xpose.msra.mxu0 0.0
  %3806 = vmatpush.xpose.msra.mxu0 0.0
  %v3807 = vand.u32 %v3228, 4294901760
  %3808 = vmatpush.xpose.msra.mxu0 %v3807
  %v3809 = vand.u32 %v3225, 4294901760
  %3810 = vmatpush.xpose.msra.mxu0 %v3809
  %v3811 = vand.u32 %v3222, 4294901760
  %3812 = vmatpush.xpose.msra.mxu0 %v3811
  %v3813 = vand.u32 %v3219, 4294901760
  %3814 = vmatpush.xpose.msra.mxu0 %v3813
  %v3815 = vand.u32 %v3171, 4294901760
  %3816 = vmatmul.f32.gmra.mxu0 %v3815
  %v3817 = vpop.f32.mrf.mxu0
  %v3818 = vadd.f32 %v3733, %v3817
  %v3819 = vand.u32 %v3174, 4294901760
  %3820 = vmatmul.f32.gmra.mxu0 %v3819
  %v3821 = vpop.f32.mrf.mxu0
  %v3822 = vadd.f32 %v3737, %v3821
  %v3823 = vand.u32 %v3177, 4294901760
  %3824 = vmatmul.f32.gmra.mxu0 %v3823
  %v3825 = vpop.f32.mrf.mxu0
  %v3826 = vadd.f32 %v3741, %v3825
  %v3827 = vand.u32 %v3180, 4294901760
  %3828 = vmatmul.f32.gmra.mxu0 %v3827
  %v3829 = vpop.f32.mrf.mxu0
  %v3830 = vadd.f32 %v3745, %v3829
  %v3831 = vand.u32 %v3183, 4294901760
  %3832 = vmatmul.f32.gmra.mxu0 %v3831
  %v3833 = vpop.f32.mrf.mxu0
  %v3834 = vadd.f32 %v3749, %v3833
  %v3835 = vand.u32 %v3186, 4294901760
  %3836 = vmatmul.f32.gmra.mxu0 %v3835
  %v3837 = vpop.f32.mrf.mxu0
  %v3838 = vadd.f32 %v3753, %v3837
  %v3839 = vand.u32 %v3189, 4294901760
  %3840 = vmatmul.f32.gmra.mxu0 %v3839
  %v3841 = vpop.f32.mrf.mxu0
  %v3842 = vadd.f32 %v3757, %v3841
  %v3843 = vand.u32 %v3192, 4294901760
  %3844 = vmatmul.f32.gmra.mxu0 %v3843
  %v3845 = vpop.f32.mrf.mxu0
  %v3846 = vadd.f32 %v3761, %v3845
  %v3847 = vand.u32 %v3195, 4294901760
  %3848 = vmatmul.f32.gmra.mxu0 %v3847
  %v3849 = vpop.f32.mrf.mxu0
  %v3850 = vadd.f32 %v3765, %v3849
  %v3851 = vand.u32 %v3198, 4294901760
  %3852 = vmatmul.f32.gmra.mxu0 %v3851
  %v3853 = vpop.f32.mrf.mxu0
  %v3854 = vadd.f32 %v3769, %v3853
  %v3855 = vand.u32 %v3201, 4294901760
  %3856 = vmatmul.f32.gmra.mxu0 %v3855
  %v3857 = vpop.f32.mrf.mxu0
  %v3858 = vadd.f32 %v3773, %v3857
  %v3859 = vand.u32 %v3204, 4294901760
  %3860 = vmatmul.f32.gmra.mxu0 %v3859
  %v3861 = vpop.f32.mrf.mxu0
  %v3862 = vadd.f32 %v3777, %v3861
  %v3863 = vand.u32 %v3207, 4294901760
  %3864 = vmatmul.f32.gmra.mxu0 %v3863
  %v3865 = vpop.f32.mrf.mxu0
  %v3866 = vadd.f32 %v3781, %v3865
  %v3867 = vand.u32 %v3210, 4294901760
  %3868 = vmatmul.f32.gmra.mxu0 %v3867
  %v3869 = vpop.f32.mrf.mxu0
  %v3870 = vadd.f32 %v3785, %v3869
  %v3871 = vand.u32 %v3213, 4294901760
  %3872 = vmatmul.f32.gmra.mxu0 %v3871
  %v3873 = vpop.f32.mrf.mxu0
  %v3874 = vadd.f32 %v3789, %v3873
  %v3875 = vand.u32 %v3216, 4294901760
  %3876 = vmatmul.f32.gmra.mxu0 %v3875
  %v3877 = vpop.f32.mrf.mxu0
  %v3878 = vadd.f32 %v3793, %v3877
  %3879 = vdwg.mxu0
  %v3880 = vmax.f32 %v3818, 0.0
  %v3881 = vmax.f32 %v3822, 0.0
  %v3882 = vmax.f32 %v3826, 0.0
  %v3883 = vmax.f32 %v3830, 0.0
  %v3884 = vmax.f32 %v3834, 0.0
  %v3885 = vmax.f32 %v3838, 0.0
  %v3886 = vmax.f32 %v3842, 0.0
  %v3887 = vmax.f32 %v3846, 0.0
  %v3888 = vmax.f32 %v3850, 0.0
  %v3889 = vmax.f32 %v3854, 0.0
  %v3890 = vmax.f32 %v3858, 0.0
  %v3891 = vmax.f32 %v3862, 0.0
  %v3892 = vmax.f32 %v3866, 0.0
  %v3893 = vmax.f32 %v3870, 0.0
  %v3894 = vmax.f32 %v3874, 0.0
  %v3895 = vmax.f32 %v3878, 0.0
  %v3896 = vld [vmem:[%s11] sm:$0xff]
  %v3897 = vld [vmem:[%s11 + $0x8] sm:$0xff]
  %v3898 = vld [vmem:[%s11 + $0x10] sm:$0xff]
  %v3899 = vld [vmem:[%s11 + $0x18] sm:$0xff]
  %v3900 = vld [vmem:[%s11 + $0x20] sm:$0xff]
  %v3901 = vld [vmem:[%s11 + $0x28] sm:$0xff]
  %v3902 = vld [vmem:[%s11 + $0x30] sm:$0xff]
  %v3903 = vld [vmem:[%s11 + $0x38] sm:$0xff]
  %v3904 = vld [vmem:[%s12] sm:$0x1]
  %v3906 = vperm.slane %v3904, 0
  %v3909 = vsel %vm2482, %v3880, 0
  %v3912 = vsel %vm2482, %v3881, 0
  %v3915 = vsel %vm2482, %v3882, 0
  %v3918 = vsel %vm2482, %v3883, 0
  %v3921 = vsel %vm2482, %v3884, 0
  %v3924 = vsel %vm2482, %v3885, 0
  %v3927 = vsel %vm2482, %v3886, 0
  %v3930 = vsel %vm2482, %v3887, 0
  %v3933 = vsel %vm2482, %v3888, 0
  %v3936 = vsel %vm2482, %v3889, 0
  %v3939 = vsel %vm2482, %v3890, 0
  %v3942 = vsel %vm2482, %v3891, 0
  %v3945 = vsel %vm2482, %v3892, 0
  %v3948 = vsel %vm2482, %v3893, 0
  %v3951 = vsel %vm2482, %v3894, 0
  %v3954 = vsel %vm2482, %v3895, 0
  %v3957 = vsel %vm2482, %v3896, 0
  %v3960 = vsel %vm2482, %v3897, 0
  %v3963 = vsel %vm2482, %v3898, 0
  %v3966 = vsel %vm2482, %v3899, 0
  %v3969 = vsel %vm2482, %v3900, 0
  %v3972 = vsel %vm2482, %v3901, 0
  %v3975 = vsel %vm2482, %v3902, 0
  %v3978 = vsel %vm2482, %v3903, 0
  %3980 = vmatpush.xpose.msra.mxu0 0.0
  %3981 = vmatpush.xpose.msra.mxu0 0.0
  %3982 = vmatpush.xpose.msra.mxu0 0.0
  %3983 = vmatpush.xpose.msra.mxu0 0.0
  %3984 = vmatpush.xpose.msra.mxu0 0.0
  %3985 = vmatpush.xpose.msra.mxu0 0.0
  %3986 = vmatpush.xpose.msra.mxu0 0.0
  %3987 = vmatpush.xpose.msra.mxu0 0.0
  %v3988 = vand.u32 %v3978, 4294901760
  %3989 = vmatpush.xpose.msra.mxu0 %v3988
  %v3990 = vand.u32 %v3975, 4294901760
  %3991 = vmatpush.xpose.msra.mxu0 %v3990
  %v3992 = vand.u32 %v3972, 4294901760
  %3993 = vmatpush.xpose.msra.mxu0 %v3992
  %v3994 = vand.u32 %v3969, 4294901760
  %3995 = vmatpush.xpose.msra.mxu0 %v3994
  %v3996 = vand.u32 %v3966, 4294901760
  %3997 = vmatpush.xpose.msra.mxu0 %v3996
  %v3998 = vand.u32 %v3963, 4294901760
  %3999 = vmatpush.xpose.msra.mxu0 %v3998
  %v4000 = vand.u32 %v3960, 4294901760
  %4001 = vmatpush.xpose.msra.mxu0 %v4000
  %v4002 = vand.u32 %v3957, 4294901760
  %4003 = vmatpush.xpose.msra.mxu0 %v4002
  %v4004 = vand.u32 %v3909, 4294901760
  %v4005 = vsub.f32 %v3909, %v4004
  %v4006 = vand.u32 %v4005, 4294901760
  %v4007 = vsub.f32 %v4005, %v4006
  %v4008 = vand.u32 %v4007, 4294901760
  %4009 = vmatmul.f32.gmra.mxu0 %v4008
  %v4010 = vpop.f32.mrf.mxu0
  %v4011 = vadd.f32 %v3906, %v4010
  %v4012 = vand.u32 %v3912, 4294901760
  %v4013 = vsub.f32 %v3912, %v4012
  %v4014 = vand.u32 %v4013, 4294901760
  %v4015 = vsub.f32 %v4013, %v4014
  %v4016 = vand.u32 %v4015, 4294901760
  %4017 = vmatmul.f32.gmra.mxu0 %v4016
  %v4018 = vpop.f32.mrf.mxu0
  %v4019 = vadd.f32 %v3906, %v4018
  %v4020 = vand.u32 %v3915, 4294901760
  %v4021 = vsub.f32 %v3915, %v4020
  %v4022 = vand.u32 %v4021, 4294901760
  %v4023 = vsub.f32 %v4021, %v4022
  %v4024 = vand.u32 %v4023, 4294901760
  %4025 = vmatmul.f32.gmra.mxu0 %v4024
  %v4026 = vpop.f32.mrf.mxu0
  %v4027 = vadd.f32 %v3906, %v4026
  %v4028 = vand.u32 %v3918, 4294901760
  %v4029 = vsub.f32 %v3918, %v4028
  %v4030 = vand.u32 %v4029, 4294901760
  %v4031 = vsub.f32 %v4029, %v4030
  %v4032 = vand.u32 %v4031, 4294901760
  %4033 = vmatmul.f32.gmra.mxu0 %v4032
  %v4034 = vpop.f32.mrf.mxu0
  %v4035 = vadd.f32 %v3906, %v4034
  %v4036 = vand.u32 %v3921, 4294901760
  %v4037 = vsub.f32 %v3921, %v4036
  %v4038 = vand.u32 %v4037, 4294901760
  %v4039 = vsub.f32 %v4037, %v4038
  %v4040 = vand.u32 %v4039, 4294901760
  %4041 = vmatmul.f32.gmra.mxu0 %v4040
  %v4042 = vpop.f32.mrf.mxu0
  %v4043 = vadd.f32 %v3906, %v4042
  %v4044 = vand.u32 %v3924, 4294901760
  %v4045 = vsub.f32 %v3924, %v4044
  %v4046 = vand.u32 %v4045, 4294901760
  %v4047 = vsub.f32 %v4045, %v4046
  %v4048 = vand.u32 %v4047, 4294901760
  %4049 = vmatmul.f32.gmra.mxu0 %v4048
  %v4050 = vpop.f32.mrf.mxu0
  %v4051 = vadd.f32 %v3906, %v4050
  %v4052 = vand.u32 %v3927, 4294901760
  %v4053 = vsub.f32 %v3927, %v4052
  %v4054 = vand.u32 %v4053, 4294901760
  %v4055 = vsub.f32 %v4053, %v4054
  %v4056 = vand.u32 %v4055, 4294901760
  %4057 = vmatmul.f32.gmra.mxu0 %v4056
  %v4058 = vpop.f32.mrf.mxu0
  %v4059 = vadd.f32 %v3906, %v4058
  %v4060 = vand.u32 %v3930, 4294901760
  %v4061 = vsub.f32 %v3930, %v4060
  %v4062 = vand.u32 %v4061, 4294901760
  %v4063 = vsub.f32 %v4061, %v4062
  %v4064 = vand.u32 %v4063, 4294901760
  %4065 = vmatmul.f32.gmra.mxu0 %v4064
  %v4066 = vpop.f32.mrf.mxu0
  %v4067 = vadd.f32 %v3906, %v4066
  %v4068 = vand.u32 %v3933, 4294901760
  %v4069 = vsub.f32 %v3933, %v4068
  %v4070 = vand.u32 %v4069, 4294901760
  %v4071 = vsub.f32 %v4069, %v4070
  %v4072 = vand.u32 %v4071, 4294901760
  %4073 = vmatmul.f32.gmra.mxu0 %v4072
  %v4074 = vpop.f32.mrf.mxu0
  %v4075 = vadd.f32 %v3906, %v4074
  %v4076 = vand.u32 %v3936, 4294901760
  %v4077 = vsub.f32 %v3936, %v4076
  %v4078 = vand.u32 %v4077, 4294901760
  %v4079 = vsub.f32 %v4077, %v4078
  %v4080 = vand.u32 %v4079, 4294901760
  %4081 = vmatmul.f32.gmra.mxu0 %v4080
  %v4082 = vpop.f32.mrf.mxu0
  %v4083 = vadd.f32 %v3906, %v4082
  %v4084 = vand.u32 %v3939, 4294901760
  %v4085 = vsub.f32 %v3939, %v4084
  %v4086 = vand.u32 %v4085, 4294901760
  %v4087 = vsub.f32 %v4085, %v4086
  %v4088 = vand.u32 %v4087, 4294901760
  %4089 = vmatmul.f32.gmra.mxu0 %v4088
  %v4090 = vpop.f32.mrf.mxu0
  %v4091 = vadd.f32 %v3906, %v4090
  %v4092 = vand.u32 %v3942, 4294901760
  %v4093 = vsub.f32 %v3942, %v4092
  %v4094 = vand.u32 %v4093, 4294901760
  %v4095 = vsub.f32 %v4093, %v4094
  %v4096 = vand.u32 %v4095, 4294901760
  %4097 = vmatmul.f32.gmra.mxu0 %v4096
  %v4098 = vpop.f32.mrf.mxu0
  %v4099 = vadd.f32 %v3906, %v4098
  %v4100 = vand.u32 %v3945, 4294901760
  %v4101 = vsub.f32 %v3945, %v4100
  %v4102 = vand.u32 %v4101, 4294901760
  %v4103 = vsub.f32 %v4101, %v4102
  %v4104 = vand.u32 %v4103, 4294901760
  %4105 = vmatmul.f32.gmra.mxu0 %v4104
  %v4106 = vpop.f32.mrf.mxu0
  %v4107 = vadd.f32 %v3906, %v4106
  %v4108 = vand.u32 %v3948, 4294901760
  %v4109 = vsub.f32 %v3948, %v4108
  %v4110 = vand.u32 %v4109, 4294901760
  %v4111 = vsub.f32 %v4109, %v4110
  %v4112 = vand.u32 %v4111, 4294901760
  %4113 = vmatmul.f32.gmra.mxu0 %v4112
  %v4114 = vpop.f32.mrf.mxu0
  %v4115 = vadd.f32 %v3906, %v4114
  %v4116 = vand.u32 %v3951, 4294901760
  %v4117 = vsub.f32 %v3951, %v4116
  %v4118 = vand.u32 %v4117, 4294901760
  %v4119 = vsub.f32 %v4117, %v4118
  %v4120 = vand.u32 %v4119, 4294901760
  %4121 = vmatmul.f32.gmra.mxu0 %v4120
  %v4122 = vpop.f32.mrf.mxu0
  %v4123 = vadd.f32 %v3906, %v4122
  %v4124 = vand.u32 %v3954, 4294901760
  %v4125 = vsub.f32 %v3954, %v4124
  %v4126 = vand.u32 %v4125, 4294901760
  %v4127 = vsub.f32 %v4125, %v4126
  %v4128 = vand.u32 %v4127, 4294901760
  %4129 = vmatmul.f32.gmra.mxu0 %v4128
  %v4130 = vpop.f32.mrf.mxu0
  %v4131 = vadd.f32 %v3906, %v4130
  %4132 = vdwg.mxu0
  %4133 = vmatpush.xpose.msra.mxu0 0.0
  %4134 = vmatpush.xpose.msra.mxu0 0.0
  %4135 = vmatpush.xpose.msra.mxu0 0.0
  %4136 = vmatpush.xpose.msra.mxu0 0.0
  %4137 = vmatpush.xpose.msra.mxu0 0.0
  %4138 = vmatpush.xpose.msra.mxu0 0.0
  %4139 = vmatpush.xpose.msra.mxu0 0.0
  %4140 = vmatpush.xpose.msra.mxu0 0.0
  %v4141 = vand.u32 %v3978, 4294901760
  %v4142 = vsub.f32 %v3978, %v4141
  %v4143 = vand.u32 %v4142, 4294901760
  %v4144 = vsub.f32 %v4142, %v4143
  %v4145 = vand.u32 %v4144, 4294901760
  %4146 = vmatpush.xpose.msra.mxu0 %v4145
  %v4147 = vand.u32 %v3975, 4294901760
  %v4148 = vsub.f32 %v3975, %v4147
  %v4149 = vand.u32 %v4148, 4294901760
  %v4150 = vsub.f32 %v4148, %v4149
  %v4151 = vand.u32 %v4150, 4294901760
  %4152 = vmatpush.xpose.msra.mxu0 %v4151
  %v4153 = vand.u32 %v3972, 4294901760
  %v4154 = vsub.f32 %v3972, %v4153
  %v4155 = vand.u32 %v4154, 4294901760
  %v4156 = vsub.f32 %v4154, %v4155
  %v4157 = vand.u32 %v4156, 4294901760
  %4158 = vmatpush.xpose.msra.mxu0 %v4157
  %v4159 = vand.u32 %v3969, 4294901760
  %v4160 = vsub.f32 %v3969, %v4159
  %v4161 = vand.u32 %v4160, 4294901760
  %v4162 = vsub.f32 %v4160, %v4161
  %v4163 = vand.u32 %v4162, 4294901760
  %4164 = vmatpush.xpose.msra.mxu0 %v4163
  %v4165 = vand.u32 %v3966, 4294901760
  %v4166 = vsub.f32 %v3966, %v4165
  %v4167 = vand.u32 %v4166, 4294901760
  %v4168 = vsub.f32 %v4166, %v4167
  %v4169 = vand.u32 %v4168, 4294901760
  %4170 = vmatpush.xpose.msra.mxu0 %v4169
  %v4171 = vand.u32 %v3963, 4294901760
  %v4172 = vsub.f32 %v3963, %v4171
  %v4173 = vand.u32 %v4172, 4294901760
  %v4174 = vsub.f32 %v4172, %v4173
  %v4175 = vand.u32 %v4174, 4294901760
  %4176 = vmatpush.xpose.msra.mxu0 %v4175
  %v4177 = vand.u32 %v3960, 4294901760
  %v4178 = vsub.f32 %v3960, %v4177
  %v4179 = vand.u32 %v4178, 4294901760
  %v4180 = vsub.f32 %v4178, %v4179
  %v4181 = vand.u32 %v4180, 4294901760
  %4182 = vmatpush.xpose.msra.mxu0 %v4181
  %v4183 = vand.u32 %v3957, 4294901760
  %v4184 = vsub.f32 %v3957, %v4183
  %v4185 = vand.u32 %v4184, 4294901760
  %v4186 = vsub.f32 %v4184, %v4185
  %v4187 = vand.u32 %v4186, 4294901760
  %4188 = vmatpush.xpose.msra.mxu0 %v4187
  %v4189 = vand.u32 %v3909, 4294901760
  %4190 = vmatmul.f32.gmra.mxu0 %v4189
  %v4191 = vpop.f32.mrf.mxu0
  %v4192 = vadd.f32 %v4011, %v4191
  %v4193 = vand.u32 %v3912, 4294901760
  %4194 = vmatmul.f32.gmra.mxu0 %v4193
  %v4195 = vpop.f32.mrf.mxu0
  %v4196 = vadd.f32 %v4019, %v4195
  %v4197 = vand.u32 %v3915, 4294901760
  %4198 = vmatmul.f32.gmra.mxu0 %v4197
  %v4199 = vpop.f32.mrf.mxu0
  %v4200 = vadd.f32 %v4027, %v4199
  %v4201 = vand.u32 %v3918, 4294901760
  %4202 = vmatmul.f32.gmra.mxu0 %v4201
  %v4203 = vpop.f32.mrf.mxu0
  %v4204 = vadd.f32 %v4035, %v4203
  %v4205 = vand.u32 %v3921, 4294901760
  %4206 = vmatmul.f32.gmra.mxu0 %v4205
  %v4207 = vpop.f32.mrf.mxu0
  %v4208 = vadd.f32 %v4043, %v4207
  %v4209 = vand.u32 %v3924, 4294901760
  %4210 = vmatmul.f32.gmra.mxu0 %v4209
  %v4211 = vpop.f32.mrf.mxu0
  %v4212 = vadd.f32 %v4051, %v4211
  %v4213 = vand.u32 %v3927, 4294901760
  %4214 = vmatmul.f32.gmra.mxu0 %v4213
  %v4215 = vpop.f32.mrf.mxu0
  %v4216 = vadd.f32 %v4059, %v4215
  %v4217 = vand.u32 %v3930, 4294901760
  %4218 = vmatmul.f32.gmra.mxu0 %v4217
  %v4219 = vpop.f32.mrf.mxu0
  %v4220 = vadd.f32 %v4067, %v4219
  %v4221 = vand.u32 %v3933, 4294901760
  %4222 = vmatmul.f32.gmra.mxu0 %v4221
  %v4223 = vpop.f32.mrf.mxu0
  %v4224 = vadd.f32 %v4075, %v4223
  %v4225 = vand.u32 %v3936, 4294901760
  %4226 = vmatmul.f32.gmra.mxu0 %v4225
  %v4227 = vpop.f32.mrf.mxu0
  %v4228 = vadd.f32 %v4083, %v4227
  %v4229 = vand.u32 %v3939, 4294901760
  %4230 = vmatmul.f32.gmra.mxu0 %v4229
  %v4231 = vpop.f32.mrf.mxu0
  %v4232 = vadd.f32 %v4091, %v4231
  %v4233 = vand.u32 %v3942, 4294901760
  %4234 = vmatmul.f32.gmra.mxu0 %v4233
  %v4235 = vpop.f32.mrf.mxu0
  %v4236 = vadd.f32 %v4099, %v4235
  %v4237 = vand.u32 %v3945, 4294901760
  %4238 = vmatmul.f32.gmra.mxu0 %v4237
  %v4239 = vpop.f32.mrf.mxu0
  %v4240 = vadd.f32 %v4107, %v4239
  %v4241 = vand.u32 %v3948, 4294901760
  %4242 = vmatmul.f32.gmra.mxu0 %v4241
  %v4243 = vpop.f32.mrf.mxu0
  %v4244 = vadd.f32 %v4115, %v4243
  %v4245 = vand.u32 %v3951, 4294901760
  %4246 = vmatmul.f32.gmra.mxu0 %v4245
  %v4247 = vpop.f32.mrf.mxu0
  %v4248 = vadd.f32 %v4123, %v4247
  %v4249 = vand.u32 %v3954, 4294901760
  %4250 = vmatmul.f32.gmra.mxu0 %v4249
  %v4251 = vpop.f32.mrf.mxu0
  %v4252 = vadd.f32 %v4131, %v4251
  %4253 = vdwg.mxu0
  %4254 = vmatpush.xpose.msra.mxu0 0.0
  %4255 = vmatpush.xpose.msra.mxu0 0.0
  %4256 = vmatpush.xpose.msra.mxu0 0.0
  %4257 = vmatpush.xpose.msra.mxu0 0.0
  %4258 = vmatpush.xpose.msra.mxu0 0.0
  %4259 = vmatpush.xpose.msra.mxu0 0.0
  %4260 = vmatpush.xpose.msra.mxu0 0.0
  %4261 = vmatpush.xpose.msra.mxu0 0.0
  %v4262 = vand.u32 %v3978, 4294901760
  %v4263 = vsub.f32 %v3978, %v4262
  %4264 = vmatpush.xpose.msra.mxu0 %v4263
  %v4265 = vand.u32 %v3975, 4294901760
  %v4266 = vsub.f32 %v3975, %v4265
  %4267 = vmatpush.xpose.msra.mxu0 %v4266
  %v4268 = vand.u32 %v3972, 4294901760
  %v4269 = vsub.f32 %v3972, %v4268
  %4270 = vmatpush.xpose.msra.mxu0 %v4269
  %v4271 = vand.u32 %v3969, 4294901760
  %v4272 = vsub.f32 %v3969, %v4271
  %4273 = vmatpush.xpose.msra.mxu0 %v4272
  %v4274 = vand.u32 %v3966, 4294901760
  %v4275 = vsub.f32 %v3966, %v4274
  %4276 = vmatpush.xpose.msra.mxu0 %v4275
  %v4277 = vand.u32 %v3963, 4294901760
  %v4278 = vsub.f32 %v3963, %v4277
  %4279 = vmatpush.xpose.msra.mxu0 %v4278
  %v4280 = vand.u32 %v3960, 4294901760
  %v4281 = vsub.f32 %v3960, %v4280
  %4282 = vmatpush.xpose.msra.mxu0 %v4281
  %v4283 = vand.u32 %v3957, 4294901760
  %v4284 = vsub.f32 %v3957, %v4283
  %4285 = vmatpush.xpose.msra.mxu0 %v4284
  %v4286 = vand.u32 %v3909, 4294901760
  %v4287 = vsub.f32 %v3909, %v4286
  %4288 = vmatmul.f32.gmra.mxu0 %v4287
  %v4289 = vpop.f32.mrf.mxu0
  %v4290 = vadd.f32 %v4192, %v4289
  %v4291 = vand.u32 %v3912, 4294901760
  %v4292 = vsub.f32 %v3912, %v4291
  %4293 = vmatmul.f32.gmra.mxu0 %v4292
  %v4294 = vpop.f32.mrf.mxu0
  %v4295 = vadd.f32 %v4196, %v4294
  %v4296 = vand.u32 %v3915, 4294901760
  %v4297 = vsub.f32 %v3915, %v4296
  %4298 = vmatmul.f32.gmra.mxu0 %v4297
  %v4299 = vpop.f32.mrf.mxu0
  %v4300 = vadd.f32 %v4200, %v4299
  %v4301 = vand.u32 %v3918, 4294901760
  %v4302 = vsub.f32 %v3918, %v4301
  %4303 = vmatmul.f32.gmra.mxu0 %v4302
  %v4304 = vpop.f32.mrf.mxu0
  %v4305 = vadd.f32 %v4204, %v4304
  %v4306 = vand.u32 %v3921, 4294901760
  %v4307 = vsub.f32 %v3921, %v4306
  %4308 = vmatmul.f32.gmra.mxu0 %v4307
  %v4309 = vpop.f32.mrf.mxu0
  %v4310 = vadd.f32 %v4208, %v4309
  %v4311 = vand.u32 %v3924, 4294901760
  %v4312 = vsub.f32 %v3924, %v4311
  %4313 = vmatmul.f32.gmra.mxu0 %v4312
  %v4314 = vpop.f32.mrf.mxu0
  %v4315 = vadd.f32 %v4212, %v4314
  %v4316 = vand.u32 %v3927, 4294901760
  %v4317 = vsub.f32 %v3927, %v4316
  %4318 = vmatmul.f32.gmra.mxu0 %v4317
  %v4319 = vpop.f32.mrf.mxu0
  %v4320 = vadd.f32 %v4216, %v4319
  %v4321 = vand.u32 %v3930, 4294901760
  %v4322 = vsub.f32 %v3930, %v4321
  %4323 = vmatmul.f32.gmra.mxu0 %v4322
  %v4324 = vpop.f32.mrf.mxu0
  %v4325 = vadd.f32 %v4220, %v4324
  %v4326 = vand.u32 %v3933, 4294901760
  %v4327 = vsub.f32 %v3933, %v4326
  %4328 = vmatmul.f32.gmra.mxu0 %v4327
  %v4329 = vpop.f32.mrf.mxu0
  %v4330 = vadd.f32 %v4224, %v4329
  %v4331 = vand.u32 %v3936, 4294901760
  %v4332 = vsub.f32 %v3936, %v4331
  %4333 = vmatmul.f32.gmra.mxu0 %v4332
  %v4334 = vpop.f32.mrf.mxu0
  %v4335 = vadd.f32 %v4228, %v4334
  %v4336 = vand.u32 %v3939, 4294901760
  %v4337 = vsub.f32 %v3939, %v4336
  %4338 = vmatmul.f32.gmra.mxu0 %v4337
  %v4339 = vpop.f32.mrf.mxu0
  %v4340 = vadd.f32 %v4232, %v4339
  %v4341 = vand.u32 %v3942, 4294901760
  %v4342 = vsub.f32 %v3942, %v4341
  %4343 = vmatmul.f32.gmra.mxu0 %v4342
  %v4344 = vpop.f32.mrf.mxu0
  %v4345 = vadd.f32 %v4236, %v4344
  %v4346 = vand.u32 %v3945, 4294901760
  %v4347 = vsub.f32 %v3945, %v4346
  %4348 = vmatmul.f32.gmra.mxu0 %v4347
  %v4349 = vpop.f32.mrf.mxu0
  %v4350 = vadd.f32 %v4240, %v4349
  %v4351 = vand.u32 %v3948, 4294901760
  %v4352 = vsub.f32 %v3948, %v4351
  %4353 = vmatmul.f32.gmra.mxu0 %v4352
  %v4354 = vpop.f32.mrf.mxu0
  %v4355 = vadd.f32 %v4244, %v4354
  %v4356 = vand.u32 %v3951, 4294901760
  %v4357 = vsub.f32 %v3951, %v4356
  %4358 = vmatmul.f32.gmra.mxu0 %v4357
  %v4359 = vpop.f32.mrf.mxu0
  %v4360 = vadd.f32 %v4248, %v4359
  %v4361 = vand.u32 %v3954, 4294901760
  %v4362 = vsub.f32 %v3954, %v4361
  %4363 = vmatmul.f32.gmra.mxu0 %v4362
  %v4364 = vpop.f32.mrf.mxu0
  %v4365 = vadd.f32 %v4252, %v4364
  %4366 = vdwg.mxu0
  %4367 = vmatpush.xpose.msra.mxu0 0.0
  %4368 = vmatpush.xpose.msra.mxu0 0.0
  %4369 = vmatpush.xpose.msra.mxu0 0.0
  %4370 = vmatpush.xpose.msra.mxu0 0.0
  %4371 = vmatpush.xpose.msra.mxu0 0.0
  %4372 = vmatpush.xpose.msra.mxu0 0.0
  %4373 = vmatpush.xpose.msra.mxu0 0.0
  %4374 = vmatpush.xpose.msra.mxu0 0.0
  %v4375 = vand.u32 %v3978, 4294901760
  %4376 = vmatpush.xpose.msra.mxu0 %v4375
  %v4377 = vand.u32 %v3975, 4294901760
  %4378 = vmatpush.xpose.msra.mxu0 %v4377
  %v4379 = vand.u32 %v3972, 4294901760
  %4380 = vmatpush.xpose.msra.mxu0 %v4379
  %v4381 = vand.u32 %v3969, 4294901760
  %4382 = vmatpush.xpose.msra.mxu0 %v4381
  %v4383 = vand.u32 %v3966, 4294901760
  %4384 = vmatpush.xpose.msra.mxu0 %v4383
  %v4385 = vand.u32 %v3963, 4294901760
  %4386 = vmatpush.xpose.msra.mxu0 %v4385
  %v4387 = vand.u32 %v3960, 4294901760
  %4388 = vmatpush.xpose.msra.mxu0 %v4387
  %v4389 = vand.u32 %v3957, 4294901760
  %4390 = vmatpush.xpose.msra.mxu0 %v4389
  %v4391 = vand.u32 %v3909, 4294901760
  %v4392 = vsub.f32 %v3909, %v4391
  %v4393 = vand.u32 %v4392, 4294901760
  %4394 = vmatmul.f32.gmra.mxu0 %v4393
  %v4395 = vpop.f32.mrf.mxu0
  %v4396 = vadd.f32 %v4290, %v4395
  %v4397 = vand.u32 %v3912, 4294901760
  %v4398 = vsub.f32 %v3912, %v4397
  %v4399 = vand.u32 %v4398, 4294901760
  %4400 = vmatmul.f32.gmra.mxu0 %v4399
  %v4401 = vpop.f32.mrf.mxu0
  %v4402 = vadd.f32 %v4295, %v4401
  %v4403 = vand.u32 %v3915, 4294901760
  %v4404 = vsub.f32 %v3915, %v4403
  %v4405 = vand.u32 %v4404, 4294901760
  %4406 = vmatmul.f32.gmra.mxu0 %v4405
  %v4407 = vpop.f32.mrf.mxu0
  %v4408 = vadd.f32 %v4300, %v4407
  %v4409 = vand.u32 %v3918, 4294901760
  %v4410 = vsub.f32 %v3918, %v4409
  %v4411 = vand.u32 %v4410, 4294901760
  %4412 = vmatmul.f32.gmra.mxu0 %v4411
  %v4413 = vpop.f32.mrf.mxu0
  %v4414 = vadd.f32 %v4305, %v4413
  %v4415 = vand.u32 %v3921, 4294901760
  %v4416 = vsub.f32 %v3921, %v4415
  %v4417 = vand.u32 %v4416, 4294901760
  %4418 = vmatmul.f32.gmra.mxu0 %v4417
  %v4419 = vpop.f32.mrf.mxu0
  %v4420 = vadd.f32 %v4310, %v4419
  %v4421 = vand.u32 %v3924, 4294901760
  %v4422 = vsub.f32 %v3924, %v4421
  %v4423 = vand.u32 %v4422, 4294901760
  %4424 = vmatmul.f32.gmra.mxu0 %v4423
  %v4425 = vpop.f32.mrf.mxu0
  %v4426 = vadd.f32 %v4315, %v4425
  %v4427 = vand.u32 %v3927, 4294901760
  %v4428 = vsub.f32 %v3927, %v4427
  %v4429 = vand.u32 %v4428, 4294901760
  %4430 = vmatmul.f32.gmra.mxu0 %v4429
  %v4431 = vpop.f32.mrf.mxu0
  %v4432 = vadd.f32 %v4320, %v4431
  %v4433 = vand.u32 %v3930, 4294901760
  %v4434 = vsub.f32 %v3930, %v4433
  %v4435 = vand.u32 %v4434, 4294901760
  %4436 = vmatmul.f32.gmra.mxu0 %v4435
  %v4437 = vpop.f32.mrf.mxu0
  %v4438 = vadd.f32 %v4325, %v4437
  %v4439 = vand.u32 %v3933, 4294901760
  %v4440 = vsub.f32 %v3933, %v4439
  %v4441 = vand.u32 %v4440, 4294901760
  %4442 = vmatmul.f32.gmra.mxu0 %v4441
  %v4443 = vpop.f32.mrf.mxu0
  %v4444 = vadd.f32 %v4330, %v4443
  %v4445 = vand.u32 %v3936, 4294901760
  %v4446 = vsub.f32 %v3936, %v4445
  %v4447 = vand.u32 %v4446, 4294901760
  %4448 = vmatmul.f32.gmra.mxu0 %v4447
  %v4449 = vpop.f32.mrf.mxu0
  %v4450 = vadd.f32 %v4335, %v4449
  %v4451 = vand.u32 %v3939, 4294901760
  %v4452 = vsub.f32 %v3939, %v4451
  %v4453 = vand.u32 %v4452, 4294901760
  %4454 = vmatmul.f32.gmra.mxu0 %v4453
  %v4455 = vpop.f32.mrf.mxu0
  %v4456 = vadd.f32 %v4340, %v4455
  %v4457 = vand.u32 %v3942, 4294901760
  %v4458 = vsub.f32 %v3942, %v4457
  %v4459 = vand.u32 %v4458, 4294901760
  %4460 = vmatmul.f32.gmra.mxu0 %v4459
  %v4461 = vpop.f32.mrf.mxu0
  %v4462 = vadd.f32 %v4345, %v4461
  %v4463 = vand.u32 %v3945, 4294901760
  %v4464 = vsub.f32 %v3945, %v4463
  %v4465 = vand.u32 %v4464, 4294901760
  %4466 = vmatmul.f32.gmra.mxu0 %v4465
  %v4467 = vpop.f32.mrf.mxu0
  %v4468 = vadd.f32 %v4350, %v4467
  %v4469 = vand.u32 %v3948, 4294901760
  %v4470 = vsub.f32 %v3948, %v4469
  %v4471 = vand.u32 %v4470, 4294901760
  %4472 = vmatmul.f32.gmra.mxu0 %v4471
  %v4473 = vpop.f32.mrf.mxu0
  %v4474 = vadd.f32 %v4355, %v4473
  %v4475 = vand.u32 %v3951, 4294901760
  %v4476 = vsub.f32 %v3951, %v4475
  %v4477 = vand.u32 %v4476, 4294901760
  %4478 = vmatmul.f32.gmra.mxu0 %v4477
  %v4479 = vpop.f32.mrf.mxu0
  %v4480 = vadd.f32 %v4360, %v4479
  %v4481 = vand.u32 %v3954, 4294901760
  %v4482 = vsub.f32 %v3954, %v4481
  %v4483 = vand.u32 %v4482, 4294901760
  %4484 = vmatmul.f32.gmra.mxu0 %v4483
  %v4485 = vpop.f32.mrf.mxu0
  %v4486 = vadd.f32 %v4365, %v4485
  %4487 = vdwg.mxu0
  %4488 = vmatpush.xpose.msra.mxu0 0.0
  %4489 = vmatpush.xpose.msra.mxu0 0.0
  %4490 = vmatpush.xpose.msra.mxu0 0.0
  %4491 = vmatpush.xpose.msra.mxu0 0.0
  %4492 = vmatpush.xpose.msra.mxu0 0.0
  %4493 = vmatpush.xpose.msra.mxu0 0.0
  %4494 = vmatpush.xpose.msra.mxu0 0.0
  %4495 = vmatpush.xpose.msra.mxu0 0.0
  %v4496 = vand.u32 %v3978, 4294901760
  %v4497 = vsub.f32 %v3978, %v4496
  %v4498 = vand.u32 %v4497, 4294901760
  %4499 = vmatpush.xpose.msra.mxu0 %v4498
  %v4500 = vand.u32 %v3975, 4294901760
  %v4501 = vsub.f32 %v3975, %v4500
  %v4502 = vand.u32 %v4501, 4294901760
  %4503 = vmatpush.xpose.msra.mxu0 %v4502
  %v4504 = vand.u32 %v3972, 4294901760
  %v4505 = vsub.f32 %v3972, %v4504
  %v4506 = vand.u32 %v4505, 4294901760
  %4507 = vmatpush.xpose.msra.mxu0 %v4506
  %v4508 = vand.u32 %v3969, 4294901760
  %v4509 = vsub.f32 %v3969, %v4508
  %v4510 = vand.u32 %v4509, 4294901760
  %4511 = vmatpush.xpose.msra.mxu0 %v4510
  %v4512 = vand.u32 %v3966, 4294901760
  %v4513 = vsub.f32 %v3966, %v4512
  %v4514 = vand.u32 %v4513, 4294901760
  %4515 = vmatpush.xpose.msra.mxu0 %v4514
  %v4516 = vand.u32 %v3963, 4294901760
  %v4517 = vsub.f32 %v3963, %v4516
  %v4518 = vand.u32 %v4517, 4294901760
  %4519 = vmatpush.xpose.msra.mxu0 %v4518
  %v4520 = vand.u32 %v3960, 4294901760
  %v4521 = vsub.f32 %v3960, %v4520
  %v4522 = vand.u32 %v4521, 4294901760
  %4523 = vmatpush.xpose.msra.mxu0 %v4522
  %v4524 = vand.u32 %v3957, 4294901760
  %v4525 = vsub.f32 %v3957, %v4524
  %v4526 = vand.u32 %v4525, 4294901760
  %4527 = vmatpush.xpose.msra.mxu0 %v4526
  %v4528 = vand.u32 %v3909, 4294901760
  %4529 = vmatmul.f32.gmra.mxu0 %v4528
  %v4530 = vpop.f32.mrf.mxu0
  %v4531 = vadd.f32 %v4396, %v4530
  %v4532 = vand.u32 %v3912, 4294901760
  %4533 = vmatmul.f32.gmra.mxu0 %v4532
  %v4534 = vpop.f32.mrf.mxu0
  %v4535 = vadd.f32 %v4402, %v4534
  %v4536 = vand.u32 %v3915, 4294901760
  %4537 = vmatmul.f32.gmra.mxu0 %v4536
  %v4538 = vpop.f32.mrf.mxu0
  %v4539 = vadd.f32 %v4408, %v4538
  %v4540 = vand.u32 %v3918, 4294901760
  %4541 = vmatmul.f32.gmra.mxu0 %v4540
  %v4542 = vpop.f32.mrf.mxu0
  %v4543 = vadd.f32 %v4414, %v4542
  %v4544 = vand.u32 %v3921, 4294901760
  %4545 = vmatmul.f32.gmra.mxu0 %v4544
  %v4546 = vpop.f32.mrf.mxu0
  %v4547 = vadd.f32 %v4420, %v4546
  %v4548 = vand.u32 %v3924, 4294901760
  %4549 = vmatmul.f32.gmra.mxu0 %v4548
  %v4550 = vpop.f32.mrf.mxu0
  %v4551 = vadd.f32 %v4426, %v4550
  %v4552 = vand.u32 %v3927, 4294901760
  %4553 = vmatmul.f32.gmra.mxu0 %v4552
  %v4554 = vpop.f32.mrf.mxu0
  %v4555 = vadd.f32 %v4432, %v4554
  %v4556 = vand.u32 %v3930, 4294901760
  %4557 = vmatmul.f32.gmra.mxu0 %v4556
  %v4558 = vpop.f32.mrf.mxu0
  %v4559 = vadd.f32 %v4438, %v4558
  %v4560 = vand.u32 %v3933, 4294901760
  %4561 = vmatmul.f32.gmra.mxu0 %v4560
  %v4562 = vpop.f32.mrf.mxu0
  %v4563 = vadd.f32 %v4444, %v4562
  %v4564 = vand.u32 %v3936, 4294901760
  %4565 = vmatmul.f32.gmra.mxu0 %v4564
  %v4566 = vpop.f32.mrf.mxu0
  %v4567 = vadd.f32 %v4450, %v4566
  %v4568 = vand.u32 %v3939, 4294901760
  %4569 = vmatmul.f32.gmra.mxu0 %v4568
  %v4570 = vpop.f32.mrf.mxu0
  %v4571 = vadd.f32 %v4456, %v4570
  %v4572 = vand.u32 %v3942, 4294901760
  %4573 = vmatmul.f32.gmra.mxu0 %v4572
  %v4574 = vpop.f32.mrf.mxu0
  %v4575 = vadd.f32 %v4462, %v4574
  %v4576 = vand.u32 %v3945, 4294901760
  %4577 = vmatmul.f32.gmra.mxu0 %v4576
  %v4578 = vpop.f32.mrf.mxu0
  %v4579 = vadd.f32 %v4468, %v4578
  %v4580 = vand.u32 %v3948, 4294901760
  %4581 = vmatmul.f32.gmra.mxu0 %v4580
  %v4582 = vpop.f32.mrf.mxu0
  %v4583 = vadd.f32 %v4474, %v4582
  %v4584 = vand.u32 %v3951, 4294901760
  %4585 = vmatmul.f32.gmra.mxu0 %v4584
  %v4586 = vpop.f32.mrf.mxu0
  %v4587 = vadd.f32 %v4480, %v4586
  %v4588 = vand.u32 %v3954, 4294901760
  %4589 = vmatmul.f32.gmra.mxu0 %v4588
  %v4590 = vpop.f32.mrf.mxu0
  %v4591 = vadd.f32 %v4486, %v4590
  %4592 = vdwg.mxu0
  %4593 = vmatpush.xpose.msra.mxu0 0.0
  %4594 = vmatpush.xpose.msra.mxu0 0.0
  %4595 = vmatpush.xpose.msra.mxu0 0.0
  %4596 = vmatpush.xpose.msra.mxu0 0.0
  %4597 = vmatpush.xpose.msra.mxu0 0.0
  %4598 = vmatpush.xpose.msra.mxu0 0.0
  %4599 = vmatpush.xpose.msra.mxu0 0.0
  %4600 = vmatpush.xpose.msra.mxu0 0.0
  %v4601 = vand.u32 %v3978, 4294901760
  %4602 = vmatpush.xpose.msra.mxu0 %v4601
  %v4603 = vand.u32 %v3975, 4294901760
  %4604 = vmatpush.xpose.msra.mxu0 %v4603
  %v4605 = vand.u32 %v3972, 4294901760
  %4606 = vmatpush.xpose.msra.mxu0 %v4605
  %v4607 = vand.u32 %v3969, 4294901760
  %4608 = vmatpush.xpose.msra.mxu0 %v4607
  %v4609 = vand.u32 %v3966, 4294901760
  %4610 = vmatpush.xpose.msra.mxu0 %v4609
  %v4611 = vand.u32 %v3963, 4294901760
  %4612 = vmatpush.xpose.msra.mxu0 %v4611
  %v4613 = vand.u32 %v3960, 4294901760
  %4614 = vmatpush.xpose.msra.mxu0 %v4613
  %v4615 = vand.u32 %v3957, 4294901760
  %4616 = vmatpush.xpose.msra.mxu0 %v4615
  %v4617 = vand.u32 %v3909, 4294901760
  %4618 = vmatmul.f32.gmra.mxu0 %v4617
  %v4619 = vpop.f32.mrf.mxu0
  %v4620 = vadd.f32 %v4531, %v4619
  %v4621 = vand.u32 %v3912, 4294901760
  %4622 = vmatmul.f32.gmra.mxu0 %v4621
  %v4623 = vpop.f32.mrf.mxu0
  %v4624 = vadd.f32 %v4535, %v4623
  %v4625 = vand.u32 %v3915, 4294901760
  %4626 = vmatmul.f32.gmra.mxu0 %v4625
  %v4627 = vpop.f32.mrf.mxu0
  %v4628 = vadd.f32 %v4539, %v4627
  %v4629 = vand.u32 %v3918, 4294901760
  %4630 = vmatmul.f32.gmra.mxu0 %v4629
  %v4631 = vpop.f32.mrf.mxu0
  %v4632 = vadd.f32 %v4543, %v4631
  %v4633 = vand.u32 %v3921, 4294901760
  %4634 = vmatmul.f32.gmra.mxu0 %v4633
  %v4635 = vpop.f32.mrf.mxu0
  %v4636 = vadd.f32 %v4547, %v4635
  %v4637 = vand.u32 %v3924, 4294901760
  %4638 = vmatmul.f32.gmra.mxu0 %v4637
  %v4639 = vpop.f32.mrf.mxu0
  %v4640 = vadd.f32 %v4551, %v4639
  %v4641 = vand.u32 %v3927, 4294901760
  %4642 = vmatmul.f32.gmra.mxu0 %v4641
  %v4643 = vpop.f32.mrf.mxu0
  %v4644 = vadd.f32 %v4555, %v4643
  %v4645 = vand.u32 %v3930, 4294901760
  %4646 = vmatmul.f32.gmra.mxu0 %v4645
  %v4647 = vpop.f32.mrf.mxu0
  %v4648 = vadd.f32 %v4559, %v4647
  %v4649 = vand.u32 %v3933, 4294901760
  %4650 = vmatmul.f32.gmra.mxu0 %v4649
  %v4651 = vpop.f32.mrf.mxu0
  %v4652 = vadd.f32 %v4563, %v4651
  %v4653 = vand.u32 %v3936, 4294901760
  %4654 = vmatmul.f32.gmra.mxu0 %v4653
  %v4655 = vpop.f32.mrf.mxu0
  %v4656 = vadd.f32 %v4567, %v4655
  %v4657 = vand.u32 %v3939, 4294901760
  %4658 = vmatmul.f32.gmra.mxu0 %v4657
  %v4659 = vpop.f32.mrf.mxu0
  %v4660 = vadd.f32 %v4571, %v4659
  %v4661 = vand.u32 %v3942, 4294901760
  %4662 = vmatmul.f32.gmra.mxu0 %v4661
  %v4663 = vpop.f32.mrf.mxu0
  %v4664 = vadd.f32 %v4575, %v4663
  %v4665 = vand.u32 %v3945, 4294901760
  %4666 = vmatmul.f32.gmra.mxu0 %v4665
  %v4667 = vpop.f32.mrf.mxu0
  %v4668 = vadd.f32 %v4579, %v4667
  %v4669 = vand.u32 %v3948, 4294901760
  %4670 = vmatmul.f32.gmra.mxu0 %v4669
  %v4671 = vpop.f32.mrf.mxu0
  %v4672 = vadd.f32 %v4583, %v4671
  %v4673 = vand.u32 %v3951, 4294901760
  %4674 = vmatmul.f32.gmra.mxu0 %v4673
  %v4675 = vpop.f32.mrf.mxu0
  %v4676 = vadd.f32 %v4587, %v4675
  %v4677 = vand.u32 %v3954, 4294901760
  %4678 = vmatmul.f32.gmra.mxu0 %v4677
  %v4679 = vpop.f32.mrf.mxu0
  %v4680 = vadd.f32 %v4591, %v4679
  %4681 = vdwg.mxu0
  %v4682 = vmax.f32 %v4620, 0.0
  %v4683 = vmax.f32 %v4624, 0.0
  %v4684 = vmax.f32 %v4628, 0.0
  %v4685 = vmax.f32 %v4632, 0.0
  %v4686 = vmax.f32 %v4636, 0.0
  %v4687 = vmax.f32 %v4640, 0.0
  %v4688 = vmax.f32 %v4644, 0.0
  %v4689 = vmax.f32 %v4648, 0.0
  %v4690 = vmax.f32 %v4652, 0.0
  %v4691 = vmax.f32 %v4656, 0.0
  %v4692 = vmax.f32 %v4660, 0.0
  %v4693 = vmax.f32 %v4664, 0.0
  %v4694 = vmax.f32 %v4668, 0.0
  %v4695 = vmax.f32 %v4672, 0.0
  %v4696 = vmax.f32 %v4676, 0.0
  %v4697 = vmax.f32 %v4680, 0.0
  %v4698 = vld [vmem:[%s13] sm:$0xff]
  %v4699 = vld [vmem:[%s13 + $0x8] sm:$0xff]
  %v4700 = vld [vmem:[%s13 + $0x10] sm:$0xff]
  %v4701 = vld [vmem:[%s13 + $0x18] sm:$0xff]
  %v4702 = vld [vmem:[%s13 + $0x20] sm:$0xff]
  %v4703 = vld [vmem:[%s13 + $0x28] sm:$0xff]
  %v4704 = vld [vmem:[%s13 + $0x30] sm:$0xff]
  %v4705 = vld [vmem:[%s13 + $0x38] sm:$0xff]
  %v4706 = vld [vmem:[%s13 + $0x40] sm:$0xff]
  %v4707 = vld [vmem:[%s13 + $0x48] sm:$0xff]
  %v4708 = vld [vmem:[%s13 + $0x50] sm:$0xff]
  %v4709 = vld [vmem:[%s13 + $0x58] sm:$0xff]
  %v4710 = vld [vmem:[%s13 + $0x60] sm:$0xff]
  %v4711 = vld [vmem:[%s13 + $0x68] sm:$0xff]
  %v4712 = vld [vmem:[%s13 + $0x70] sm:$0xff]
  %v4713 = vld [vmem:[%s13 + $0x78] sm:$0xff]
  %v4714 = vld [vmem:[%s14] sm:$0x1]
  %v4716 = vperm.slane %v4714, 0
  %v4719 = vsel %vm1749, %v4682, 0
  %v4722 = vsel %vm1749, %v4683, 0
  %v4725 = vsel %vm1749, %v4684, 0
  %v4728 = vsel %vm1749, %v4685, 0
  %v4731 = vsel %vm1749, %v4686, 0
  %v4734 = vsel %vm1749, %v4687, 0
  %v4737 = vsel %vm1749, %v4688, 0
  %v4740 = vsel %vm1749, %v4689, 0
  %v4743 = vsel %vm1749, %v4690, 0
  %v4746 = vsel %vm1749, %v4691, 0
  %v4749 = vsel %vm1749, %v4692, 0
  %v4752 = vsel %vm1749, %v4693, 0
  %v4755 = vsel %vm1749, %v4694, 0
  %v4758 = vsel %vm1749, %v4695, 0
  %v4761 = vsel %vm1749, %v4696, 0
  %v4764 = vsel %vm1749, %v4697, 0
  %v4767 = vsel %vm1749, %v4698, 0
  %v4770 = vsel %vm1749, %v4699, 0
  %v4773 = vsel %vm1749, %v4700, 0
  %v4776 = vsel %vm1749, %v4701, 0
  %v4779 = vsel %vm1749, %v4702, 0
  %v4782 = vsel %vm1749, %v4703, 0
  %v4785 = vsel %vm1749, %v4704, 0
  %v4788 = vsel %vm1749, %v4705, 0
  %v4791 = vsel %vm1749, %v4706, 0
  %v4794 = vsel %vm1749, %v4707, 0
  %v4797 = vsel %vm1749, %v4708, 0
  %v4800 = vsel %vm1749, %v4709, 0
  %v4803 = vsel %vm1749, %v4710, 0
  %v4806 = vsel %vm1749, %v4711, 0
  %v4809 = vsel %vm1749, %v4712, 0
  %v4812 = vsel %vm1749, %v4713, 0
  %v4814 = vand.u32 %v4812, 4294901760
  %4815 = vmatpush.xpose.msra.mxu0 %v4814
  %v4816 = vand.u32 %v4809, 4294901760
  %4817 = vmatpush.xpose.msra.mxu0 %v4816
  %v4818 = vand.u32 %v4806, 4294901760
  %4819 = vmatpush.xpose.msra.mxu0 %v4818
  %v4820 = vand.u32 %v4803, 4294901760
  %4821 = vmatpush.xpose.msra.mxu0 %v4820
  %v4822 = vand.u32 %v4800, 4294901760
  %4823 = vmatpush.xpose.msra.mxu0 %v4822
  %v4824 = vand.u32 %v4797, 4294901760
  %4825 = vmatpush.xpose.msra.mxu0 %v4824
  %v4826 = vand.u32 %v4794, 4294901760
  %4827 = vmatpush.xpose.msra.mxu0 %v4826
  %v4828 = vand.u32 %v4791, 4294901760
  %4829 = vmatpush.xpose.msra.mxu0 %v4828
  %v4830 = vand.u32 %v4788, 4294901760
  %4831 = vmatpush.xpose.msra.mxu0 %v4830
  %v4832 = vand.u32 %v4785, 4294901760
  %4833 = vmatpush.xpose.msra.mxu0 %v4832
  %v4834 = vand.u32 %v4782, 4294901760
  %4835 = vmatpush.xpose.msra.mxu0 %v4834
  %v4836 = vand.u32 %v4779, 4294901760
  %4837 = vmatpush.xpose.msra.mxu0 %v4836
  %v4838 = vand.u32 %v4776, 4294901760
  %4839 = vmatpush.xpose.msra.mxu0 %v4838
  %v4840 = vand.u32 %v4773, 4294901760
  %4841 = vmatpush.xpose.msra.mxu0 %v4840
  %v4842 = vand.u32 %v4770, 4294901760
  %4843 = vmatpush.xpose.msra.mxu0 %v4842
  %v4844 = vand.u32 %v4767, 4294901760
  %4845 = vmatpush.xpose.msra.mxu0 %v4844
  %v4846 = vand.u32 %v4719, 4294901760
  %v4847 = vsub.f32 %v4719, %v4846
  %v4848 = vand.u32 %v4847, 4294901760
  %v4849 = vsub.f32 %v4847, %v4848
  %v4850 = vand.u32 %v4849, 4294901760
  %4851 = vmatmul.f32.gmra.mxu0 %v4850
  %v4852 = vpop.f32.mrf.mxu0
  %v4853 = vadd.f32 %v4716, %v4852
  %v4854 = vand.u32 %v4722, 4294901760
  %v4855 = vsub.f32 %v4722, %v4854
  %v4856 = vand.u32 %v4855, 4294901760
  %v4857 = vsub.f32 %v4855, %v4856
  %v4858 = vand.u32 %v4857, 4294901760
  %4859 = vmatmul.f32.gmra.mxu0 %v4858
  %v4860 = vpop.f32.mrf.mxu0
  %v4861 = vadd.f32 %v4716, %v4860
  %v4862 = vand.u32 %v4725, 4294901760
  %v4863 = vsub.f32 %v4725, %v4862
  %v4864 = vand.u32 %v4863, 4294901760
  %v4865 = vsub.f32 %v4863, %v4864
  %v4866 = vand.u32 %v4865, 4294901760
  %4867 = vmatmul.f32.gmra.mxu0 %v4866
  %v4868 = vpop.f32.mrf.mxu0
  %v4869 = vadd.f32 %v4716, %v4868
  %v4870 = vand.u32 %v4728, 4294901760
  %v4871 = vsub.f32 %v4728, %v4870
  %v4872 = vand.u32 %v4871, 4294901760
  %v4873 = vsub.f32 %v4871, %v4872
  %v4874 = vand.u32 %v4873, 4294901760
  %4875 = vmatmul.f32.gmra.mxu0 %v4874
  %v4876 = vpop.f32.mrf.mxu0
  %v4877 = vadd.f32 %v4716, %v4876
  %v4878 = vand.u32 %v4731, 4294901760
  %v4879 = vsub.f32 %v4731, %v4878
  %v4880 = vand.u32 %v4879, 4294901760
  %v4881 = vsub.f32 %v4879, %v4880
  %v4882 = vand.u32 %v4881, 4294901760
  %4883 = vmatmul.f32.gmra.mxu0 %v4882
  %v4884 = vpop.f32.mrf.mxu0
  %v4885 = vadd.f32 %v4716, %v4884
  %v4886 = vand.u32 %v4734, 4294901760
  %v4887 = vsub.f32 %v4734, %v4886
  %v4888 = vand.u32 %v4887, 4294901760
  %v4889 = vsub.f32 %v4887, %v4888
  %v4890 = vand.u32 %v4889, 4294901760
  %4891 = vmatmul.f32.gmra.mxu0 %v4890
  %v4892 = vpop.f32.mrf.mxu0
  %v4893 = vadd.f32 %v4716, %v4892
  %v4894 = vand.u32 %v4737, 4294901760
  %v4895 = vsub.f32 %v4737, %v4894
  %v4896 = vand.u32 %v4895, 4294901760
  %v4897 = vsub.f32 %v4895, %v4896
  %v4898 = vand.u32 %v4897, 4294901760
  %4899 = vmatmul.f32.gmra.mxu0 %v4898
  %v4900 = vpop.f32.mrf.mxu0
  %v4901 = vadd.f32 %v4716, %v4900
  %v4902 = vand.u32 %v4740, 4294901760
  %v4903 = vsub.f32 %v4740, %v4902
  %v4904 = vand.u32 %v4903, 4294901760
  %v4905 = vsub.f32 %v4903, %v4904
  %v4906 = vand.u32 %v4905, 4294901760
  %4907 = vmatmul.f32.gmra.mxu0 %v4906
  %v4908 = vpop.f32.mrf.mxu0
  %v4909 = vadd.f32 %v4716, %v4908
  %v4910 = vand.u32 %v4743, 4294901760
  %v4911 = vsub.f32 %v4743, %v4910
  %v4912 = vand.u32 %v4911, 4294901760
  %v4913 = vsub.f32 %v4911, %v4912
  %v4914 = vand.u32 %v4913, 4294901760
  %4915 = vmatmul.f32.gmra.mxu0 %v4914
  %v4916 = vpop.f32.mrf.mxu0
  %v4917 = vadd.f32 %v4716, %v4916
  %v4918 = vand.u32 %v4746, 4294901760
  %v4919 = vsub.f32 %v4746, %v4918
  %v4920 = vand.u32 %v4919, 4294901760
  %v4921 = vsub.f32 %v4919, %v4920
  %v4922 = vand.u32 %v4921, 4294901760
  %4923 = vmatmul.f32.gmra.mxu0 %v4922
  %v4924 = vpop.f32.mrf.mxu0
  %v4925 = vadd.f32 %v4716, %v4924
  %v4926 = vand.u32 %v4749, 4294901760
  %v4927 = vsub.f32 %v4749, %v4926
  %v4928 = vand.u32 %v4927, 4294901760
  %v4929 = vsub.f32 %v4927, %v4928
  %v4930 = vand.u32 %v4929, 4294901760
  %4931 = vmatmul.f32.gmra.mxu0 %v4930
  %v4932 = vpop.f32.mrf.mxu0
  %v4933 = vadd.f32 %v4716, %v4932
  %v4934 = vand.u32 %v4752, 4294901760
  %v4935 = vsub.f32 %v4752, %v4934
  %v4936 = vand.u32 %v4935, 4294901760
  %v4937 = vsub.f32 %v4935, %v4936
  %v4938 = vand.u32 %v4937, 4294901760
  %4939 = vmatmul.f32.gmra.mxu0 %v4938
  %v4940 = vpop.f32.mrf.mxu0
  %v4941 = vadd.f32 %v4716, %v4940
  %v4942 = vand.u32 %v4755, 4294901760
  %v4943 = vsub.f32 %v4755, %v4942
  %v4944 = vand.u32 %v4943, 4294901760
  %v4945 = vsub.f32 %v4943, %v4944
  %v4946 = vand.u32 %v4945, 4294901760
  %4947 = vmatmul.f32.gmra.mxu0 %v4946
  %v4948 = vpop.f32.mrf.mxu0
  %v4949 = vadd.f32 %v4716, %v4948
  %v4950 = vand.u32 %v4758, 4294901760
  %v4951 = vsub.f32 %v4758, %v4950
  %v4952 = vand.u32 %v4951, 4294901760
  %v4953 = vsub.f32 %v4951, %v4952
  %v4954 = vand.u32 %v4953, 4294901760
  %4955 = vmatmul.f32.gmra.mxu0 %v4954
  %v4956 = vpop.f32.mrf.mxu0
  %v4957 = vadd.f32 %v4716, %v4956
  %v4958 = vand.u32 %v4761, 4294901760
  %v4959 = vsub.f32 %v4761, %v4958
  %v4960 = vand.u32 %v4959, 4294901760
  %v4961 = vsub.f32 %v4959, %v4960
  %v4962 = vand.u32 %v4961, 4294901760
  %4963 = vmatmul.f32.gmra.mxu0 %v4962
  %v4964 = vpop.f32.mrf.mxu0
  %v4965 = vadd.f32 %v4716, %v4964
  %v4966 = vand.u32 %v4764, 4294901760
  %v4967 = vsub.f32 %v4764, %v4966
  %v4968 = vand.u32 %v4967, 4294901760
  %v4969 = vsub.f32 %v4967, %v4968
  %v4970 = vand.u32 %v4969, 4294901760
  %4971 = vmatmul.f32.gmra.mxu0 %v4970
  %v4972 = vpop.f32.mrf.mxu0
  %v4973 = vadd.f32 %v4716, %v4972
  %4974 = vdwg.mxu0
  %v4975 = vand.u32 %v4812, 4294901760
  %v4976 = vsub.f32 %v4812, %v4975
  %v4977 = vand.u32 %v4976, 4294901760
  %v4978 = vsub.f32 %v4976, %v4977
  %v4979 = vand.u32 %v4978, 4294901760
  %4980 = vmatpush.xpose.msra.mxu0 %v4979
  %v4981 = vand.u32 %v4809, 4294901760
  %v4982 = vsub.f32 %v4809, %v4981
  %v4983 = vand.u32 %v4982, 4294901760
  %v4984 = vsub.f32 %v4982, %v4983
  %v4985 = vand.u32 %v4984, 4294901760
  %4986 = vmatpush.xpose.msra.mxu0 %v4985
  %v4987 = vand.u32 %v4806, 4294901760
  %v4988 = vsub.f32 %v4806, %v4987
  %v4989 = vand.u32 %v4988, 4294901760
  %v4990 = vsub.f32 %v4988, %v4989
  %v4991 = vand.u32 %v4990, 4294901760
  %4992 = vmatpush.xpose.msra.mxu0 %v4991
  %v4993 = vand.u32 %v4803, 4294901760
  %v4994 = vsub.f32 %v4803, %v4993
  %v4995 = vand.u32 %v4994, 4294901760
  %v4996 = vsub.f32 %v4994, %v4995
  %v4997 = vand.u32 %v4996, 4294901760
  %4998 = vmatpush.xpose.msra.mxu0 %v4997
  %v4999 = vand.u32 %v4800, 4294901760
  %v5000 = vsub.f32 %v4800, %v4999
  %v5001 = vand.u32 %v5000, 4294901760
  %v5002 = vsub.f32 %v5000, %v5001
  %v5003 = vand.u32 %v5002, 4294901760
  %5004 = vmatpush.xpose.msra.mxu0 %v5003
  %v5005 = vand.u32 %v4797, 4294901760
  %v5006 = vsub.f32 %v4797, %v5005
  %v5007 = vand.u32 %v5006, 4294901760
  %v5008 = vsub.f32 %v5006, %v5007
  %v5009 = vand.u32 %v5008, 4294901760
  %5010 = vmatpush.xpose.msra.mxu0 %v5009
  %v5011 = vand.u32 %v4794, 4294901760
  %v5012 = vsub.f32 %v4794, %v5011
  %v5013 = vand.u32 %v5012, 4294901760
  %v5014 = vsub.f32 %v5012, %v5013
  %v5015 = vand.u32 %v5014, 4294901760
  %5016 = vmatpush.xpose.msra.mxu0 %v5015
  %v5017 = vand.u32 %v4791, 4294901760
  %v5018 = vsub.f32 %v4791, %v5017
  %v5019 = vand.u32 %v5018, 4294901760
  %v5020 = vsub.f32 %v5018, %v5019
  %v5021 = vand.u32 %v5020, 4294901760
  %5022 = vmatpush.xpose.msra.mxu0 %v5021
  %v5023 = vand.u32 %v4788, 4294901760
  %v5024 = vsub.f32 %v4788, %v5023
  %v5025 = vand.u32 %v5024, 4294901760
  %v5026 = vsub.f32 %v5024, %v5025
  %v5027 = vand.u32 %v5026, 4294901760
  %5028 = vmatpush.xpose.msra.mxu0 %v5027
  %v5029 = vand.u32 %v4785, 4294901760
  %v5030 = vsub.f32 %v4785, %v5029
  %v5031 = vand.u32 %v5030, 4294901760
  %v5032 = vsub.f32 %v5030, %v5031
  %v5033 = vand.u32 %v5032, 4294901760
  %5034 = vmatpush.xpose.msra.mxu0 %v5033
  %v5035 = vand.u32 %v4782, 4294901760
  %v5036 = vsub.f32 %v4782, %v5035
  %v5037 = vand.u32 %v5036, 4294901760
  %v5038 = vsub.f32 %v5036, %v5037
  %v5039 = vand.u32 %v5038, 4294901760
  %5040 = vmatpush.xpose.msra.mxu0 %v5039
  %v5041 = vand.u32 %v4779, 4294901760
  %v5042 = vsub.f32 %v4779, %v5041
  %v5043 = vand.u32 %v5042, 4294901760
  %v5044 = vsub.f32 %v5042, %v5043
  %v5045 = vand.u32 %v5044, 4294901760
  %5046 = vmatpush.xpose.msra.mxu0 %v5045
  %v5047 = vand.u32 %v4776, 4294901760
  %v5048 = vsub.f32 %v4776, %v5047
  %v5049 = vand.u32 %v5048, 4294901760
  %v5050 = vsub.f32 %v5048, %v5049
  %v5051 = vand.u32 %v5050, 4294901760
  %5052 = vmatpush.xpose.msra.mxu0 %v5051
  %v5053 = vand.u32 %v4773, 4294901760
  %v5054 = vsub.f32 %v4773, %v5053
  %v5055 = vand.u32 %v5054, 4294901760
  %v5056 = vsub.f32 %v5054, %v5055
  %v5057 = vand.u32 %v5056, 4294901760
  %5058 = vmatpush.xpose.msra.mxu0 %v5057
  %v5059 = vand.u32 %v4770, 4294901760
  %v5060 = vsub.f32 %v4770, %v5059
  %v5061 = vand.u32 %v5060, 4294901760
  %v5062 = vsub.f32 %v5060, %v5061
  %v5063 = vand.u32 %v5062, 4294901760
  %5064 = vmatpush.xpose.msra.mxu0 %v5063
  %v5065 = vand.u32 %v4767, 4294901760
  %v5066 = vsub.f32 %v4767, %v5065
  %v5067 = vand.u32 %v5066, 4294901760
  %v5068 = vsub.f32 %v5066, %v5067
  %v5069 = vand.u32 %v5068, 4294901760
  %5070 = vmatpush.xpose.msra.mxu0 %v5069
  %v5071 = vand.u32 %v4719, 4294901760
  %5072 = vmatmul.f32.gmra.mxu0 %v5071
  %v5073 = vpop.f32.mrf.mxu0
  %v5074 = vadd.f32 %v4853, %v5073
  %v5075 = vand.u32 %v4722, 4294901760
  %5076 = vmatmul.f32.gmra.mxu0 %v5075
  %v5077 = vpop.f32.mrf.mxu0
  %v5078 = vadd.f32 %v4861, %v5077
  %v5079 = vand.u32 %v4725, 4294901760
  %5080 = vmatmul.f32.gmra.mxu0 %v5079
  %v5081 = vpop.f32.mrf.mxu0
  %v5082 = vadd.f32 %v4869, %v5081
  %v5083 = vand.u32 %v4728, 4294901760
  %5084 = vmatmul.f32.gmra.mxu0 %v5083
  %v5085 = vpop.f32.mrf.mxu0
  %v5086 = vadd.f32 %v4877, %v5085
  %v5087 = vand.u32 %v4731, 4294901760
  %5088 = vmatmul.f32.gmra.mxu0 %v5087
  %v5089 = vpop.f32.mrf.mxu0
  %v5090 = vadd.f32 %v4885, %v5089
  %v5091 = vand.u32 %v4734, 4294901760
  %5092 = vmatmul.f32.gmra.mxu0 %v5091
  %v5093 = vpop.f32.mrf.mxu0
  %v5094 = vadd.f32 %v4893, %v5093
  %v5095 = vand.u32 %v4737, 4294901760
  %5096 = vmatmul.f32.gmra.mxu0 %v5095
  %v5097 = vpop.f32.mrf.mxu0
  %v5098 = vadd.f32 %v4901, %v5097
  %v5099 = vand.u32 %v4740, 4294901760
  %5100 = vmatmul.f32.gmra.mxu0 %v5099
  %v5101 = vpop.f32.mrf.mxu0
  %v5102 = vadd.f32 %v4909, %v5101
  %v5103 = vand.u32 %v4743, 4294901760
  %5104 = vmatmul.f32.gmra.mxu0 %v5103
  %v5105 = vpop.f32.mrf.mxu0
  %v5106 = vadd.f32 %v4917, %v5105
  %v5107 = vand.u32 %v4746, 4294901760
  %5108 = vmatmul.f32.gmra.mxu0 %v5107
  %v5109 = vpop.f32.mrf.mxu0
  %v5110 = vadd.f32 %v4925, %v5109
  %v5111 = vand.u32 %v4749, 4294901760
  %5112 = vmatmul.f32.gmra.mxu0 %v5111
  %v5113 = vpop.f32.mrf.mxu0
  %v5114 = vadd.f32 %v4933, %v5113
  %v5115 = vand.u32 %v4752, 4294901760
  %5116 = vmatmul.f32.gmra.mxu0 %v5115
  %v5117 = vpop.f32.mrf.mxu0
  %v5118 = vadd.f32 %v4941, %v5117
  %v5119 = vand.u32 %v4755, 4294901760
  %5120 = vmatmul.f32.gmra.mxu0 %v5119
  %v5121 = vpop.f32.mrf.mxu0
  %v5122 = vadd.f32 %v4949, %v5121
  %v5123 = vand.u32 %v4758, 4294901760
  %5124 = vmatmul.f32.gmra.mxu0 %v5123
  %v5125 = vpop.f32.mrf.mxu0
  %v5126 = vadd.f32 %v4957, %v5125
  %v5127 = vand.u32 %v4761, 4294901760
  %5128 = vmatmul.f32.gmra.mxu0 %v5127
  %v5129 = vpop.f32.mrf.mxu0
  %v5130 = vadd.f32 %v4965, %v5129
  %v5131 = vand.u32 %v4764, 4294901760
  %5132 = vmatmul.f32.gmra.mxu0 %v5131
  %v5133 = vpop.f32.mrf.mxu0
  %v5134 = vadd.f32 %v4973, %v5133
  %5135 = vdwg.mxu0
  %v5136 = vand.u32 %v4812, 4294901760
  %v5137 = vsub.f32 %v4812, %v5136
  %5138 = vmatpush.xpose.msra.mxu0 %v5137
  %v5139 = vand.u32 %v4809, 4294901760
  %v5140 = vsub.f32 %v4809, %v5139
  %5141 = vmatpush.xpose.msra.mxu0 %v5140
  %v5142 = vand.u32 %v4806, 4294901760
  %v5143 = vsub.f32 %v4806, %v5142
  %5144 = vmatpush.xpose.msra.mxu0 %v5143
  %v5145 = vand.u32 %v4803, 4294901760
  %v5146 = vsub.f32 %v4803, %v5145
  %5147 = vmatpush.xpose.msra.mxu0 %v5146
  %v5148 = vand.u32 %v4800, 4294901760
  %v5149 = vsub.f32 %v4800, %v5148
  %5150 = vmatpush.xpose.msra.mxu0 %v5149
  %v5151 = vand.u32 %v4797, 4294901760
  %v5152 = vsub.f32 %v4797, %v5151
  %5153 = vmatpush.xpose.msra.mxu0 %v5152
  %v5154 = vand.u32 %v4794, 4294901760
  %v5155 = vsub.f32 %v4794, %v5154
  %5156 = vmatpush.xpose.msra.mxu0 %v5155
  %v5157 = vand.u32 %v4791, 4294901760
  %v5158 = vsub.f32 %v4791, %v5157
  %5159 = vmatpush.xpose.msra.mxu0 %v5158
  %v5160 = vand.u32 %v4788, 4294901760
  %v5161 = vsub.f32 %v4788, %v5160
  %5162 = vmatpush.xpose.msra.mxu0 %v5161
  %v5163 = vand.u32 %v4785, 4294901760
  %v5164 = vsub.f32 %v4785, %v5163
  %5165 = vmatpush.xpose.msra.mxu0 %v5164
  %v5166 = vand.u32 %v4782, 4294901760
  %v5167 = vsub.f32 %v4782, %v5166
  %5168 = vmatpush.xpose.msra.mxu0 %v5167
  %v5169 = vand.u32 %v4779, 4294901760
  %v5170 = vsub.f32 %v4779, %v5169
  %5171 = vmatpush.xpose.msra.mxu0 %v5170
  %v5172 = vand.u32 %v4776, 4294901760
  %v5173 = vsub.f32 %v4776, %v5172
  %5174 = vmatpush.xpose.msra.mxu0 %v5173
  %v5175 = vand.u32 %v4773, 4294901760
  %v5176 = vsub.f32 %v4773, %v5175
  %5177 = vmatpush.xpose.msra.mxu0 %v5176
  %v5178 = vand.u32 %v4770, 4294901760
  %v5179 = vsub.f32 %v4770, %v5178
  %5180 = vmatpush.xpose.msra.mxu0 %v5179
  %v5181 = vand.u32 %v4767, 4294901760
  %v5182 = vsub.f32 %v4767, %v5181
  %5183 = vmatpush.xpose.msra.mxu0 %v5182
  %v5184 = vand.u32 %v4719, 4294901760
  %v5185 = vsub.f32 %v4719, %v5184
  %5186 = vmatmul.f32.gmra.mxu0 %v5185
  %v5187 = vpop.f32.mrf.mxu0
  %v5188 = vadd.f32 %v5074, %v5187
  %v5189 = vand.u32 %v4722, 4294901760
  %v5190 = vsub.f32 %v4722, %v5189
  %5191 = vmatmul.f32.gmra.mxu0 %v5190
  %v5192 = vpop.f32.mrf.mxu0
  %v5193 = vadd.f32 %v5078, %v5192
  %v5194 = vand.u32 %v4725, 4294901760
  %v5195 = vsub.f32 %v4725, %v5194
  %5196 = vmatmul.f32.gmra.mxu0 %v5195
  %v5197 = vpop.f32.mrf.mxu0
  %v5198 = vadd.f32 %v5082, %v5197
  %v5199 = vand.u32 %v4728, 4294901760
  %v5200 = vsub.f32 %v4728, %v5199
  %5201 = vmatmul.f32.gmra.mxu0 %v5200
  %v5202 = vpop.f32.mrf.mxu0
  %v5203 = vadd.f32 %v5086, %v5202
  %v5204 = vand.u32 %v4731, 4294901760
  %v5205 = vsub.f32 %v4731, %v5204
  %5206 = vmatmul.f32.gmra.mxu0 %v5205
  %v5207 = vpop.f32.mrf.mxu0
  %v5208 = vadd.f32 %v5090, %v5207
  %v5209 = vand.u32 %v4734, 4294901760
  %v5210 = vsub.f32 %v4734, %v5209
  %5211 = vmatmul.f32.gmra.mxu0 %v5210
  %v5212 = vpop.f32.mrf.mxu0
  %v5213 = vadd.f32 %v5094, %v5212
  %v5214 = vand.u32 %v4737, 4294901760
  %v5215 = vsub.f32 %v4737, %v5214
  %5216 = vmatmul.f32.gmra.mxu0 %v5215
  %v5217 = vpop.f32.mrf.mxu0
  %v5218 = vadd.f32 %v5098, %v5217
  %v5219 = vand.u32 %v4740, 4294901760
  %v5220 = vsub.f32 %v4740, %v5219
  %5221 = vmatmul.f32.gmra.mxu0 %v5220
  %v5222 = vpop.f32.mrf.mxu0
  %v5223 = vadd.f32 %v5102, %v5222
  %v5224 = vand.u32 %v4743, 4294901760
  %v5225 = vsub.f32 %v4743, %v5224
  %5226 = vmatmul.f32.gmra.mxu0 %v5225
  %v5227 = vpop.f32.mrf.mxu0
  %v5228 = vadd.f32 %v5106, %v5227
  %v5229 = vand.u32 %v4746, 4294901760
  %v5230 = vsub.f32 %v4746, %v5229
  %5231 = vmatmul.f32.gmra.mxu0 %v5230
  %v5232 = vpop.f32.mrf.mxu0
  %v5233 = vadd.f32 %v5110, %v5232
  %v5234 = vand.u32 %v4749, 4294901760
  %v5235 = vsub.f32 %v4749, %v5234
  %5236 = vmatmul.f32.gmra.mxu0 %v5235
  %v5237 = vpop.f32.mrf.mxu0
  %v5238 = vadd.f32 %v5114, %v5237
  %v5239 = vand.u32 %v4752, 4294901760
  %v5240 = vsub.f32 %v4752, %v5239
  %5241 = vmatmul.f32.gmra.mxu0 %v5240
  %v5242 = vpop.f32.mrf.mxu0
  %v5243 = vadd.f32 %v5118, %v5242
  %v5244 = vand.u32 %v4755, 4294901760
  %v5245 = vsub.f32 %v4755, %v5244
  %5246 = vmatmul.f32.gmra.mxu0 %v5245
  %v5247 = vpop.f32.mrf.mxu0
  %v5248 = vadd.f32 %v5122, %v5247
  %v5249 = vand.u32 %v4758, 4294901760
  %v5250 = vsub.f32 %v4758, %v5249
  %5251 = vmatmul.f32.gmra.mxu0 %v5250
  %v5252 = vpop.f32.mrf.mxu0
  %v5253 = vadd.f32 %v5126, %v5252
  %v5254 = vand.u32 %v4761, 4294901760
  %v5255 = vsub.f32 %v4761, %v5254
  %5256 = vmatmul.f32.gmra.mxu0 %v5255
  %v5257 = vpop.f32.mrf.mxu0
  %v5258 = vadd.f32 %v5130, %v5257
  %v5259 = vand.u32 %v4764, 4294901760
  %v5260 = vsub.f32 %v4764, %v5259
  %5261 = vmatmul.f32.gmra.mxu0 %v5260
  %v5262 = vpop.f32.mrf.mxu0
  %v5263 = vadd.f32 %v5134, %v5262
  %5264 = vdwg.mxu0
  %v5265 = vand.u32 %v4812, 4294901760
  %5266 = vmatpush.xpose.msra.mxu0 %v5265
  %v5267 = vand.u32 %v4809, 4294901760
  %5268 = vmatpush.xpose.msra.mxu0 %v5267
  %v5269 = vand.u32 %v4806, 4294901760
  %5270 = vmatpush.xpose.msra.mxu0 %v5269
  %v5271 = vand.u32 %v4803, 4294901760
  %5272 = vmatpush.xpose.msra.mxu0 %v5271
  %v5273 = vand.u32 %v4800, 4294901760
  %5274 = vmatpush.xpose.msra.mxu0 %v5273
  %v5275 = vand.u32 %v4797, 4294901760
  %5276 = vmatpush.xpose.msra.mxu0 %v5275
  %v5277 = vand.u32 %v4794, 4294901760
  %5278 = vmatpush.xpose.msra.mxu0 %v5277
  %v5279 = vand.u32 %v4791, 4294901760
  %5280 = vmatpush.xpose.msra.mxu0 %v5279
  %v5281 = vand.u32 %v4788, 4294901760
  %5282 = vmatpush.xpose.msra.mxu0 %v5281
  %v5283 = vand.u32 %v4785, 4294901760
  %5284 = vmatpush.xpose.msra.mxu0 %v5283
  %v5285 = vand.u32 %v4782, 4294901760
  %5286 = vmatpush.xpose.msra.mxu0 %v5285
  %v5287 = vand.u32 %v4779, 4294901760
  %5288 = vmatpush.xpose.msra.mxu0 %v5287
  %v5289 = vand.u32 %v4776, 4294901760
  %5290 = vmatpush.xpose.msra.mxu0 %v5289
  %v5291 = vand.u32 %v4773, 4294901760
  %5292 = vmatpush.xpose.msra.mxu0 %v5291
  %v5293 = vand.u32 %v4770, 4294901760
  %5294 = vmatpush.xpose.msra.mxu0 %v5293
  %v5295 = vand.u32 %v4767, 4294901760
  %5296 = vmatpush.xpose.msra.mxu0 %v5295
  %v5297 = vand.u32 %v4719, 4294901760
  %v5298 = vsub.f32 %v4719, %v5297
  %v5299 = vand.u32 %v5298, 4294901760
  %5300 = vmatmul.f32.gmra.mxu0 %v5299
  %v5301 = vpop.f32.mrf.mxu0
  %v5302 = vadd.f32 %v5188, %v5301
  %v5303 = vand.u32 %v4722, 4294901760
  %v5304 = vsub.f32 %v4722, %v5303
  %v5305 = vand.u32 %v5304, 4294901760
  %5306 = vmatmul.f32.gmra.mxu0 %v5305
  %v5307 = vpop.f32.mrf.mxu0
  %v5308 = vadd.f32 %v5193, %v5307
  %v5309 = vand.u32 %v4725, 4294901760
  %v5310 = vsub.f32 %v4725, %v5309
  %v5311 = vand.u32 %v5310, 4294901760
  %5312 = vmatmul.f32.gmra.mxu0 %v5311
  %v5313 = vpop.f32.mrf.mxu0
  %v5314 = vadd.f32 %v5198, %v5313
  %v5315 = vand.u32 %v4728, 4294901760
  %v5316 = vsub.f32 %v4728, %v5315
  %v5317 = vand.u32 %v5316, 4294901760
  %5318 = vmatmul.f32.gmra.mxu0 %v5317
  %v5319 = vpop.f32.mrf.mxu0
  %v5320 = vadd.f32 %v5203, %v5319
  %v5321 = vand.u32 %v4731, 4294901760
  %v5322 = vsub.f32 %v4731, %v5321
  %v5323 = vand.u32 %v5322, 4294901760
  %5324 = vmatmul.f32.gmra.mxu0 %v5323
  %v5325 = vpop.f32.mrf.mxu0
  %v5326 = vadd.f32 %v5208, %v5325
  %v5327 = vand.u32 %v4734, 4294901760
  %v5328 = vsub.f32 %v4734, %v5327
  %v5329 = vand.u32 %v5328, 4294901760
  %5330 = vmatmul.f32.gmra.mxu0 %v5329
  %v5331 = vpop.f32.mrf.mxu0
  %v5332 = vadd.f32 %v5213, %v5331
  %v5333 = vand.u32 %v4737, 4294901760
  %v5334 = vsub.f32 %v4737, %v5333
  %v5335 = vand.u32 %v5334, 4294901760
  %5336 = vmatmul.f32.gmra.mxu0 %v5335
  %v5337 = vpop.f32.mrf.mxu0
  %v5338 = vadd.f32 %v5218, %v5337
  %v5339 = vand.u32 %v4740, 4294901760
  %v5340 = vsub.f32 %v4740, %v5339
  %v5341 = vand.u32 %v5340, 4294901760
  %5342 = vmatmul.f32.gmra.mxu0 %v5341
  %v5343 = vpop.f32.mrf.mxu0
  %v5344 = vadd.f32 %v5223, %v5343
  %v5345 = vand.u32 %v4743, 4294901760
  %v5346 = vsub.f32 %v4743, %v5345
  %v5347 = vand.u32 %v5346, 4294901760
  %5348 = vmatmul.f32.gmra.mxu0 %v5347
  %v5349 = vpop.f32.mrf.mxu0
  %v5350 = vadd.f32 %v5228, %v5349
  %v5351 = vand.u32 %v4746, 4294901760
  %v5352 = vsub.f32 %v4746, %v5351
  %v5353 = vand.u32 %v5352, 4294901760
  %5354 = vmatmul.f32.gmra.mxu0 %v5353
  %v5355 = vpop.f32.mrf.mxu0
  %v5356 = vadd.f32 %v5233, %v5355
  %v5357 = vand.u32 %v4749, 4294901760
  %v5358 = vsub.f32 %v4749, %v5357
  %v5359 = vand.u32 %v5358, 4294901760
  %5360 = vmatmul.f32.gmra.mxu0 %v5359
  %v5361 = vpop.f32.mrf.mxu0
  %v5362 = vadd.f32 %v5238, %v5361
  %v5363 = vand.u32 %v4752, 4294901760
  %v5364 = vsub.f32 %v4752, %v5363
  %v5365 = vand.u32 %v5364, 4294901760
  %5366 = vmatmul.f32.gmra.mxu0 %v5365
  %v5367 = vpop.f32.mrf.mxu0
  %v5368 = vadd.f32 %v5243, %v5367
  %v5369 = vand.u32 %v4755, 4294901760
  %v5370 = vsub.f32 %v4755, %v5369
  %v5371 = vand.u32 %v5370, 4294901760
  %5372 = vmatmul.f32.gmra.mxu0 %v5371
  %v5373 = vpop.f32.mrf.mxu0
  %v5374 = vadd.f32 %v5248, %v5373
  %v5375 = vand.u32 %v4758, 4294901760
  %v5376 = vsub.f32 %v4758, %v5375
  %v5377 = vand.u32 %v5376, 4294901760
  %5378 = vmatmul.f32.gmra.mxu0 %v5377
  %v5379 = vpop.f32.mrf.mxu0
  %v5380 = vadd.f32 %v5253, %v5379
  %v5381 = vand.u32 %v4761, 4294901760
  %v5382 = vsub.f32 %v4761, %v5381
  %v5383 = vand.u32 %v5382, 4294901760
  %5384 = vmatmul.f32.gmra.mxu0 %v5383
  %v5385 = vpop.f32.mrf.mxu0
  %v5386 = vadd.f32 %v5258, %v5385
  %v5387 = vand.u32 %v4764, 4294901760
  %v5388 = vsub.f32 %v4764, %v5387
  %v5389 = vand.u32 %v5388, 4294901760
  %5390 = vmatmul.f32.gmra.mxu0 %v5389
  %v5391 = vpop.f32.mrf.mxu0
  %v5392 = vadd.f32 %v5263, %v5391
  %5393 = vdwg.mxu0
  %v5394 = vand.u32 %v4812, 4294901760
  %v5395 = vsub.f32 %v4812, %v5394
  %v5396 = vand.u32 %v5395, 4294901760
  %5397 = vmatpush.xpose.msra.mxu0 %v5396
  %v5398 = vand.u32 %v4809, 4294901760
  %v5399 = vsub.f32 %v4809, %v5398
  %v5400 = vand.u32 %v5399, 4294901760
  %5401 = vmatpush.xpose.msra.mxu0 %v5400
  %v5402 = vand.u32 %v4806, 4294901760
  %v5403 = vsub.f32 %v4806, %v5402
  %v5404 = vand.u32 %v5403, 4294901760
  %5405 = vmatpush.xpose.msra.mxu0 %v5404
  %v5406 = vand.u32 %v4803, 4294901760
  %v5407 = vsub.f32 %v4803, %v5406
  %v5408 = vand.u32 %v5407, 4294901760
  %5409 = vmatpush.xpose.msra.mxu0 %v5408
  %v5410 = vand.u32 %v4800, 4294901760
  %v5411 = vsub.f32 %v4800, %v5410
  %v5412 = vand.u32 %v5411, 4294901760
  %5413 = vmatpush.xpose.msra.mxu0 %v5412
  %v5414 = vand.u32 %v4797, 4294901760
  %v5415 = vsub.f32 %v4797, %v5414
  %v5416 = vand.u32 %v5415, 4294901760
  %5417 = vmatpush.xpose.msra.mxu0 %v5416
  %v5418 = vand.u32 %v4794, 4294901760
  %v5419 = vsub.f32 %v4794, %v5418
  %v5420 = vand.u32 %v5419, 4294901760
  %5421 = vmatpush.xpose.msra.mxu0 %v5420
  %v5422 = vand.u32 %v4791, 4294901760
  %v5423 = vsub.f32 %v4791, %v5422
  %v5424 = vand.u32 %v5423, 4294901760
  %5425 = vmatpush.xpose.msra.mxu0 %v5424
  %v5426 = vand.u32 %v4788, 4294901760
  %v5427 = vsub.f32 %v4788, %v5426
  %v5428 = vand.u32 %v5427, 4294901760
  %5429 = vmatpush.xpose.msra.mxu0 %v5428
  %v5430 = vand.u32 %v4785, 4294901760
  %v5431 = vsub.f32 %v4785, %v5430
  %v5432 = vand.u32 %v5431, 4294901760
  %5433 = vmatpush.xpose.msra.mxu0 %v5432
  %v5434 = vand.u32 %v4782, 4294901760
  %v5435 = vsub.f32 %v4782, %v5434
  %v5436 = vand.u32 %v5435, 4294901760
  %5437 = vmatpush.xpose.msra.mxu0 %v5436
  %v5438 = vand.u32 %v4779, 4294901760
  %v5439 = vsub.f32 %v4779, %v5438
  %v5440 = vand.u32 %v5439, 4294901760
  %5441 = vmatpush.xpose.msra.mxu0 %v5440
  %v5442 = vand.u32 %v4776, 4294901760
  %v5443 = vsub.f32 %v4776, %v5442
  %v5444 = vand.u32 %v5443, 4294901760
  %5445 = vmatpush.xpose.msra.mxu0 %v5444
  %v5446 = vand.u32 %v4773, 4294901760
  %v5447 = vsub.f32 %v4773, %v5446
  %v5448 = vand.u32 %v5447, 4294901760
  %5449 = vmatpush.xpose.msra.mxu0 %v5448
  %v5450 = vand.u32 %v4770, 4294901760
  %v5451 = vsub.f32 %v4770, %v5450
  %v5452 = vand.u32 %v5451, 4294901760
  %5453 = vmatpush.xpose.msra.mxu0 %v5452
  %v5454 = vand.u32 %v4767, 4294901760
  %v5455 = vsub.f32 %v4767, %v5454
  %v5456 = vand.u32 %v5455, 4294901760
  %5457 = vmatpush.xpose.msra.mxu0 %v5456
  %v5458 = vand.u32 %v4719, 4294901760
  %5459 = vmatmul.f32.gmra.mxu0 %v5458
  %v5460 = vpop.f32.mrf.mxu0
  %v5461 = vadd.f32 %v5302, %v5460
  %v5462 = vand.u32 %v4722, 4294901760
  %5463 = vmatmul.f32.gmra.mxu0 %v5462
  %v5464 = vpop.f32.mrf.mxu0
  %v5465 = vadd.f32 %v5308, %v5464
  %v5466 = vand.u32 %v4725, 4294901760
  %5467 = vmatmul.f32.gmra.mxu0 %v5466
  %v5468 = vpop.f32.mrf.mxu0
  %v5469 = vadd.f32 %v5314, %v5468
  %v5470 = vand.u32 %v4728, 4294901760
  %5471 = vmatmul.f32.gmra.mxu0 %v5470
  %v5472 = vpop.f32.mrf.mxu0
  %v5473 = vadd.f32 %v5320, %v5472
  %v5474 = vand.u32 %v4731, 4294901760
  %5475 = vmatmul.f32.gmra.mxu0 %v5474
  %v5476 = vpop.f32.mrf.mxu0
  %v5477 = vadd.f32 %v5326, %v5476
  %v5478 = vand.u32 %v4734, 4294901760
  %5479 = vmatmul.f32.gmra.mxu0 %v5478
  %v5480 = vpop.f32.mrf.mxu0
  %v5481 = vadd.f32 %v5332, %v5480
  %v5482 = vand.u32 %v4737, 4294901760
  %5483 = vmatmul.f32.gmra.mxu0 %v5482
  %v5484 = vpop.f32.mrf.mxu0
  %v5485 = vadd.f32 %v5338, %v5484
  %v5486 = vand.u32 %v4740, 4294901760
  %5487 = vmatmul.f32.gmra.mxu0 %v5486
  %v5488 = vpop.f32.mrf.mxu0
  %v5489 = vadd.f32 %v5344, %v5488
  %v5490 = vand.u32 %v4743, 4294901760
  %5491 = vmatmul.f32.gmra.mxu0 %v5490
  %v5492 = vpop.f32.mrf.mxu0
  %v5493 = vadd.f32 %v5350, %v5492
  %v5494 = vand.u32 %v4746, 4294901760
  %5495 = vmatmul.f32.gmra.mxu0 %v5494
  %v5496 = vpop.f32.mrf.mxu0
  %v5497 = vadd.f32 %v5356, %v5496
  %v5498 = vand.u32 %v4749, 4294901760
  %5499 = vmatmul.f32.gmra.mxu0 %v5498
  %v5500 = vpop.f32.mrf.mxu0
  %v5501 = vadd.f32 %v5362, %v5500
  %v5502 = vand.u32 %v4752, 4294901760
  %5503 = vmatmul.f32.gmra.mxu0 %v5502
  %v5504 = vpop.f32.mrf.mxu0
  %v5505 = vadd.f32 %v5368, %v5504
  %v5506 = vand.u32 %v4755, 4294901760
  %5507 = vmatmul.f32.gmra.mxu0 %v5506
  %v5508 = vpop.f32.mrf.mxu0
  %v5509 = vadd.f32 %v5374, %v5508
  %v5510 = vand.u32 %v4758, 4294901760
  %5511 = vmatmul.f32.gmra.mxu0 %v5510
  %v5512 = vpop.f32.mrf.mxu0
  %v5513 = vadd.f32 %v5380, %v5512
  %v5514 = vand.u32 %v4761, 4294901760
  %5515 = vmatmul.f32.gmra.mxu0 %v5514
  %v5516 = vpop.f32.mrf.mxu0
  %v5517 = vadd.f32 %v5386, %v5516
  %v5518 = vand.u32 %v4764, 4294901760
  %5519 = vmatmul.f32.gmra.mxu0 %v5518
  %v5520 = vpop.f32.mrf.mxu0
  %v5521 = vadd.f32 %v5392, %v5520
  %5522 = vdwg.mxu0
  %v5523 = vand.u32 %v4812, 4294901760
  %5524 = vmatpush.xpose.msra.mxu0 %v5523
  %v5525 = vand.u32 %v4809, 4294901760
  %5526 = vmatpush.xpose.msra.mxu0 %v5525
  %v5527 = vand.u32 %v4806, 4294901760
  %5528 = vmatpush.xpose.msra.mxu0 %v5527
  %v5529 = vand.u32 %v4803, 4294901760
  %5530 = vmatpush.xpose.msra.mxu0 %v5529
  %v5531 = vand.u32 %v4800, 4294901760
  %5532 = vmatpush.xpose.msra.mxu0 %v5531
  %v5533 = vand.u32 %v4797, 4294901760
  %5534 = vmatpush.xpose.msra.mxu0 %v5533
  %v5535 = vand.u32 %v4794, 4294901760
  %5536 = vmatpush.xpose.msra.mxu0 %v5535
  %v5537 = vand.u32 %v4791, 4294901760
  %5538 = vmatpush.xpose.msra.mxu0 %v5537
  %v5539 = vand.u32 %v4788, 4294901760
  %5540 = vmatpush.xpose.msra.mxu0 %v5539
  %v5541 = vand.u32 %v4785, 4294901760
  %5542 = vmatpush.xpose.msra.mxu0 %v5541
  %v5543 = vand.u32 %v4782, 4294901760
  %5544 = vmatpush.xpose.msra.mxu0 %v5543
  %v5545 = vand.u32 %v4779, 4294901760
  %5546 = vmatpush.xpose.msra.mxu0 %v5545
  %v5547 = vand.u32 %v4776, 4294901760
  %5548 = vmatpush.xpose.msra.mxu0 %v5547
  %v5549 = vand.u32 %v4773, 4294901760
  %5550 = vmatpush.xpose.msra.mxu0 %v5549
  %v5551 = vand.u32 %v4770, 4294901760
  %5552 = vmatpush.xpose.msra.mxu0 %v5551
  %v5553 = vand.u32 %v4767, 4294901760
  %5554 = vmatpush.xpose.msra.mxu0 %v5553
  %v5555 = vand.u32 %v4719, 4294901760
  %5556 = vmatmul.f32.gmra.mxu0 %v5555
  %v5557 = vpop.f32.mrf.mxu0
  %v5558 = vadd.f32 %v5461, %v5557
  %v5559 = vand.u32 %v4722, 4294901760
  %5560 = vmatmul.f32.gmra.mxu0 %v5559
  %v5561 = vpop.f32.mrf.mxu0
  %v5562 = vadd.f32 %v5465, %v5561
  %v5563 = vand.u32 %v4725, 4294901760
  %5564 = vmatmul.f32.gmra.mxu0 %v5563
  %v5565 = vpop.f32.mrf.mxu0
  %v5566 = vadd.f32 %v5469, %v5565
  %v5567 = vand.u32 %v4728, 4294901760
  %5568 = vmatmul.f32.gmra.mxu0 %v5567
  %v5569 = vpop.f32.mrf.mxu0
  %v5570 = vadd.f32 %v5473, %v5569
  %v5571 = vand.u32 %v4731, 4294901760
  %5572 = vmatmul.f32.gmra.mxu0 %v5571
  %v5573 = vpop.f32.mrf.mxu0
  %v5574 = vadd.f32 %v5477, %v5573
  %v5575 = vand.u32 %v4734, 4294901760
  %5576 = vmatmul.f32.gmra.mxu0 %v5575
  %v5577 = vpop.f32.mrf.mxu0
  %v5578 = vadd.f32 %v5481, %v5577
  %v5579 = vand.u32 %v4737, 4294901760
  %5580 = vmatmul.f32.gmra.mxu0 %v5579
  %v5581 = vpop.f32.mrf.mxu0
  %v5582 = vadd.f32 %v5485, %v5581
  %v5583 = vand.u32 %v4740, 4294901760
  %5584 = vmatmul.f32.gmra.mxu0 %v5583
  %v5585 = vpop.f32.mrf.mxu0
  %v5586 = vadd.f32 %v5489, %v5585
  %v5587 = vand.u32 %v4743, 4294901760
  %5588 = vmatmul.f32.gmra.mxu0 %v5587
  %v5589 = vpop.f32.mrf.mxu0
  %v5590 = vadd.f32 %v5493, %v5589
  %v5591 = vand.u32 %v4746, 4294901760
  %5592 = vmatmul.f32.gmra.mxu0 %v5591
  %v5593 = vpop.f32.mrf.mxu0
  %v5594 = vadd.f32 %v5497, %v5593
  %v5595 = vand.u32 %v4749, 4294901760
  %5596 = vmatmul.f32.gmra.mxu0 %v5595
  %v5597 = vpop.f32.mrf.mxu0
  %v5598 = vadd.f32 %v5501, %v5597
  %v5599 = vand.u32 %v4752, 4294901760
  %5600 = vmatmul.f32.gmra.mxu0 %v5599
  %v5601 = vpop.f32.mrf.mxu0
  %v5602 = vadd.f32 %v5505, %v5601
  %v5603 = vand.u32 %v4755, 4294901760
  %5604 = vmatmul.f32.gmra.mxu0 %v5603
  %v5605 = vpop.f32.mrf.mxu0
  %v5606 = vadd.f32 %v5509, %v5605
  %v5607 = vand.u32 %v4758, 4294901760
  %5608 = vmatmul.f32.gmra.mxu0 %v5607
  %v5609 = vpop.f32.mrf.mxu0
  %v5610 = vadd.f32 %v5513, %v5609
  %v5611 = vand.u32 %v4761, 4294901760
  %5612 = vmatmul.f32.gmra.mxu0 %v5611
  %v5613 = vpop.f32.mrf.mxu0
  %v5614 = vadd.f32 %v5517, %v5613
  %v5615 = vand.u32 %v4764, 4294901760
  %5616 = vmatmul.f32.gmra.mxu0 %v5615
  %v5617 = vpop.f32.mrf.mxu0
  %v5618 = vadd.f32 %v5521, %v5617
  %5619 = vdwg.mxu0
  %v5620 = vmax.f32 %v5558, 0.0
  %v5621 = vmax.f32 %v5562, 0.0
  %v5622 = vmax.f32 %v5566, 0.0
  %v5623 = vmax.f32 %v5570, 0.0
  %v5624 = vmax.f32 %v5574, 0.0
  %v5625 = vmax.f32 %v5578, 0.0
  %v5626 = vmax.f32 %v5582, 0.0
  %v5627 = vmax.f32 %v5586, 0.0
  %v5628 = vmax.f32 %v5590, 0.0
  %v5629 = vmax.f32 %v5594, 0.0
  %v5630 = vmax.f32 %v5598, 0.0
  %v5631 = vmax.f32 %v5602, 0.0
  %v5632 = vmax.f32 %v5606, 0.0
  %v5633 = vmax.f32 %v5610, 0.0
  %v5634 = vmax.f32 %v5614, 0.0
  %v5635 = vmax.f32 %v5618, 0.0
  %v5636 = vld [vmem:[%s15] sm:$0xff]
  %v5637 = vld [vmem:[%s15 + $0x8] sm:$0xff]
  %v5638 = vld [vmem:[%s15 + $0x10] sm:$0xff]
  %v5639 = vld [vmem:[%s16] sm:$0x1]
  %v5641 = vperm.slane %v5639, 0
  %5643 = vmatpush.xpose.msra.mxu0 0.0
  %5644 = vmatpush.xpose.msra.mxu0 0.0
  %5645 = vmatpush.xpose.msra.mxu0 0.0
  %5646 = vmatpush.xpose.msra.mxu0 0.0
  %5647 = vmatpush.xpose.msra.mxu0 0.0
  %5648 = vmatpush.xpose.msra.mxu0 0.0
  %5649 = vmatpush.xpose.msra.mxu0 0.0
  %5650 = vmatpush.xpose.msra.mxu0 0.0
  %5651 = vmatpush.xpose.msra.mxu0 0.0
  %5652 = vmatpush.xpose.msra.mxu0 0.0
  %5653 = vmatpush.xpose.msra.mxu0 0.0
  %5654 = vmatpush.xpose.msra.mxu0 0.0
  %5655 = vmatpush.xpose.msra.mxu0 0.0
  %v5656 = vand.u32 %v5638, 4294901760
  %5657 = vmatpush.xpose.msra.mxu0 %v5656
  %v5658 = vand.u32 %v5637, 4294901760
  %5659 = vmatpush.xpose.msra.mxu0 %v5658
  %v5660 = vand.u32 %v5636, 4294901760
  %5661 = vmatpush.xpose.msra.mxu0 %v5660
  %v5662 = vand.u32 %v5620, 4294901760
  %v5663 = vsub.f32 %v5620, %v5662
  %v5664 = vand.u32 %v5663, 4294901760
  %v5665 = vsub.f32 %v5663, %v5664
  %v5666 = vand.u32 %v5665, 4294901760
  %5667 = vmatmul.f32.gmra.mxu0 %v5666
  %v5668 = vpop.f32.mrf.mxu0
  %v5669 = vadd.f32 %v5641, %v5668
  %v5670 = vand.u32 %v5621, 4294901760
  %v5671 = vsub.f32 %v5621, %v5670
  %v5672 = vand.u32 %v5671, 4294901760
  %v5673 = vsub.f32 %v5671, %v5672
  %v5674 = vand.u32 %v5673, 4294901760
  %5675 = vmatmul.f32.gmra.mxu0 %v5674
  %v5676 = vpop.f32.mrf.mxu0
  %v5677 = vadd.f32 %v5641, %v5676
  %v5678 = vand.u32 %v5622, 4294901760
  %v5679 = vsub.f32 %v5622, %v5678
  %v5680 = vand.u32 %v5679, 4294901760
  %v5681 = vsub.f32 %v5679, %v5680
  %v5682 = vand.u32 %v5681, 4294901760
  %5683 = vmatmul.f32.gmra.mxu0 %v5682
  %v5684 = vpop.f32.mrf.mxu0
  %v5685 = vadd.f32 %v5641, %v5684
  %v5686 = vand.u32 %v5623, 4294901760
  %v5687 = vsub.f32 %v5623, %v5686
  %v5688 = vand.u32 %v5687, 4294901760
  %v5689 = vsub.f32 %v5687, %v5688
  %v5690 = vand.u32 %v5689, 4294901760
  %5691 = vmatmul.f32.gmra.mxu0 %v5690
  %v5692 = vpop.f32.mrf.mxu0
  %v5693 = vadd.f32 %v5641, %v5692
  %v5694 = vand.u32 %v5624, 4294901760
  %v5695 = vsub.f32 %v5624, %v5694
  %v5696 = vand.u32 %v5695, 4294901760
  %v5697 = vsub.f32 %v5695, %v5696
  %v5698 = vand.u32 %v5697, 4294901760
  %5699 = vmatmul.f32.gmra.mxu0 %v5698
  %v5700 = vpop.f32.mrf.mxu0
  %v5701 = vadd.f32 %v5641, %v5700
  %v5702 = vand.u32 %v5625, 4294901760
  %v5703 = vsub.f32 %v5625, %v5702
  %v5704 = vand.u32 %v5703, 4294901760
  %v5705 = vsub.f32 %v5703, %v5704
  %v5706 = vand.u32 %v5705, 4294901760
  %5707 = vmatmul.f32.gmra.mxu0 %v5706
  %v5708 = vpop.f32.mrf.mxu0
  %v5709 = vadd.f32 %v5641, %v5708
  %v5710 = vand.u32 %v5626, 4294901760
  %v5711 = vsub.f32 %v5626, %v5710
  %v5712 = vand.u32 %v5711, 4294901760
  %v5713 = vsub.f32 %v5711, %v5712
  %v5714 = vand.u32 %v5713, 4294901760
  %5715 = vmatmul.f32.gmra.mxu0 %v5714
  %v5716 = vpop.f32.mrf.mxu0
  %v5717 = vadd.f32 %v5641, %v5716
  %v5718 = vand.u32 %v5627, 4294901760
  %v5719 = vsub.f32 %v5627, %v5718
  %v5720 = vand.u32 %v5719, 4294901760
  %v5721 = vsub.f32 %v5719, %v5720
  %v5722 = vand.u32 %v5721, 4294901760
  %5723 = vmatmul.f32.gmra.mxu0 %v5722
  %v5724 = vpop.f32.mrf.mxu0
  %v5725 = vadd.f32 %v5641, %v5724
  %v5726 = vand.u32 %v5628, 4294901760
  %v5727 = vsub.f32 %v5628, %v5726
  %v5728 = vand.u32 %v5727, 4294901760
  %v5729 = vsub.f32 %v5727, %v5728
  %v5730 = vand.u32 %v5729, 4294901760
  %5731 = vmatmul.f32.gmra.mxu0 %v5730
  %v5732 = vpop.f32.mrf.mxu0
  %v5733 = vadd.f32 %v5641, %v5732
  %v5734 = vand.u32 %v5629, 4294901760
  %v5735 = vsub.f32 %v5629, %v5734
  %v5736 = vand.u32 %v5735, 4294901760
  %v5737 = vsub.f32 %v5735, %v5736
  %v5738 = vand.u32 %v5737, 4294901760
  %5739 = vmatmul.f32.gmra.mxu0 %v5738
  %v5740 = vpop.f32.mrf.mxu0
  %v5741 = vadd.f32 %v5641, %v5740
  %v5742 = vand.u32 %v5630, 4294901760
  %v5743 = vsub.f32 %v5630, %v5742
  %v5744 = vand.u32 %v5743, 4294901760
  %v5745 = vsub.f32 %v5743, %v5744
  %v5746 = vand.u32 %v5745, 4294901760
  %5747 = vmatmul.f32.gmra.mxu0 %v5746
  %v5748 = vpop.f32.mrf.mxu0
  %v5749 = vadd.f32 %v5641, %v5748
  %v5750 = vand.u32 %v5631, 4294901760
  %v5751 = vsub.f32 %v5631, %v5750
  %v5752 = vand.u32 %v5751, 4294901760
  %v5753 = vsub.f32 %v5751, %v5752
  %v5754 = vand.u32 %v5753, 4294901760
  %5755 = vmatmul.f32.gmra.mxu0 %v5754
  %v5756 = vpop.f32.mrf.mxu0
  %v5757 = vadd.f32 %v5641, %v5756
  %v5758 = vand.u32 %v5632, 4294901760
  %v5759 = vsub.f32 %v5632, %v5758
  %v5760 = vand.u32 %v5759, 4294901760
  %v5761 = vsub.f32 %v5759, %v5760
  %v5762 = vand.u32 %v5761, 4294901760
  %5763 = vmatmul.f32.gmra.mxu0 %v5762
  %v5764 = vpop.f32.mrf.mxu0
  %v5765 = vadd.f32 %v5641, %v5764
  %v5766 = vand.u32 %v5633, 4294901760
  %v5767 = vsub.f32 %v5633, %v5766
  %v5768 = vand.u32 %v5767, 4294901760
  %v5769 = vsub.f32 %v5767, %v5768
  %v5770 = vand.u32 %v5769, 4294901760
  %5771 = vmatmul.f32.gmra.mxu0 %v5770
  %v5772 = vpop.f32.mrf.mxu0
  %v5773 = vadd.f32 %v5641, %v5772
  %v5774 = vand.u32 %v5634, 4294901760
  %v5775 = vsub.f32 %v5634, %v5774
  %v5776 = vand.u32 %v5775, 4294901760
  %v5777 = vsub.f32 %v5775, %v5776
  %v5778 = vand.u32 %v5777, 4294901760
  %5779 = vmatmul.f32.gmra.mxu0 %v5778
  %v5780 = vpop.f32.mrf.mxu0
  %v5781 = vadd.f32 %v5641, %v5780
  %v5782 = vand.u32 %v5635, 4294901760
  %v5783 = vsub.f32 %v5635, %v5782
  %v5784 = vand.u32 %v5783, 4294901760
  %v5785 = vsub.f32 %v5783, %v5784
  %v5786 = vand.u32 %v5785, 4294901760
  %5787 = vmatmul.f32.gmra.mxu0 %v5786
  %v5788 = vpop.f32.mrf.mxu0
  %v5789 = vadd.f32 %v5641, %v5788
  %5790 = vdwg.mxu0
  %5791 = vmatpush.xpose.msra.mxu0 0.0
  %5792 = vmatpush.xpose.msra.mxu0 0.0
  %5793 = vmatpush.xpose.msra.mxu0 0.0
  %5794 = vmatpush.xpose.msra.mxu0 0.0
  %5795 = vmatpush.xpose.msra.mxu0 0.0
  %5796 = vmatpush.xpose.msra.mxu0 0.0
  %5797 = vmatpush.xpose.msra.mxu0 0.0
  %5798 = vmatpush.xpose.msra.mxu0 0.0
  %5799 = vmatpush.xpose.msra.mxu0 0.0
  %5800 = vmatpush.xpose.msra.mxu0 0.0
  %5801 = vmatpush.xpose.msra.mxu0 0.0
  %5802 = vmatpush.xpose.msra.mxu0 0.0
  %5803 = vmatpush.xpose.msra.mxu0 0.0
  %v5804 = vand.u32 %v5638, 4294901760
  %v5805 = vsub.f32 %v5638, %v5804
  %v5806 = vand.u32 %v5805, 4294901760
  %v5807 = vsub.f32 %v5805, %v5806
  %v5808 = vand.u32 %v5807, 4294901760
  %5809 = vmatpush.xpose.msra.mxu0 %v5808
  %v5810 = vand.u32 %v5637, 4294901760
  %v5811 = vsub.f32 %v5637, %v5810
  %v5812 = vand.u32 %v5811, 4294901760
  %v5813 = vsub.f32 %v5811, %v5812
  %v5814 = vand.u32 %v5813, 4294901760
  %5815 = vmatpush.xpose.msra.mxu0 %v5814
  %v5816 = vand.u32 %v5636, 4294901760
  %v5817 = vsub.f32 %v5636, %v5816
  %v5818 = vand.u32 %v5817, 4294901760
  %v5819 = vsub.f32 %v5817, %v5818
  %v5820 = vand.u32 %v5819, 4294901760
  %5821 = vmatpush.xpose.msra.mxu0 %v5820
  %v5822 = vand.u32 %v5620, 4294901760
  %5823 = vmatmul.f32.gmra.mxu0 %v5822
  %v5824 = vpop.f32.mrf.mxu0
  %v5825 = vadd.f32 %v5669, %v5824
  %v5826 = vand.u32 %v5621, 4294901760
  %5827 = vmatmul.f32.gmra.mxu0 %v5826
  %v5828 = vpop.f32.mrf.mxu0
  %v5829 = vadd.f32 %v5677, %v5828
  %v5830 = vand.u32 %v5622, 4294901760
  %5831 = vmatmul.f32.gmra.mxu0 %v5830
  %v5832 = vpop.f32.mrf.mxu0
  %v5833 = vadd.f32 %v5685, %v5832
  %v5834 = vand.u32 %v5623, 4294901760
  %5835 = vmatmul.f32.gmra.mxu0 %v5834
  %v5836 = vpop.f32.mrf.mxu0
  %v5837 = vadd.f32 %v5693, %v5836
  %v5838 = vand.u32 %v5624, 4294901760
  %5839 = vmatmul.f32.gmra.mxu0 %v5838
  %v5840 = vpop.f32.mrf.mxu0
  %v5841 = vadd.f32 %v5701, %v5840
  %v5842 = vand.u32 %v5625, 4294901760
  %5843 = vmatmul.f32.gmra.mxu0 %v5842
  %v5844 = vpop.f32.mrf.mxu0
  %v5845 = vadd.f32 %v5709, %v5844
  %v5846 = vand.u32 %v5626, 4294901760
  %5847 = vmatmul.f32.gmra.mxu0 %v5846
  %v5848 = vpop.f32.mrf.mxu0
  %v5849 = vadd.f32 %v5717, %v5848
  %v5850 = vand.u32 %v5627, 4294901760
  %5851 = vmatmul.f32.gmra.mxu0 %v5850
  %v5852 = vpop.f32.mrf.mxu0
  %v5853 = vadd.f32 %v5725, %v5852
  %v5854 = vand.u32 %v5628, 4294901760
  %5855 = vmatmul.f32.gmra.mxu0 %v5854
  %v5856 = vpop.f32.mrf.mxu0
  %v5857 = vadd.f32 %v5733, %v5856
  %v5858 = vand.u32 %v5629, 4294901760
  %5859 = vmatmul.f32.gmra.mxu0 %v5858
  %v5860 = vpop.f32.mrf.mxu0
  %v5861 = vadd.f32 %v5741, %v5860
  %v5862 = vand.u32 %v5630, 4294901760
  %5863 = vmatmul.f32.gmra.mxu0 %v5862
  %v5864 = vpop.f32.mrf.mxu0
  %v5865 = vadd.f32 %v5749, %v5864
  %v5866 = vand.u32 %v5631, 4294901760
  %5867 = vmatmul.f32.gmra.mxu0 %v5866
  %v5868 = vpop.f32.mrf.mxu0
  %v5869 = vadd.f32 %v5757, %v5868
  %v5870 = vand.u32 %v5632, 4294901760
  %5871 = vmatmul.f32.gmra.mxu0 %v5870
  %v5872 = vpop.f32.mrf.mxu0
  %v5873 = vadd.f32 %v5765, %v5872
  %v5874 = vand.u32 %v5633, 4294901760
  %5875 = vmatmul.f32.gmra.mxu0 %v5874
  %v5876 = vpop.f32.mrf.mxu0
  %v5877 = vadd.f32 %v5773, %v5876
  %v5878 = vand.u32 %v5634, 4294901760
  %5879 = vmatmul.f32.gmra.mxu0 %v5878
  %v5880 = vpop.f32.mrf.mxu0
  %v5881 = vadd.f32 %v5781, %v5880
  %v5882 = vand.u32 %v5635, 4294901760
  %5883 = vmatmul.f32.gmra.mxu0 %v5882
  %v5884 = vpop.f32.mrf.mxu0
  %v5885 = vadd.f32 %v5789, %v5884
  %5886 = vdwg.mxu0
  %5887 = vmatpush.xpose.msra.mxu0 0.0
  %5888 = vmatpush.xpose.msra.mxu0 0.0
  %5889 = vmatpush.xpose.msra.mxu0 0.0
  %5890 = vmatpush.xpose.msra.mxu0 0.0
  %5891 = vmatpush.xpose.msra.mxu0 0.0
  %5892 = vmatpush.xpose.msra.mxu0 0.0
  %5893 = vmatpush.xpose.msra.mxu0 0.0
  %5894 = vmatpush.xpose.msra.mxu0 0.0
  %5895 = vmatpush.xpose.msra.mxu0 0.0
  %5896 = vmatpush.xpose.msra.mxu0 0.0
  %5897 = vmatpush.xpose.msra.mxu0 0.0
  %5898 = vmatpush.xpose.msra.mxu0 0.0
  %5899 = vmatpush.xpose.msra.mxu0 0.0
  %v5900 = vand.u32 %v5638, 4294901760
  %v5901 = vsub.f32 %v5638, %v5900
  %5902 = vmatpush.xpose.msra.mxu0 %v5901
  %v5903 = vand.u32 %v5637, 4294901760
  %v5904 = vsub.f32 %v5637, %v5903
  %5905 = vmatpush.xpose.msra.mxu0 %v5904
  %v5906 = vand.u32 %v5636, 4294901760
  %v5907 = vsub.f32 %v5636, %v5906
  %5908 = vmatpush.xpose.msra.mxu0 %v5907
  %v5909 = vand.u32 %v5620, 4294901760
  %v5910 = vsub.f32 %v5620, %v5909
  %5911 = vmatmul.f32.gmra.mxu0 %v5910
  %v5912 = vpop.f32.mrf.mxu0
  %v5913 = vadd.f32 %v5825, %v5912
  %v5914 = vand.u32 %v5621, 4294901760
  %v5915 = vsub.f32 %v5621, %v5914
  %5916 = vmatmul.f32.gmra.mxu0 %v5915
  %v5917 = vpop.f32.mrf.mxu0
  %v5918 = vadd.f32 %v5829, %v5917
  %v5919 = vand.u32 %v5622, 4294901760
  %v5920 = vsub.f32 %v5622, %v5919
  %5921 = vmatmul.f32.gmra.mxu0 %v5920
  %v5922 = vpop.f32.mrf.mxu0
  %v5923 = vadd.f32 %v5833, %v5922
  %v5924 = vand.u32 %v5623, 4294901760
  %v5925 = vsub.f32 %v5623, %v5924
  %5926 = vmatmul.f32.gmra.mxu0 %v5925
  %v5927 = vpop.f32.mrf.mxu0
  %v5928 = vadd.f32 %v5837, %v5927
  %v5929 = vand.u32 %v5624, 4294901760
  %v5930 = vsub.f32 %v5624, %v5929
  %5931 = vmatmul.f32.gmra.mxu0 %v5930
  %v5932 = vpop.f32.mrf.mxu0
  %v5933 = vadd.f32 %v5841, %v5932
  %v5934 = vand.u32 %v5625, 4294901760
  %v5935 = vsub.f32 %v5625, %v5934
  %5936 = vmatmul.f32.gmra.mxu0 %v5935
  %v5937 = vpop.f32.mrf.mxu0
  %v5938 = vadd.f32 %v5845, %v5937
  %v5939 = vand.u32 %v5626, 4294901760
  %v5940 = vsub.f32 %v5626, %v5939
  %5941 = vmatmul.f32.gmra.mxu0 %v5940
  %v5942 = vpop.f32.mrf.mxu0
  %v5943 = vadd.f32 %v5849, %v5942
  %v5944 = vand.u32 %v5627, 4294901760
  %v5945 = vsub.f32 %v5627, %v5944
  %5946 = vmatmul.f32.gmra.mxu0 %v5945
  %v5947 = vpop.f32.mrf.mxu0
  %v5948 = vadd.f32 %v5853, %v5947
  %v5949 = vand.u32 %v5628, 4294901760
  %v5950 = vsub.f32 %v5628, %v5949
  %5951 = vmatmul.f32.gmra.mxu0 %v5950
  %v5952 = vpop.f32.mrf.mxu0
  %v5953 = vadd.f32 %v5857, %v5952
  %v5954 = vand.u32 %v5629, 4294901760
  %v5955 = vsub.f32 %v5629, %v5954
  %5956 = vmatmul.f32.gmra.mxu0 %v5955
  %v5957 = vpop.f32.mrf.mxu0
  %v5958 = vadd.f32 %v5861, %v5957
  %v5959 = vand.u32 %v5630, 4294901760
  %v5960 = vsub.f32 %v5630, %v5959
  %5961 = vmatmul.f32.gmra.mxu0 %v5960
  %v5962 = vpop.f32.mrf.mxu0
  %v5963 = vadd.f32 %v5865, %v5962
  %v5964 = vand.u32 %v5631, 4294901760
  %v5965 = vsub.f32 %v5631, %v5964
  %5966 = vmatmul.f32.gmra.mxu0 %v5965
  %v5967 = vpop.f32.mrf.mxu0
  %v5968 = vadd.f32 %v5869, %v5967
  %v5969 = vand.u32 %v5632, 4294901760
  %v5970 = vsub.f32 %v5632, %v5969
  %5971 = vmatmul.f32.gmra.mxu0 %v5970
  %v5972 = vpop.f32.mrf.mxu0
  %v5973 = vadd.f32 %v5873, %v5972
  %v5974 = vand.u32 %v5633, 4294901760
  %v5975 = vsub.f32 %v5633, %v5974
  %5976 = vmatmul.f32.gmra.mxu0 %v5975
  %v5977 = vpop.f32.mrf.mxu0
  %v5978 = vadd.f32 %v5877, %v5977
  %v5979 = vand.u32 %v5634, 4294901760
  %v5980 = vsub.f32 %v5634, %v5979
  %5981 = vmatmul.f32.gmra.mxu0 %v5980
  %v5982 = vpop.f32.mrf.mxu0
  %v5983 = vadd.f32 %v5881, %v5982
  %v5984 = vand.u32 %v5635, 4294901760
  %v5985 = vsub.f32 %v5635, %v5984
  %5986 = vmatmul.f32.gmra.mxu0 %v5985
  %v5987 = vpop.f32.mrf.mxu0
  %v5988 = vadd.f32 %v5885, %v5987
  %5989 = vdwg.mxu0
  %5990 = vmatpush.xpose.msra.mxu0 0.0
  %5991 = vmatpush.xpose.msra.mxu0 0.0
  %5992 = vmatpush.xpose.msra.mxu0 0.0
  %5993 = vmatpush.xpose.msra.mxu0 0.0
  %5994 = vmatpush.xpose.msra.mxu0 0.0
  %5995 = vmatpush.xpose.msra.mxu0 0.0
  %5996 = vmatpush.xpose.msra.mxu0 0.0
  %5997 = vmatpush.xpose.msra.mxu0 0.0
  %5998 = vmatpush.xpose.msra.mxu0 0.0
  %5999 = vmatpush.xpose.msra.mxu0 0.0
  %6000 = vmatpush.xpose.msra.mxu0 0.0
  %6001 = vmatpush.xpose.msra.mxu0 0.0
  %6002 = vmatpush.xpose.msra.mxu0 0.0
  %v6003 = vand.u32 %v5638, 4294901760
  %6004 = vmatpush.xpose.msra.mxu0 %v6003
  %v6005 = vand.u32 %v5637, 4294901760
  %6006 = vmatpush.xpose.msra.mxu0 %v6005
  %v6007 = vand.u32 %v5636, 4294901760
  %6008 = vmatpush.xpose.msra.mxu0 %v6007
  %v6009 = vand.u32 %v5620, 4294901760
  %v6010 = vsub.f32 %v5620, %v6009
  %v6011 = vand.u32 %v6010, 4294901760
  %6012 = vmatmul.f32.gmra.mxu0 %v6011
  %v6013 = vpop.f32.mrf.mxu0
  %v6014 = vadd.f32 %v5913, %v6013
  %v6015 = vand.u32 %v5621, 4294901760
  %v6016 = vsub.f32 %v5621, %v6015
  %v6017 = vand.u32 %v6016, 4294901760
  %6018 = vmatmul.f32.gmra.mxu0 %v6017
  %v6019 = vpop.f32.mrf.mxu0
  %v6020 = vadd.f32 %v5918, %v6019
  %v6021 = vand.u32 %v5622, 4294901760
  %v6022 = vsub.f32 %v5622, %v6021
  %v6023 = vand.u32 %v6022, 4294901760
  %6024 = vmatmul.f32.gmra.mxu0 %v6023
  %v6025 = vpop.f32.mrf.mxu0
  %v6026 = vadd.f32 %v5923, %v6025
  %v6027 = vand.u32 %v5623, 4294901760
  %v6028 = vsub.f32 %v5623, %v6027
  %v6029 = vand.u32 %v6028, 4294901760
  %6030 = vmatmul.f32.gmra.mxu0 %v6029
  %v6031 = vpop.f32.mrf.mxu0
  %v6032 = vadd.f32 %v5928, %v6031
  %v6033 = vand.u32 %v5624, 4294901760
  %v6034 = vsub.f32 %v5624, %v6033
  %v6035 = vand.u32 %v6034, 4294901760
  %6036 = vmatmul.f32.gmra.mxu0 %v6035
  %v6037 = vpop.f32.mrf.mxu0
  %v6038 = vadd.f32 %v5933, %v6037
  %v6039 = vand.u32 %v5625, 4294901760
  %v6040 = vsub.f32 %v5625, %v6039
  %v6041 = vand.u32 %v6040, 4294901760
  %6042 = vmatmul.f32.gmra.mxu0 %v6041
  %v6043 = vpop.f32.mrf.mxu0
  %v6044 = vadd.f32 %v5938, %v6043
  %v6045 = vand.u32 %v5626, 4294901760
  %v6046 = vsub.f32 %v5626, %v6045
  %v6047 = vand.u32 %v6046, 4294901760
  %6048 = vmatmul.f32.gmra.mxu0 %v6047
  %v6049 = vpop.f32.mrf.mxu0
  %v6050 = vadd.f32 %v5943, %v6049
  %v6051 = vand.u32 %v5627, 4294901760
  %v6052 = vsub.f32 %v5627, %v6051
  %v6053 = vand.u32 %v6052, 4294901760
  %6054 = vmatmul.f32.gmra.mxu0 %v6053
  %v6055 = vpop.f32.mrf.mxu0
  %v6056 = vadd.f32 %v5948, %v6055
  %v6057 = vand.u32 %v5628, 4294901760
  %v6058 = vsub.f32 %v5628, %v6057
  %v6059 = vand.u32 %v6058, 4294901760
  %6060 = vmatmul.f32.gmra.mxu0 %v6059
  %v6061 = vpop.f32.mrf.mxu0
  %v6062 = vadd.f32 %v5953, %v6061
  %v6063 = vand.u32 %v5629, 4294901760
  %v6064 = vsub.f32 %v5629, %v6063
  %v6065 = vand.u32 %v6064, 4294901760
  %6066 = vmatmul.f32.gmra.mxu0 %v6065
  %v6067 = vpop.f32.mrf.mxu0
  %v6068 = vadd.f32 %v5958, %v6067
  %v6069 = vand.u32 %v5630, 4294901760
  %v6070 = vsub.f32 %v5630, %v6069
  %v6071 = vand.u32 %v6070, 4294901760
  %6072 = vmatmul.f32.gmra.mxu0 %v6071
  %v6073 = vpop.f32.mrf.mxu0
  %v6074 = vadd.f32 %v5963, %v6073
  %v6075 = vand.u32 %v5631, 4294901760
  %v6076 = vsub.f32 %v5631, %v6075
  %v6077 = vand.u32 %v6076, 4294901760
  %6078 = vmatmul.f32.gmra.mxu0 %v6077
  %v6079 = vpop.f32.mrf.mxu0
  %v6080 = vadd.f32 %v5968, %v6079
  %v6081 = vand.u32 %v5632, 4294901760
  %v6082 = vsub.f32 %v5632, %v6081
  %v6083 = vand.u32 %v6082, 4294901760
  %6084 = vmatmul.f32.gmra.mxu0 %v6083
  %v6085 = vpop.f32.mrf.mxu0
  %v6086 = vadd.f32 %v5973, %v6085
  %v6087 = vand.u32 %v5633, 4294901760
  %v6088 = vsub.f32 %v5633, %v6087
  %v6089 = vand.u32 %v6088, 4294901760
  %6090 = vmatmul.f32.gmra.mxu0 %v6089
  %v6091 = vpop.f32.mrf.mxu0
  %v6092 = vadd.f32 %v5978, %v6091
  %v6093 = vand.u32 %v5634, 4294901760
  %v6094 = vsub.f32 %v5634, %v6093
  %v6095 = vand.u32 %v6094, 4294901760
  %6096 = vmatmul.f32.gmra.mxu0 %v6095
  %v6097 = vpop.f32.mrf.mxu0
  %v6098 = vadd.f32 %v5983, %v6097
  %v6099 = vand.u32 %v5635, 4294901760
  %v6100 = vsub.f32 %v5635, %v6099
  %v6101 = vand.u32 %v6100, 4294901760
  %6102 = vmatmul.f32.gmra.mxu0 %v6101
  %v6103 = vpop.f32.mrf.mxu0
  %v6104 = vadd.f32 %v5988, %v6103
  %6105 = vdwg.mxu0
  %6106 = vmatpush.xpose.msra.mxu0 0.0
  %6107 = vmatpush.xpose.msra.mxu0 0.0
  %6108 = vmatpush.xpose.msra.mxu0 0.0
  %6109 = vmatpush.xpose.msra.mxu0 0.0
  %6110 = vmatpush.xpose.msra.mxu0 0.0
  %6111 = vmatpush.xpose.msra.mxu0 0.0
  %6112 = vmatpush.xpose.msra.mxu0 0.0
  %6113 = vmatpush.xpose.msra.mxu0 0.0
  %6114 = vmatpush.xpose.msra.mxu0 0.0
  %6115 = vmatpush.xpose.msra.mxu0 0.0
  %6116 = vmatpush.xpose.msra.mxu0 0.0
  %6117 = vmatpush.xpose.msra.mxu0 0.0
  %6118 = vmatpush.xpose.msra.mxu0 0.0
  %v6119 = vand.u32 %v5638, 4294901760
  %v6120 = vsub.f32 %v5638, %v6119
  %v6121 = vand.u32 %v6120, 4294901760
  %6122 = vmatpush.xpose.msra.mxu0 %v6121
  %v6123 = vand.u32 %v5637, 4294901760
  %v6124 = vsub.f32 %v5637, %v6123
  %v6125 = vand.u32 %v6124, 4294901760
  %6126 = vmatpush.xpose.msra.mxu0 %v6125
  %v6127 = vand.u32 %v5636, 4294901760
  %v6128 = vsub.f32 %v5636, %v6127
  %v6129 = vand.u32 %v6128, 4294901760
  %6130 = vmatpush.xpose.msra.mxu0 %v6129
  %v6131 = vand.u32 %v5620, 4294901760
  %6132 = vmatmul.f32.gmra.mxu0 %v6131
  %v6133 = vpop.f32.mrf.mxu0
  %v6134 = vadd.f32 %v6014, %v6133
  %v6135 = vand.u32 %v5621, 4294901760
  %6136 = vmatmul.f32.gmra.mxu0 %v6135
  %v6137 = vpop.f32.mrf.mxu0
  %v6138 = vadd.f32 %v6020, %v6137
  %v6139 = vand.u32 %v5622, 4294901760
  %6140 = vmatmul.f32.gmra.mxu0 %v6139
  %v6141 = vpop.f32.mrf.mxu0
  %v6142 = vadd.f32 %v6026, %v6141
  %v6143 = vand.u32 %v5623, 4294901760
  %6144 = vmatmul.f32.gmra.mxu0 %v6143
  %v6145 = vpop.f32.mrf.mxu0
  %v6146 = vadd.f32 %v6032, %v6145
  %v6147 = vand.u32 %v5624, 4294901760
  %6148 = vmatmul.f32.gmra.mxu0 %v6147
  %v6149 = vpop.f32.mrf.mxu0
  %v6150 = vadd.f32 %v6038, %v6149
  %v6151 = vand.u32 %v5625, 4294901760
  %6152 = vmatmul.f32.gmra.mxu0 %v6151
  %v6153 = vpop.f32.mrf.mxu0
  %v6154 = vadd.f32 %v6044, %v6153
  %v6155 = vand.u32 %v5626, 4294901760
  %6156 = vmatmul.f32.gmra.mxu0 %v6155
  %v6157 = vpop.f32.mrf.mxu0
  %v6158 = vadd.f32 %v6050, %v6157
  %v6159 = vand.u32 %v5627, 4294901760
  %6160 = vmatmul.f32.gmra.mxu0 %v6159
  %v6161 = vpop.f32.mrf.mxu0
  %v6162 = vadd.f32 %v6056, %v6161
  %v6163 = vand.u32 %v5628, 4294901760
  %6164 = vmatmul.f32.gmra.mxu0 %v6163
  %v6165 = vpop.f32.mrf.mxu0
  %v6166 = vadd.f32 %v6062, %v6165
  %v6167 = vand.u32 %v5629, 4294901760
  %6168 = vmatmul.f32.gmra.mxu0 %v6167
  %v6169 = vpop.f32.mrf.mxu0
  %v6170 = vadd.f32 %v6068, %v6169
  %v6171 = vand.u32 %v5630, 4294901760
  %6172 = vmatmul.f32.gmra.mxu0 %v6171
  %v6173 = vpop.f32.mrf.mxu0
  %v6174 = vadd.f32 %v6074, %v6173
  %v6175 = vand.u32 %v5631, 4294901760
  %6176 = vmatmul.f32.gmra.mxu0 %v6175
  %v6177 = vpop.f32.mrf.mxu0
  %v6178 = vadd.f32 %v6080, %v6177
  %v6179 = vand.u32 %v5632, 4294901760
  %6180 = vmatmul.f32.gmra.mxu0 %v6179
  %v6181 = vpop.f32.mrf.mxu0
  %v6182 = vadd.f32 %v6086, %v6181
  %v6183 = vand.u32 %v5633, 4294901760
  %6184 = vmatmul.f32.gmra.mxu0 %v6183
  %v6185 = vpop.f32.mrf.mxu0
  %v6186 = vadd.f32 %v6092, %v6185
  %v6187 = vand.u32 %v5634, 4294901760
  %6188 = vmatmul.f32.gmra.mxu0 %v6187
  %v6189 = vpop.f32.mrf.mxu0
  %v6190 = vadd.f32 %v6098, %v6189
  %v6191 = vand.u32 %v5635, 4294901760
  %6192 = vmatmul.f32.gmra.mxu0 %v6191
  %v6193 = vpop.f32.mrf.mxu0
  %v6194 = vadd.f32 %v6104, %v6193
  %6195 = vdwg.mxu0
  %6196 = vmatpush.xpose.msra.mxu0 0.0
  %6197 = vmatpush.xpose.msra.mxu0 0.0
  %6198 = vmatpush.xpose.msra.mxu0 0.0
  %6199 = vmatpush.xpose.msra.mxu0 0.0
  %6200 = vmatpush.xpose.msra.mxu0 0.0
  %6201 = vmatpush.xpose.msra.mxu0 0.0
  %6202 = vmatpush.xpose.msra.mxu0 0.0
  %6203 = vmatpush.xpose.msra.mxu0 0.0
  %6204 = vmatpush.xpose.msra.mxu0 0.0
  %6205 = vmatpush.xpose.msra.mxu0 0.0
  %6206 = vmatpush.xpose.msra.mxu0 0.0
  %6207 = vmatpush.xpose.msra.mxu0 0.0
  %6208 = vmatpush.xpose.msra.mxu0 0.0
  %v6209 = vand.u32 %v5638, 4294901760
  %6210 = vmatpush.xpose.msra.mxu0 %v6209
  %v6211 = vand.u32 %v5637, 4294901760
  %6212 = vmatpush.xpose.msra.mxu0 %v6211
  %v6213 = vand.u32 %v5636, 4294901760
  %6214 = vmatpush.xpose.msra.mxu0 %v6213
  %v6215 = vand.u32 %v5620, 4294901760
  %6216 = vmatmul.f32.gmra.mxu0 %v6215
  %v6217 = vpop.f32.mrf.mxu0
  %v6218 = vadd.f32 %v6134, %v6217
  %v6219 = vand.u32 %v5621, 4294901760
  %6220 = vmatmul.f32.gmra.mxu0 %v6219
  %v6221 = vpop.f32.mrf.mxu0
  %v6222 = vadd.f32 %v6138, %v6221
  %v6223 = vand.u32 %v5622, 4294901760
  %6224 = vmatmul.f32.gmra.mxu0 %v6223
  %v6225 = vpop.f32.mrf.mxu0
  %v6226 = vadd.f32 %v6142, %v6225
  %v6227 = vand.u32 %v5623, 4294901760
  %6228 = vmatmul.f32.gmra.mxu0 %v6227
  %v6229 = vpop.f32.mrf.mxu0
  %v6230 = vadd.f32 %v6146, %v6229
  %v6231 = vand.u32 %v5624, 4294901760
  %6232 = vmatmul.f32.gmra.mxu0 %v6231
  %v6233 = vpop.f32.mrf.mxu0
  %v6234 = vadd.f32 %v6150, %v6233
  %v6235 = vand.u32 %v5625, 4294901760
  %6236 = vmatmul.f32.gmra.mxu0 %v6235
  %v6237 = vpop.f32.mrf.mxu0
  %v6238 = vadd.f32 %v6154, %v6237
  %v6239 = vand.u32 %v5626, 4294901760
  %6240 = vmatmul.f32.gmra.mxu0 %v6239
  %v6241 = vpop.f32.mrf.mxu0
  %v6242 = vadd.f32 %v6158, %v6241
  %v6243 = vand.u32 %v5627, 4294901760
  %6244 = vmatmul.f32.gmra.mxu0 %v6243
  %v6245 = vpop.f32.mrf.mxu0
  %v6246 = vadd.f32 %v6162, %v6245
  %v6247 = vand.u32 %v5628, 4294901760
  %6248 = vmatmul.f32.gmra.mxu0 %v6247
  %v6249 = vpop.f32.mrf.mxu0
  %v6250 = vadd.f32 %v6166, %v6249
  %v6251 = vand.u32 %v5629, 4294901760
  %6252 = vmatmul.f32.gmra.mxu0 %v6251
  %v6253 = vpop.f32.mrf.mxu0
  %v6254 = vadd.f32 %v6170, %v6253
  %v6255 = vand.u32 %v5630, 4294901760
  %6256 = vmatmul.f32.gmra.mxu0 %v6255
  %v6257 = vpop.f32.mrf.mxu0
  %v6258 = vadd.f32 %v6174, %v6257
  %v6259 = vand.u32 %v5631, 4294901760
  %6260 = vmatmul.f32.gmra.mxu0 %v6259
  %v6261 = vpop.f32.mrf.mxu0
  %v6262 = vadd.f32 %v6178, %v6261
  %v6263 = vand.u32 %v5632, 4294901760
  %6264 = vmatmul.f32.gmra.mxu0 %v6263
  %v6265 = vpop.f32.mrf.mxu0
  %v6266 = vadd.f32 %v6182, %v6265
  %v6267 = vand.u32 %v5633, 4294901760
  %6268 = vmatmul.f32.gmra.mxu0 %v6267
  %v6269 = vpop.f32.mrf.mxu0
  %v6270 = vadd.f32 %v6186, %v6269
  %v6271 = vand.u32 %v5634, 4294901760
  %6272 = vmatmul.f32.gmra.mxu0 %v6271
  %v6273 = vpop.f32.mrf.mxu0
  %v6274 = vadd.f32 %v6190, %v6273
  %v6275 = vand.u32 %v5635, 4294901760
  %6276 = vmatmul.f32.gmra.mxu0 %v6275
  %v6277 = vpop.f32.mrf.mxu0
  %v6278 = vadd.f32 %v6194, %v6277
  %6279 = vdwg.mxu0
  %v6280 = vsub.f32 0.0, %v6218
  %v6281 = vsub.f32 0.0, %v6222
  %v6282 = vsub.f32 0.0, %v6226
  %v6283 = vsub.f32 0.0, %v6230
  %v6284 = vsub.f32 0.0, %v6234
  %v6285 = vsub.f32 0.0, %v6238
  %v6286 = vsub.f32 0.0, %v6242
  %v6287 = vsub.f32 0.0, %v6246
  %v6288 = vsub.f32 0.0, %v6250
  %v6289 = vsub.f32 0.0, %v6254
  %v6290 = vsub.f32 0.0, %v6258
  %v6291 = vsub.f32 0.0, %v6262
  %v6292 = vsub.f32 0.0, %v6266
  %v6293 = vsub.f32 0.0, %v6270
  %v6294 = vsub.f32 0.0, %v6274
  %v6295 = vsub.f32 0.0, %v6278
  %v6296 = vmul.f32 %v6280, 1.442695
  %v6297 = vpow.pop %v6296
  %v6298 = vmul.f32 %v6281, 1.442695
  %v6299 = vpow.pop %v6298
  %v6300 = vmul.f32 %v6282, 1.442695
  %v6301 = vpow.pop %v6300
  %v6302 = vmul.f32 %v6283, 1.442695
  %v6303 = vpow.pop %v6302
  %v6304 = vmul.f32 %v6284, 1.442695
  %v6305 = vpow.pop %v6304
  %v6306 = vmul.f32 %v6285, 1.442695
  %v6307 = vpow.pop %v6306
  %v6308 = vmul.f32 %v6286, 1.442695
  %v6309 = vpow.pop %v6308
  %v6310 = vmul.f32 %v6287, 1.442695
  %v6311 = vpow.pop %v6310
  %v6312 = vmul.f32 %v6288, 1.442695
  %v6313 = vpow.pop %v6312
  %v6314 = vmul.f32 %v6289, 1.442695
  %v6315 = vpow.pop %v6314
  %v6316 = vmul.f32 %v6290, 1.442695
  %v6317 = vpow.pop %v6316
  %v6318 = vmul.f32 %v6291, 1.442695
  %v6319 = vpow.pop %v6318
  %v6320 = vmul.f32 %v6292, 1.442695
  %v6321 = vpow.pop %v6320
  %v6322 = vmul.f32 %v6293, 1.442695
  %v6323 = vpow.pop %v6322
  %v6324 = vmul.f32 %v6294, 1.442695
  %v6325 = vpow.pop %v6324
  %v6326 = vmul.f32 %v6295, 1.442695
  %v6327 = vpow.pop %v6326
  %v6328 = vadd.f32 %v6297, 1.0
  %v6329 = vadd.f32 %v6299, 1.0
  %v6330 = vadd.f32 %v6301, 1.0
  %v6331 = vadd.f32 %v6303, 1.0
  %v6332 = vadd.f32 %v6305, 1.0
  %v6333 = vadd.f32 %v6307, 1.0
  %v6334 = vadd.f32 %v6309, 1.0
  %v6335 = vadd.f32 %v6311, 1.0
  %v6336 = vadd.f32 %v6313, 1.0
  %v6337 = vadd.f32 %v6315, 1.0
  %v6338 = vadd.f32 %v6317, 1.0
  %v6339 = vadd.f32 %v6319, 1.0
  %v6340 = vadd.f32 %v6321, 1.0
  %v6341 = vadd.f32 %v6323, 1.0
  %v6342 = vadd.f32 %v6325, 1.0
  %v6343 = vadd.f32 %v6327, 1.0
  %v6344 = vrcp.pop %v6328
  %v6345 = vmul.f32 %v6328, %v6344
  %v6346 = vsub.f32 1.0, %v6345
  %v6347 = vmul.f32 %v6344, %v6346
  %v6348 = vadd.f32 %v6344, %v6347
  %vm6349 = vweird.f32 %v6328
  %vm6350 = vweird.f32 %v6344
  %vm6351 = vmor %vm6349, %vm6350
  %v6352 = vsel %vm6351, %v6344, %v6348
  %v6353 = vand.u32 2147483647, %v6328
  %vm6354 = vcmp.eq.f32.partialorder %v6353, 8.507059e+37
  %v6355 = vand.u32 %v6328, 2147483648
  %v6356 = vor.u32 1.1754944e-38, %v6355
  %v6357 = vsel %vm6354, %v6356, %v6352
  %v6358 = vmul.f32 1.0, %v6357
  %v6359 = vrcp.pop %v6329
  %v6360 = vmul.f32 %v6329, %v6359
  %v6361 = vsub.f32 1.0, %v6360
  %v6362 = vmul.f32 %v6359, %v6361
  %v6363 = vadd.f32 %v6359, %v6362
  %vm6364 = vweird.f32 %v6329
  %vm6365 = vweird.f32 %v6359
  %vm6366 = vmor %vm6364, %vm6365
  %v6367 = vsel %vm6366, %v6359, %v6363
  %v6368 = vand.u32 2147483647, %v6329
  %vm6369 = vcmp.eq.f32.partialorder %v6368, 8.507059e+37
  %v6370 = vand.u32 %v6329, 2147483648
  %v6371 = vor.u32 1.1754944e-38, %v6370
  %v6372 = vsel %vm6369, %v6371, %v6367
  %v6373 = vmul.f32 1.0, %v6372
  %v6374 = vrcp.pop %v6330
  %v6375 = vmul.f32 %v6330, %v6374
  %v6376 = vsub.f32 1.0, %v6375
  %v6377 = vmul.f32 %v6374, %v6376
  %v6378 = vadd.f32 %v6374, %v6377
  %vm6379 = vweird.f32 %v6330
  %vm6380 = vweird.f32 %v6374
  %vm6381 = vmor %vm6379, %vm6380
  %v6382 = vsel %vm6381, %v6374, %v6378
  %v6383 = vand.u32 2147483647, %v6330
  %vm6384 = vcmp.eq.f32.partialorder %v6383, 8.507059e+37
  %v6385 = vand.u32 %v6330, 2147483648
  %v6386 = vor.u32 1.1754944e-38, %v6385
  %v6387 = vsel %vm6384, %v6386, %v6382
  %v6388 = vmul.f32 1.0, %v6387
  %v6389 = vrcp.pop %v6331
  %v6390 = vmul.f32 %v6331, %v6389
  %v6391 = vsub.f32 1.0, %v6390
  %v6392 = vmul.f32 %v6389, %v6391
  %v6393 = vadd.f32 %v6389, %v6392
  %vm6394 = vweird.f32 %v6331
  %vm6395 = vweird.f32 %v6389
  %vm6396 = vmor %vm6394, %vm6395
  %v6397 = vsel %vm6396, %v6389, %v6393
  %v6398 = vand.u32 2147483647, %v6331
  %vm6399 = vcmp.eq.f32.partialorder %v6398, 8.507059e+37
  %v6400 = vand.u32 %v6331, 2147483648
  %v6401 = vor.u32 1.1754944e-38, %v6400
  %v6402 = vsel %vm6399, %v6401, %v6397
  %v6403 = vmul.f32 1.0, %v6402
  %v6404 = vrcp.pop %v6332
  %v6405 = vmul.f32 %v6332, %v6404
  %v6406 = vsub.f32 1.0, %v6405
  %v6407 = vmul.f32 %v6404, %v6406
  %v6408 = vadd.f32 %v6404, %v6407
  %vm6409 = vweird.f32 %v6332
  %vm6410 = vweird.f32 %v6404
  %vm6411 = vmor %vm6409, %vm6410
  %v6412 = vsel %vm6411, %v6404, %v6408
  %v6413 = vand.u32 2147483647, %v6332
  %vm6414 = vcmp.eq.f32.partialorder %v6413, 8.507059e+37
  %v6415 = vand.u32 %v6332, 2147483648
  %v6416 = vor.u32 1.1754944e-38, %v6415
  %v6417 = vsel %vm6414, %v6416, %v6412
  %v6418 = vmul.f32 1.0, %v6417
  %v6419 = vrcp.pop %v6333
  %v6420 = vmul.f32 %v6333, %v6419
  %v6421 = vsub.f32 1.0, %v6420
  %v6422 = vmul.f32 %v6419, %v6421
  %v6423 = vadd.f32 %v6419, %v6422
  %vm6424 = vweird.f32 %v6333
  %vm6425 = vweird.f32 %v6419
  %vm6426 = vmor %vm6424, %vm6425
  %v6427 = vsel %vm6426, %v6419, %v6423
  %v6428 = vand.u32 2147483647, %v6333
  %vm6429 = vcmp.eq.f32.partialorder %v6428, 8.507059e+37
  %v6430 = vand.u32 %v6333, 2147483648
  %v6431 = vor.u32 1.1754944e-38, %v6430
  %v6432 = vsel %vm6429, %v6431, %v6427
  %v6433 = vmul.f32 1.0, %v6432
  %v6434 = vrcp.pop %v6334
  %v6435 = vmul.f32 %v6334, %v6434
  %v6436 = vsub.f32 1.0, %v6435
  %v6437 = vmul.f32 %v6434, %v6436
  %v6438 = vadd.f32 %v6434, %v6437
  %vm6439 = vweird.f32 %v6334
  %vm6440 = vweird.f32 %v6434
  %vm6441 = vmor %vm6439, %vm6440
  %v6442 = vsel %vm6441, %v6434, %v6438
  %v6443 = vand.u32 2147483647, %v6334
  %vm6444 = vcmp.eq.f32.partialorder %v6443, 8.507059e+37
  %v6445 = vand.u32 %v6334, 2147483648
  %v6446 = vor.u32 1.1754944e-38, %v6445
  %v6447 = vsel %vm6444, %v6446, %v6442
  %v6448 = vmul.f32 1.0, %v6447
  %v6449 = vrcp.pop %v6335
  %v6450 = vmul.f32 %v6335, %v6449
  %v6451 = vsub.f32 1.0, %v6450
  %v6452 = vmul.f32 %v6449, %v6451
  %v6453 = vadd.f32 %v6449, %v6452
  %vm6454 = vweird.f32 %v6335
  %vm6455 = vweird.f32 %v6449
  %vm6456 = vmor %vm6454, %vm6455
  %v6457 = vsel %vm6456, %v6449, %v6453
  %v6458 = vand.u32 2147483647, %v6335
  %vm6459 = vcmp.eq.f32.partialorder %v6458, 8.507059e+37
  %v6460 = vand.u32 %v6335, 2147483648
  %v6461 = vor.u32 1.1754944e-38, %v6460
  %v6462 = vsel %vm6459, %v6461, %v6457
  %v6463 = vmul.f32 1.0, %v6462
  %v6464 = vrcp.pop %v6336
  %v6465 = vmul.f32 %v6336, %v6464
  %v6466 = vsub.f32 1.0, %v6465
  %v6467 = vmul.f32 %v6464, %v6466
  %v6468 = vadd.f32 %v6464, %v6467
  %vm6469 = vweird.f32 %v6336
  %vm6470 = vweird.f32 %v6464
  %vm6471 = vmor %vm6469, %vm6470
  %v6472 = vsel %vm6471, %v6464, %v6468
  %v6473 = vand.u32 2147483647, %v6336
  %vm6474 = vcmp.eq.f32.partialorder %v6473, 8.507059e+37
  %v6475 = vand.u32 %v6336, 2147483648
  %v6476 = vor.u32 1.1754944e-38, %v6475
  %v6477 = vsel %vm6474, %v6476, %v6472
  %v6478 = vmul.f32 1.0, %v6477
  %v6479 = vrcp.pop %v6337
  %v6480 = vmul.f32 %v6337, %v6479
  %v6481 = vsub.f32 1.0, %v6480
  %v6482 = vmul.f32 %v6479, %v6481
  %v6483 = vadd.f32 %v6479, %v6482
  %vm6484 = vweird.f32 %v6337
  %vm6485 = vweird.f32 %v6479
  %vm6486 = vmor %vm6484, %vm6485
  %v6487 = vsel %vm6486, %v6479, %v6483
  %v6488 = vand.u32 2147483647, %v6337
  %vm6489 = vcmp.eq.f32.partialorder %v6488, 8.507059e+37
  %v6490 = vand.u32 %v6337, 2147483648
  %v6491 = vor.u32 1.1754944e-38, %v6490
  %v6492 = vsel %vm6489, %v6491, %v6487
  %v6493 = vmul.f32 1.0, %v6492
  %v6494 = vrcp.pop %v6338
  %v6495 = vmul.f32 %v6338, %v6494
  %v6496 = vsub.f32 1.0, %v6495
  %v6497 = vmul.f32 %v6494, %v6496
  %v6498 = vadd.f32 %v6494, %v6497
  %vm6499 = vweird.f32 %v6338
  %vm6500 = vweird.f32 %v6494
  %vm6501 = vmor %vm6499, %vm6500
  %v6502 = vsel %vm6501, %v6494, %v6498
  %v6503 = vand.u32 2147483647, %v6338
  %vm6504 = vcmp.eq.f32.partialorder %v6503, 8.507059e+37
  %v6505 = vand.u32 %v6338, 2147483648
  %v6506 = vor.u32 1.1754944e-38, %v6505
  %v6507 = vsel %vm6504, %v6506, %v6502
  %v6508 = vmul.f32 1.0, %v6507
  %v6509 = vrcp.pop %v6339
  %v6510 = vmul.f32 %v6339, %v6509
  %v6511 = vsub.f32 1.0, %v6510
  %v6512 = vmul.f32 %v6509, %v6511
  %v6513 = vadd.f32 %v6509, %v6512
  %vm6514 = vweird.f32 %v6339
  %vm6515 = vweird.f32 %v6509
  %vm6516 = vmor %vm6514, %vm6515
  %v6517 = vsel %vm6516, %v6509, %v6513
  %v6518 = vand.u32 2147483647, %v6339
  %vm6519 = vcmp.eq.f32.partialorder %v6518, 8.507059e+37
  %v6520 = vand.u32 %v6339, 2147483648
  %v6521 = vor.u32 1.1754944e-38, %v6520
  %v6522 = vsel %vm6519, %v6521, %v6517
  %v6523 = vmul.f32 1.0, %v6522
  %v6524 = vrcp.pop %v6340
  %v6525 = vmul.f32 %v6340, %v6524
  %v6526 = vsub.f32 1.0, %v6525
  %v6527 = vmul.f32 %v6524, %v6526
  %v6528 = vadd.f32 %v6524, %v6527
  %vm6529 = vweird.f32 %v6340
  %vm6530 = vweird.f32 %v6524
  %vm6531 = vmor %vm6529, %vm6530
  %v6532 = vsel %vm6531, %v6524, %v6528
  %v6533 = vand.u32 2147483647, %v6340
  %vm6534 = vcmp.eq.f32.partialorder %v6533, 8.507059e+37
  %v6535 = vand.u32 %v6340, 2147483648
  %v6536 = vor.u32 1.1754944e-38, %v6535
  %v6537 = vsel %vm6534, %v6536, %v6532
  %v6538 = vmul.f32 1.0, %v6537
  %v6539 = vrcp.pop %v6341
  %v6540 = vmul.f32 %v6341, %v6539
  %v6541 = vsub.f32 1.0, %v6540
  %v6542 = vmul.f32 %v6539, %v6541
  %v6543 = vadd.f32 %v6539, %v6542
  %vm6544 = vweird.f32 %v6341
  %vm6545 = vweird.f32 %v6539
  %vm6546 = vmor %vm6544, %vm6545
  %v6547 = vsel %vm6546, %v6539, %v6543
  %v6548 = vand.u32 2147483647, %v6341
  %vm6549 = vcmp.eq.f32.partialorder %v6548, 8.507059e+37
  %v6550 = vand.u32 %v6341, 2147483648
  %v6551 = vor.u32 1.1754944e-38, %v6550
  %v6552 = vsel %vm6549, %v6551, %v6547
  %v6553 = vmul.f32 1.0, %v6552
  %v6554 = vrcp.pop %v6342
  %v6555 = vmul.f32 %v6342, %v6554
  %v6556 = vsub.f32 1.0, %v6555
  %v6557 = vmul.f32 %v6554, %v6556
  %v6558 = vadd.f32 %v6554, %v6557
  %vm6559 = vweird.f32 %v6342
  %vm6560 = vweird.f32 %v6554
  %vm6561 = vmor %vm6559, %vm6560
  %v6562 = vsel %vm6561, %v6554, %v6558
  %v6563 = vand.u32 2147483647, %v6342
  %vm6564 = vcmp.eq.f32.partialorder %v6563, 8.507059e+37
  %v6565 = vand.u32 %v6342, 2147483648
  %v6566 = vor.u32 1.1754944e-38, %v6565
  %v6567 = vsel %vm6564, %v6566, %v6562
  %v6568 = vmul.f32 1.0, %v6567
  %v6569 = vrcp.pop %v6343
  %v6570 = vmul.f32 %v6343, %v6569
  %v6571 = vsub.f32 1.0, %v6570
  %v6572 = vmul.f32 %v6569, %v6571
  %v6573 = vadd.f32 %v6569, %v6572
  %vm6574 = vweird.f32 %v6343
  %vm6575 = vweird.f32 %v6569
  %vm6576 = vmor %vm6574, %vm6575
  %v6577 = vsel %vm6576, %v6569, %v6573
  %v6578 = vand.u32 2147483647, %v6343
  %vm6579 = vcmp.eq.f32.partialorder %v6578, 8.507059e+37
  %v6580 = vand.u32 %v6343, 2147483648
  %v6581 = vor.u32 1.1754944e-38, %v6580
  %v6582 = vsel %vm6579, %v6581, %v6577
  %v6583 = vmul.f32 1.0, %v6582
  %6584 = vst.msk [vmem:[%s17] sm:$0xff] %vm92, %v6358
  %6585 = vst.msk [vmem:[%s17 + $0x8] sm:$0xff] %vm92, %v6373
  %6586 = vst.msk [vmem:[%s17 + $0x10] sm:$0xff] %vm92, %v6388
  %6587 = vst.msk [vmem:[%s17 + $0x18] sm:$0xff] %vm92, %v6403
  %6588 = vst.msk [vmem:[%s17 + $0x20] sm:$0xff] %vm92, %v6418
  %6589 = vst.msk [vmem:[%s17 + $0x28] sm:$0xff] %vm92, %v6433
  %6590 = vst.msk [vmem:[%s17 + $0x30] sm:$0xff] %vm92, %v6448
  %6591 = vst.msk [vmem:[%s17 + $0x38] sm:$0xff] %vm92, %v6463
  %6592 = vst.msk [vmem:[%s17 + $0x40] sm:$0xff] %vm92, %v6478
  %6593 = vst.msk [vmem:[%s17 + $0x48] sm:$0xff] %vm92, %v6493
  %6594 = vst.msk [vmem:[%s17 + $0x50] sm:$0xff] %vm92, %v6508
  %6595 = vst.msk [vmem:[%s17 + $0x58] sm:$0xff] %vm92, %v6523
  %6596 = vst.msk [vmem:[%s17 + $0x60] sm:$0xff] %vm92, %v6538
  %6597 = vst.msk [vmem:[%s17 + $0x68] sm:$0xff] %vm92, %v6553
  %6598 = vst.msk [vmem:[%s17 + $0x70] sm:$0xff] %vm92, %v6568
  %6599 = vst.msk [vmem:[%s17 + $0x78] sm:$0xff] %vm92, %v6583
  // Predicated region
  $region70: #{tpu_custom_call.1} parent=0 // pred_check
    _
  $region71: #{tpu_custom_call.1} parent=0 // pred_check_branch
    %6601 = sbr.rel (0) target = $region73
  $region72: #{tpu_custom_call.1} parent=0 // pred_region
    _
  $region73: #{tpu_custom_call.1} parent=0 // pred_fallthru
    _
  // Predicated region
  $region74: #{tpu_custom_call.1} parent=0 // pred_check
    _
  $region75: #{tpu_custom_call.1} parent=0 // pred_check_branch
    %6603 = sbr.rel (0) target = $region77
  $region76: #{tpu_custom_call.1} parent=0 // pred_region
    _
  $region77: #{tpu_custom_call.1} parent=0 // pred_fallthru
    _

</llo_original>
